<compile_context>
chip_gen: v7x
topology: tpu7x:2x2x1
jax: 0.10.0
libtpu: 0.0.40
codegen_flags: <defaults>
</compile_context>

<pallas_src>
import functools

import numpy as np
import jax
import jax.numpy as jnp
from jax import lax
from jax.experimental import pallas as pl
from jax.experimental.pallas import tpu as pltpu

BN_EPS = 1e-5

_LAYER_CFGS = [
    # (Cin, Cout, K, S, P, act)
    (32, 16, 4, 1, 0, "relu"),
    (16, 8, 3, 2, 1, "relu"),
    (8, 4, 4, 2, 1, "relu"),
    (4, 1, 4, 2, 1, "tanh"),
]


def _round_up(x, m):
    return ((x + m - 1) // m) * m


# --------------------------------------------------------------------------
# Fused Pallas kernel: 4 x (bf16 deconv GEMM -> train-mode BN -> activation)
# --------------------------------------------------------------------------
def _decoder_kernel(*refs, num_layers, n_valid):
    x_ref, out_ref = refs[0], refs[-1]
    layer_refs = refs[1:-1]                      # 5 refs per layer

    x = x_ref[...]                               # (Npad, Din0_pad) f32
    for l in range(num_layers):
        a_ref, selm_ref, selt_ref, g_ref, b_ref = layer_refs[5 * l:5 * l + 5]

        # Transposed conv as one dense GEMM; bf16 operands, f32 accumulate.
        y = jnp.dot(x.astype(jnp.bfloat16), a_ref[...],
                    preferred_element_type=jnp.float32)       # (Npad, Dout_pad)

        # One-pass BN stats (training mode).  Pad rows of y are exactly zero
        # (pad rows of x are zeroed below), pad lanes map to zero selm rows, so
        # the sums only see the N*OH*OW valid samples (1/(N*OH*OW) is baked
        # into selm).  Stack [sum; sumsq] -> ONE selector matmul.
        ysum = jnp.sum(y, axis=0, keepdims=True)               # (1, Dout_pad)
        ysq = jnp.sum(y * y, axis=0, keepdims=True)            # (1, Dout_pad)
        stats = jnp.concatenate([ysum, ysq], axis=0)           # (2, Dout_pad)
        ch = jnp.dot(stats, selm_ref[...],
                     preferred_element_type=jnp.float32)       # (2, Cpad)
        mean, meansq = ch[0:1, :], ch[1:2, :]
        var = meansq - mean * mean

        # Fold BN into one per-channel scale/shift (conv bias omitted: exactly
        # cancelled by the mean subtraction in training-mode BN).
        scale = g_ref[...] * lax.rsqrt(var + BN_EPS)           # (1, Cpad)
        shift = b_ref[...] - mean * scale                      # (1, Cpad)

        # Broadcast scale/shift onto (co, oh, ow) lanes: ONE selector matmul.
        ss = jnp.concatenate([scale, shift], axis=0)           # (2, Cpad)
        ssf = jnp.dot(ss, selt_ref[...],
                      preferred_element_type=jnp.float32)      # (2, Dout_pad)
        z = y * ssf[0:1, :] + ssf[1:2, :]

        if l < num_layers - 1:
            act = jnp.maximum(z, 0.0)
            # Re-zero the batch pad rows (they picked up `shift`) so they do
            # not pollute the next layer's GEMM and BN statistics.
            if n_valid < act.shape[0]:
                row_ids = lax.broadcasted_iota(jnp.int32, act.shape, 0)
                act = jnp.where(row_ids < n_valid, act, 0.0)
            x = act
        else:
            x = jnp.tanh(z)

    out_ref[...] = x


# --------------------------------------------------------------------------
# Host-side weight preparation (numpy, run ONCE per parameter set)
# --------------------------------------------------------------------------
def _deconv_matrix(Wt, Hin, Win, S, P):
    """Dense A s.t. flatten_CHW(convT(x)) = flatten_CHW(x) @ A  (bias omitted)."""
    Cin, Cout, K, _ = Wt.shape
    OH = (Hin - 1) * S - 2 * P + K
    OW = (Win - 1) * S - 2 * P + K
    ph = np.zeros((K, Hin, OH), np.float32)
    pw = np.zeros((K, Win, OW), np.float32)
    for k in range(K):
        for h in range(Hin):
            o = h * S - P + k
            if 0 <= o < OH:
                ph[k, h, o] = 1.0
        for w in range(Win):
            o = w * S - P + k
            if 0 <= o < OW:
                pw[k, w, o] = 1.0
    A = np.einsum("cdij,iho,jwp->chwdop", Wt, ph, pw)
    return A.reshape(Cin * Hin * Win, Cout * OH * OW), OH, OW


def _prep_layer(layer, Hin, Win, N, cpad, din_pad):
    Wt = np.asarray(layer["W"], dtype=np.float32)        # (Cin, Cout, K, K)
    Cin, Cout, K, _ = Wt.shape
    A, OH, OW = _deconv_matrix(Wt, Hin, Win, layer["S"], layer["P"])
    din_real, dout_real = A.shape
    dout_pad = _round_up(dout_real, 128)

    # Zero-padded deconv matrix (zero rows for pad input lanes, zero columns
    # for pad output lanes -> pad lanes stay exactly 0 through the layer).
    A_pad = np.zeros((din_pad, dout_pad), np.float32)
    A_pad[:din_real, :dout_real] = A

    # Block-diagonal channel selectors (zero-padded to cpad channels and to
    # the padded lane width).
    selm = np.zeros((dout_pad, cpad), np.float32)
    selm[:dout_real, :Cout] = np.kron(
        np.eye(Cout, dtype=np.float32),
        np.ones((OH * OW, 1), np.float32)) / float(N * OH * OW)
    selt = np.zeros((cpad, dout_pad), np.float32)
    selt[:Cout, :dout_real] = np.kron(
        np.eye(Cout, dtype=np.float32), np.ones((1, OH * OW), np.float32))

    g = np.zeros((1, cpad), np.float32)
    g[0, :Cout] = np.asarray(layer["gamma"], np.float32)
    b = np.zeros((1, cpad), np.float32)
    b[0, :Cout] = np.asarray(layer["beta"], np.float32)

    args = [jnp.asarray(A_pad).astype(jnp.bfloat16),      # bf16 MXU operand
            jnp.asarray(selm), jnp.asarray(selt),
            jnp.asarray(g), jnp.asarray(b)]
    return args, OH, OW, Cout, dout_pad


# --------------------------------------------------------------------------
# Build the decoder: prep weights once, return a cached jitted forward.
# --------------------------------------------------------------------------
def make_decoder(params, in_shape, batch):
    C0, H0, W0 = in_shape
    N = int(batch)
    npad = max(8, _round_up(N, 8))
    cpad = max(8, max(int(np.asarray(l["W"]).shape[1]) for l in params))

    din0_real = C0 * H0 * W0
    din_pad = _round_up(din0_real, 128)
    din0_pad = din_pad

    flat_inputs = []
    h, w, cout = H0, W0, C0
    for layer in params:
        args, h, w, cout, dout_pad = _prep_layer(layer, h, w, N, cpad, din_pad)
        flat_inputs.extend(args)
        din_pad = dout_pad

    d_last_real = cout * h * w
    d_last_pad = din_pad
    out_c, out_h, out_w = cout, h, w

    kernel = functools.partial(_decoder_kernel,
                               num_layers=len(params), n_valid=N)
    n_in = 1 + len(flat_inputs)
    call = pl.pallas_call(
        kernel,
        out_shape=jax.ShapeDtypeStruct((npad, d_last_pad), jnp.float32),
        # No grid: whole arrays resident in VMEM, single-buffered (no useless
        # double-buffering of the ~1.4 MiB of bf16 weights).
        in_specs=[pl.BlockSpec(memory_space=pltpu.MemorySpace.VMEM)] * n_in,
        out_specs=pl.BlockSpec(memory_space=pltpu.MemorySpace.VMEM),
        compiler_params=pltpu.CompilerParams(
            vmem_limit_bytes=32 * 1024 * 1024),
    )

    @jax.jit
    def forward(z):
        if z.shape != (N, C0, H0, W0):
            raise ValueError(
                f"decoder was built for input shape {(N, C0, H0, W0)}, "
                f"got {z.shape}; rebuild with make_decoder for a new batch.")
        x0 = z.reshape(N, din0_real).astype(jnp.float32)
        x0 = jnp.pad(x0, ((0, npad - N), (0, din0_pad - din0_real)))
        out = call(x0, *flat_inputs)
        return out[:N, :d_last_real].reshape(N, out_c, out_h, out_w)

    return forward


# --------------------------------------------------------------------------
# Deterministic parameter init (shapes from Decoder.__init__)
# --------------------------------------------------------------------------
def init_params(seed=42):
    key = jax.random.PRNGKey(seed)
    params = []
    for (cin, cout, k, s, p, act) in _LAYER_CFGS:
        key, kw, kb, kg, kbeta = jax.random.split(key, 5)
        params.append(dict(
            W=0.1 * jax.random.normal(kw, (cin, cout, k, k), jnp.float32),
            b=0.1 * jax.random.normal(kb, (cout,), jnp.float32),  # reference only
            gamma=1.0 + 0.1 * jax.random.normal(kg, (cout,), jnp.float32),
            beta=0.1 * jax.random.normal(kbeta, (cout,), jnp.float32),
            K=k, S=s, P=p, act=act,
        ))
    return params


# --------------------------------------------------------------------------
# Pure-JAX f32 reference (includes the conv bias, which the kernel omits
# because training-mode BN cancels it exactly).
# --------------------------------------------------------------------------
def _reference_forward(z, params):
    x = z
    for layer in params:
        K, S, P = layer["K"], layer["S"], layer["P"]
        Wt = layer["W"]                                     # (Cin, Cout, K, K)
        Wconv = Wt[:, :, ::-1, ::-1].transpose(1, 0, 2, 3)  # (Cout, Cin, K, K)
        y = lax.conv_general_dilated(
            x, Wconv, window_strides=(1, 1),
            padding=[(K - 1 - P, K - 1 - P)] * 2,
            lhs_dilation=(S, S),
            dimension_numbers=("NCHW", "OIHW", "NCHW"),
        ) + layer["b"].reshape(1, -1, 1, 1)
        mean = jnp.mean(y, axis=(0, 2, 3), keepdims=True)
        var = jnp.mean((y - mean) ** 2, axis=(0, 2, 3), keepdims=True)
        y = (y - mean) * lax.rsqrt(var + BN_EPS)
        y = layer["gamma"].reshape(1, -1, 1, 1) * y + layer["beta"].reshape(1, -1, 1, 1)
        x = jnp.maximum(y, 0.0) if layer["act"] == "relu" else jnp.tanh(y)
    return x


if __name__ == "__main__":
    key = jax.random.PRNGKey(0)
    # DCGAN-style decoder input: (N, 32, 1, 1) -> (N, 1, 28, 28)
    z = jax.random.normal(key, (2, 32, 1, 1), dtype=jnp.float32)
    params = init_params()

    forward = make_decoder(params, in_shape=(32, 1, 1), batch=2)
    out = jax.block_until_ready(forward(z))
    assert out.shape == (2, 1, 28, 28), out.shape

    ref = jax.block_until_ready(_reference_forward(z, params))
    max_err = float(jnp.max(jnp.abs(out - ref)))
    # Tolerance sized for bf16 MXU operands (f32 reference).
    assert jnp.allclose(out, ref, atol=4e-2, rtol=4e-2), max_err

    print("KERNEL_OK")
</pallas_src>

<mosaic_0001>
module attributes {stable_mosaic.version = 11 : i64} {
  func.func @_decoder_kernel(%arg0: memref<8x128xf32, #tpu.memory_space<vmem>>, %arg1: memref<128x256xbf16, #tpu.memory_space<vmem>>, %arg2: memref<256x16xf32, #tpu.memory_space<vmem>>, %arg3: memref<16x256xf32, #tpu.memory_space<vmem>>, %arg4: memref<1x16xf32, #tpu.memory_space<vmem>>, %arg5: memref<1x16xf32, #tpu.memory_space<vmem>>, %arg6: memref<256x512xbf16, #tpu.memory_space<vmem>>, %arg7: memref<512x16xf32, #tpu.memory_space<vmem>>, %arg8: memref<16x512xf32, #tpu.memory_space<vmem>>, %arg9: memref<1x16xf32, #tpu.memory_space<vmem>>, %arg10: memref<1x16xf32, #tpu.memory_space<vmem>>, %arg11: memref<512x896xbf16, #tpu.memory_space<vmem>>, %arg12: memref<896x16xf32, #tpu.memory_space<vmem>>, %arg13: memref<16x896xf32, #tpu.memory_space<vmem>>, %arg14: memref<1x16xf32, #tpu.memory_space<vmem>>, %arg15: memref<1x16xf32, #tpu.memory_space<vmem>>, %arg16: memref<896x896xbf16, #tpu.memory_space<vmem>>, %arg17: memref<896x16xf32, #tpu.memory_space<vmem>>, %arg18: memref<16x896xf32, #tpu.memory_space<vmem>>, %arg19: memref<1x16xf32, #tpu.memory_space<vmem>>, %arg20: memref<1x16xf32, #tpu.memory_space<vmem>>, %arg21: memref<8x896xf32, #tpu.memory_space<vmem>>) attributes {dimension_semantics = [], scalar_prefetch = 0 : i64, scratch_operands = 0 : i64, tpu.core_type = #tpu.core_type<tc>} {
    %c0 = arith.constant 0 : index
    %c0_0 = arith.constant 0 : index
    %0 = vector.load %arg0[%c0, %c0_0] : memref<8x128xf32, #tpu.memory_space<vmem>>, vector<8x128xf32>
    %1 = arith.truncf %0 : vector<8x128xf32> to vector<8x128xbf16>
    %c0_1 = arith.constant 0 : index
    %c0_2 = arith.constant 0 : index
    %2 = vector.load %arg1[%c0_1, %c0_2] : memref<128x256xbf16, #tpu.memory_space<vmem>>, vector<128x256xbf16>
    %cst = arith.constant dense<0.000000e+00> : vector<8x256xf32>
    %3 = tpu.matmul %1, %2, %cst {dimension_numbers = #tpu.dot_dimension_numbers<[1], [0], [0], [1], [0, 0, 1, 1], [], []>} : vector<8x128xbf16>, vector<128x256xbf16>, vector<8x256xf32> -> vector<8x256xf32>
    %cst_3 = arith.constant dense<0.000000e+00> : vector<256xf32>
    %4 = vector.multi_reduction <add>, %3, %cst_3 [0] : vector<8x256xf32> to vector<256xf32>
    %5 = vector.shape_cast %4 : vector<256xf32> to vector<1x256xf32>
    %6 = arith.mulf %3, %3 : vector<8x256xf32>
    %cst_4 = arith.constant dense<0.000000e+00> : vector<256xf32>
    %7 = vector.multi_reduction <add>, %6, %cst_4 [0] : vector<8x256xf32> to vector<256xf32>
    %8 = vector.shape_cast %7 : vector<256xf32> to vector<1x256xf32>
    %9 = tpu.concatenate %5, %8 in 0 : vector<1x256xf32>, vector<1x256xf32> -> vector<2x256xf32>
    %c0_5 = arith.constant 0 : index
    %c0_6 = arith.constant 0 : index
    %10 = vector.load %arg2[%c0_5, %c0_6] : memref<256x16xf32, #tpu.memory_space<vmem>>, vector<256x16xf32>
    %cst_7 = arith.constant dense<0.000000e+00> : vector<2x16xf32>
    %11 = tpu.matmul %9, %10, %cst_7 {dimension_numbers = #tpu.dot_dimension_numbers<[1], [0], [0], [1], [0, 0, 1, 1], [], []>} : vector<2x256xf32>, vector<256x16xf32>, vector<2x16xf32> -> vector<2x16xf32>
    %12 = vector.extract_strided_slice %11 {offsets = [0, 0], sizes = [1, 16], strides = [1, 1]} : vector<2x16xf32> to vector<1x16xf32>
    %13 = vector.extract_strided_slice %11 {offsets = [1, 0], sizes = [1, 16], strides = [1, 1]} : vector<2x16xf32> to vector<1x16xf32>
    %14 = arith.mulf %12, %12 : vector<1x16xf32>
    %15 = arith.subf %13, %14 : vector<1x16xf32>
    %c0_8 = arith.constant 0 : index
    %c0_9 = arith.constant 0 : index
    %16 = vector.load %arg4[%c0_8, %c0_9] : memref<1x16xf32, #tpu.memory_space<vmem>>, vector<1x16xf32>
    %cst_10 = arith.constant 9.99999974E-6 : f32
    %17 = vector.broadcast %cst_10 : f32 to vector<1x16xf32>
    %18 = arith.addf %15, %17 : vector<1x16xf32>
    %19 = math.rsqrt %18 : vector<1x16xf32>
    %20 = arith.mulf %16, %19 : vector<1x16xf32>
    %c0_11 = arith.constant 0 : index
    %c0_12 = arith.constant 0 : index
    %21 = vector.load %arg5[%c0_11, %c0_12] : memref<1x16xf32, #tpu.memory_space<vmem>>, vector<1x16xf32>
    %22 = arith.mulf %12, %20 : vector<1x16xf32>
    %23 = arith.subf %21, %22 : vector<1x16xf32>
    %24 = tpu.concatenate %20, %23 in 0 : vector<1x16xf32>, vector<1x16xf32> -> vector<2x16xf32>
    %c0_13 = arith.constant 0 : index
    %c0_14 = arith.constant 0 : index
    %25 = vector.load %arg3[%c0_13, %c0_14] : memref<16x256xf32, #tpu.memory_space<vmem>>, vector<16x256xf32>
    %cst_15 = arith.constant dense<0.000000e+00> : vector<2x256xf32>
    %26 = tpu.matmul %24, %25, %cst_15 {dimension_numbers = #tpu.dot_dimension_numbers<[1], [0], [0], [1], [0, 0, 1, 1], [], []>} : vector<2x16xf32>, vector<16x256xf32>, vector<2x256xf32> -> vector<2x256xf32>
    %27 = vector.extract_strided_slice %26 {offsets = [0, 0], sizes = [1, 256], strides = [1, 1]} : vector<2x256xf32> to vector<1x256xf32>
    %28 = vector.broadcast %27 : vector<1x256xf32> to vector<8x256xf32>
    %29 = arith.mulf %3, %28 : vector<8x256xf32>
    %30 = vector.extract_strided_slice %26 {offsets = [1, 0], sizes = [1, 256], strides = [1, 1]} : vector<2x256xf32> to vector<1x256xf32>
    %31 = vector.broadcast %30 : vector<1x256xf32> to vector<8x256xf32>
    %32 = arith.addf %29, %31 : vector<8x256xf32>
    %cst_16 = arith.constant 0.000000e+00 : f32
    %33 = vector.broadcast %cst_16 : f32 to vector<8x256xf32>
    %34 = arith.maximumf %32, %33 : vector<8x256xf32>
    %35 = tpu.iota {dimensions = array<i32: 0>} : vector<8x256xi32>
    %c2_i32 = arith.constant 2 : i32
    %36 = vector.broadcast %c2_i32 : i32 to vector<8x256xi32>
    %37 = arith.cmpi slt, %35, %36 : vector<8x256xi32>
    %cst_17 = arith.constant 0.000000e+00 : f32
    %38 = vector.broadcast %cst_17 : f32 to vector<8x256xf32>
    %39 = arith.select %37, %34, %38 : vector<8x256xi1>, vector<8x256xf32>
    %40 = arith.truncf %39 : vector<8x256xf32> to vector<8x256xbf16>
    %c0_18 = arith.constant 0 : index
    %c0_19 = arith.constant 0 : index
    %41 = vector.load %arg6[%c0_18, %c0_19] : memref<256x512xbf16, #tpu.memory_space<vmem>>, vector<256x512xbf16>
    %cst_20 = arith.constant dense<0.000000e+00> : vector<8x512xf32>
    %42 = tpu.matmul %40, %41, %cst_20 {dimension_numbers = #tpu.dot_dimension_numbers<[1], [0], [0], [1], [0, 0, 1, 1], [], []>} : vector<8x256xbf16>, vector<256x512xbf16>, vector<8x512xf32> -> vector<8x512xf32>
    %cst_21 = arith.constant dense<0.000000e+00> : vector<512xf32>
    %43 = vector.multi_reduction <add>, %42, %cst_21 [0] : vector<8x512xf32> to vector<512xf32>
    %44 = vector.shape_cast %43 : vector<512xf32> to vector<1x512xf32>
    %45 = arith.mulf %42, %42 : vector<8x512xf32>
    %cst_22 = arith.constant dense<0.000000e+00> : vector<512xf32>
    %46 = vector.multi_reduction <add>, %45, %cst_22 [0] : vector<8x512xf32> to vector<512xf32>
    %47 = vector.shape_cast %46 : vector<512xf32> to vector<1x512xf32>
    %48 = tpu.concatenate %44, %47 in 0 : vector<1x512xf32>, vector<1x512xf32> -> vector<2x512xf32>
    %c0_23 = arith.constant 0 : index
    %c0_24 = arith.constant 0 : index
    %49 = vector.load %arg7[%c0_23, %c0_24] : memref<512x16xf32, #tpu.memory_space<vmem>>, vector<512x16xf32>
    %cst_25 = arith.constant dense<0.000000e+00> : vector<2x16xf32>
    %50 = tpu.matmul %48, %49, %cst_25 {dimension_numbers = #tpu.dot_dimension_numbers<[1], [0], [0], [1], [0, 0, 1, 1], [], []>} : vector<2x512xf32>, vector<512x16xf32>, vector<2x16xf32> -> vector<2x16xf32>
    %51 = vector.extract_strided_slice %50 {offsets = [0, 0], sizes = [1, 16], strides = [1, 1]} : vector<2x16xf32> to vector<1x16xf32>
    %52 = vector.extract_strided_slice %50 {offsets = [1, 0], sizes = [1, 16], strides = [1, 1]} : vector<2x16xf32> to vector<1x16xf32>
    %53 = arith.mulf %51, %51 : vector<1x16xf32>
    %54 = arith.subf %52, %53 : vector<1x16xf32>
    %c0_26 = arith.constant 0 : index
    %c0_27 = arith.constant 0 : index
    %55 = vector.load %arg9[%c0_26, %c0_27] : memref<1x16xf32, #tpu.memory_space<vmem>>, vector<1x16xf32>
    %cst_28 = arith.constant 9.99999974E-6 : f32
    %56 = vector.broadcast %cst_28 : f32 to vector<1x16xf32>
    %57 = arith.addf %54, %56 : vector<1x16xf32>
    %58 = math.rsqrt %57 : vector<1x16xf32>
    %59 = arith.mulf %55, %58 : vector<1x16xf32>
    %c0_29 = arith.constant 0 : index
    %c0_30 = arith.constant 0 : index
    %60 = vector.load %arg10[%c0_29, %c0_30] : memref<1x16xf32, #tpu.memory_space<vmem>>, vector<1x16xf32>
    %61 = arith.mulf %51, %59 : vector<1x16xf32>
    %62 = arith.subf %60, %61 : vector<1x16xf32>
    %63 = tpu.concatenate %59, %62 in 0 : vector<1x16xf32>, vector<1x16xf32> -> vector<2x16xf32>
    %c0_31 = arith.constant 0 : index
    %c0_32 = arith.constant 0 : index
    %64 = vector.load %arg8[%c0_31, %c0_32] : memref<16x512xf32, #tpu.memory_space<vmem>>, vector<16x512xf32>
    %cst_33 = arith.constant dense<0.000000e+00> : vector<2x512xf32>
    %65 = tpu.matmul %63, %64, %cst_33 {dimension_numbers = #tpu.dot_dimension_numbers<[1], [0], [0], [1], [0, 0, 1, 1], [], []>} : vector<2x16xf32>, vector<16x512xf32>, vector<2x512xf32> -> vector<2x512xf32>
    %66 = vector.extract_strided_slice %65 {offsets = [0, 0], sizes = [1, 512], strides = [1, 1]} : vector<2x512xf32> to vector<1x512xf32>
    %67 = vector.broadcast %66 : vector<1x512xf32> to vector<8x512xf32>
    %68 = arith.mulf %42, %67 : vector<8x512xf32>
    %69 = vector.extract_strided_slice %65 {offsets = [1, 0], sizes = [1, 512], strides = [1, 1]} : vector<2x512xf32> to vector<1x512xf32>
    %70 = vector.broadcast %69 : vector<1x512xf32> to vector<8x512xf32>
    %71 = arith.addf %68, %70 : vector<8x512xf32>
    %cst_34 = arith.constant 0.000000e+00 : f32
    %72 = vector.broadcast %cst_34 : f32 to vector<8x512xf32>
    %73 = arith.maximumf %71, %72 : vector<8x512xf32>
    %74 = tpu.iota {dimensions = array<i32: 0>} : vector<8x512xi32>
    %c2_i32_35 = arith.constant 2 : i32
    %75 = vector.broadcast %c2_i32_35 : i32 to vector<8x512xi32>
    %76 = arith.cmpi slt, %74, %75 : vector<8x512xi32>
    %cst_36 = arith.constant 0.000000e+00 : f32
    %77 = vector.broadcast %cst_36 : f32 to vector<8x512xf32>
    %78 = arith.select %76, %73, %77 : vector<8x512xi1>, vector<8x512xf32>
    %79 = arith.truncf %78 : vector<8x512xf32> to vector<8x512xbf16>
    %c0_37 = arith.constant 0 : index
    %c0_38 = arith.constant 0 : index
    %80 = vector.load %arg11[%c0_37, %c0_38] : memref<512x896xbf16, #tpu.memory_space<vmem>>, vector<512x896xbf16>
    %cst_39 = arith.constant dense<0.000000e+00> : vector<8x896xf32>
    %81 = tpu.matmul %79, %80, %cst_39 {dimension_numbers = #tpu.dot_dimension_numbers<[1], [0], [0], [1], [0, 0, 1, 1], [], []>} : vector<8x512xbf16>, vector<512x896xbf16>, vector<8x896xf32> -> vector<8x896xf32>
    %cst_40 = arith.constant dense<0.000000e+00> : vector<896xf32>
    %82 = vector.multi_reduction <add>, %81, %cst_40 [0] : vector<8x896xf32> to vector<896xf32>
    %83 = vector.shape_cast %82 : vector<896xf32> to vector<1x896xf32>
    %84 = arith.mulf %81, %81 : vector<8x896xf32>
    %cst_41 = arith.constant dense<0.000000e+00> : vector<896xf32>
    %85 = vector.multi_reduction <add>, %84, %cst_41 [0] : vector<8x896xf32> to vector<896xf32>
    %86 = vector.shape_cast %85 : vector<896xf32> to vector<1x896xf32>
    %87 = tpu.concatenate %83, %86 in 0 : vector<1x896xf32>, vector<1x896xf32> -> vector<2x896xf32>
    %c0_42 = arith.constant 0 : index
    %c0_43 = arith.constant 0 : index
    %88 = vector.load %arg12[%c0_42, %c0_43] : memref<896x16xf32, #tpu.memory_space<vmem>>, vector<896x16xf32>
    %cst_44 = arith.constant dense<0.000000e+00> : vector<2x16xf32>
    %89 = tpu.matmul %87, %88, %cst_44 {dimension_numbers = #tpu.dot_dimension_numbers<[1], [0], [0], [1], [0, 0, 1, 1], [], []>} : vector<2x896xf32>, vector<896x16xf32>, vector<2x16xf32> -> vector<2x16xf32>
    %90 = vector.extract_strided_slice %89 {offsets = [0, 0], sizes = [1, 16], strides = [1, 1]} : vector<2x16xf32> to vector<1x16xf32>
    %91 = vector.extract_strided_slice %89 {offsets = [1, 0], sizes = [1, 16], strides = [1, 1]} : vector<2x16xf32> to vector<1x16xf32>
    %92 = arith.mulf %90, %90 : vector<1x16xf32>
    %93 = arith.subf %91, %92 : vector<1x16xf32>
    %c0_45 = arith.constant 0 : index
    %c0_46 = arith.constant 0 : index
    %94 = vector.load %arg14[%c0_45, %c0_46] : memref<1x16xf32, #tpu.memory_space<vmem>>, vector<1x16xf32>
    %cst_47 = arith.constant 9.99999974E-6 : f32
    %95 = vector.broadcast %cst_47 : f32 to vector<1x16xf32>
    %96 = arith.addf %93, %95 : vector<1x16xf32>
    %97 = math.rsqrt %96 : vector<1x16xf32>
    %98 = arith.mulf %94, %97 : vector<1x16xf32>
    %c0_48 = arith.constant 0 : index
    %c0_49 = arith.constant 0 : index
    %99 = vector.load %arg15[%c0_48, %c0_49] : memref<1x16xf32, #tpu.memory_space<vmem>>, vector<1x16xf32>
    %100 = arith.mulf %90, %98 : vector<1x16xf32>
    %101 = arith.subf %99, %100 : vector<1x16xf32>
    %102 = tpu.concatenate %98, %101 in 0 : vector<1x16xf32>, vector<1x16xf32> -> vector<2x16xf32>
    %c0_50 = arith.constant 0 : index
    %c0_51 = arith.constant 0 : index
    %103 = vector.load %arg13[%c0_50, %c0_51] : memref<16x896xf32, #tpu.memory_space<vmem>>, vector<16x896xf32>
    %cst_52 = arith.constant dense<0.000000e+00> : vector<2x896xf32>
    %104 = tpu.matmul %102, %103, %cst_52 {dimension_numbers = #tpu.dot_dimension_numbers<[1], [0], [0], [1], [0, 0, 1, 1], [], []>} : vector<2x16xf32>, vector<16x896xf32>, vector<2x896xf32> -> vector<2x896xf32>
    %105 = vector.extract_strided_slice %104 {offsets = [0, 0], sizes = [1, 896], strides = [1, 1]} : vector<2x896xf32> to vector<1x896xf32>
    %106 = vector.broadcast %105 : vector<1x896xf32> to vector<8x896xf32>
    %107 = arith.mulf %81, %106 : vector<8x896xf32>
    %108 = vector.extract_strided_slice %104 {offsets = [1, 0], sizes = [1, 896], strides = [1, 1]} : vector<2x896xf32> to vector<1x896xf32>
    %109 = vector.broadcast %108 : vector<1x896xf32> to vector<8x896xf32>
    %110 = arith.addf %107, %109 : vector<8x896xf32>
    %cst_53 = arith.constant 0.000000e+00 : f32
    %111 = vector.broadcast %cst_53 : f32 to vector<8x896xf32>
    %112 = arith.maximumf %110, %111 : vector<8x896xf32>
    %113 = tpu.iota {dimensions = array<i32: 0>} : vector<8x896xi32>
    %c2_i32_54 = arith.constant 2 : i32
    %114 = vector.broadcast %c2_i32_54 : i32 to vector<8x896xi32>
    %115 = arith.cmpi slt, %113, %114 : vector<8x896xi32>
    %cst_55 = arith.constant 0.000000e+00 : f32
    %116 = vector.broadcast %cst_55 : f32 to vector<8x896xf32>
    %117 = arith.select %115, %112, %116 : vector<8x896xi1>, vector<8x896xf32>
    %118 = arith.truncf %117 : vector<8x896xf32> to vector<8x896xbf16>
    %c0_56 = arith.constant 0 : index
    %c0_57 = arith.constant 0 : index
    %119 = vector.load %arg16[%c0_56, %c0_57] : memref<896x896xbf16, #tpu.memory_space<vmem>>, vector<896x896xbf16>
    %cst_58 = arith.constant dense<0.000000e+00> : vector<8x896xf32>
    %120 = tpu.matmul %118, %119, %cst_58 {dimension_numbers = #tpu.dot_dimension_numbers<[1], [0], [0], [1], [0, 0, 1, 1], [], []>} : vector<8x896xbf16>, vector<896x896xbf16>, vector<8x896xf32> -> vector<8x896xf32>
    %cst_59 = arith.constant dense<0.000000e+00> : vector<896xf32>
    %121 = vector.multi_reduction <add>, %120, %cst_59 [0] : vector<8x896xf32> to vector<896xf32>
    %122 = vector.shape_cast %121 : vector<896xf32> to vector<1x896xf32>
    %123 = arith.mulf %120, %120 : vector<8x896xf32>
    %cst_60 = arith.constant dense<0.000000e+00> : vector<896xf32>
    %124 = vector.multi_reduction <add>, %123, %cst_60 [0] : vector<8x896xf32> to vector<896xf32>
    %125 = vector.shape_cast %124 : vector<896xf32> to vector<1x896xf32>
    %126 = tpu.concatenate %122, %125 in 0 : vector<1x896xf32>, vector<1x896xf32> -> vector<2x896xf32>
    %c0_61 = arith.constant 0 : index
    %c0_62 = arith.constant 0 : index
    %127 = vector.load %arg17[%c0_61, %c0_62] : memref<896x16xf32, #tpu.memory_space<vmem>>, vector<896x16xf32>
    %cst_63 = arith.constant dense<0.000000e+00> : vector<2x16xf32>
    %128 = tpu.matmul %126, %127, %cst_63 {dimension_numbers = #tpu.dot_dimension_numbers<[1], [0], [0], [1], [0, 0, 1, 1], [], []>} : vector<2x896xf32>, vector<896x16xf32>, vector<2x16xf32> -> vector<2x16xf32>
    %129 = vector.extract_strided_slice %128 {offsets = [0, 0], sizes = [1, 16], strides = [1, 1]} : vector<2x16xf32> to vector<1x16xf32>
    %130 = vector.extract_strided_slice %128 {offsets = [1, 0], sizes = [1, 16], strides = [1, 1]} : vector<2x16xf32> to vector<1x16xf32>
    %131 = arith.mulf %129, %129 : vector<1x16xf32>
    %132 = arith.subf %130, %131 : vector<1x16xf32>
    %c0_64 = arith.constant 0 : index
    %c0_65 = arith.constant 0 : index
    %133 = vector.load %arg19[%c0_64, %c0_65] : memref<1x16xf32, #tpu.memory_space<vmem>>, vector<1x16xf32>
    %cst_66 = arith.constant 9.99999974E-6 : f32
    %134 = vector.broadcast %cst_66 : f32 to vector<1x16xf32>
    %135 = arith.addf %132, %134 : vector<1x16xf32>
    %136 = math.rsqrt %135 : vector<1x16xf32>
    %137 = arith.mulf %133, %136 : vector<1x16xf32>
    %c0_67 = arith.constant 0 : index
    %c0_68 = arith.constant 0 : index
    %138 = vector.load %arg20[%c0_67, %c0_68] : memref<1x16xf32, #tpu.memory_space<vmem>>, vector<1x16xf32>
    %139 = arith.mulf %129, %137 : vector<1x16xf32>
    %140 = arith.subf %138, %139 : vector<1x16xf32>
    %141 = tpu.concatenate %137, %140 in 0 : vector<1x16xf32>, vector<1x16xf32> -> vector<2x16xf32>
    %c0_69 = arith.constant 0 : index
    %c0_70 = arith.constant 0 : index
    %142 = vector.load %arg18[%c0_69, %c0_70] : memref<16x896xf32, #tpu.memory_space<vmem>>, vector<16x896xf32>
    %cst_71 = arith.constant dense<0.000000e+00> : vector<2x896xf32>
    %143 = tpu.matmul %141, %142, %cst_71 {dimension_numbers = #tpu.dot_dimension_numbers<[1], [0], [0], [1], [0, 0, 1, 1], [], []>} : vector<2x16xf32>, vector<16x896xf32>, vector<2x896xf32> -> vector<2x896xf32>
    %144 = vector.extract_strided_slice %143 {offsets = [0, 0], sizes = [1, 896], strides = [1, 1]} : vector<2x896xf32> to vector<1x896xf32>
    %145 = vector.broadcast %144 : vector<1x896xf32> to vector<8x896xf32>
    %146 = arith.mulf %120, %145 : vector<8x896xf32>
    %147 = vector.extract_strided_slice %143 {offsets = [1, 0], sizes = [1, 896], strides = [1, 1]} : vector<2x896xf32> to vector<1x896xf32>
    %148 = vector.broadcast %147 : vector<1x896xf32> to vector<8x896xf32>
    %149 = arith.addf %146, %148 : vector<8x896xf32>
    %150 = math.tanh %149 : vector<8x896xf32>
    %c0_72 = arith.constant 0 : index
    %c0_73 = arith.constant 0 : index
    %151 = vector.load %arg21[%c0_72, %c0_73] : memref<8x896xf32, #tpu.memory_space<vmem>>, vector<8x896xf32>
    tpu.vector_store %arg21[%c0_72, %c0_73], %150 {strides = array<i32>} : memref<8x896xf32, #tpu.memory_space<vmem>>, vector<8x896xf32>,
    return
  }
}

</mosaic_0001>

<llo_original>
// kernel: forward.1
$region0: #{forward.1}
  #allocation0 [shape = 'u32[]', space=smem, size = 0x4, offset = 0x4, fixed_abs, tag = 'smem constant byte address 0x4 - core index']
  #allocation1 [shape = 'u32[144,128]{1,0:T(1,128)}', space=vmem, size = 0x12000, scoped, tag = 'internal scratch']
  %s0 = inlined_call_operand.vmem [shape: f32[8,128], index: 0, kind: input, shape index: {}]
  %s1 = inlined_call_operand.vmem [shape: bf16[128,256], index: 1, kind: input, shape index: {}]
  %s2 = inlined_call_operand.vmem [shape: f32[256,16], index: 2, kind: input, shape index: {}]
  %s3 = inlined_call_operand.vmem [shape: f32[16,256], index: 3, kind: input, shape index: {}]
  %s4 = inlined_call_operand.vmem [shape: f32[1,16], index: 4, kind: input, shape index: {}]
  %s5 = inlined_call_operand.vmem [shape: f32[1,16], index: 5, kind: input, shape index: {}]
  %s6 = inlined_call_operand.vmem [shape: bf16[256,512], index: 6, kind: input, shape index: {}]
  %s7 = inlined_call_operand.vmem [shape: f32[512,16], index: 7, kind: input, shape index: {}]
  %s8 = inlined_call_operand.vmem [shape: f32[16,512], index: 8, kind: input, shape index: {}]
  %s9 = inlined_call_operand.vmem [shape: f32[1,16], index: 9, kind: input, shape index: {}]
  %s10 = inlined_call_operand.vmem [shape: f32[1,16], index: 10, kind: input, shape index: {}]
  %s11 = inlined_call_operand.vmem [shape: bf16[512,896], index: 11, kind: input, shape index: {}]
  %s12 = inlined_call_operand.vmem [shape: f32[896,16], index: 12, kind: input, shape index: {}]
  %s13 = inlined_call_operand.vmem [shape: f32[16,896], index: 13, kind: input, shape index: {}]
  %s14 = inlined_call_operand.vmem [shape: f32[1,16], index: 14, kind: input, shape index: {}]
  %s15 = inlined_call_operand.vmem [shape: f32[1,16], index: 15, kind: input, shape index: {}]
  %s16 = inlined_call_operand.vmem [shape: bf16[896,896], index: 16, kind: input, shape index: {}]
  %s17 = inlined_call_operand.vmem [shape: f32[896,16], index: 17, kind: input, shape index: {}]
  %s18 = inlined_call_operand.vmem [shape: f32[16,896], index: 18, kind: input, shape index: {}]
  %s19 = inlined_call_operand.vmem [shape: f32[1,16], index: 19, kind: input, shape index: {}]
  %s20 = inlined_call_operand.vmem [shape: f32[1,16], index: 20, kind: input, shape index: {}]
  %s21 = inlined_call_operand.vmem [shape: f32[8,896], index: 21, kind: output, shape index: {}]
  %s22 = sld [smem:[#allocation0]]
  $region94: #{forward.1} parent=0
    _
  %s24 = ssub.s32 1, %s22
  %s25 = scalar_select 0, %s24, %s22
  // Predicated region
  $region2: #{forward.1} parent=0 // pred_check
    _
  $region3: #{forward.1} parent=0 // pred_check_branch
    %27 = sbr.rel (0) target = $region5
  $region4: #{forward.1} parent=0 // pred_region
    _
  $region5: #{forward.1} parent=0 // pred_fallthru
    _
  // Predicated region
  $region6: #{forward.1} parent=0 // pred_check
    _
  $region7: #{forward.1} parent=0 // pred_check_branch
    %29 = sbr.rel (0) target = $region9
  $region8: #{forward.1} parent=0 // pred_region
    _
  $region9: #{forward.1} parent=0 // pred_fallthru
    _
  // Predicated region
  $region10: #{forward.1} parent=0 // pred_check
    _
  $region11: #{forward.1} parent=0 // pred_check_branch
    %31 = sbr.rel (0) target = $region13
  $region12: #{forward.1} parent=0 // pred_region
    _
  $region13: #{forward.1} parent=0 // pred_fallthru
    _
  // Predicated region
  $region14: #{forward.1} parent=0 // pred_check
    _
  $region15: #{forward.1} parent=0 // pred_check_branch
    %33 = sbr.rel (0) target = $region17
  $region16: #{forward.1} parent=0 // pred_region
    _
  $region17: #{forward.1} parent=0 // pred_fallthru
    _
  // Predicated region
  $region18: #{forward.1} parent=0 // pred_check
    _
  $region19: #{forward.1} parent=0 // pred_check_branch
    %35 = sbr.rel (0) target = $region21
  $region20: #{forward.1} parent=0 // pred_region
    _
  $region21: #{forward.1} parent=0 // pred_fallthru
    _
  // Predicated region
  $region22: #{forward.1} parent=0 // pred_check
    _
  $region23: #{forward.1} parent=0 // pred_check_branch
    %37 = sbr.rel (0) target = $region25
  $region24: #{forward.1} parent=0 // pred_region
    _
  $region25: #{forward.1} parent=0 // pred_fallthru
    _
  // Predicated region
  $region26: #{forward.1} parent=0 // pred_check
    _
  $region27: #{forward.1} parent=0 // pred_check_branch
    %39 = sbr.rel (0) target = $region29
  $region28: #{forward.1} parent=0 // pred_region
    _
  $region29: #{forward.1} parent=0 // pred_fallthru
    _
  // Predicated region
  $region30: #{forward.1} parent=0 // pred_check
    _
  $region31: #{forward.1} parent=0 // pred_check_branch
    %41 = sbr.rel (0) target = $region33
  $region32: #{forward.1} parent=0 // pred_region
    _
  $region33: #{forward.1} parent=0 // pred_fallthru
    _
  // Predicated region
  $region34: #{forward.1} parent=0 // pred_check
    _
  $region35: #{forward.1} parent=0 // pred_check_branch
    %43 = sbr.rel (0) target = $region37
  $region36: #{forward.1} parent=0 // pred_region
    _
  $region37: #{forward.1} parent=0 // pred_fallthru
    _
  // Predicated region
  $region38: #{forward.1} parent=0 // pred_check
    _
  $region39: #{forward.1} parent=0 // pred_check_branch
    %45 = sbr.rel (0) target = $region41
  $region40: #{forward.1} parent=0 // pred_region
    _
  $region41: #{forward.1} parent=0 // pred_fallthru
    _
  // Predicated region
  $region42: #{forward.1} parent=0 // pred_check
    _
  $region43: #{forward.1} parent=0 // pred_check_branch
    %47 = sbr.rel (0) target = $region45
  $region44: #{forward.1} parent=0 // pred_region
    _
  $region45: #{forward.1} parent=0 // pred_fallthru
    _
  // Predicated region
  $region46: #{forward.1} parent=0 // pred_check
    _
  $region47: #{forward.1} parent=0 // pred_check_branch
    %49 = sbr.rel (0) target = $region49
  $region48: #{forward.1} parent=0 // pred_region
    _
  $region49: #{forward.1} parent=0 // pred_fallthru
    _
  // Predicated region
  $region50: #{forward.1} parent=0 // pred_check
    _
  $region51: #{forward.1} parent=0 // pred_check_branch
    %51 = sbr.rel (0) target = $region53
  $region52: #{forward.1} parent=0 // pred_region
    _
  $region53: #{forward.1} parent=0 // pred_fallthru
    _
  // Predicated region
  $region54: #{forward.1} parent=0 // pred_check
    _
  $region55: #{forward.1} parent=0 // pred_check_branch
    %53 = sbr.rel (0) target = $region57
  $region56: #{forward.1} parent=0 // pred_region
    _
  $region57: #{forward.1} parent=0 // pred_fallthru
    _
  // Predicated region
  $region58: #{forward.1} parent=0 // pred_check
    _
  $region59: #{forward.1} parent=0 // pred_check_branch
    %55 = sbr.rel (0) target = $region61
  $region60: #{forward.1} parent=0 // pred_region
    _
  $region61: #{forward.1} parent=0 // pred_fallthru
    _
  // Predicated region
  $region62: #{forward.1} parent=0 // pred_check
    _
  $region63: #{forward.1} parent=0 // pred_check_branch
    %57 = sbr.rel (0) target = $region65
  $region64: #{forward.1} parent=0 // pred_region
    _
  $region65: #{forward.1} parent=0 // pred_fallthru
    _
  // Predicated region
  $region66: #{forward.1} parent=0 // pred_check
    _
  $region67: #{forward.1} parent=0 // pred_check_branch
    %59 = sbr.rel (0) target = $region69
  $region68: #{forward.1} parent=0 // pred_region
    _
  $region69: #{forward.1} parent=0 // pred_fallthru
    _
  // Predicated region
  $region70: #{forward.1} parent=0 // pred_check
    _
  $region71: #{forward.1} parent=0 // pred_check_branch
    %61 = sbr.rel (0) target = $region73
  $region72: #{forward.1} parent=0 // pred_region
    _
  $region73: #{forward.1} parent=0 // pred_fallthru
    _
  // Predicated region
  $region74: #{forward.1} parent=0 // pred_check
    _
  $region75: #{forward.1} parent=0 // pred_check_branch
    %63 = sbr.rel (0) target = $region77
  $region76: #{forward.1} parent=0 // pred_region
    _
  $region77: #{forward.1} parent=0 // pred_fallthru
    _
  // Predicated region
  $region78: #{forward.1} parent=0 // pred_check
    _
  $region79: #{forward.1} parent=0 // pred_check_branch
    %65 = sbr.rel (0) target = $region81
  $region80: #{forward.1} parent=0 // pred_region
    _
  $region81: #{forward.1} parent=0 // pred_fallthru
    _
  // Predicated region
  $region82: #{forward.1} parent=0 // pred_check
    _
  $region83: #{forward.1} parent=0 // pred_check_branch
    %67 = sbr.rel (0) target = $region85
  $region84: #{forward.1} parent=0 // pred_region
    _
  $region85: #{forward.1} parent=0 // pred_fallthru
    _
  %v69 = vld [vmem:[%s0] sm:$0xff]
  %v70 = vpack.c.bf16 %v69, %v69
  %v71 = vld [vmem:[%s1] sm:$0xff]
  %v72 = vld [vmem:[%s1 + $0x8] sm:$0xff]
  %v73 = vld [vmem:[%s1 + $0x10] sm:$0xff]
  %v74 = vld [vmem:[%s1 + $0x18] sm:$0xff]
  %v75 = vld [vmem:[%s1 + $0x20] sm:$0xff]
  %v76 = vld [vmem:[%s1 + $0x28] sm:$0xff]
  %v77 = vld [vmem:[%s1 + $0x30] sm:$0xff]
  %v78 = vld [vmem:[%s1 + $0x38] sm:$0xff]
  %v79 = vld [vmem:[%s1 + $0x40] sm:$0xff]
  %v80 = vld [vmem:[%s1 + $0x48] sm:$0xff]
  %v81 = vld [vmem:[%s1 + $0x50] sm:$0xff]
  %v82 = vld [vmem:[%s1 + $0x58] sm:$0xff]
  %v83 = vld [vmem:[%s1 + $0x60] sm:$0xff]
  %v84 = vld [vmem:[%s1 + $0x68] sm:$0xff]
  %v85 = vld [vmem:[%s1 + $0x70] sm:$0xff]
  %v86 = vld [vmem:[%s1 + $0x78] sm:$0xff]
  %v103 = vunpack.c.l.b16 %v71
  %v104 = vunpack.c.h.b16 %v71
  %v105 = vunpack.c.l.b16 %v72
  %v106 = vunpack.c.h.b16 %v72
  %v107 = vunpack.c.l.b16 %v73
  %v108 = vunpack.c.h.b16 %v73
  %v109 = vunpack.c.l.b16 %v74
  %v110 = vunpack.c.h.b16 %v74
  %v111 = vunpack.c.l.b16 %v75
  %v112 = vunpack.c.h.b16 %v75
  %v113 = vunpack.c.l.b16 %v76
  %v114 = vunpack.c.h.b16 %v76
  %v115 = vunpack.c.l.b16 %v77
  %v116 = vunpack.c.h.b16 %v77
  %v117 = vunpack.c.l.b16 %v78
  %v118 = vunpack.c.h.b16 %v78
  %v119 = vunpack.c.l.b16 %v79
  %v120 = vunpack.c.h.b16 %v79
  %v121 = vunpack.c.l.b16 %v80
  %v122 = vunpack.c.h.b16 %v80
  %v123 = vunpack.c.l.b16 %v81
  %v124 = vunpack.c.h.b16 %v81
  %v125 = vunpack.c.l.b16 %v82
  %v126 = vunpack.c.h.b16 %v82
  %v127 = vunpack.c.l.b16 %v83
  %v128 = vunpack.c.h.b16 %v83
  %v129 = vunpack.c.l.b16 %v84
  %v130 = vunpack.c.h.b16 %v84
  %v131 = vunpack.c.l.b16 %v85
  %v132 = vunpack.c.h.b16 %v85
  %v133 = vunpack.c.l.b16 %v86
  %v134 = vunpack.c.h.b16 %v86
  %v135 = vpack.c.b16 %v105, %v103
  %v136 = vpack.c.b16 %v106, %v104
  %v137 = vpack.c.b16 %v109, %v107
  %v138 = vpack.c.b16 %v110, %v108
  %v139 = vpack.c.b16 %v113, %v111
  %v140 = vpack.c.b16 %v114, %v112
  %v141 = vpack.c.b16 %v117, %v115
  %v142 = vpack.c.b16 %v118, %v116
  %v143 = vpack.c.b16 %v121, %v119
  %v144 = vpack.c.b16 %v122, %v120
  %v145 = vpack.c.b16 %v125, %v123
  %v146 = vpack.c.b16 %v126, %v124
  %v147 = vpack.c.b16 %v129, %v127
  %v148 = vpack.c.b16 %v130, %v128
  %v149 = vpack.c.b16 %v133, %v131
  %v150 = vpack.c.b16 %v134, %v132
  %167 = vmatprep.subr.bf16.mxu0 %v136
  %168 = vmatpush1.bf16.msra.mxu0 %v135
  %169 = vmatprep.subr.bf16.mxu0 %v138
  %170 = vmatpush1.bf16.msra.mxu0 %v137
  %171 = vmatprep.subr.bf16.mxu0 %v140
  %172 = vmatpush1.bf16.msra.mxu0 %v139
  %173 = vmatprep.subr.bf16.mxu0 %v142
  %174 = vmatpush1.bf16.msra.mxu0 %v141
  %175 = vmatprep.subr.bf16.mxu0 %v144
  %176 = vmatpush1.bf16.msra.mxu0 %v143
  %177 = vmatprep.subr.bf16.mxu0 %v146
  %178 = vmatpush1.bf16.msra.mxu0 %v145
  %179 = vmatprep.subr.bf16.mxu0 %v148
  %180 = vmatpush1.bf16.msra.mxu0 %v147
  %181 = vmatprep.subr.bf16.mxu0 %v150
  %182 = vmatpush1.bf16.msra.mxu0 %v149
  %183 = vmatprep.subr.bf16.mxu0 0
  %184 = vmatpush1.bf16.msra.mxu0 0
  %185 = vmatprep.subr.bf16.mxu0 0
  %186 = vmatpush1.bf16.msra.mxu0 0
  %187 = vmatprep.subr.bf16.mxu0 0
  %188 = vmatpush1.bf16.msra.mxu0 0
  %189 = vmatprep.subr.bf16.mxu0 0
  %190 = vmatpush1.bf16.msra.mxu0 0
  %191 = vmatprep.subr.bf16.mxu0 0
  %192 = vmatpush1.bf16.msra.mxu0 0
  %193 = vmatprep.subr.bf16.mxu0 0
  %194 = vmatpush1.bf16.msra.mxu0 0
  %195 = vmatprep.subr.bf16.mxu0 0
  %196 = vmatpush1.bf16.msra.mxu0 0
  %197 = vmatprep.subr.bf16.mxu0 0
  %198 = vmatpush1.bf16.msra.mxu0 0
  %199 = vmatprep.mubr.bf16.mxu0 0
  %200 = vmatmul.mubr.bf16.gmra.mrb[0].mxu0 %v70
  %v201 = vpop.f32.mrb[0].mxu0
  %v202 = vadd.f32 0.0, %v201
  %v203 = vpop.f32.mrb[0].mxu0
  %v204 = vadd.f32 0.0, %v203
  %v205 = vpop.f32.mrb[0].mxu0
  %v206 = vpop.f32.mrb[0].mxu0
  %207 = vdwg.mxu0
  %v208 = vrot.slane %v202, 4
  %v209 = vadd.f32 %v202, %v208
  %v210 = vrot.slane %v209, 2
  %v211 = vadd.f32 %v209, %v210
  %v212 = vrot.slane %v211, 1
  %v213 = vadd.f32 %v211, %v212
  %v214 = vrot.slane %v204, 4
  %v215 = vadd.f32 %v204, %v214
  %v216 = vrot.slane %v215, 2
  %v217 = vadd.f32 %v215, %v216
  %v218 = vrot.slane %v217, 1
  %v219 = vadd.f32 %v217, %v218
  %v220 = vmul.f32 %v202, %v202
  %v221 = vmul.f32 %v204, %v204
  %v222 = vrot.slane %v220, 4
  %v223 = vadd.f32 %v220, %v222
  %v224 = vrot.slane %v223, 2
  %v225 = vadd.f32 %v223, %v224
  %v226 = vrot.slane %v225, 1
  %v227 = vadd.f32 %v225, %v226
  %v228 = vrot.slane %v221, 4
  %v229 = vadd.f32 %v221, %v228
  %v230 = vrot.slane %v229, 2
  %v231 = vadd.f32 %v229, %v230
  %v232 = vrot.slane %v231, 1
  %v233 = vadd.f32 %v231, %v232
  %vm234 = vcmask 1040384
  %v235 = vsel %vm234, %v213, %v227
  %v236 = vsel %vm234, %v219, %v233
  %v237 = vld [vmem:[%s2] sm:$0xff]
  %v238 = vld [vmem:[%s2 + $0x8] sm:$0xff]
  %v239 = vld [vmem:[%s2 + $0x10] sm:$0xff]
  %v240 = vld [vmem:[%s2 + $0x18] sm:$0xff]
  %v241 = vld [vmem:[%s2 + $0x20] sm:$0xff]
  %v242 = vld [vmem:[%s2 + $0x28] sm:$0xff]
  %v243 = vld [vmem:[%s2 + $0x30] sm:$0xff]
  %v244 = vld [vmem:[%s2 + $0x38] sm:$0xff]
  %v245 = vld [vmem:[%s2 + $0x40] sm:$0xff]
  %v246 = vld [vmem:[%s2 + $0x48] sm:$0xff]
  %v247 = vld [vmem:[%s2 + $0x50] sm:$0xff]
  %v248 = vld [vmem:[%s2 + $0x58] sm:$0xff]
  %v249 = vld [vmem:[%s2 + $0x60] sm:$0xff]
  %v250 = vld [vmem:[%s2 + $0x68] sm:$0xff]
  %v251 = vld [vmem:[%s2 + $0x70] sm:$0xff]
  %v252 = vld [vmem:[%s2 + $0x78] sm:$0xff]
  %v253 = vld [vmem:[%s2 + $0x80] sm:$0xff]
  %v254 = vld [vmem:[%s2 + $0x88] sm:$0xff]
  %v255 = vld [vmem:[%s2 + $0x90] sm:$0xff]
  %v256 = vld [vmem:[%s2 + $0x98] sm:$0xff]
  %v257 = vld [vmem:[%s2 + $0xa0] sm:$0xff]
  %v258 = vld [vmem:[%s2 + $0xa8] sm:$0xff]
  %v259 = vld [vmem:[%s2 + $0xb0] sm:$0xff]
  %v260 = vld [vmem:[%s2 + $0xb8] sm:$0xff]
  %v261 = vld [vmem:[%s2 + $0xc0] sm:$0xff]
  %v262 = vld [vmem:[%s2 + $0xc8] sm:$0xff]
  %v263 = vld [vmem:[%s2 + $0xd0] sm:$0xff]
  %v264 = vld [vmem:[%s2 + $0xd8] sm:$0xff]
  %v265 = vld [vmem:[%s2 + $0xe0] sm:$0xff]
  %v266 = vld [vmem:[%s2 + $0xe8] sm:$0xff]
  %v267 = vld [vmem:[%s2 + $0xf0] sm:$0xff]
  %v268 = vld [vmem:[%s2 + $0xf8] sm:$0xff]
  %269 = vmatprep.subr.mxu0 0.0
  %270 = vmatpush1.msra.mxu0 %v237
  %271 = vmatprep.subr.mxu0 0.0
  %272 = vmatpush1.msra.mxu0 %v238
  %273 = vmatprep.subr.mxu0 0.0
  %274 = vmatpush1.msra.mxu0 %v239
  %275 = vmatprep.subr.mxu0 0.0
  %276 = vmatpush1.msra.mxu0 %v240
  %277 = vmatprep.subr.mxu0 0.0
  %278 = vmatpush1.msra.mxu0 %v241
  %279 = vmatprep.subr.mxu0 0.0
  %280 = vmatpush1.msra.mxu0 %v242
  %281 = vmatprep.subr.mxu0 0.0
  %282 = vmatpush1.msra.mxu0 %v243
  %283 = vmatprep.subr.mxu0 0.0
  %284 = vmatpush1.msra.mxu0 %v244
  %285 = vmatprep.subr.mxu0 0.0
  %286 = vmatpush1.msra.mxu0 %v245
  %287 = vmatprep.subr.mxu0 0.0
  %288 = vmatpush1.msra.mxu0 %v246
  %289 = vmatprep.subr.mxu0 0.0
  %290 = vmatpush1.msra.mxu0 %v247
  %291 = vmatprep.subr.mxu0 0.0
  %292 = vmatpush1.msra.mxu0 %v248
  %293 = vmatprep.subr.mxu0 0.0
  %294 = vmatpush1.msra.mxu0 %v249
  %295 = vmatprep.subr.mxu0 0.0
  %296 = vmatpush1.msra.mxu0 %v250
  %297 = vmatprep.subr.mxu0 0.0
  %298 = vmatpush1.msra.mxu0 %v251
  %299 = vmatprep.subr.mxu0 0.0
  %300 = vmatpush1.msra.mxu0 %v252
  %301 = vmatprep.subr.mxu0 0.0
  %302 = vmatpush1.msra.mxu0 %v253
  %303 = vmatprep.subr.mxu0 0.0
  %304 = vmatpush1.msra.mxu0 %v254
  %305 = vmatprep.subr.mxu0 0.0
  %306 = vmatpush1.msra.mxu0 %v255
  %307 = vmatprep.subr.mxu0 0.0
  %308 = vmatpush1.msra.mxu0 %v256
  %309 = vmatprep.subr.mxu0 0.0
  %310 = vmatpush1.msra.mxu0 %v257
  %311 = vmatprep.subr.mxu0 0.0
  %312 = vmatpush1.msra.mxu0 %v258
  %313 = vmatprep.subr.mxu0 0.0
  %314 = vmatpush1.msra.mxu0 %v259
  %315 = vmatprep.subr.mxu0 0.0
  %316 = vmatpush1.msra.mxu0 %v260
  %317 = vmatprep.subr.mxu0 0.0
  %318 = vmatpush1.msra.mxu0 %v261
  %319 = vmatprep.subr.mxu0 0.0
  %320 = vmatpush1.msra.mxu0 %v262
  %321 = vmatprep.subr.mxu0 0.0
  %322 = vmatpush1.msra.mxu0 %v263
  %323 = vmatprep.subr.mxu0 0.0
  %324 = vmatpush1.msra.mxu0 %v264
  %325 = vmatprep.subr.mxu0 0.0
  %326 = vmatpush1.msra.mxu0 %v265
  %327 = vmatprep.subr.mxu0 0.0
  %328 = vmatpush1.msra.mxu0 %v266
  %329 = vmatprep.subr.mxu0 0.0
  %330 = vmatpush1.msra.mxu0 %v267
  %331 = vmatprep.subr.mxu0 0.0
  %332 = vmatpush1.msra.mxu0 %v268
  %333 = vmatprep.mubr.f32.mxu0 %v236
  %334 = vmatmul.mubr.f32.gmra.mrb[0].mxu0 %v235
  %v335 = vpop.f32.mrb[0].mxu0
  %v336 = vadd.f32 0.0, %v335
  %v337 = vpop.f32.mrb[0].mxu0
  %338 = vdwg.mxu0
  %v339 = vmul.f32 %v336, %v336
  %v341 = vrot.slane %v339, 7
  %v343 = vsub.f32 %v336, %v341
  %v344 = vld [vmem:[%s4] sm:$0x1]
  %v345 = vadd.f32 %v343, 1e-05
  %v346 = vrsqrt.pop %v345
  %v349 = vunpack.c.l.s4 1966171168
  %v350 = vunpack.c.0.s8 %v349
  %v351 = vlaneseq
  %v352 = vshrl.u32 %v351, 7
  %v353 = vsub.s32 %v350, %v352
  %v354 = vrot.slane %v346, %v353
  %v355 = vcombine.high %v354, %v354
  %v357 = vunpack.c.l.s4 1966171168
  %v358 = vunpack.c.0.s8 %v357
  %v359 = vlaneseq
  %v360 = vshrl.u32 %v359, 7
  %v361 = vsub.s32 %v358, %v360
  %v362 = vrot.slane %v355, %v361
  %v364 = vmul.f32 %v344, %v362
  %v365 = vld [vmem:[%s5] sm:$0x1]
  %v366 = vmul.f32 %v336, %v364
  %v367 = vsub.f32 %v365, %v366
  %v369 = vlaneseq
  %v370 = vshrl.u32 %v369, 7
  %v371 = vsub.s32 0, %v370
  %v372 = vrot.slane %v367, %v371
  %v374 = vsel %vm234, %v364, %v372
  %v375 = vld [vmem:[%s3] sm:$0xff]
  %v376 = vld [vmem:[%s3 + $0x8] sm:$0xff]
  %v377 = vld [vmem:[%s3 + $0x10] sm:$0xff]
  %v378 = vld [vmem:[%s3 + $0x18] sm:$0xff]
  %vm379 = vcmask 130048
  %v381 = vsel %vm379, %v374, 0
  %383 = vmatprep.subr.mxu0 %v376
  %384 = vmatpush1.msra.mxu0 %v375
  %385 = vmatprep.subr.mxu0 %v378
  %386 = vmatpush1.msra.mxu0 %v377
  %387 = vmatprep.subr.mxu0 0.0
  %388 = vmatpush1.msra.mxu0 0.0
  %389 = vmatprep.subr.mxu0 0.0
  %390 = vmatpush1.msra.mxu0 0.0
  %391 = vmatprep.subr.mxu0 0.0
  %392 = vmatpush1.msra.mxu0 0.0
  %393 = vmatprep.subr.mxu0 0.0
  %394 = vmatpush1.msra.mxu0 0.0
  %395 = vmatprep.subr.mxu0 0.0
  %396 = vmatpush1.msra.mxu0 0.0
  %397 = vmatprep.subr.mxu0 0.0
  %398 = vmatpush1.msra.mxu0 0.0
  %399 = vmatprep.subr.mxu0 0.0
  %400 = vmatpush1.msra.mxu0 0.0
  %401 = vmatprep.subr.mxu0 0.0
  %402 = vmatpush1.msra.mxu0 0.0
  %403 = vmatprep.subr.mxu0 0.0
  %404 = vmatpush1.msra.mxu0 0.0
  %405 = vmatprep.subr.mxu0 0.0
  %406 = vmatpush1.msra.mxu0 0.0
  %407 = vmatprep.subr.mxu0 0.0
  %408 = vmatpush1.msra.mxu0 0.0
  %409 = vmatprep.subr.mxu0 0.0
  %410 = vmatpush1.msra.mxu0 0.0
  %411 = vmatprep.subr.mxu0 0.0
  %412 = vmatpush1.msra.mxu0 0.0
  %413 = vmatprep.subr.mxu0 0.0
  %414 = vmatpush1.msra.mxu0 0.0
  %415 = vmatprep.subr.mxu0 0.0
  %416 = vmatpush1.msra.mxu0 0.0
  %417 = vmatprep.subr.mxu0 0.0
  %418 = vmatpush1.msra.mxu0 0.0
  %419 = vmatprep.subr.mxu0 0.0
  %420 = vmatpush1.msra.mxu0 0.0
  %421 = vmatprep.subr.mxu0 0.0
  %422 = vmatpush1.msra.mxu0 0.0
  %423 = vmatprep.subr.mxu0 0.0
  %424 = vmatpush1.msra.mxu0 0.0
  %425 = vmatprep.subr.mxu0 0.0
  %426 = vmatpush1.msra.mxu0 0.0
  %427 = vmatprep.subr.mxu0 0.0
  %428 = vmatpush1.msra.mxu0 0.0
  %429 = vmatprep.subr.mxu0 0.0
  %430 = vmatpush1.msra.mxu0 0.0
  %431 = vmatprep.subr.mxu0 0.0
  %432 = vmatpush1.msra.mxu0 0.0
  %433 = vmatprep.subr.mxu0 0.0
  %434 = vmatpush1.msra.mxu0 0.0
  %435 = vmatprep.subr.mxu0 0.0
  %436 = vmatpush1.msra.mxu0 0.0
  %437 = vmatprep.subr.mxu0 0.0
  %438 = vmatpush1.msra.mxu0 0.0
  %439 = vmatprep.subr.mxu0 0.0
  %440 = vmatpush1.msra.mxu0 0.0
  %441 = vmatprep.subr.mxu0 0.0
  %442 = vmatpush1.msra.mxu0 0.0
  %443 = vmatprep.subr.mxu0 0.0
  %444 = vmatpush1.msra.mxu0 0.0
  %445 = vmatprep.subr.mxu0 0.0
  %446 = vmatpush1.msra.mxu0 0.0
  %447 = vmatprep.mubr.f32.mxu0 0.0
  %448 = vmatmul.mubr.f32.gmra.mrb[0].mxu0 %v381
  %v449 = vpop.f32.mrb[0].mxu0
  %v450 = vadd.f32 0.0, %v449
  %v451 = vpop.f32.mrb[0].mxu0
  %v452 = vadd.f32 0.0, %v451
  %453 = vdwg.mxu0
  %v454 = vlaneseq
  %v455 = vshrl.u32 %v454, 7
  %v456 = vsub.s32 0, %v455
  %v457 = vrot.slane %v450, %v456
  %v458 = vlaneseq
  %v459 = vshrl.u32 %v458, 7
  %v460 = vsub.s32 0, %v459
  %v461 = vrot.slane %v452, %v460
  %v462 = vmul.f32 %v202, %v457
  %v463 = vmul.f32 %v204, %v461
  %v464 = vlaneseq
  %v465 = vshrl.u32 %v464, 7
  %v466 = vsub.s32 1, %v465
  %v467 = vrot.slane %v450, %v466
  %v468 = vlaneseq
  %v469 = vshrl.u32 %v468, 7
  %v470 = vsub.s32 1, %v469
  %v471 = vrot.slane %v452, %v470
  %v472 = vadd.f32 %v462, %v467
  %v473 = vadd.f32 %v463, %v471
  %v474 = vmax.f32 %v472, 0.0
  %v475 = vmax.f32 %v473, 0.0
  %v476 = vlaneseq
  %v477 = vshrl.u32 %v476, 7
  %vm478 = vcmp.lt.s32.totalorder %v477, 2
  %v479 = vsel %vm478, %v474, 0.0
  %v480 = vsel %vm478, %v475, 0.0
  %v481 = vpack.c.bf16 %v479, %v479
  %v482 = vpack.c.bf16 %v480, %v480
  %v483 = vld [vmem:[%s6] sm:$0xff]
  %v484 = vld [vmem:[%s6 + $0x8] sm:$0xff]
  %v485 = vld [vmem:[%s6 + $0x10] sm:$0xff]
  %v486 = vld [vmem:[%s6 + $0x18] sm:$0xff]
  %v487 = vld [vmem:[%s6 + $0x20] sm:$0xff]
  %v488 = vld [vmem:[%s6 + $0x28] sm:$0xff]
  %v489 = vld [vmem:[%s6 + $0x30] sm:$0xff]
  %v490 = vld [vmem:[%s6 + $0x38] sm:$0xff]
  %v491 = vld [vmem:[%s6 + $0x40] sm:$0xff]
  %v492 = vld [vmem:[%s6 + $0x48] sm:$0xff]
  %v493 = vld [vmem:[%s6 + $0x50] sm:$0xff]
  %v494 = vld [vmem:[%s6 + $0x58] sm:$0xff]
  %v495 = vld [vmem:[%s6 + $0x60] sm:$0xff]
  %v496 = vld [vmem:[%s6 + $0x68] sm:$0xff]
  %v497 = vld [vmem:[%s6 + $0x70] sm:$0xff]
  %v498 = vld [vmem:[%s6 + $0x78] sm:$0xff]
  %v499 = vld [vmem:[%s6 + $0x80] sm:$0xff]
  %v500 = vld [vmem:[%s6 + $0x88] sm:$0xff]
  %v501 = vld [vmem:[%s6 + $0x90] sm:$0xff]
  %v502 = vld [vmem:[%s6 + $0x98] sm:$0xff]
  %v503 = vld [vmem:[%s6 + $0xa0] sm:$0xff]
  %v504 = vld [vmem:[%s6 + $0xa8] sm:$0xff]
  %v505 = vld [vmem:[%s6 + $0xb0] sm:$0xff]
  %v506 = vld [vmem:[%s6 + $0xb8] sm:$0xff]
  %v507 = vld [vmem:[%s6 + $0xc0] sm:$0xff]
  %v508 = vld [vmem:[%s6 + $0xc8] sm:$0xff]
  %v509 = vld [vmem:[%s6 + $0xd0] sm:$0xff]
  %v510 = vld [vmem:[%s6 + $0xd8] sm:$0xff]
  %v511 = vld [vmem:[%s6 + $0xe0] sm:$0xff]
  %v512 = vld [vmem:[%s6 + $0xe8] sm:$0xff]
  %v513 = vld [vmem:[%s6 + $0xf0] sm:$0xff]
  %v514 = vld [vmem:[%s6 + $0xf8] sm:$0xff]
  %v515 = vld [vmem:[%s6 + $0x100] sm:$0xff]
  %v516 = vld [vmem:[%s6 + $0x108] sm:$0xff]
  %v517 = vld [vmem:[%s6 + $0x110] sm:$0xff]
  %v518 = vld [vmem:[%s6 + $0x118] sm:$0xff]
  %v519 = vld [vmem:[%s6 + $0x120] sm:$0xff]
  %v520 = vld [vmem:[%s6 + $0x128] sm:$0xff]
  %v521 = vld [vmem:[%s6 + $0x130] sm:$0xff]
  %v522 = vld [vmem:[%s6 + $0x138] sm:$0xff]
  %v523 = vld [vmem:[%s6 + $0x140] sm:$0xff]
  %v524 = vld [vmem:[%s6 + $0x148] sm:$0xff]
  %v525 = vld [vmem:[%s6 + $0x150] sm:$0xff]
  %v526 = vld [vmem:[%s6 + $0x158] sm:$0xff]
  %v527 = vld [vmem:[%s6 + $0x160] sm:$0xff]
  %v528 = vld [vmem:[%s6 + $0x168] sm:$0xff]
  %v529 = vld [vmem:[%s6 + $0x170] sm:$0xff]
  %v530 = vld [vmem:[%s6 + $0x178] sm:$0xff]
  %v531 = vld [vmem:[%s6 + $0x180] sm:$0xff]
  %v532 = vld [vmem:[%s6 + $0x188] sm:$0xff]
  %v533 = vld [vmem:[%s6 + $0x190] sm:$0xff]
  %v534 = vld [vmem:[%s6 + $0x198] sm:$0xff]
  %v535 = vld [vmem:[%s6 + $0x1a0] sm:$0xff]
  %v536 = vld [vmem:[%s6 + $0x1a8] sm:$0xff]
  %v537 = vld [vmem:[%s6 + $0x1b0] sm:$0xff]
  %v538 = vld [vmem:[%s6 + $0x1b8] sm:$0xff]
  %v539 = vld [vmem:[%s6 + $0x1c0] sm:$0xff]
  %v540 = vld [vmem:[%s6 + $0x1c8] sm:$0xff]
  %v541 = vld [vmem:[%s6 + $0x1d0] sm:$0xff]
  %v542 = vld [vmem:[%s6 + $0x1d8] sm:$0xff]
  %v543 = vld [vmem:[%s6 + $0x1e0] sm:$0xff]
  %v544 = vld [vmem:[%s6 + $0x1e8] sm:$0xff]
  %v545 = vld [vmem:[%s6 + $0x1f0] sm:$0xff]
  %v546 = vld [vmem:[%s6 + $0x1f8] sm:$0xff]
  %v611 = vunpack.c.l.b16 %v483
  %v612 = vunpack.c.h.b16 %v483
  %v613 = vunpack.c.l.b16 %v484
  %v614 = vunpack.c.h.b16 %v484
  %v615 = vunpack.c.l.b16 %v485
  %v616 = vunpack.c.h.b16 %v485
  %v617 = vunpack.c.l.b16 %v486
  %v618 = vunpack.c.h.b16 %v486
  %v619 = vunpack.c.l.b16 %v487
  %v620 = vunpack.c.h.b16 %v487
  %v621 = vunpack.c.l.b16 %v488
  %v622 = vunpack.c.h.b16 %v488
  %v623 = vunpack.c.l.b16 %v489
  %v624 = vunpack.c.h.b16 %v489
  %v625 = vunpack.c.l.b16 %v490
  %v626 = vunpack.c.h.b16 %v490
  %v627 = vunpack.c.l.b16 %v491
  %v628 = vunpack.c.h.b16 %v491
  %v629 = vunpack.c.l.b16 %v492
  %v630 = vunpack.c.h.b16 %v492
  %v631 = vunpack.c.l.b16 %v493
  %v632 = vunpack.c.h.b16 %v493
  %v633 = vunpack.c.l.b16 %v494
  %v634 = vunpack.c.h.b16 %v494
  %v635 = vunpack.c.l.b16 %v495
  %v636 = vunpack.c.h.b16 %v495
  %v637 = vunpack.c.l.b16 %v496
  %v638 = vunpack.c.h.b16 %v496
  %v639 = vunpack.c.l.b16 %v497
  %v640 = vunpack.c.h.b16 %v497
  %v641 = vunpack.c.l.b16 %v498
  %v642 = vunpack.c.h.b16 %v498
  %v643 = vunpack.c.l.b16 %v499
  %v644 = vunpack.c.h.b16 %v499
  %v645 = vunpack.c.l.b16 %v500
  %v646 = vunpack.c.h.b16 %v500
  %v647 = vunpack.c.l.b16 %v501
  %v648 = vunpack.c.h.b16 %v501
  %v649 = vunpack.c.l.b16 %v502
  %v650 = vunpack.c.h.b16 %v502
  %v651 = vunpack.c.l.b16 %v503
  %v652 = vunpack.c.h.b16 %v503
  %v653 = vunpack.c.l.b16 %v504
  %v654 = vunpack.c.h.b16 %v504
  %v655 = vunpack.c.l.b16 %v505
  %v656 = vunpack.c.h.b16 %v505
  %v657 = vunpack.c.l.b16 %v506
  %v658 = vunpack.c.h.b16 %v506
  %v659 = vunpack.c.l.b16 %v507
  %v660 = vunpack.c.h.b16 %v507
  %v661 = vunpack.c.l.b16 %v508
  %v662 = vunpack.c.h.b16 %v508
  %v663 = vunpack.c.l.b16 %v509
  %v664 = vunpack.c.h.b16 %v509
  %v665 = vunpack.c.l.b16 %v510
  %v666 = vunpack.c.h.b16 %v510
  %v667 = vunpack.c.l.b16 %v511
  %v668 = vunpack.c.h.b16 %v511
  %v669 = vunpack.c.l.b16 %v512
  %v670 = vunpack.c.h.b16 %v512
  %v671 = vunpack.c.l.b16 %v513
  %v672 = vunpack.c.h.b16 %v513
  %v673 = vunpack.c.l.b16 %v514
  %v674 = vunpack.c.h.b16 %v514
  %v675 = vunpack.c.l.b16 %v515
  %v676 = vunpack.c.h.b16 %v515
  %v677 = vunpack.c.l.b16 %v516
  %v678 = vunpack.c.h.b16 %v516
  %v679 = vunpack.c.l.b16 %v517
  %v680 = vunpack.c.h.b16 %v517
  %v681 = vunpack.c.l.b16 %v518
  %v682 = vunpack.c.h.b16 %v518
  %v683 = vunpack.c.l.b16 %v519
  %v684 = vunpack.c.h.b16 %v519
  %v685 = vunpack.c.l.b16 %v520
  %v686 = vunpack.c.h.b16 %v520
  %v687 = vunpack.c.l.b16 %v521
  %v688 = vunpack.c.h.b16 %v521
  %v689 = vunpack.c.l.b16 %v522
  %v690 = vunpack.c.h.b16 %v522
  %v691 = vunpack.c.l.b16 %v523
  %v692 = vunpack.c.h.b16 %v523
  %v693 = vunpack.c.l.b16 %v524
  %v694 = vunpack.c.h.b16 %v524
  %v695 = vunpack.c.l.b16 %v525
  %v696 = vunpack.c.h.b16 %v525
  %v697 = vunpack.c.l.b16 %v526
  %v698 = vunpack.c.h.b16 %v526
  %v699 = vunpack.c.l.b16 %v527
  %v700 = vunpack.c.h.b16 %v527
  %v701 = vunpack.c.l.b16 %v528
  %v702 = vunpack.c.h.b16 %v528
  %v703 = vunpack.c.l.b16 %v529
  %v704 = vunpack.c.h.b16 %v529
  %v705 = vunpack.c.l.b16 %v530
  %v706 = vunpack.c.h.b16 %v530
  %v707 = vunpack.c.l.b16 %v531
  %v708 = vunpack.c.h.b16 %v531
  %v709 = vunpack.c.l.b16 %v532
  %v710 = vunpack.c.h.b16 %v532
  %v711 = vunpack.c.l.b16 %v533
  %v712 = vunpack.c.h.b16 %v533
  %v713 = vunpack.c.l.b16 %v534
  %v714 = vunpack.c.h.b16 %v534
  %v715 = vunpack.c.l.b16 %v535
  %v716 = vunpack.c.h.b16 %v535
  %v717 = vunpack.c.l.b16 %v536
  %v718 = vunpack.c.h.b16 %v536
  %v719 = vunpack.c.l.b16 %v537
  %v720 = vunpack.c.h.b16 %v537
  %v721 = vunpack.c.l.b16 %v538
  %v722 = vunpack.c.h.b16 %v538
  %v723 = vunpack.c.l.b16 %v539
  %v724 = vunpack.c.h.b16 %v539
  %v725 = vunpack.c.l.b16 %v540
  %v726 = vunpack.c.h.b16 %v540
  %v727 = vunpack.c.l.b16 %v541
  %v728 = vunpack.c.h.b16 %v541
  %v729 = vunpack.c.l.b16 %v542
  %v730 = vunpack.c.h.b16 %v542
  %v731 = vunpack.c.l.b16 %v543
  %v732 = vunpack.c.h.b16 %v543
  %v733 = vunpack.c.l.b16 %v544
  %v734 = vunpack.c.h.b16 %v544
  %v735 = vunpack.c.l.b16 %v545
  %v736 = vunpack.c.h.b16 %v545
  %v737 = vunpack.c.l.b16 %v546
  %v738 = vunpack.c.h.b16 %v546
  %v739 = vpack.c.b16 %v615, %v611
  %v740 = vpack.c.b16 %v616, %v612
  %v741 = vpack.c.b16 %v617, %v613
  %v742 = vpack.c.b16 %v618, %v614
  %v743 = vpack.c.b16 %v623, %v619
  %v744 = vpack.c.b16 %v624, %v620
  %v745 = vpack.c.b16 %v625, %v621
  %v746 = vpack.c.b16 %v626, %v622
  %v747 = vpack.c.b16 %v631, %v627
  %v748 = vpack.c.b16 %v632, %v628
  %v749 = vpack.c.b16 %v633, %v629
  %v750 = vpack.c.b16 %v634, %v630
  %v751 = vpack.c.b16 %v639, %v635
  %v752 = vpack.c.b16 %v640, %v636
  %v753 = vpack.c.b16 %v641, %v637
  %v754 = vpack.c.b16 %v642, %v638
  %v755 = vpack.c.b16 %v647, %v643
  %v756 = vpack.c.b16 %v648, %v644
  %v757 = vpack.c.b16 %v649, %v645
  %v758 = vpack.c.b16 %v650, %v646
  %v759 = vpack.c.b16 %v655, %v651
  %v760 = vpack.c.b16 %v656, %v652
  %v761 = vpack.c.b16 %v657, %v653
  %v762 = vpack.c.b16 %v658, %v654
  %v763 = vpack.c.b16 %v663, %v659
  %v764 = vpack.c.b16 %v664, %v660
  %v765 = vpack.c.b16 %v665, %v661
  %v766 = vpack.c.b16 %v666, %v662
  %v767 = vpack.c.b16 %v671, %v667
  %v768 = vpack.c.b16 %v672, %v668
  %v769 = vpack.c.b16 %v673, %v669
  %v770 = vpack.c.b16 %v674, %v670
  %v771 = vpack.c.b16 %v679, %v675
  %v772 = vpack.c.b16 %v680, %v676
  %v773 = vpack.c.b16 %v681, %v677
  %v774 = vpack.c.b16 %v682, %v678
  %v775 = vpack.c.b16 %v687, %v683
  %v776 = vpack.c.b16 %v688, %v684
  %v777 = vpack.c.b16 %v689, %v685
  %v778 = vpack.c.b16 %v690, %v686
  %v779 = vpack.c.b16 %v695, %v691
  %v780 = vpack.c.b16 %v696, %v692
  %v781 = vpack.c.b16 %v697, %v693
  %v782 = vpack.c.b16 %v698, %v694
  %v783 = vpack.c.b16 %v703, %v699
  %v784 = vpack.c.b16 %v704, %v700
  %v785 = vpack.c.b16 %v705, %v701
  %v786 = vpack.c.b16 %v706, %v702
  %v787 = vpack.c.b16 %v711, %v707
  %v788 = vpack.c.b16 %v712, %v708
  %v789 = vpack.c.b16 %v713, %v709
  %v790 = vpack.c.b16 %v714, %v710
  %v791 = vpack.c.b16 %v719, %v715
  %v792 = vpack.c.b16 %v720, %v716
  %v793 = vpack.c.b16 %v721, %v717
  %v794 = vpack.c.b16 %v722, %v718
  %v795 = vpack.c.b16 %v727, %v723
  %v796 = vpack.c.b16 %v728, %v724
  %v797 = vpack.c.b16 %v729, %v725
  %v798 = vpack.c.b16 %v730, %v726
  %v799 = vpack.c.b16 %v735, %v731
  %v800 = vpack.c.b16 %v736, %v732
  %v801 = vpack.c.b16 %v737, %v733
  %v802 = vpack.c.b16 %v738, %v734
  %867 = vmatprep.subr.bf16.mxu0 %v740
  %868 = vmatpush1.bf16.msra.mxu0 %v739
  %869 = vmatprep.subr.bf16.mxu0 %v744
  %870 = vmatpush1.bf16.msra.mxu0 %v743
  %871 = vmatprep.subr.bf16.mxu0 %v748
  %872 = vmatpush1.bf16.msra.mxu0 %v747
  %873 = vmatprep.subr.bf16.mxu0 %v752
  %874 = vmatpush1.bf16.msra.mxu0 %v751
  %875 = vmatprep.subr.bf16.mxu0 %v756
  %876 = vmatpush1.bf16.msra.mxu0 %v755
  %877 = vmatprep.subr.bf16.mxu0 %v760
  %878 = vmatpush1.bf16.msra.mxu0 %v759
  %879 = vmatprep.subr.bf16.mxu0 %v764
  %880 = vmatpush1.bf16.msra.mxu0 %v763
  %881 = vmatprep.subr.bf16.mxu0 %v768
  %882 = vmatpush1.bf16.msra.mxu0 %v767
  %883 = vmatprep.subr.bf16.mxu0 %v772
  %884 = vmatpush1.bf16.msra.mxu0 %v771
  %885 = vmatprep.subr.bf16.mxu0 %v776
  %886 = vmatpush1.bf16.msra.mxu0 %v775
  %887 = vmatprep.subr.bf16.mxu0 %v780
  %888 = vmatpush1.bf16.msra.mxu0 %v779
  %889 = vmatprep.subr.bf16.mxu0 %v784
  %890 = vmatpush1.bf16.msra.mxu0 %v783
  %891 = vmatprep.subr.bf16.mxu0 %v788
  %892 = vmatpush1.bf16.msra.mxu0 %v787
  %893 = vmatprep.subr.bf16.mxu0 %v792
  %894 = vmatpush1.bf16.msra.mxu0 %v791
  %895 = vmatprep.subr.bf16.mxu0 %v796
  %896 = vmatpush1.bf16.msra.mxu0 %v795
  %897 = vmatprep.subr.bf16.mxu0 %v800
  %898 = vmatpush1.bf16.msra.mxu0 %v799
  %899 = vmatprep.mubr.bf16.mxu0 %v482
  %900 = vmatmul.mubr.bf16.gmra.mrb[0].mxu0 %v481
  %v901 = vpop.f32.mrb[0].mxu0
  %v902 = vadd.f32 0.0, %v901
  %v903 = vpop.f32.mrb[0].mxu0
  %v904 = vadd.f32 0.0, %v903
  %v905 = vpop.f32.mrb[0].mxu0
  %v906 = vpop.f32.mrb[0].mxu0
  %907 = vdwg.mxu0
  %908 = vmatprep.subr.bf16.mxu0 %v742
  %909 = vmatpush1.bf16.msra.mxu0 %v741
  %910 = vmatprep.subr.bf16.mxu0 %v746
  %911 = vmatpush1.bf16.msra.mxu0 %v745
  %912 = vmatprep.subr.bf16.mxu0 %v750
  %913 = vmatpush1.bf16.msra.mxu0 %v749
  %914 = vmatprep.subr.bf16.mxu0 %v754
  %915 = vmatpush1.bf16.msra.mxu0 %v753
  %916 = vmatprep.subr.bf16.mxu0 %v758
  %917 = vmatpush1.bf16.msra.mxu0 %v757
  %918 = vmatprep.subr.bf16.mxu0 %v762
  %919 = vmatpush1.bf16.msra.mxu0 %v761
  %920 = vmatprep.subr.bf16.mxu0 %v766
  %921 = vmatpush1.bf16.msra.mxu0 %v765
  %922 = vmatprep.subr.bf16.mxu0 %v770
  %923 = vmatpush1.bf16.msra.mxu0 %v769
  %924 = vmatprep.subr.bf16.mxu0 %v774
  %925 = vmatpush1.bf16.msra.mxu0 %v773
  %926 = vmatprep.subr.bf16.mxu0 %v778
  %927 = vmatpush1.bf16.msra.mxu0 %v777
  %928 = vmatprep.subr.bf16.mxu0 %v782
  %929 = vmatpush1.bf16.msra.mxu0 %v781
  %930 = vmatprep.subr.bf16.mxu0 %v786
  %931 = vmatpush1.bf16.msra.mxu0 %v785
  %932 = vmatprep.subr.bf16.mxu0 %v790
  %933 = vmatpush1.bf16.msra.mxu0 %v789
  %934 = vmatprep.subr.bf16.mxu0 %v794
  %935 = vmatpush1.bf16.msra.mxu0 %v793
  %936 = vmatprep.subr.bf16.mxu0 %v798
  %937 = vmatpush1.bf16.msra.mxu0 %v797
  %938 = vmatprep.subr.bf16.mxu0 %v802
  %939 = vmatpush1.bf16.msra.mxu0 %v801
  %940 = vmatprep.mubr.bf16.mxu0 %v482
  %941 = vmatmul.mubr.bf16.gmra.mrb[0].mxu0 %v481
  %v942 = vpop.f32.mrb[0].mxu0
  %v943 = vadd.f32 0.0, %v942
  %v944 = vpop.f32.mrb[0].mxu0
  %v945 = vadd.f32 0.0, %v944
  %v946 = vpop.f32.mrb[0].mxu0
  %v947 = vpop.f32.mrb[0].mxu0
  %948 = vdwg.mxu0
  %v949 = vrot.slane %v902, 4
  %v950 = vadd.f32 %v902, %v949
  %v951 = vrot.slane %v950, 2
  %v952 = vadd.f32 %v950, %v951
  %v953 = vrot.slane %v952, 1
  %v954 = vadd.f32 %v952, %v953
  %v955 = vrot.slane %v904, 4
  %v956 = vadd.f32 %v904, %v955
  %v957 = vrot.slane %v956, 2
  %v958 = vadd.f32 %v956, %v957
  %v959 = vrot.slane %v958, 1
  %v960 = vadd.f32 %v958, %v959
  %v961 = vrot.slane %v943, 4
  %v962 = vadd.f32 %v943, %v961
  %v963 = vrot.slane %v962, 2
  %v964 = vadd.f32 %v962, %v963
  %v965 = vrot.slane %v964, 1
  %v966 = vadd.f32 %v964, %v965
  %v967 = vrot.slane %v945, 4
  %v968 = vadd.f32 %v945, %v967
  %v969 = vrot.slane %v968, 2
  %v970 = vadd.f32 %v968, %v969
  %v971 = vrot.slane %v970, 1
  %v972 = vadd.f32 %v970, %v971
  %v973 = vmul.f32 %v902, %v902
  %v974 = vmul.f32 %v904, %v904
  %v975 = vmul.f32 %v943, %v943
  %v976 = vmul.f32 %v945, %v945
  %v977 = vrot.slane %v973, 4
  %v978 = vadd.f32 %v973, %v977
  %v979 = vrot.slane %v978, 2
  %v980 = vadd.f32 %v978, %v979
  %v981 = vrot.slane %v980, 1
  %v982 = vadd.f32 %v980, %v981
  %v983 = vrot.slane %v974, 4
  %v984 = vadd.f32 %v974, %v983
  %v985 = vrot.slane %v984, 2
  %v986 = vadd.f32 %v984, %v985
  %v987 = vrot.slane %v986, 1
  %v988 = vadd.f32 %v986, %v987
  %v989 = vrot.slane %v975, 4
  %v990 = vadd.f32 %v975, %v989
  %v991 = vrot.slane %v990, 2
  %v992 = vadd.f32 %v990, %v991
  %v993 = vrot.slane %v992, 1
  %v994 = vadd.f32 %v992, %v993
  %v995 = vrot.slane %v976, 4
  %v996 = vadd.f32 %v976, %v995
  %v997 = vrot.slane %v996, 2
  %v998 = vadd.f32 %v996, %v997
  %v999 = vrot.slane %v998, 1
  %v1000 = vadd.f32 %v998, %v999
  %v1001 = vsel %vm234, %v954, %v982
  %v1002 = vsel %vm234, %v960, %v988
  %v1003 = vsel %vm234, %v966, %v994
  %v1004 = vsel %vm234, %v972, %v1000
  %v1005 = vld [vmem:[%s7] sm:$0xff]
  %v1006 = vld [vmem:[%s7 + $0x8] sm:$0xff]
  %v1007 = vld [vmem:[%s7 + $0x10] sm:$0xff]
  %v1008 = vld [vmem:[%s7 + $0x18] sm:$0xff]
  %v1009 = vld [vmem:[%s7 + $0x20] sm:$0xff]
  %v1010 = vld [vmem:[%s7 + $0x28] sm:$0xff]
  %v1011 = vld [vmem:[%s7 + $0x30] sm:$0xff]
  %v1012 = vld [vmem:[%s7 + $0x38] sm:$0xff]
  %v1013 = vld [vmem:[%s7 + $0x40] sm:$0xff]
  %v1014 = vld [vmem:[%s7 + $0x48] sm:$0xff]
  %v1015 = vld [vmem:[%s7 + $0x50] sm:$0xff]
  %v1016 = vld [vmem:[%s7 + $0x58] sm:$0xff]
  %v1017 = vld [vmem:[%s7 + $0x60] sm:$0xff]
  %v1018 = vld [vmem:[%s7 + $0x68] sm:$0xff]
  %v1019 = vld [vmem:[%s7 + $0x70] sm:$0xff]
  %v1020 = vld [vmem:[%s7 + $0x78] sm:$0xff]
  %v1021 = vld [vmem:[%s7 + $0x80] sm:$0xff]
  %v1022 = vld [vmem:[%s7 + $0x88] sm:$0xff]
  %v1023 = vld [vmem:[%s7 + $0x90] sm:$0xff]
  %v1024 = vld [vmem:[%s7 + $0x98] sm:$0xff]
  %v1025 = vld [vmem:[%s7 + $0xa0] sm:$0xff]
  %v1026 = vld [vmem:[%s7 + $0xa8] sm:$0xff]
  %v1027 = vld [vmem:[%s7 + $0xb0] sm:$0xff]
  %v1028 = vld [vmem:[%s7 + $0xb8] sm:$0xff]
  %v1029 = vld [vmem:[%s7 + $0xc0] sm:$0xff]
  %v1030 = vld [vmem:[%s7 + $0xc8] sm:$0xff]
  %v1031 = vld [vmem:[%s7 + $0xd0] sm:$0xff]
  %v1032 = vld [vmem:[%s7 + $0xd8] sm:$0xff]
  %v1033 = vld [vmem:[%s7 + $0xe0] sm:$0xff]
  %v1034 = vld [vmem:[%s7 + $0xe8] sm:$0xff]
  %v1035 = vld [vmem:[%s7 + $0xf0] sm:$0xff]
  %v1036 = vld [vmem:[%s7 + $0xf8] sm:$0xff]
  %v1037 = vld [vmem:[%s7 + $0x100] sm:$0xff]
  %v1038 = vld [vmem:[%s7 + $0x108] sm:$0xff]
  %v1039 = vld [vmem:[%s7 + $0x110] sm:$0xff]
  %v1040 = vld [vmem:[%s7 + $0x118] sm:$0xff]
  %v1041 = vld [vmem:[%s7 + $0x120] sm:$0xff]
  %v1042 = vld [vmem:[%s7 + $0x128] sm:$0xff]
  %v1043 = vld [vmem:[%s7 + $0x130] sm:$0xff]
  %v1044 = vld [vmem:[%s7 + $0x138] sm:$0xff]
  %v1045 = vld [vmem:[%s7 + $0x140] sm:$0xff]
  %v1046 = vld [vmem:[%s7 + $0x148] sm:$0xff]
  %v1047 = vld [vmem:[%s7 + $0x150] sm:$0xff]
  %v1048 = vld [vmem:[%s7 + $0x158] sm:$0xff]
  %v1049 = vld [vmem:[%s7 + $0x160] sm:$0xff]
  %v1050 = vld [vmem:[%s7 + $0x168] sm:$0xff]
  %v1051 = vld [vmem:[%s7 + $0x170] sm:$0xff]
  %v1052 = vld [vmem:[%s7 + $0x178] sm:$0xff]
  %v1053 = vld [vmem:[%s7 + $0x180] sm:$0xff]
  %v1054 = vld [vmem:[%s7 + $0x188] sm:$0xff]
  %v1055 = vld [vmem:[%s7 + $0x190] sm:$0xff]
  %v1056 = vld [vmem:[%s7 + $0x198] sm:$0xff]
  %v1057 = vld [vmem:[%s7 + $0x1a0] sm:$0xff]
  %v1058 = vld [vmem:[%s7 + $0x1a8] sm:$0xff]
  %v1059 = vld [vmem:[%s7 + $0x1b0] sm:$0xff]
  %v1060 = vld [vmem:[%s7 + $0x1b8] sm:$0xff]
  %v1061 = vld [vmem:[%s7 + $0x1c0] sm:$0xff]
  %v1062 = vld [vmem:[%s7 + $0x1c8] sm:$0xff]
  %v1063 = vld [vmem:[%s7 + $0x1d0] sm:$0xff]
  %v1064 = vld [vmem:[%s7 + $0x1d8] sm:$0xff]
  %v1065 = vld [vmem:[%s7 + $0x1e0] sm:$0xff]
  %v1066 = vld [vmem:[%s7 + $0x1e8] sm:$0xff]
  %v1067 = vld [vmem:[%s7 + $0x1f0] sm:$0xff]
  %v1068 = vld [vmem:[%s7 + $0x1f8] sm:$0xff]
  %1069 = vmatprep.subr.mxu0 0.0
  %1070 = vmatpush1.msra.mxu0 %v1005
  %1071 = vmatprep.subr.mxu0 0.0
  %1072 = vmatpush1.msra.mxu0 %v1006
  %1073 = vmatprep.subr.mxu0 0.0
  %1074 = vmatpush1.msra.mxu0 %v1007
  %1075 = vmatprep.subr.mxu0 0.0
  %1076 = vmatpush1.msra.mxu0 %v1008
  %1077 = vmatprep.subr.mxu0 0.0
  %1078 = vmatpush1.msra.mxu0 %v1009
  %1079 = vmatprep.subr.mxu0 0.0
  %1080 = vmatpush1.msra.mxu0 %v1010
  %1081 = vmatprep.subr.mxu0 0.0
  %1082 = vmatpush1.msra.mxu0 %v1011
  %1083 = vmatprep.subr.mxu0 0.0
  %1084 = vmatpush1.msra.mxu0 %v1012
  %1085 = vmatprep.subr.mxu0 0.0
  %1086 = vmatpush1.msra.mxu0 %v1013
  %1087 = vmatprep.subr.mxu0 0.0
  %1088 = vmatpush1.msra.mxu0 %v1014
  %1089 = vmatprep.subr.mxu0 0.0
  %1090 = vmatpush1.msra.mxu0 %v1015
  %1091 = vmatprep.subr.mxu0 0.0
  %1092 = vmatpush1.msra.mxu0 %v1016
  %1093 = vmatprep.subr.mxu0 0.0
  %1094 = vmatpush1.msra.mxu0 %v1017
  %1095 = vmatprep.subr.mxu0 0.0
  %1096 = vmatpush1.msra.mxu0 %v1018
  %1097 = vmatprep.subr.mxu0 0.0
  %1098 = vmatpush1.msra.mxu0 %v1019
  %1099 = vmatprep.subr.mxu0 0.0
  %1100 = vmatpush1.msra.mxu0 %v1020
  %1101 = vmatprep.subr.mxu0 0.0
  %1102 = vmatpush1.msra.mxu0 %v1021
  %1103 = vmatprep.subr.mxu0 0.0
  %1104 = vmatpush1.msra.mxu0 %v1022
  %1105 = vmatprep.subr.mxu0 0.0
  %1106 = vmatpush1.msra.mxu0 %v1023
  %1107 = vmatprep.subr.mxu0 0.0
  %1108 = vmatpush1.msra.mxu0 %v1024
  %1109 = vmatprep.subr.mxu0 0.0
  %1110 = vmatpush1.msra.mxu0 %v1025
  %1111 = vmatprep.subr.mxu0 0.0
  %1112 = vmatpush1.msra.mxu0 %v1026
  %1113 = vmatprep.subr.mxu0 0.0
  %1114 = vmatpush1.msra.mxu0 %v1027
  %1115 = vmatprep.subr.mxu0 0.0
  %1116 = vmatpush1.msra.mxu0 %v1028
  %1117 = vmatprep.subr.mxu0 0.0
  %1118 = vmatpush1.msra.mxu0 %v1029
  %1119 = vmatprep.subr.mxu0 0.0
  %1120 = vmatpush1.msra.mxu0 %v1030
  %1121 = vmatprep.subr.mxu0 0.0
  %1122 = vmatpush1.msra.mxu0 %v1031
  %1123 = vmatprep.subr.mxu0 0.0
  %1124 = vmatpush1.msra.mxu0 %v1032
  %1125 = vmatprep.subr.mxu0 0.0
  %1126 = vmatpush1.msra.mxu0 %v1033
  %1127 = vmatprep.subr.mxu0 0.0
  %1128 = vmatpush1.msra.mxu0 %v1034
  %1129 = vmatprep.subr.mxu0 0.0
  %1130 = vmatpush1.msra.mxu0 %v1035
  %1131 = vmatprep.subr.mxu0 0.0
  %1132 = vmatpush1.msra.mxu0 %v1036
  %1133 = vmatprep.mubr.f32.mxu0 %v1002
  %1134 = vmatmul.mubr.f32.gmra.mrb[0].mxu0 %v1001
  %v1135 = vpop.f32.mrb[0].mxu0
  %v1136 = vadd.f32 0.0, %v1135
  %v1137 = vpop.f32.mrb[0].mxu0
  %1138 = vdwg.mxu0
  %1139 = vmatprep.subr.mxu0 0.0
  %1140 = vmatpush1.msra.mxu0 %v1037
  %1141 = vmatprep.subr.mxu0 0.0
  %1142 = vmatpush1.msra.mxu0 %v1038
  %1143 = vmatprep.subr.mxu0 0.0
  %1144 = vmatpush1.msra.mxu0 %v1039
  %1145 = vmatprep.subr.mxu0 0.0
  %1146 = vmatpush1.msra.mxu0 %v1040
  %1147 = vmatprep.subr.mxu0 0.0
  %1148 = vmatpush1.msra.mxu0 %v1041
  %1149 = vmatprep.subr.mxu0 0.0
  %1150 = vmatpush1.msra.mxu0 %v1042
  %1151 = vmatprep.subr.mxu0 0.0
  %1152 = vmatpush1.msra.mxu0 %v1043
  %1153 = vmatprep.subr.mxu0 0.0
  %1154 = vmatpush1.msra.mxu0 %v1044
  %1155 = vmatprep.subr.mxu0 0.0
  %1156 = vmatpush1.msra.mxu0 %v1045
  %1157 = vmatprep.subr.mxu0 0.0
  %1158 = vmatpush1.msra.mxu0 %v1046
  %1159 = vmatprep.subr.mxu0 0.0
  %1160 = vmatpush1.msra.mxu0 %v1047
  %1161 = vmatprep.subr.mxu0 0.0
  %1162 = vmatpush1.msra.mxu0 %v1048
  %1163 = vmatprep.subr.mxu0 0.0
  %1164 = vmatpush1.msra.mxu0 %v1049
  %1165 = vmatprep.subr.mxu0 0.0
  %1166 = vmatpush1.msra.mxu0 %v1050
  %1167 = vmatprep.subr.mxu0 0.0
  %1168 = vmatpush1.msra.mxu0 %v1051
  %1169 = vmatprep.subr.mxu0 0.0
  %1170 = vmatpush1.msra.mxu0 %v1052
  %1171 = vmatprep.subr.mxu0 0.0
  %1172 = vmatpush1.msra.mxu0 %v1053
  %1173 = vmatprep.subr.mxu0 0.0
  %1174 = vmatpush1.msra.mxu0 %v1054
  %1175 = vmatprep.subr.mxu0 0.0
  %1176 = vmatpush1.msra.mxu0 %v1055
  %1177 = vmatprep.subr.mxu0 0.0
  %1178 = vmatpush1.msra.mxu0 %v1056
  %1179 = vmatprep.subr.mxu0 0.0
  %1180 = vmatpush1.msra.mxu0 %v1057
  %1181 = vmatprep.subr.mxu0 0.0
  %1182 = vmatpush1.msra.mxu0 %v1058
  %1183 = vmatprep.subr.mxu0 0.0
  %1184 = vmatpush1.msra.mxu0 %v1059
  %1185 = vmatprep.subr.mxu0 0.0
  %1186 = vmatpush1.msra.mxu0 %v1060
  %1187 = vmatprep.subr.mxu0 0.0
  %1188 = vmatpush1.msra.mxu0 %v1061
  %1189 = vmatprep.subr.mxu0 0.0
  %1190 = vmatpush1.msra.mxu0 %v1062
  %1191 = vmatprep.subr.mxu0 0.0
  %1192 = vmatpush1.msra.mxu0 %v1063
  %1193 = vmatprep.subr.mxu0 0.0
  %1194 = vmatpush1.msra.mxu0 %v1064
  %1195 = vmatprep.subr.mxu0 0.0
  %1196 = vmatpush1.msra.mxu0 %v1065
  %1197 = vmatprep.subr.mxu0 0.0
  %1198 = vmatpush1.msra.mxu0 %v1066
  %1199 = vmatprep.subr.mxu0 0.0
  %1200 = vmatpush1.msra.mxu0 %v1067
  %1201 = vmatprep.subr.mxu0 0.0
  %1202 = vmatpush1.msra.mxu0 %v1068
  %1203 = vmatprep.mubr.f32.mxu0 %v1004
  %1204 = vmatmul.mubr.f32.gmra.mrb[0].mxu0 %v1003
  %v1205 = vpop.f32.mrb[0].mxu0
  %v1206 = vadd.f32 %v1136, %v1205
  %v1207 = vpop.f32.mrb[0].mxu0
  %1208 = vdwg.mxu0
  %v1209 = vmul.f32 %v1206, %v1206
  %v1211 = vrot.slane %v1209, 7
  %v1213 = vsub.f32 %v1206, %v1211
  %v1214 = vld [vmem:[%s9] sm:$0x1]
  %v1215 = vadd.f32 %v1213, 1e-05
  %v1216 = vrsqrt.pop %v1215
  %v1219 = vunpack.c.l.s4 1966171168
  %v1220 = vunpack.c.0.s8 %v1219
  %v1221 = vlaneseq
  %v1222 = vshrl.u32 %v1221, 7
  %v1223 = vsub.s32 %v1220, %v1222
  %v1224 = vrot.slane %v1216, %v1223
  %v1225 = vcombine.high %v1224, %v1224
  %v1227 = vunpack.c.l.s4 1966171168
  %v1228 = vunpack.c.0.s8 %v1227
  %v1229 = vlaneseq
  %v1230 = vshrl.u32 %v1229, 7
  %v1231 = vsub.s32 %v1228, %v1230
  %v1232 = vrot.slane %v1225, %v1231
  %v1234 = vmul.f32 %v1214, %v1232
  %v1235 = vld [vmem:[%s10] sm:$0x1]
  %v1236 = vmul.f32 %v1206, %v1234
  %v1237 = vsub.f32 %v1235, %v1236
  %v1239 = vlaneseq
  %v1240 = vshrl.u32 %v1239, 7
  %v1241 = vsub.s32 0, %v1240
  %v1242 = vrot.slane %v1237, %v1241
  %v1244 = vsel %vm234, %v1234, %v1242
  %v1245 = vld [vmem:[%s8] sm:$0xff]
  %v1246 = vld [vmem:[%s8 + $0x8] sm:$0xff]
  %v1247 = vld [vmem:[%s8 + $0x10] sm:$0xff]
  %v1248 = vld [vmem:[%s8 + $0x18] sm:$0xff]
  %v1249 = vld [vmem:[%s8 + $0x20] sm:$0xff]
  %v1250 = vld [vmem:[%s8 + $0x28] sm:$0xff]
  %v1251 = vld [vmem:[%s8 + $0x30] sm:$0xff]
  %v1252 = vld [vmem:[%s8 + $0x38] sm:$0xff]
  %v1254 = vsel %vm379, %v1244, 0
  %1256 = vmatprep.subr.mxu0 %v1246
  %1257 = vmatpush1.msra.mxu0 %v1245
  %1258 = vmatprep.subr.mxu0 %v1250
  %1259 = vmatpush1.msra.mxu0 %v1249
  %1260 = vmatprep.subr.mxu0 0.0
  %1261 = vmatpush1.msra.mxu0 0.0
  %1262 = vmatprep.subr.mxu0 0.0
  %1263 = vmatpush1.msra.mxu0 0.0
  %1264 = vmatprep.subr.mxu0 0.0
  %1265 = vmatpush1.msra.mxu0 0.0
  %1266 = vmatprep.subr.mxu0 0.0
  %1267 = vmatpush1.msra.mxu0 0.0
  %1268 = vmatprep.subr.mxu0 0.0
  %1269 = vmatpush1.msra.mxu0 0.0
  %1270 = vmatprep.subr.mxu0 0.0
  %1271 = vmatpush1.msra.mxu0 0.0
  %1272 = vmatprep.subr.mxu0 0.0
  %1273 = vmatpush1.msra.mxu0 0.0
  %1274 = vmatprep.subr.mxu0 0.0
  %1275 = vmatpush1.msra.mxu0 0.0
  %1276 = vmatprep.subr.mxu0 0.0
  %1277 = vmatpush1.msra.mxu0 0.0
  %1278 = vmatprep.subr.mxu0 0.0
  %1279 = vmatpush1.msra.mxu0 0.0
  %1280 = vmatprep.subr.mxu0 0.0
  %1281 = vmatpush1.msra.mxu0 0.0
  %1282 = vmatprep.subr.mxu0 0.0
  %1283 = vmatpush1.msra.mxu0 0.0
  %1284 = vmatprep.subr.mxu0 0.0
  %1285 = vmatpush1.msra.mxu0 0.0
  %1286 = vmatprep.subr.mxu0 0.0
  %1287 = vmatpush1.msra.mxu0 0.0
  %1288 = vmatprep.subr.mxu0 0.0
  %1289 = vmatpush1.msra.mxu0 0.0
  %1290 = vmatprep.subr.mxu0 0.0
  %1291 = vmatpush1.msra.mxu0 0.0
  %1292 = vmatprep.subr.mxu0 0.0
  %1293 = vmatpush1.msra.mxu0 0.0
  %1294 = vmatprep.subr.mxu0 0.0
  %1295 = vmatpush1.msra.mxu0 0.0
  %1296 = vmatprep.subr.mxu0 0.0
  %1297 = vmatpush1.msra.mxu0 0.0
  %1298 = vmatprep.subr.mxu0 0.0
  %1299 = vmatpush1.msra.mxu0 0.0
  %1300 = vmatprep.subr.mxu0 0.0
  %1301 = vmatpush1.msra.mxu0 0.0
  %1302 = vmatprep.subr.mxu0 0.0
  %1303 = vmatpush1.msra.mxu0 0.0
  %1304 = vmatprep.subr.mxu0 0.0
  %1305 = vmatpush1.msra.mxu0 0.0
  %1306 = vmatprep.subr.mxu0 0.0
  %1307 = vmatpush1.msra.mxu0 0.0
  %1308 = vmatprep.subr.mxu0 0.0
  %1309 = vmatpush1.msra.mxu0 0.0
  %1310 = vmatprep.subr.mxu0 0.0
  %1311 = vmatpush1.msra.mxu0 0.0
  %1312 = vmatprep.subr.mxu0 0.0
  %1313 = vmatpush1.msra.mxu0 0.0
  %1314 = vmatprep.subr.mxu0 0.0
  %1315 = vmatpush1.msra.mxu0 0.0
  %1316 = vmatprep.subr.mxu0 0.0
  %1317 = vmatpush1.msra.mxu0 0.0
  %1318 = vmatprep.subr.mxu0 0.0
  %1319 = vmatpush1.msra.mxu0 0.0
  %1320 = vmatprep.mubr.f32.mxu0 0.0
  %1321 = vmatmul.mubr.f32.gmra.mrb[0].mxu0 %v1254
  %v1322 = vpop.f32.mrb[0].mxu0
  %v1323 = vadd.f32 0.0, %v1322
  %v1324 = vpop.f32.mrb[0].mxu0
  %v1325 = vadd.f32 0.0, %v1324
  %1326 = vdwg.mxu0
  %1327 = vmatprep.subr.mxu0 %v1248
  %1328 = vmatpush1.msra.mxu0 %v1247
  %1329 = vmatprep.subr.mxu0 %v1252
  %1330 = vmatpush1.msra.mxu0 %v1251
  %1331 = vmatprep.subr.mxu0 0.0
  %1332 = vmatpush1.msra.mxu0 0.0
  %1333 = vmatprep.subr.mxu0 0.0
  %1334 = vmatpush1.msra.mxu0 0.0
  %1335 = vmatprep.subr.mxu0 0.0
  %1336 = vmatpush1.msra.mxu0 0.0
  %1337 = vmatprep.subr.mxu0 0.0
  %1338 = vmatpush1.msra.mxu0 0.0
  %1339 = vmatprep.subr.mxu0 0.0
  %1340 = vmatpush1.msra.mxu0 0.0
  %1341 = vmatprep.subr.mxu0 0.0
  %1342 = vmatpush1.msra.mxu0 0.0
  %1343 = vmatprep.subr.mxu0 0.0
  %1344 = vmatpush1.msra.mxu0 0.0
  %1345 = vmatprep.subr.mxu0 0.0
  %1346 = vmatpush1.msra.mxu0 0.0
  %1347 = vmatprep.subr.mxu0 0.0
  %1348 = vmatpush1.msra.mxu0 0.0
  %1349 = vmatprep.subr.mxu0 0.0
  %1350 = vmatpush1.msra.mxu0 0.0
  %1351 = vmatprep.subr.mxu0 0.0
  %1352 = vmatpush1.msra.mxu0 0.0
  %1353 = vmatprep.subr.mxu0 0.0
  %1354 = vmatpush1.msra.mxu0 0.0
  %1355 = vmatprep.subr.mxu0 0.0
  %1356 = vmatpush1.msra.mxu0 0.0
  %1357 = vmatprep.subr.mxu0 0.0
  %1358 = vmatpush1.msra.mxu0 0.0
  %1359 = vmatprep.subr.mxu0 0.0
  %1360 = vmatpush1.msra.mxu0 0.0
  %1361 = vmatprep.subr.mxu0 0.0
  %1362 = vmatpush1.msra.mxu0 0.0
  %1363 = vmatprep.subr.mxu0 0.0
  %1364 = vmatpush1.msra.mxu0 0.0
  %1365 = vmatprep.subr.mxu0 0.0
  %1366 = vmatpush1.msra.mxu0 0.0
  %1367 = vmatprep.subr.mxu0 0.0
  %1368 = vmatpush1.msra.mxu0 0.0
  %1369 = vmatprep.subr.mxu0 0.0
  %1370 = vmatpush1.msra.mxu0 0.0
  %1371 = vmatprep.subr.mxu0 0.0
  %1372 = vmatpush1.msra.mxu0 0.0
  %1373 = vmatprep.subr.mxu0 0.0
  %1374 = vmatpush1.msra.mxu0 0.0
  %1375 = vmatprep.subr.mxu0 0.0
  %1376 = vmatpush1.msra.mxu0 0.0
  %1377 = vmatprep.subr.mxu0 0.0
  %1378 = vmatpush1.msra.mxu0 0.0
  %1379 = vmatprep.subr.mxu0 0.0
  %1380 = vmatpush1.msra.mxu0 0.0
  %1381 = vmatprep.subr.mxu0 0.0
  %1382 = vmatpush1.msra.mxu0 0.0
  %1383 = vmatprep.subr.mxu0 0.0
  %1384 = vmatpush1.msra.mxu0 0.0
  %1385 = vmatprep.subr.mxu0 0.0
  %1386 = vmatpush1.msra.mxu0 0.0
  %1387 = vmatprep.subr.mxu0 0.0
  %1388 = vmatpush1.msra.mxu0 0.0
  %1389 = vmatprep.subr.mxu0 0.0
  %1390 = vmatpush1.msra.mxu0 0.0
  %1391 = vmatprep.mubr.f32.mxu0 0.0
  %1392 = vmatmul.mubr.f32.gmra.mrb[0].mxu0 %v1254
  %v1393 = vpop.f32.mrb[0].mxu0
  %v1394 = vadd.f32 0.0, %v1393
  %v1395 = vpop.f32.mrb[0].mxu0
  %v1396 = vadd.f32 0.0, %v1395
  %1397 = vdwg.mxu0
  %v1398 = vlaneseq
  %v1399 = vshrl.u32 %v1398, 7
  %v1400 = vsub.s32 0, %v1399
  %v1401 = vrot.slane %v1323, %v1400
  %v1402 = vlaneseq
  %v1403 = vshrl.u32 %v1402, 7
  %v1404 = vsub.s32 0, %v1403
  %v1405 = vrot.slane %v1325, %v1404
  %v1406 = vlaneseq
  %v1407 = vshrl.u32 %v1406, 7
  %v1408 = vsub.s32 0, %v1407
  %v1409 = vrot.slane %v1394, %v1408
  %v1410 = vlaneseq
  %v1411 = vshrl.u32 %v1410, 7
  %v1412 = vsub.s32 0, %v1411
  %v1413 = vrot.slane %v1396, %v1412
  %v1414 = vmul.f32 %v902, %v1401
  %v1415 = vmul.f32 %v904, %v1405
  %v1416 = vmul.f32 %v943, %v1409
  %v1417 = vmul.f32 %v945, %v1413
  %v1418 = vlaneseq
  %v1419 = vshrl.u32 %v1418, 7
  %v1420 = vsub.s32 1, %v1419
  %v1421 = vrot.slane %v1323, %v1420
  %v1422 = vlaneseq
  %v1423 = vshrl.u32 %v1422, 7
  %v1424 = vsub.s32 1, %v1423
  %v1425 = vrot.slane %v1325, %v1424
  %v1426 = vlaneseq
  %v1427 = vshrl.u32 %v1426, 7
  %v1428 = vsub.s32 1, %v1427
  %v1429 = vrot.slane %v1394, %v1428
  %v1430 = vlaneseq
  %v1431 = vshrl.u32 %v1430, 7
  %v1432 = vsub.s32 1, %v1431
  %v1433 = vrot.slane %v1396, %v1432
  %v1434 = vadd.f32 %v1414, %v1421
  %v1435 = vadd.f32 %v1415, %v1425
  %v1436 = vadd.f32 %v1416, %v1429
  %v1437 = vadd.f32 %v1417, %v1433
  %v1438 = vmax.f32 %v1434, 0.0
  %v1439 = vmax.f32 %v1435, 0.0
  %v1440 = vmax.f32 %v1436, 0.0
  %v1441 = vmax.f32 %v1437, 0.0
  %v1442 = vsel %vm478, %v1438, 0.0
  %v1443 = vsel %vm478, %v1439, 0.0
  %v1444 = vsel %vm478, %v1440, 0.0
  %v1445 = vsel %vm478, %v1441, 0.0
  %v1446 = vpack.c.bf16 %v1442, %v1442
  %v1447 = vpack.c.bf16 %v1443, %v1443
  %v1448 = vpack.c.bf16 %v1444, %v1444
  %v1449 = vpack.c.bf16 %v1445, %v1445
  %v1450 = vld [vmem:[%s11] sm:$0xff]
  %v1451 = vld [vmem:[%s11 + $0x8] sm:$0xff]
  %v1452 = vld [vmem:[%s11 + $0x10] sm:$0xff]
  %v1453 = vld [vmem:[%s11 + $0x18] sm:$0xf]
  %v1454 = vld [vmem:[%s11 + $0x1c] sm:$0xff]
  %v1455 = vld [vmem:[%s11 + $0x24] sm:$0xff]
  %v1456 = vld [vmem:[%s11 + $0x2c] sm:$0xff]
  %v1457 = vld [vmem:[%s11 + $0x34] sm:$0xf]
  %v1458 = vld [vmem:[%s11 + $0x38] sm:$0xff]
  %v1459 = vld [vmem:[%s11 + $0x40] sm:$0xff]
  %v1460 = vld [vmem:[%s11 + $0x48] sm:$0xff]
  %v1461 = vld [vmem:[%s11 + $0x50] sm:$0xf]
  %v1462 = vld [vmem:[%s11 + $0x54] sm:$0xff]
  %v1463 = vld [vmem:[%s11 + $0x5c] sm:$0xff]
  %v1464 = vld [vmem:[%s11 + $0x64] sm:$0xff]
  %v1465 = vld [vmem:[%s11 + $0x6c] sm:$0xf]
  %v1466 = vld [vmem:[%s11 + $0x70] sm:$0xff]
  %v1467 = vld [vmem:[%s11 + $0x78] sm:$0xff]
  %v1468 = vld [vmem:[%s11 + $0x80] sm:$0xff]
  %v1469 = vld [vmem:[%s11 + $0x88] sm:$0xf]
  %v1470 = vld [vmem:[%s11 + $0x8c] sm:$0xff]
  %v1471 = vld [vmem:[%s11 + $0x94] sm:$0xff]
  %v1472 = vld [vmem:[%s11 + $0x9c] sm:$0xff]
  %v1473 = vld [vmem:[%s11 + $0xa4] sm:$0xf]
  %v1474 = vld [vmem:[%s11 + $0xa8] sm:$0xff]
  %v1475 = vld [vmem:[%s11 + $0xb0] sm:$0xff]
  %v1476 = vld [vmem:[%s11 + $0xb8] sm:$0xff]
  %v1477 = vld [vmem:[%s11 + $0xc0] sm:$0xf]
  %v1478 = vld [vmem:[%s11 + $0xc4] sm:$0xff]
  %v1479 = vld [vmem:[%s11 + $0xcc] sm:$0xff]
  %v1480 = vld [vmem:[%s11 + $0xd4] sm:$0xff]
  %v1481 = vld [vmem:[%s11 + $0xdc] sm:$0xf]
  %v1482 = vld [vmem:[%s11 + $0xe0] sm:$0xff]
  %v1483 = vld [vmem:[%s11 + $0xe8] sm:$0xff]
  %v1484 = vld [vmem:[%s11 + $0xf0] sm:$0xff]
  %v1485 = vld [vmem:[%s11 + $0xf8] sm:$0xf]
  %v1486 = vld [vmem:[%s11 + $0xfc] sm:$0xff]
  %v1487 = vld [vmem:[%s11 + $0x104] sm:$0xff]
  %v1488 = vld [vmem:[%s11 + $0x10c] sm:$0xff]
  %v1489 = vld [vmem:[%s11 + $0x114] sm:$0xf]
  %v1490 = vld [vmem:[%s11 + $0x118] sm:$0xff]
  %v1491 = vld [vmem:[%s11 + $0x120] sm:$0xff]
  %v1492 = vld [vmem:[%s11 + $0x128] sm:$0xff]
  %v1493 = vld [vmem:[%s11 + $0x130] sm:$0xf]
  %v1494 = vld [vmem:[%s11 + $0x134] sm:$0xff]
  %v1495 = vld [vmem:[%s11 + $0x13c] sm:$0xff]
  %v1496 = vld [vmem:[%s11 + $0x144] sm:$0xff]
  %v1497 = vld [vmem:[%s11 + $0x14c] sm:$0xf]
  %v1498 = vld [vmem:[%s11 + $0x150] sm:$0xff]
  %v1499 = vld [vmem:[%s11 + $0x158] sm:$0xff]
  %v1500 = vld [vmem:[%s11 + $0x160] sm:$0xff]
  %v1501 = vld [vmem:[%s11 + $0x168] sm:$0xf]
  %v1502 = vld [vmem:[%s11 + $0x16c] sm:$0xff]
  %v1503 = vld [vmem:[%s11 + $0x174] sm:$0xff]
  %v1504 = vld [vmem:[%s11 + $0x17c] sm:$0xff]
  %v1505 = vld [vmem:[%s11 + $0x184] sm:$0xf]
  %v1506 = vld [vmem:[%s11 + $0x188] sm:$0xff]
  %v1507 = vld [vmem:[%s11 + $0x190] sm:$0xff]
  %v1508 = vld [vmem:[%s11 + $0x198] sm:$0xff]
  %v1509 = vld [vmem:[%s11 + $0x1a0] sm:$0xf]
  %v1510 = vld [vmem:[%s11 + $0x1a4] sm:$0xff]
  %v1511 = vld [vmem:[%s11 + $0x1ac] sm:$0xff]
  %v1512 = vld [vmem:[%s11 + $0x1b4] sm:$0xff]
  %v1513 = vld [vmem:[%s11 + $0x1bc] sm:$0xf]
  %v1514 = vld [vmem:[%s11 + $0x1c0] sm:$0xff]
  %v1515 = vld [vmem:[%s11 + $0x1c8] sm:$0xff]
  %v1516 = vld [vmem:[%s11 + $0x1d0] sm:$0xff]
  %v1517 = vld [vmem:[%s11 + $0x1d8] sm:$0xf]
  %v1518 = vld [vmem:[%s11 + $0x1dc] sm:$0xff]
  %v1519 = vld [vmem:[%s11 + $0x1e4] sm:$0xff]
  %v1520 = vld [vmem:[%s11 + $0x1ec] sm:$0xff]
  %v1521 = vld [vmem:[%s11 + $0x1f4] sm:$0xf]
  %v1522 = vld [vmem:[%s11 + $0x1f8] sm:$0xff]
  %v1523 = vld [vmem:[%s11 + $0x200] sm:$0xff]
  %v1524 = vld [vmem:[%s11 + $0x208] sm:$0xff]
  %v1525 = vld [vmem:[%s11 + $0x210] sm:$0xf]
  %v1526 = vld [vmem:[%s11 + $0x214] sm:$0xff]
  %v1527 = vld [vmem:[%s11 + $0x21c] sm:$0xff]
  %v1528 = vld [vmem:[%s11 + $0x224] sm:$0xff]
  %v1529 = vld [vmem:[%s11 + $0x22c] sm:$0xf]
  %v1530 = vld [vmem:[%s11 + $0x230] sm:$0xff]
  %v1531 = vld [vmem:[%s11 + $0x238] sm:$0xff]
  %v1532 = vld [vmem:[%s11 + $0x240] sm:$0xff]
  %v1533 = vld [vmem:[%s11 + $0x248] sm:$0xf]
  %v1534 = vld [vmem:[%s11 + $0x24c] sm:$0xff]
  %v1535 = vld [vmem:[%s11 + $0x254] sm:$0xff]
  %v1536 = vld [vmem:[%s11 + $0x25c] sm:$0xff]
  %v1537 = vld [vmem:[%s11 + $0x264] sm:$0xf]
  %v1538 = vld [vmem:[%s11 + $0x268] sm:$0xff]
  %v1539 = vld [vmem:[%s11 + $0x270] sm:$0xff]
  %v1540 = vld [vmem:[%s11 + $0x278] sm:$0xff]
  %v1541 = vld [vmem:[%s11 + $0x280] sm:$0xf]
  %v1542 = vld [vmem:[%s11 + $0x284] sm:$0xff]
  %v1543 = vld [vmem:[%s11 + $0x28c] sm:$0xff]
  %v1544 = vld [vmem:[%s11 + $0x294] sm:$0xff]
  %v1545 = vld [vmem:[%s11 + $0x29c] sm:$0xf]
  %v1546 = vld [vmem:[%s11 + $0x2a0] sm:$0xff]
  %v1547 = vld [vmem:[%s11 + $0x2a8] sm:$0xff]
  %v1548 = vld [vmem:[%s11 + $0x2b0] sm:$0xff]
  %v1549 = vld [vmem:[%s11 + $0x2b8] sm:$0xf]
  %v1550 = vld [vmem:[%s11 + $0x2bc] sm:$0xff]
  %v1551 = vld [vmem:[%s11 + $0x2c4] sm:$0xff]
  %v1552 = vld [vmem:[%s11 + $0x2cc] sm:$0xff]
  %v1553 = vld [vmem:[%s11 + $0x2d4] sm:$0xf]
  %v1554 = vld [vmem:[%s11 + $0x2d8] sm:$0xff]
  %v1555 = vld [vmem:[%s11 + $0x2e0] sm:$0xff]
  %v1556 = vld [vmem:[%s11 + $0x2e8] sm:$0xff]
  %v1557 = vld [vmem:[%s11 + $0x2f0] sm:$0xf]
  %v1558 = vld [vmem:[%s11 + $0x2f4] sm:$0xff]
  %v1559 = vld [vmem:[%s11 + $0x2fc] sm:$0xff]
  %v1560 = vld [vmem:[%s11 + $0x304] sm:$0xff]
  %v1561 = vld [vmem:[%s11 + $0x30c] sm:$0xf]
  %v1562 = vld [vmem:[%s11 + $0x310] sm:$0xff]
  %v1563 = vld [vmem:[%s11 + $0x318] sm:$0xff]
  %v1564 = vld [vmem:[%s11 + $0x320] sm:$0xff]
  %v1565 = vld [vmem:[%s11 + $0x328] sm:$0xf]
  %v1566 = vld [vmem:[%s11 + $0x32c] sm:$0xff]
  %v1567 = vld [vmem:[%s11 + $0x334] sm:$0xff]
  %v1568 = vld [vmem:[%s11 + $0x33c] sm:$0xff]
  %v1569 = vld [vmem:[%s11 + $0x344] sm:$0xf]
  %v1570 = vld [vmem:[%s11 + $0x348] sm:$0xff]
  %v1571 = vld [vmem:[%s11 + $0x350] sm:$0xff]
  %v1572 = vld [vmem:[%s11 + $0x358] sm:$0xff]
  %v1573 = vld [vmem:[%s11 + $0x360] sm:$0xf]
  %v1574 = vld [vmem:[%s11 + $0x364] sm:$0xff]
  %v1575 = vld [vmem:[%s11 + $0x36c] sm:$0xff]
  %v1576 = vld [vmem:[%s11 + $0x374] sm:$0xff]
  %v1577 = vld [vmem:[%s11 + $0x37c] sm:$0xf]
  %v1578 = vld [vmem:[%s11 + $0x380] sm:$0xff]
  %v1579 = vld [vmem:[%s11 + $0x388] sm:$0xff]
  %v1580 = vld [vmem:[%s11 + $0x390] sm:$0xff]
  %v1581 = vld [vmem:[%s11 + $0x398] sm:$0xf]
  %v1582 = vld [vmem:[%s11 + $0x39c] sm:$0xff]
  %v1583 = vld [vmem:[%s11 + $0x3a4] sm:$0xff]
  %v1584 = vld [vmem:[%s11 + $0x3ac] sm:$0xff]
  %v1585 = vld [vmem:[%s11 + $0x3b4] sm:$0xf]
  %v1586 = vld [vmem:[%s11 + $0x3b8] sm:$0xff]
  %v1587 = vld [vmem:[%s11 + $0x3c0] sm:$0xff]
  %v1588 = vld [vmem:[%s11 + $0x3c8] sm:$0xff]
  %v1589 = vld [vmem:[%s11 + $0x3d0] sm:$0xf]
  %v1590 = vld [vmem:[%s11 + $0x3d4] sm:$0xff]
  %v1591 = vld [vmem:[%s11 + $0x3dc] sm:$0xff]
  %v1592 = vld [vmem:[%s11 + $0x3e4] sm:$0xff]
  %v1593 = vld [vmem:[%s11 + $0x3ec] sm:$0xf]
  %v1594 = vld [vmem:[%s11 + $0x3f0] sm:$0xff]
  %v1595 = vld [vmem:[%s11 + $0x3f8] sm:$0xff]
  %v1596 = vld [vmem:[%s11 + $0x400] sm:$0xff]
  %v1597 = vld [vmem:[%s11 + $0x408] sm:$0xf]
  %v1598 = vld [vmem:[%s11 + $0x40c] sm:$0xff]
  %v1599 = vld [vmem:[%s11 + $0x414] sm:$0xff]
  %v1600 = vld [vmem:[%s11 + $0x41c] sm:$0xff]
  %v1601 = vld [vmem:[%s11 + $0x424] sm:$0xf]
  %v1602 = vld [vmem:[%s11 + $0x428] sm:$0xff]
  %v1603 = vld [vmem:[%s11 + $0x430] sm:$0xff]
  %v1604 = vld [vmem:[%s11 + $0x438] sm:$0xff]
  %v1605 = vld [vmem:[%s11 + $0x440] sm:$0xf]
  %v1606 = vld [vmem:[%s11 + $0x444] sm:$0xff]
  %v1607 = vld [vmem:[%s11 + $0x44c] sm:$0xff]
  %v1608 = vld [vmem:[%s11 + $0x454] sm:$0xff]
  %v1609 = vld [vmem:[%s11 + $0x45c] sm:$0xf]
  %v1610 = vld [vmem:[%s11 + $0x460] sm:$0xff]
  %v1611 = vld [vmem:[%s11 + $0x468] sm:$0xff]
  %v1612 = vld [vmem:[%s11 + $0x470] sm:$0xff]
  %v1613 = vld [vmem:[%s11 + $0x478] sm:$0xf]
  %v1614 = vld [vmem:[%s11 + $0x47c] sm:$0xff]
  %v1615 = vld [vmem:[%s11 + $0x484] sm:$0xff]
  %v1616 = vld [vmem:[%s11 + $0x48c] sm:$0xff]
  %v1617 = vld [vmem:[%s11 + $0x494] sm:$0xf]
  %v1618 = vld [vmem:[%s11 + $0x498] sm:$0xff]
  %v1619 = vld [vmem:[%s11 + $0x4a0] sm:$0xff]
  %v1620 = vld [vmem:[%s11 + $0x4a8] sm:$0xff]
  %v1621 = vld [vmem:[%s11 + $0x4b0] sm:$0xf]
  %v1622 = vld [vmem:[%s11 + $0x4b4] sm:$0xff]
  %v1623 = vld [vmem:[%s11 + $0x4bc] sm:$0xff]
  %v1624 = vld [vmem:[%s11 + $0x4c4] sm:$0xff]
  %v1625 = vld [vmem:[%s11 + $0x4cc] sm:$0xf]
  %v1626 = vld [vmem:[%s11 + $0x4d0] sm:$0xff]
  %v1627 = vld [vmem:[%s11 + $0x4d8] sm:$0xff]
  %v1628 = vld [vmem:[%s11 + $0x4e0] sm:$0xff]
  %v1629 = vld [vmem:[%s11 + $0x4e8] sm:$0xf]
  %v1630 = vld [vmem:[%s11 + $0x4ec] sm:$0xff]
  %v1631 = vld [vmem:[%s11 + $0x4f4] sm:$0xff]
  %v1632 = vld [vmem:[%s11 + $0x4fc] sm:$0xff]
  %v1633 = vld [vmem:[%s11 + $0x504] sm:$0xf]
  %v1634 = vld [vmem:[%s11 + $0x508] sm:$0xff]
  %v1635 = vld [vmem:[%s11 + $0x510] sm:$0xff]
  %v1636 = vld [vmem:[%s11 + $0x518] sm:$0xff]
  %v1637 = vld [vmem:[%s11 + $0x520] sm:$0xf]
  %v1638 = vld [vmem:[%s11 + $0x524] sm:$0xff]
  %v1639 = vld [vmem:[%s11 + $0x52c] sm:$0xff]
  %v1640 = vld [vmem:[%s11 + $0x534] sm:$0xff]
  %v1641 = vld [vmem:[%s11 + $0x53c] sm:$0xf]
  %v1642 = vld [vmem:[%s11 + $0x540] sm:$0xff]
  %v1643 = vld [vmem:[%s11 + $0x548] sm:$0xff]
  %v1644 = vld [vmem:[%s11 + $0x550] sm:$0xff]
  %v1645 = vld [vmem:[%s11 + $0x558] sm:$0xf]
  %v1646 = vld [vmem:[%s11 + $0x55c] sm:$0xff]
  %v1647 = vld [vmem:[%s11 + $0x564] sm:$0xff]
  %v1648 = vld [vmem:[%s11 + $0x56c] sm:$0xff]
  %v1649 = vld [vmem:[%s11 + $0x574] sm:$0xf]
  %v1650 = vld [vmem:[%s11 + $0x578] sm:$0xff]
  %v1651 = vld [vmem:[%s11 + $0x580] sm:$0xff]
  %v1652 = vld [vmem:[%s11 + $0x588] sm:$0xff]
  %v1653 = vld [vmem:[%s11 + $0x590] sm:$0xf]
  %v1654 = vld [vmem:[%s11 + $0x594] sm:$0xff]
  %v1655 = vld [vmem:[%s11 + $0x59c] sm:$0xff]
  %v1656 = vld [vmem:[%s11 + $0x5a4] sm:$0xff]
  %v1657 = vld [vmem:[%s11 + $0x5ac] sm:$0xf]
  %v1658 = vld [vmem:[%s11 + $0x5b0] sm:$0xff]
  %v1659 = vld [vmem:[%s11 + $0x5b8] sm:$0xff]
  %v1660 = vld [vmem:[%s11 + $0x5c0] sm:$0xff]
  %v1661 = vld [vmem:[%s11 + $0x5c8] sm:$0xf]
  %v1662 = vld [vmem:[%s11 + $0x5cc] sm:$0xff]
  %v1663 = vld [vmem:[%s11 + $0x5d4] sm:$0xff]
  %v1664 = vld [vmem:[%s11 + $0x5dc] sm:$0xff]
  %v1665 = vld [vmem:[%s11 + $0x5e4] sm:$0xf]
  %v1666 = vld [vmem:[%s11 + $0x5e8] sm:$0xff]
  %v1667 = vld [vmem:[%s11 + $0x5f0] sm:$0xff]
  %v1668 = vld [vmem:[%s11 + $0x5f8] sm:$0xff]
  %v1669 = vld [vmem:[%s11 + $0x600] sm:$0xf]
  %v1670 = vld [vmem:[%s11 + $0x604] sm:$0xff]
  %v1671 = vld [vmem:[%s11 + $0x60c] sm:$0xff]
  %v1672 = vld [vmem:[%s11 + $0x614] sm:$0xff]
  %v1673 = vld [vmem:[%s11 + $0x61c] sm:$0xf]
  %v1674 = vld [vmem:[%s11 + $0x620] sm:$0xff]
  %v1675 = vld [vmem:[%s11 + $0x628] sm:$0xff]
  %v1676 = vld [vmem:[%s11 + $0x630] sm:$0xff]
  %v1677 = vld [vmem:[%s11 + $0x638] sm:$0xf]
  %v1678 = vld [vmem:[%s11 + $0x63c] sm:$0xff]
  %v1679 = vld [vmem:[%s11 + $0x644] sm:$0xff]
  %v1680 = vld [vmem:[%s11 + $0x64c] sm:$0xff]
  %v1681 = vld [vmem:[%s11 + $0x654] sm:$0xf]
  %v1682 = vld [vmem:[%s11 + $0x658] sm:$0xff]
  %v1683 = vld [vmem:[%s11 + $0x660] sm:$0xff]
  %v1684 = vld [vmem:[%s11 + $0x668] sm:$0xff]
  %v1685 = vld [vmem:[%s11 + $0x670] sm:$0xf]
  %v1686 = vld [vmem:[%s11 + $0x674] sm:$0xff]
  %v1687 = vld [vmem:[%s11 + $0x67c] sm:$0xff]
  %v1688 = vld [vmem:[%s11 + $0x684] sm:$0xff]
  %v1689 = vld [vmem:[%s11 + $0x68c] sm:$0xf]
  %v1690 = vld [vmem:[%s11 + $0x690] sm:$0xff]
  %v1691 = vld [vmem:[%s11 + $0x698] sm:$0xff]
  %v1692 = vld [vmem:[%s11 + $0x6a0] sm:$0xff]
  %v1693 = vld [vmem:[%s11 + $0x6a8] sm:$0xf]
  %v1694 = vld [vmem:[%s11 + $0x6ac] sm:$0xff]
  %v1695 = vld [vmem:[%s11 + $0x6b4] sm:$0xff]
  %v1696 = vld [vmem:[%s11 + $0x6bc] sm:$0xff]
  %v1697 = vld [vmem:[%s11 + $0x6c4] sm:$0xf]
  %v1698 = vld [vmem:[%s11 + $0x6c8] sm:$0xff]
  %v1699 = vld [vmem:[%s11 + $0x6d0] sm:$0xff]
  %v1700 = vld [vmem:[%s11 + $0x6d8] sm:$0xff]
  %v1701 = vld [vmem:[%s11 + $0x6e0] sm:$0xf]
  %v1702 = vld [vmem:[%s11 + $0x6e4] sm:$0xff]
  %v1703 = vld [vmem:[%s11 + $0x6ec] sm:$0xff]
  %v1704 = vld [vmem:[%s11 + $0x6f4] sm:$0xff]
  %v1705 = vld [vmem:[%s11 + $0x6fc] sm:$0xf]
  %v1962 = vunpack.c.l.b16 %v1450
  %v1963 = vunpack.c.h.b16 %v1450
  %v1964 = vunpack.c.l.b16 %v1451
  %v1965 = vunpack.c.h.b16 %v1451
  %v1966 = vunpack.c.l.b16 %v1452
  %v1967 = vunpack.c.h.b16 %v1452
  %v1968 = vunpack.c.l.b16 %v1453
  %v1969 = vunpack.c.l.b16 %v1454
  %v1970 = vunpack.c.h.b16 %v1454
  %v1971 = vunpack.c.l.b16 %v1455
  %v1972 = vunpack.c.h.b16 %v1455
  %v1973 = vunpack.c.l.b16 %v1456
  %v1974 = vunpack.c.h.b16 %v1456
  %v1975 = vunpack.c.l.b16 %v1457
  %v1976 = vunpack.c.l.b16 %v1458
  %v1977 = vunpack.c.h.b16 %v1458
  %v1978 = vunpack.c.l.b16 %v1459
  %v1979 = vunpack.c.h.b16 %v1459
  %v1980 = vunpack.c.l.b16 %v1460
  %v1981 = vunpack.c.h.b16 %v1460
  %v1982 = vunpack.c.l.b16 %v1461
  %v1983 = vunpack.c.l.b16 %v1462
  %v1984 = vunpack.c.h.b16 %v1462
  %v1985 = vunpack.c.l.b16 %v1463
  %v1986 = vunpack.c.h.b16 %v1463
  %v1987 = vunpack.c.l.b16 %v1464
  %v1988 = vunpack.c.h.b16 %v1464
  %v1989 = vunpack.c.l.b16 %v1465
  %v1990 = vunpack.c.l.b16 %v1466
  %v1991 = vunpack.c.h.b16 %v1466
  %v1992 = vunpack.c.l.b16 %v1467
  %v1993 = vunpack.c.h.b16 %v1467
  %v1994 = vunpack.c.l.b16 %v1468
  %v1995 = vunpack.c.h.b16 %v1468
  %v1996 = vunpack.c.l.b16 %v1469
  %v1997 = vunpack.c.l.b16 %v1470
  %v1998 = vunpack.c.h.b16 %v1470
  %v1999 = vunpack.c.l.b16 %v1471
  %v2000 = vunpack.c.h.b16 %v1471
  %v2001 = vunpack.c.l.b16 %v1472
  %v2002 = vunpack.c.h.b16 %v1472
  %v2003 = vunpack.c.l.b16 %v1473
  %v2004 = vunpack.c.l.b16 %v1474
  %v2005 = vunpack.c.h.b16 %v1474
  %v2006 = vunpack.c.l.b16 %v1475
  %v2007 = vunpack.c.h.b16 %v1475
  %v2008 = vunpack.c.l.b16 %v1476
  %v2009 = vunpack.c.h.b16 %v1476
  %v2010 = vunpack.c.l.b16 %v1477
  %v2011 = vunpack.c.l.b16 %v1478
  %v2012 = vunpack.c.h.b16 %v1478
  %v2013 = vunpack.c.l.b16 %v1479
  %v2014 = vunpack.c.h.b16 %v1479
  %v2015 = vunpack.c.l.b16 %v1480
  %v2016 = vunpack.c.h.b16 %v1480
  %v2017 = vunpack.c.l.b16 %v1481
  %v2018 = vunpack.c.l.b16 %v1482
  %v2019 = vunpack.c.h.b16 %v1482
  %v2020 = vunpack.c.l.b16 %v1483
  %v2021 = vunpack.c.h.b16 %v1483
  %v2022 = vunpack.c.l.b16 %v1484
  %v2023 = vunpack.c.h.b16 %v1484
  %v2024 = vunpack.c.l.b16 %v1485
  %v2025 = vunpack.c.l.b16 %v1486
  %v2026 = vunpack.c.h.b16 %v1486
  %v2027 = vunpack.c.l.b16 %v1487
  %v2028 = vunpack.c.h.b16 %v1487
  %v2029 = vunpack.c.l.b16 %v1488
  %v2030 = vunpack.c.h.b16 %v1488
  %v2031 = vunpack.c.l.b16 %v1489
  %v2032 = vunpack.c.l.b16 %v1490
  %v2033 = vunpack.c.h.b16 %v1490
  %v2034 = vunpack.c.l.b16 %v1491
  %v2035 = vunpack.c.h.b16 %v1491
  %v2036 = vunpack.c.l.b16 %v1492
  %v2037 = vunpack.c.h.b16 %v1492
  %v2038 = vunpack.c.l.b16 %v1493
  %v2039 = vunpack.c.l.b16 %v1494
  %v2040 = vunpack.c.h.b16 %v1494
  %v2041 = vunpack.c.l.b16 %v1495
  %v2042 = vunpack.c.h.b16 %v1495
  %v2043 = vunpack.c.l.b16 %v1496
  %v2044 = vunpack.c.h.b16 %v1496
  %v2045 = vunpack.c.l.b16 %v1497
  %v2046 = vunpack.c.l.b16 %v1498
  %v2047 = vunpack.c.h.b16 %v1498
  %v2048 = vunpack.c.l.b16 %v1499
  %v2049 = vunpack.c.h.b16 %v1499
  %v2050 = vunpack.c.l.b16 %v1500
  %v2051 = vunpack.c.h.b16 %v1500
  %v2052 = vunpack.c.l.b16 %v1501
  %v2053 = vunpack.c.l.b16 %v1502
  %v2054 = vunpack.c.h.b16 %v1502
  %v2055 = vunpack.c.l.b16 %v1503
  %v2056 = vunpack.c.h.b16 %v1503
  %v2057 = vunpack.c.l.b16 %v1504
  %v2058 = vunpack.c.h.b16 %v1504
  %v2059 = vunpack.c.l.b16 %v1505
  %v2060 = vunpack.c.l.b16 %v1506
  %v2061 = vunpack.c.h.b16 %v1506
  %v2062 = vunpack.c.l.b16 %v1507
  %v2063 = vunpack.c.h.b16 %v1507
  %v2064 = vunpack.c.l.b16 %v1508
  %v2065 = vunpack.c.h.b16 %v1508
  %v2066 = vunpack.c.l.b16 %v1509
  %v2067 = vunpack.c.l.b16 %v1510
  %v2068 = vunpack.c.h.b16 %v1510
  %v2069 = vunpack.c.l.b16 %v1511
  %v2070 = vunpack.c.h.b16 %v1511
  %v2071 = vunpack.c.l.b16 %v1512
  %v2072 = vunpack.c.h.b16 %v1512
  %v2073 = vunpack.c.l.b16 %v1513
  %v2074 = vunpack.c.l.b16 %v1514
  %v2075 = vunpack.c.h.b16 %v1514
  %v2076 = vunpack.c.l.b16 %v1515
  %v2077 = vunpack.c.h.b16 %v1515
  %v2078 = vunpack.c.l.b16 %v1516
  %v2079 = vunpack.c.h.b16 %v1516
  %v2080 = vunpack.c.l.b16 %v1517
  %v2081 = vunpack.c.l.b16 %v1518
  %v2082 = vunpack.c.h.b16 %v1518
  %v2083 = vunpack.c.l.b16 %v1519
  %v2084 = vunpack.c.h.b16 %v1519
  %v2085 = vunpack.c.l.b16 %v1520
  %v2086 = vunpack.c.h.b16 %v1520
  %v2087 = vunpack.c.l.b16 %v1521
  %v2088 = vunpack.c.l.b16 %v1522
  %v2089 = vunpack.c.h.b16 %v1522
  %v2090 = vunpack.c.l.b16 %v1523
  %v2091 = vunpack.c.h.b16 %v1523
  %v2092 = vunpack.c.l.b16 %v1524
  %v2093 = vunpack.c.h.b16 %v1524
  %v2094 = vunpack.c.l.b16 %v1525
  %v2095 = vunpack.c.l.b16 %v1526
  %v2096 = vunpack.c.h.b16 %v1526
  %v2097 = vunpack.c.l.b16 %v1527
  %v2098 = vunpack.c.h.b16 %v1527
  %v2099 = vunpack.c.l.b16 %v1528
  %v2100 = vunpack.c.h.b16 %v1528
  %v2101 = vunpack.c.l.b16 %v1529
  %v2102 = vunpack.c.l.b16 %v1530
  %v2103 = vunpack.c.h.b16 %v1530
  %v2104 = vunpack.c.l.b16 %v1531
  %v2105 = vunpack.c.h.b16 %v1531
  %v2106 = vunpack.c.l.b16 %v1532
  %v2107 = vunpack.c.h.b16 %v1532
  %v2108 = vunpack.c.l.b16 %v1533
  %v2109 = vunpack.c.l.b16 %v1534
  %v2110 = vunpack.c.h.b16 %v1534
  %v2111 = vunpack.c.l.b16 %v1535
  %v2112 = vunpack.c.h.b16 %v1535
  %v2113 = vunpack.c.l.b16 %v1536
  %v2114 = vunpack.c.h.b16 %v1536
  %v2115 = vunpack.c.l.b16 %v1537
  %v2116 = vunpack.c.l.b16 %v1538
  %v2117 = vunpack.c.h.b16 %v1538
  %v2118 = vunpack.c.l.b16 %v1539
  %v2119 = vunpack.c.h.b16 %v1539
  %v2120 = vunpack.c.l.b16 %v1540
  %v2121 = vunpack.c.h.b16 %v1540
  %v2122 = vunpack.c.l.b16 %v1541
  %v2123 = vunpack.c.l.b16 %v1542
  %v2124 = vunpack.c.h.b16 %v1542
  %v2125 = vunpack.c.l.b16 %v1543
  %v2126 = vunpack.c.h.b16 %v1543
  %v2127 = vunpack.c.l.b16 %v1544
  %v2128 = vunpack.c.h.b16 %v1544
  %v2129 = vunpack.c.l.b16 %v1545
  %v2130 = vunpack.c.l.b16 %v1546
  %v2131 = vunpack.c.h.b16 %v1546
  %v2132 = vunpack.c.l.b16 %v1547
  %v2133 = vunpack.c.h.b16 %v1547
  %v2134 = vunpack.c.l.b16 %v1548
  %v2135 = vunpack.c.h.b16 %v1548
  %v2136 = vunpack.c.l.b16 %v1549
  %v2137 = vunpack.c.l.b16 %v1550
  %v2138 = vunpack.c.h.b16 %v1550
  %v2139 = vunpack.c.l.b16 %v1551
  %v2140 = vunpack.c.h.b16 %v1551
  %v2141 = vunpack.c.l.b16 %v1552
  %v2142 = vunpack.c.h.b16 %v1552
  %v2143 = vunpack.c.l.b16 %v1553
  %v2144 = vunpack.c.l.b16 %v1554
  %v2145 = vunpack.c.h.b16 %v1554
  %v2146 = vunpack.c.l.b16 %v1555
  %v2147 = vunpack.c.h.b16 %v1555
  %v2148 = vunpack.c.l.b16 %v1556
  %v2149 = vunpack.c.h.b16 %v1556
  %v2150 = vunpack.c.l.b16 %v1557
  %v2151 = vunpack.c.l.b16 %v1558
  %v2152 = vunpack.c.h.b16 %v1558
  %v2153 = vunpack.c.l.b16 %v1559
  %v2154 = vunpack.c.h.b16 %v1559
  %v2155 = vunpack.c.l.b16 %v1560
  %v2156 = vunpack.c.h.b16 %v1560
  %v2157 = vunpack.c.l.b16 %v1561
  %v2158 = vunpack.c.l.b16 %v1562
  %v2159 = vunpack.c.h.b16 %v1562
  %v2160 = vunpack.c.l.b16 %v1563
  %v2161 = vunpack.c.h.b16 %v1563
  %v2162 = vunpack.c.l.b16 %v1564
  %v2163 = vunpack.c.h.b16 %v1564
  %v2164 = vunpack.c.l.b16 %v1565
  %v2165 = vunpack.c.l.b16 %v1566
  %v2166 = vunpack.c.h.b16 %v1566
  %v2167 = vunpack.c.l.b16 %v1567
  %v2168 = vunpack.c.h.b16 %v1567
  %v2169 = vunpack.c.l.b16 %v1568
  %v2170 = vunpack.c.h.b16 %v1568
  %v2171 = vunpack.c.l.b16 %v1569
  %v2172 = vunpack.c.l.b16 %v1570
  %v2173 = vunpack.c.h.b16 %v1570
  %v2174 = vunpack.c.l.b16 %v1571
  %v2175 = vunpack.c.h.b16 %v1571
  %v2176 = vunpack.c.l.b16 %v1572
  %v2177 = vunpack.c.h.b16 %v1572
  %v2178 = vunpack.c.l.b16 %v1573
  %v2179 = vunpack.c.l.b16 %v1574
  %v2180 = vunpack.c.h.b16 %v1574
  %v2181 = vunpack.c.l.b16 %v1575
  %v2182 = vunpack.c.h.b16 %v1575
  %v2183 = vunpack.c.l.b16 %v1576
  %v2184 = vunpack.c.h.b16 %v1576
  %v2185 = vunpack.c.l.b16 %v1577
  %v2186 = vunpack.c.l.b16 %v1578
  %v2187 = vunpack.c.h.b16 %v1578
  %v2188 = vunpack.c.l.b16 %v1579
  %v2189 = vunpack.c.h.b16 %v1579
  %v2190 = vunpack.c.l.b16 %v1580
  %v2191 = vunpack.c.h.b16 %v1580
  %v2192 = vunpack.c.l.b16 %v1581
  %v2193 = vunpack.c.l.b16 %v1582
  %v2194 = vunpack.c.h.b16 %v1582
  %v2195 = vunpack.c.l.b16 %v1583
  %v2196 = vunpack.c.h.b16 %v1583
  %v2197 = vunpack.c.l.b16 %v1584
  %v2198 = vunpack.c.h.b16 %v1584
  %v2199 = vunpack.c.l.b16 %v1585
  %v2200 = vunpack.c.l.b16 %v1586
  %v2201 = vunpack.c.h.b16 %v1586
  %v2202 = vunpack.c.l.b16 %v1587
  %v2203 = vunpack.c.h.b16 %v1587
  %v2204 = vunpack.c.l.b16 %v1588
  %v2205 = vunpack.c.h.b16 %v1588
  %v2206 = vunpack.c.l.b16 %v1589
  %v2207 = vunpack.c.l.b16 %v1590
  %v2208 = vunpack.c.h.b16 %v1590
  %v2209 = vunpack.c.l.b16 %v1591
  %v2210 = vunpack.c.h.b16 %v1591
  %v2211 = vunpack.c.l.b16 %v1592
  %v2212 = vunpack.c.h.b16 %v1592
  %v2213 = vunpack.c.l.b16 %v1593
  %v2214 = vunpack.c.l.b16 %v1594
  %v2215 = vunpack.c.h.b16 %v1594
  %v2216 = vunpack.c.l.b16 %v1595
  %v2217 = vunpack.c.h.b16 %v1595
  %v2218 = vunpack.c.l.b16 %v1596
  %v2219 = vunpack.c.h.b16 %v1596
  %v2220 = vunpack.c.l.b16 %v1597
  %v2221 = vunpack.c.l.b16 %v1598
  %v2222 = vunpack.c.h.b16 %v1598
  %v2223 = vunpack.c.l.b16 %v1599
  %v2224 = vunpack.c.h.b16 %v1599
  %v2225 = vunpack.c.l.b16 %v1600
  %v2226 = vunpack.c.h.b16 %v1600
  %v2227 = vunpack.c.l.b16 %v1601
  %v2228 = vunpack.c.l.b16 %v1602
  %v2229 = vunpack.c.h.b16 %v1602
  %v2230 = vunpack.c.l.b16 %v1603
  %v2231 = vunpack.c.h.b16 %v1603
  %v2232 = vunpack.c.l.b16 %v1604
  %v2233 = vunpack.c.h.b16 %v1604
  %v2234 = vunpack.c.l.b16 %v1605
  %v2235 = vunpack.c.l.b16 %v1606
  %v2236 = vunpack.c.h.b16 %v1606
  %v2237 = vunpack.c.l.b16 %v1607
  %v2238 = vunpack.c.h.b16 %v1607
  %v2239 = vunpack.c.l.b16 %v1608
  %v2240 = vunpack.c.h.b16 %v1608
  %v2241 = vunpack.c.l.b16 %v1609
  %v2242 = vunpack.c.l.b16 %v1610
  %v2243 = vunpack.c.h.b16 %v1610
  %v2244 = vunpack.c.l.b16 %v1611
  %v2245 = vunpack.c.h.b16 %v1611
  %v2246 = vunpack.c.l.b16 %v1612
  %v2247 = vunpack.c.h.b16 %v1612
  %v2248 = vunpack.c.l.b16 %v1613
  %v2249 = vunpack.c.l.b16 %v1614
  %v2250 = vunpack.c.h.b16 %v1614
  %v2251 = vunpack.c.l.b16 %v1615
  %v2252 = vunpack.c.h.b16 %v1615
  %v2253 = vunpack.c.l.b16 %v1616
  %v2254 = vunpack.c.h.b16 %v1616
  %v2255 = vunpack.c.l.b16 %v1617
  %v2256 = vunpack.c.l.b16 %v1618
  %v2257 = vunpack.c.h.b16 %v1618
  %v2258 = vunpack.c.l.b16 %v1619
  %v2259 = vunpack.c.h.b16 %v1619
  %v2260 = vunpack.c.l.b16 %v1620
  %v2261 = vunpack.c.h.b16 %v1620
  %v2262 = vunpack.c.l.b16 %v1621
  %v2263 = vunpack.c.l.b16 %v1622
  %v2264 = vunpack.c.h.b16 %v1622
  %v2265 = vunpack.c.l.b16 %v1623
  %v2266 = vunpack.c.h.b16 %v1623
  %v2267 = vunpack.c.l.b16 %v1624
  %v2268 = vunpack.c.h.b16 %v1624
  %v2269 = vunpack.c.l.b16 %v1625
  %v2270 = vunpack.c.l.b16 %v1626
  %v2271 = vunpack.c.h.b16 %v1626
  %v2272 = vunpack.c.l.b16 %v1627
  %v2273 = vunpack.c.h.b16 %v1627
  %v2274 = vunpack.c.l.b16 %v1628
  %v2275 = vunpack.c.h.b16 %v1628
  %v2276 = vunpack.c.l.b16 %v1629
  %v2277 = vunpack.c.l.b16 %v1630
  %v2278 = vunpack.c.h.b16 %v1630
  %v2279 = vunpack.c.l.b16 %v1631
  %v2280 = vunpack.c.h.b16 %v1631
  %v2281 = vunpack.c.l.b16 %v1632
  %v2282 = vunpack.c.h.b16 %v1632
  %v2283 = vunpack.c.l.b16 %v1633
  %v2284 = vunpack.c.l.b16 %v1634
  %v2285 = vunpack.c.h.b16 %v1634
  %v2286 = vunpack.c.l.b16 %v1635
  %v2287 = vunpack.c.h.b16 %v1635
  %v2288 = vunpack.c.l.b16 %v1636
  %v2289 = vunpack.c.h.b16 %v1636
  %v2290 = vunpack.c.l.b16 %v1637
  %v2291 = vunpack.c.l.b16 %v1638
  %v2292 = vunpack.c.h.b16 %v1638
  %v2293 = vunpack.c.l.b16 %v1639
  %v2294 = vunpack.c.h.b16 %v1639
  %v2295 = vunpack.c.l.b16 %v1640
  %v2296 = vunpack.c.h.b16 %v1640
  %v2297 = vunpack.c.l.b16 %v1641
  %v2298 = vunpack.c.l.b16 %v1642
  %v2299 = vunpack.c.h.b16 %v1642
  %v2300 = vunpack.c.l.b16 %v1643
  %v2301 = vunpack.c.h.b16 %v1643
  %v2302 = vunpack.c.l.b16 %v1644
  %v2303 = vunpack.c.h.b16 %v1644
  %v2304 = vunpack.c.l.b16 %v1645
  %v2305 = vunpack.c.l.b16 %v1646
  %v2306 = vunpack.c.h.b16 %v1646
  %v2307 = vunpack.c.l.b16 %v1647
  %v2308 = vunpack.c.h.b16 %v1647
  %v2309 = vunpack.c.l.b16 %v1648
  %v2310 = vunpack.c.h.b16 %v1648
  %v2311 = vunpack.c.l.b16 %v1649
  %v2312 = vunpack.c.l.b16 %v1650
  %v2313 = vunpack.c.h.b16 %v1650
  %v2314 = vunpack.c.l.b16 %v1651
  %v2315 = vunpack.c.h.b16 %v1651
  %v2316 = vunpack.c.l.b16 %v1652
  %v2317 = vunpack.c.h.b16 %v1652
  %v2318 = vunpack.c.l.b16 %v1653
  %v2319 = vunpack.c.l.b16 %v1654
  %v2320 = vunpack.c.h.b16 %v1654
  %v2321 = vunpack.c.l.b16 %v1655
  %v2322 = vunpack.c.h.b16 %v1655
  %v2323 = vunpack.c.l.b16 %v1656
  %v2324 = vunpack.c.h.b16 %v1656
  %v2325 = vunpack.c.l.b16 %v1657
  %v2326 = vunpack.c.l.b16 %v1658
  %v2327 = vunpack.c.h.b16 %v1658
  %v2328 = vunpack.c.l.b16 %v1659
  %v2329 = vunpack.c.h.b16 %v1659
  %v2330 = vunpack.c.l.b16 %v1660
  %v2331 = vunpack.c.h.b16 %v1660
  %v2332 = vunpack.c.l.b16 %v1661
  %v2333 = vunpack.c.l.b16 %v1662
  %v2334 = vunpack.c.h.b16 %v1662
  %v2335 = vunpack.c.l.b16 %v1663
  %v2336 = vunpack.c.h.b16 %v1663
  %v2337 = vunpack.c.l.b16 %v1664
  %v2338 = vunpack.c.h.b16 %v1664
  %v2339 = vunpack.c.l.b16 %v1665
  %v2340 = vunpack.c.l.b16 %v1666
  %v2341 = vunpack.c.h.b16 %v1666
  %v2342 = vunpack.c.l.b16 %v1667
  %v2343 = vunpack.c.h.b16 %v1667
  %v2344 = vunpack.c.l.b16 %v1668
  %v2345 = vunpack.c.h.b16 %v1668
  %v2346 = vunpack.c.l.b16 %v1669
  %v2347 = vunpack.c.l.b16 %v1670
  %v2348 = vunpack.c.h.b16 %v1670
  %v2349 = vunpack.c.l.b16 %v1671
  %v2350 = vunpack.c.h.b16 %v1671
  %v2351 = vunpack.c.l.b16 %v1672
  %v2352 = vunpack.c.h.b16 %v1672
  %v2353 = vunpack.c.l.b16 %v1673
  %v2354 = vunpack.c.l.b16 %v1674
  %v2355 = vunpack.c.h.b16 %v1674
  %v2356 = vunpack.c.l.b16 %v1675
  %v2357 = vunpack.c.h.b16 %v1675
  %v2358 = vunpack.c.l.b16 %v1676
  %v2359 = vunpack.c.h.b16 %v1676
  %v2360 = vunpack.c.l.b16 %v1677
  %v2361 = vunpack.c.l.b16 %v1678
  %v2362 = vunpack.c.h.b16 %v1678
  %v2363 = vunpack.c.l.b16 %v1679
  %v2364 = vunpack.c.h.b16 %v1679
  %v2365 = vunpack.c.l.b16 %v1680
  %v2366 = vunpack.c.h.b16 %v1680
  %v2367 = vunpack.c.l.b16 %v1681
  %v2368 = vunpack.c.l.b16 %v1682
  %v2369 = vunpack.c.h.b16 %v1682
  %v2370 = vunpack.c.l.b16 %v1683
  %v2371 = vunpack.c.h.b16 %v1683
  %v2372 = vunpack.c.l.b16 %v1684
  %v2373 = vunpack.c.h.b16 %v1684
  %v2374 = vunpack.c.l.b16 %v1685
  %v2375 = vunpack.c.l.b16 %v1686
  %v2376 = vunpack.c.h.b16 %v1686
  %v2377 = vunpack.c.l.b16 %v1687
  %v2378 = vunpack.c.h.b16 %v1687
  %v2379 = vunpack.c.l.b16 %v1688
  %v2380 = vunpack.c.h.b16 %v1688
  %v2381 = vunpack.c.l.b16 %v1689
  %v2382 = vunpack.c.l.b16 %v1690
  %v2383 = vunpack.c.h.b16 %v1690
  %v2384 = vunpack.c.l.b16 %v1691
  %v2385 = vunpack.c.h.b16 %v1691
  %v2386 = vunpack.c.l.b16 %v1692
  %v2387 = vunpack.c.h.b16 %v1692
  %v2388 = vunpack.c.l.b16 %v1693
  %v2389 = vunpack.c.l.b16 %v1694
  %v2390 = vunpack.c.h.b16 %v1694
  %v2391 = vunpack.c.l.b16 %v1695
  %v2392 = vunpack.c.h.b16 %v1695
  %v2393 = vunpack.c.l.b16 %v1696
  %v2394 = vunpack.c.h.b16 %v1696
  %v2395 = vunpack.c.l.b16 %v1697
  %v2396 = vunpack.c.l.b16 %v1698
  %v2397 = vunpack.c.h.b16 %v1698
  %v2398 = vunpack.c.l.b16 %v1699
  %v2399 = vunpack.c.h.b16 %v1699
  %v2400 = vunpack.c.l.b16 %v1700
  %v2401 = vunpack.c.h.b16 %v1700
  %v2402 = vunpack.c.l.b16 %v1701
  %v2403 = vunpack.c.l.b16 %v1702
  %v2404 = vunpack.c.h.b16 %v1702
  %v2405 = vunpack.c.l.b16 %v1703
  %v2406 = vunpack.c.h.b16 %v1703
  %v2407 = vunpack.c.l.b16 %v1704
  %v2408 = vunpack.c.h.b16 %v1704
  %v2409 = vunpack.c.l.b16 %v1705
  %v2410 = vpack.c.b16 %v1969, %v1962
  %v2411 = vpack.c.b16 %v1970, %v1963
  %v2412 = vpack.c.b16 %v1971, %v1964
  %v2413 = vpack.c.b16 %v1972, %v1965
  %v2414 = vpack.c.b16 %v1973, %v1966
  %v2415 = vpack.c.b16 %v1974, %v1967
  %v2416 = vpack.c.b16 %v1975, %v1968
  %v2417 = vpack.c.b16 %v1983, %v1976
  %v2418 = vpack.c.b16 %v1984, %v1977
  %v2419 = vpack.c.b16 %v1985, %v1978
  %v2420 = vpack.c.b16 %v1986, %v1979
  %v2421 = vpack.c.b16 %v1987, %v1980
  %v2422 = vpack.c.b16 %v1988, %v1981
  %v2423 = vpack.c.b16 %v1989, %v1982
  %v2424 = vpack.c.b16 %v1997, %v1990
  %v2425 = vpack.c.b16 %v1998, %v1991
  %v2426 = vpack.c.b16 %v1999, %v1992
  %v2427 = vpack.c.b16 %v2000, %v1993
  %v2428 = vpack.c.b16 %v2001, %v1994
  %v2429 = vpack.c.b16 %v2002, %v1995
  %v2430 = vpack.c.b16 %v2003, %v1996
  %v2431 = vpack.c.b16 %v2011, %v2004
  %v2432 = vpack.c.b16 %v2012, %v2005
  %v2433 = vpack.c.b16 %v2013, %v2006
  %v2434 = vpack.c.b16 %v2014, %v2007
  %v2435 = vpack.c.b16 %v2015, %v2008
  %v2436 = vpack.c.b16 %v2016, %v2009
  %v2437 = vpack.c.b16 %v2017, %v2010
  %v2438 = vpack.c.b16 %v2025, %v2018
  %v2439 = vpack.c.b16 %v2026, %v2019
  %v2440 = vpack.c.b16 %v2027, %v2020
  %v2441 = vpack.c.b16 %v2028, %v2021
  %v2442 = vpack.c.b16 %v2029, %v2022
  %v2443 = vpack.c.b16 %v2030, %v2023
  %v2444 = vpack.c.b16 %v2031, %v2024
  %v2445 = vpack.c.b16 %v2039, %v2032
  %v2446 = vpack.c.b16 %v2040, %v2033
  %v2447 = vpack.c.b16 %v2041, %v2034
  %v2448 = vpack.c.b16 %v2042, %v2035
  %v2449 = vpack.c.b16 %v2043, %v2036
  %v2450 = vpack.c.b16 %v2044, %v2037
  %v2451 = vpack.c.b16 %v2045, %v2038
  %v2452 = vpack.c.b16 %v2053, %v2046
  %v2453 = vpack.c.b16 %v2054, %v2047
  %v2454 = vpack.c.b16 %v2055, %v2048
  %v2455 = vpack.c.b16 %v2056, %v2049
  %v2456 = vpack.c.b16 %v2057, %v2050
  %v2457 = vpack.c.b16 %v2058, %v2051
  %v2458 = vpack.c.b16 %v2059, %v2052
  %v2459 = vpack.c.b16 %v2067, %v2060
  %v2460 = vpack.c.b16 %v2068, %v2061
  %v2461 = vpack.c.b16 %v2069, %v2062
  %v2462 = vpack.c.b16 %v2070, %v2063
  %v2463 = vpack.c.b16 %v2071, %v2064
  %v2464 = vpack.c.b16 %v2072, %v2065
  %v2465 = vpack.c.b16 %v2073, %v2066
  %v2466 = vpack.c.b16 %v2081, %v2074
  %v2467 = vpack.c.b16 %v2082, %v2075
  %v2468 = vpack.c.b16 %v2083, %v2076
  %v2469 = vpack.c.b16 %v2084, %v2077
  %v2470 = vpack.c.b16 %v2085, %v2078
  %v2471 = vpack.c.b16 %v2086, %v2079
  %v2472 = vpack.c.b16 %v2087, %v2080
  %v2473 = vpack.c.b16 %v2095, %v2088
  %v2474 = vpack.c.b16 %v2096, %v2089
  %v2475 = vpack.c.b16 %v2097, %v2090
  %v2476 = vpack.c.b16 %v2098, %v2091
  %v2477 = vpack.c.b16 %v2099, %v2092
  %v2478 = vpack.c.b16 %v2100, %v2093
  %v2479 = vpack.c.b16 %v2101, %v2094
  %v2480 = vpack.c.b16 %v2109, %v2102
  %v2481 = vpack.c.b16 %v2110, %v2103
  %v2482 = vpack.c.b16 %v2111, %v2104
  %v2483 = vpack.c.b16 %v2112, %v2105
  %v2484 = vpack.c.b16 %v2113, %v2106
  %v2485 = vpack.c.b16 %v2114, %v2107
  %v2486 = vpack.c.b16 %v2115, %v2108
  %v2487 = vpack.c.b16 %v2123, %v2116
  %v2488 = vpack.c.b16 %v2124, %v2117
  %v2489 = vpack.c.b16 %v2125, %v2118
  %v2490 = vpack.c.b16 %v2126, %v2119
  %v2491 = vpack.c.b16 %v2127, %v2120
  %v2492 = vpack.c.b16 %v2128, %v2121
  %v2493 = vpack.c.b16 %v2129, %v2122
  %v2494 = vpack.c.b16 %v2137, %v2130
  %v2495 = vpack.c.b16 %v2138, %v2131
  %v2496 = vpack.c.b16 %v2139, %v2132
  %v2497 = vpack.c.b16 %v2140, %v2133
  %v2498 = vpack.c.b16 %v2141, %v2134
  %v2499 = vpack.c.b16 %v2142, %v2135
  %v2500 = vpack.c.b16 %v2143, %v2136
  %v2501 = vpack.c.b16 %v2151, %v2144
  %v2502 = vpack.c.b16 %v2152, %v2145
  %v2503 = vpack.c.b16 %v2153, %v2146
  %v2504 = vpack.c.b16 %v2154, %v2147
  %v2505 = vpack.c.b16 %v2155, %v2148
  %v2506 = vpack.c.b16 %v2156, %v2149
  %v2507 = vpack.c.b16 %v2157, %v2150
  %v2508 = vpack.c.b16 %v2165, %v2158
  %v2509 = vpack.c.b16 %v2166, %v2159
  %v2510 = vpack.c.b16 %v2167, %v2160
  %v2511 = vpack.c.b16 %v2168, %v2161
  %v2512 = vpack.c.b16 %v2169, %v2162
  %v2513 = vpack.c.b16 %v2170, %v2163
  %v2514 = vpack.c.b16 %v2171, %v2164
  %v2515 = vpack.c.b16 %v2179, %v2172
  %v2516 = vpack.c.b16 %v2180, %v2173
  %v2517 = vpack.c.b16 %v2181, %v2174
  %v2518 = vpack.c.b16 %v2182, %v2175
  %v2519 = vpack.c.b16 %v2183, %v2176
  %v2520 = vpack.c.b16 %v2184, %v2177
  %v2521 = vpack.c.b16 %v2185, %v2178
  %v2522 = vpack.c.b16 %v2193, %v2186
  %v2523 = vpack.c.b16 %v2194, %v2187
  %v2524 = vpack.c.b16 %v2195, %v2188
  %v2525 = vpack.c.b16 %v2196, %v2189
  %v2526 = vpack.c.b16 %v2197, %v2190
  %v2527 = vpack.c.b16 %v2198, %v2191
  %v2528 = vpack.c.b16 %v2199, %v2192
  %v2529 = vpack.c.b16 %v2207, %v2200
  %v2530 = vpack.c.b16 %v2208, %v2201
  %v2531 = vpack.c.b16 %v2209, %v2202
  %v2532 = vpack.c.b16 %v2210, %v2203
  %v2533 = vpack.c.b16 %v2211, %v2204
  %v2534 = vpack.c.b16 %v2212, %v2205
  %v2535 = vpack.c.b16 %v2213, %v2206
  %v2536 = vpack.c.b16 %v2221, %v2214
  %v2537 = vpack.c.b16 %v2222, %v2215
  %v2538 = vpack.c.b16 %v2223, %v2216
  %v2539 = vpack.c.b16 %v2224, %v2217
  %v2540 = vpack.c.b16 %v2225, %v2218
  %v2541 = vpack.c.b16 %v2226, %v2219
  %v2542 = vpack.c.b16 %v2227, %v2220
  %v2543 = vpack.c.b16 %v2235, %v2228
  %v2544 = vpack.c.b16 %v2236, %v2229
  %v2545 = vpack.c.b16 %v2237, %v2230
  %v2546 = vpack.c.b16 %v2238, %v2231
  %v2547 = vpack.c.b16 %v2239, %v2232
  %v2548 = vpack.c.b16 %v2240, %v2233
  %v2549 = vpack.c.b16 %v2241, %v2234
  %v2550 = vpack.c.b16 %v2249, %v2242
  %v2551 = vpack.c.b16 %v2250, %v2243
  %v2552 = vpack.c.b16 %v2251, %v2244
  %v2553 = vpack.c.b16 %v2252, %v2245
  %v2554 = vpack.c.b16 %v2253, %v2246
  %v2555 = vpack.c.b16 %v2254, %v2247
  %v2556 = vpack.c.b16 %v2255, %v2248
  %v2557 = vpack.c.b16 %v2263, %v2256
  %v2558 = vpack.c.b16 %v2264, %v2257
  %v2559 = vpack.c.b16 %v2265, %v2258
  %v2560 = vpack.c.b16 %v2266, %v2259
  %v2561 = vpack.c.b16 %v2267, %v2260
  %v2562 = vpack.c.b16 %v2268, %v2261
  %v2563 = vpack.c.b16 %v2269, %v2262
  %v2564 = vpack.c.b16 %v2277, %v2270
  %v2565 = vpack.c.b16 %v2278, %v2271
  %v2566 = vpack.c.b16 %v2279, %v2272
  %v2567 = vpack.c.b16 %v2280, %v2273
  %v2568 = vpack.c.b16 %v2281, %v2274
  %v2569 = vpack.c.b16 %v2282, %v2275
  %v2570 = vpack.c.b16 %v2283, %v2276
  %v2571 = vpack.c.b16 %v2291, %v2284
  %v2572 = vpack.c.b16 %v2292, %v2285
  %v2573 = vpack.c.b16 %v2293, %v2286
  %v2574 = vpack.c.b16 %v2294, %v2287
  %v2575 = vpack.c.b16 %v2295, %v2288
  %v2576 = vpack.c.b16 %v2296, %v2289
  %v2577 = vpack.c.b16 %v2297, %v2290
  %v2578 = vpack.c.b16 %v2305, %v2298
  %v2579 = vpack.c.b16 %v2306, %v2299
  %v2580 = vpack.c.b16 %v2307, %v2300
  %v2581 = vpack.c.b16 %v2308, %v2301
  %v2582 = vpack.c.b16 %v2309, %v2302
  %v2583 = vpack.c.b16 %v2310, %v2303
  %v2584 = vpack.c.b16 %v2311, %v2304
  %v2585 = vpack.c.b16 %v2319, %v2312
  %v2586 = vpack.c.b16 %v2320, %v2313
  %v2587 = vpack.c.b16 %v2321, %v2314
  %v2588 = vpack.c.b16 %v2322, %v2315
  %v2589 = vpack.c.b16 %v2323, %v2316
  %v2590 = vpack.c.b16 %v2324, %v2317
  %v2591 = vpack.c.b16 %v2325, %v2318
  %v2592 = vpack.c.b16 %v2333, %v2326
  %v2593 = vpack.c.b16 %v2334, %v2327
  %v2594 = vpack.c.b16 %v2335, %v2328
  %v2595 = vpack.c.b16 %v2336, %v2329
  %v2596 = vpack.c.b16 %v2337, %v2330
  %v2597 = vpack.c.b16 %v2338, %v2331
  %v2598 = vpack.c.b16 %v2339, %v2332
  %v2599 = vpack.c.b16 %v2347, %v2340
  %v2600 = vpack.c.b16 %v2348, %v2341
  %v2601 = vpack.c.b16 %v2349, %v2342
  %v2602 = vpack.c.b16 %v2350, %v2343
  %v2603 = vpack.c.b16 %v2351, %v2344
  %v2604 = vpack.c.b16 %v2352, %v2345
  %v2605 = vpack.c.b16 %v2353, %v2346
  %v2606 = vpack.c.b16 %v2361, %v2354
  %v2607 = vpack.c.b16 %v2362, %v2355
  %v2608 = vpack.c.b16 %v2363, %v2356
  %v2609 = vpack.c.b16 %v2364, %v2357
  %v2610 = vpack.c.b16 %v2365, %v2358
  %v2611 = vpack.c.b16 %v2366, %v2359
  %v2612 = vpack.c.b16 %v2367, %v2360
  %v2613 = vpack.c.b16 %v2375, %v2368
  %v2614 = vpack.c.b16 %v2376, %v2369
  %v2615 = vpack.c.b16 %v2377, %v2370
  %v2616 = vpack.c.b16 %v2378, %v2371
  %v2617 = vpack.c.b16 %v2379, %v2372
  %v2618 = vpack.c.b16 %v2380, %v2373
  %v2619 = vpack.c.b16 %v2381, %v2374
  %v2620 = vpack.c.b16 %v2389, %v2382
  %v2621 = vpack.c.b16 %v2390, %v2383
  %v2622 = vpack.c.b16 %v2391, %v2384
  %v2623 = vpack.c.b16 %v2392, %v2385
  %v2624 = vpack.c.b16 %v2393, %v2386
  %v2625 = vpack.c.b16 %v2394, %v2387
  %v2626 = vpack.c.b16 %v2395, %v2388
  %v2627 = vpack.c.b16 %v2403, %v2396
  %v2628 = vpack.c.b16 %v2404, %v2397
  %v2629 = vpack.c.b16 %v2405, %v2398
  %v2630 = vpack.c.b16 %v2406, %v2399
  %v2631 = vpack.c.b16 %v2407, %v2400
  %v2632 = vpack.c.b16 %v2408, %v2401
  %v2633 = vpack.c.b16 %v2409, %v2402
  %2858 = vmatprep.subr.bf16.mxu0 %v2411
  %2859 = vmatpush1.bf16.msra.mxu0 %v2410
  %2860 = vmatprep.subr.bf16.mxu0 %v2418
  %2861 = vmatpush1.bf16.msra.mxu0 %v2417
  %2862 = vmatprep.subr.bf16.mxu0 %v2425
  %2863 = vmatpush1.bf16.msra.mxu0 %v2424
  %2864 = vmatprep.subr.bf16.mxu0 %v2432
  %2865 = vmatpush1.bf16.msra.mxu0 %v2431
  %2866 = vmatprep.subr.bf16.mxu0 %v2439
  %2867 = vmatpush1.bf16.msra.mxu0 %v2438
  %2868 = vmatprep.subr.bf16.mxu0 %v2446
  %2869 = vmatpush1.bf16.msra.mxu0 %v2445
  %2870 = vmatprep.subr.bf16.mxu0 %v2453
  %2871 = vmatpush1.bf16.msra.mxu0 %v2452
  %2872 = vmatprep.subr.bf16.mxu0 %v2460
  %2873 = vmatpush1.bf16.msra.mxu0 %v2459
  %2874 = vmatprep.subr.bf16.mxu0 %v2467
  %2875 = vmatpush1.bf16.msra.mxu0 %v2466
  %2876 = vmatprep.subr.bf16.mxu0 %v2474
  %2877 = vmatpush1.bf16.msra.mxu0 %v2473
  %2878 = vmatprep.subr.bf16.mxu0 %v2481
  %2879 = vmatpush1.bf16.msra.mxu0 %v2480
  %2880 = vmatprep.subr.bf16.mxu0 %v2488
  %2881 = vmatpush1.bf16.msra.mxu0 %v2487
  %2882 = vmatprep.subr.bf16.mxu0 %v2495
  %2883 = vmatpush1.bf16.msra.mxu0 %v2494
  %2884 = vmatprep.subr.bf16.mxu0 %v2502
  %2885 = vmatpush1.bf16.msra.mxu0 %v2501
  %2886 = vmatprep.subr.bf16.mxu0 %v2509
  %2887 = vmatpush1.bf16.msra.mxu0 %v2508
  %2888 = vmatprep.subr.bf16.mxu0 %v2516
  %2889 = vmatpush1.bf16.msra.mxu0 %v2515
  %2890 = vmatprep.mubr.bf16.mxu0 %v1447
  %2891 = vmatmul.mubr.bf16.gmra.mrb[0].mxu0 %v1446
  %v2892 = vpop.f32.mrb[0].mxu0
  %v2893 = vadd.f32 0.0, %v2892
  %v2894 = vpop.f32.mrb[0].mxu0
  %v2895 = vadd.f32 0.0, %v2894
  %v2896 = vpop.f32.mrb[0].mxu0
  %v2897 = vpop.f32.mrb[0].mxu0
  %2898 = vdwg.mxu0
  %2899 = vmatprep.subr.bf16.mxu0 %v2523
  %2900 = vmatpush1.bf16.msra.mxu0 %v2522
  %2901 = vmatprep.subr.bf16.mxu0 %v2530
  %2902 = vmatpush1.bf16.msra.mxu0 %v2529
  %2903 = vmatprep.subr.bf16.mxu0 %v2537
  %2904 = vmatpush1.bf16.msra.mxu0 %v2536
  %2905 = vmatprep.subr.bf16.mxu0 %v2544
  %2906 = vmatpush1.bf16.msra.mxu0 %v2543
  %2907 = vmatprep.subr.bf16.mxu0 %v2551
  %2908 = vmatpush1.bf16.msra.mxu0 %v2550
  %2909 = vmatprep.subr.bf16.mxu0 %v2558
  %2910 = vmatpush1.bf16.msra.mxu0 %v2557
  %2911 = vmatprep.subr.bf16.mxu0 %v2565
  %2912 = vmatpush1.bf16.msra.mxu0 %v2564
  %2913 = vmatprep.subr.bf16.mxu0 %v2572
  %2914 = vmatpush1.bf16.msra.mxu0 %v2571
  %2915 = vmatprep.subr.bf16.mxu0 %v2579
  %2916 = vmatpush1.bf16.msra.mxu0 %v2578
  %2917 = vmatprep.subr.bf16.mxu0 %v2586
  %2918 = vmatpush1.bf16.msra.mxu0 %v2585
  %2919 = vmatprep.subr.bf16.mxu0 %v2593
  %2920 = vmatpush1.bf16.msra.mxu0 %v2592
  %2921 = vmatprep.subr.bf16.mxu0 %v2600
  %2922 = vmatpush1.bf16.msra.mxu0 %v2599
  %2923 = vmatprep.subr.bf16.mxu0 %v2607
  %2924 = vmatpush1.bf16.msra.mxu0 %v2606
  %2925 = vmatprep.subr.bf16.mxu0 %v2614
  %2926 = vmatpush1.bf16.msra.mxu0 %v2613
  %2927 = vmatprep.subr.bf16.mxu0 %v2621
  %2928 = vmatpush1.bf16.msra.mxu0 %v2620
  %2929 = vmatprep.subr.bf16.mxu0 %v2628
  %2930 = vmatpush1.bf16.msra.mxu0 %v2627
  %2931 = vmatprep.mubr.bf16.mxu0 %v1449
  %2932 = vmatmul.mubr.bf16.gmra.mrb[0].mxu0 %v1448
  %v2933 = vpop.f32.mrb[0].mxu0
  %v2934 = vadd.f32 %v2893, %v2933
  %v2935 = vpop.f32.mrb[0].mxu0
  %v2936 = vadd.f32 %v2895, %v2935
  %v2937 = vpop.f32.mrb[0].mxu0
  %v2938 = vpop.f32.mrb[0].mxu0
  %2939 = vdwg.mxu0
  %2940 = vmatprep.subr.bf16.mxu0 %v2413
  %2941 = vmatpush1.bf16.msra.mxu0 %v2412
  %2942 = vmatprep.subr.bf16.mxu0 %v2420
  %2943 = vmatpush1.bf16.msra.mxu0 %v2419
  %2944 = vmatprep.subr.bf16.mxu0 %v2427
  %2945 = vmatpush1.bf16.msra.mxu0 %v2426
  %2946 = vmatprep.subr.bf16.mxu0 %v2434
  %2947 = vmatpush1.bf16.msra.mxu0 %v2433
  %2948 = vmatprep.subr.bf16.mxu0 %v2441
  %2949 = vmatpush1.bf16.msra.mxu0 %v2440
  %2950 = vmatprep.subr.bf16.mxu0 %v2448
  %2951 = vmatpush1.bf16.msra.mxu0 %v2447
  %2952 = vmatprep.subr.bf16.mxu0 %v2455
  %2953 = vmatpush1.bf16.msra.mxu0 %v2454
  %2954 = vmatprep.subr.bf16.mxu0 %v2462
  %2955 = vmatpush1.bf16.msra.mxu0 %v2461
  %2956 = vmatprep.subr.bf16.mxu0 %v2469
  %2957 = vmatpush1.bf16.msra.mxu0 %v2468
  %2958 = vmatprep.subr.bf16.mxu0 %v2476
  %2959 = vmatpush1.bf16.msra.mxu0 %v2475
  %2960 = vmatprep.subr.bf16.mxu0 %v2483
  %2961 = vmatpush1.bf16.msra.mxu0 %v2482
  %2962 = vmatprep.subr.bf16.mxu0 %v2490
  %2963 = vmatpush1.bf16.msra.mxu0 %v2489
  %2964 = vmatprep.subr.bf16.mxu0 %v2497
  %2965 = vmatpush1.bf16.msra.mxu0 %v2496
  %2966 = vmatprep.subr.bf16.mxu0 %v2504
  %2967 = vmatpush1.bf16.msra.mxu0 %v2503
  %2968 = vmatprep.subr.bf16.mxu0 %v2511
  %2969 = vmatpush1.bf16.msra.mxu0 %v2510
  %2970 = vmatprep.subr.bf16.mxu0 %v2518
  %2971 = vmatpush1.bf16.msra.mxu0 %v2517
  %2972 = vmatprep.mubr.bf16.mxu0 %v1447
  %2973 = vmatmul.mubr.bf16.gmra.mrb[0].mxu0 %v1446
  %v2974 = vpop.f32.mrb[0].mxu0
  %v2975 = vadd.f32 0.0, %v2974
  %v2976 = vpop.f32.mrb[0].mxu0
  %v2977 = vadd.f32 0.0, %v2976
  %v2978 = vpop.f32.mrb[0].mxu0
  %v2979 = vpop.f32.mrb[0].mxu0
  %2980 = vdwg.mxu0
  %2981 = vmatprep.subr.bf16.mxu0 %v2525
  %2982 = vmatpush1.bf16.msra.mxu0 %v2524
  %2983 = vmatprep.subr.bf16.mxu0 %v2532
  %2984 = vmatpush1.bf16.msra.mxu0 %v2531
  %2985 = vmatprep.subr.bf16.mxu0 %v2539
  %2986 = vmatpush1.bf16.msra.mxu0 %v2538
  %2987 = vmatprep.subr.bf16.mxu0 %v2546
  %2988 = vmatpush1.bf16.msra.mxu0 %v2545
  %2989 = vmatprep.subr.bf16.mxu0 %v2553
  %2990 = vmatpush1.bf16.msra.mxu0 %v2552
  %2991 = vmatprep.subr.bf16.mxu0 %v2560
  %2992 = vmatpush1.bf16.msra.mxu0 %v2559
  %2993 = vmatprep.subr.bf16.mxu0 %v2567
  %2994 = vmatpush1.bf16.msra.mxu0 %v2566
  %2995 = vmatprep.subr.bf16.mxu0 %v2574
  %2996 = vmatpush1.bf16.msra.mxu0 %v2573
  %2997 = vmatprep.subr.bf16.mxu0 %v2581
  %2998 = vmatpush1.bf16.msra.mxu0 %v2580
  %2999 = vmatprep.subr.bf16.mxu0 %v2588
  %3000 = vmatpush1.bf16.msra.mxu0 %v2587
  %3001 = vmatprep.subr.bf16.mxu0 %v2595
  %3002 = vmatpush1.bf16.msra.mxu0 %v2594
  %3003 = vmatprep.subr.bf16.mxu0 %v2602
  %3004 = vmatpush1.bf16.msra.mxu0 %v2601
  %3005 = vmatprep.subr.bf16.mxu0 %v2609
  %3006 = vmatpush1.bf16.msra.mxu0 %v2608
  %3007 = vmatprep.subr.bf16.mxu0 %v2616
  %3008 = vmatpush1.bf16.msra.mxu0 %v2615
  %3009 = vmatprep.subr.bf16.mxu0 %v2623
  %3010 = vmatpush1.bf16.msra.mxu0 %v2622
  %3011 = vmatprep.subr.bf16.mxu0 %v2630
  %3012 = vmatpush1.bf16.msra.mxu0 %v2629
  %3013 = vmatprep.mubr.bf16.mxu0 %v1449
  %3014 = vmatmul.mubr.bf16.gmra.mrb[0].mxu0 %v1448
  %v3015 = vpop.f32.mrb[0].mxu0
  %v3016 = vadd.f32 %v2975, %v3015
  %v3017 = vpop.f32.mrb[0].mxu0
  %v3018 = vadd.f32 %v2977, %v3017
  %v3019 = vpop.f32.mrb[0].mxu0
  %v3020 = vpop.f32.mrb[0].mxu0
  %3021 = vdwg.mxu0
  %3022 = vmatprep.subr.bf16.mxu0 %v2415
  %3023 = vmatpush1.bf16.msra.mxu0 %v2414
  %3024 = vmatprep.subr.bf16.mxu0 %v2422
  %3025 = vmatpush1.bf16.msra.mxu0 %v2421
  %3026 = vmatprep.subr.bf16.mxu0 %v2429
  %3027 = vmatpush1.bf16.msra.mxu0 %v2428
  %3028 = vmatprep.subr.bf16.mxu0 %v2436
  %3029 = vmatpush1.bf16.msra.mxu0 %v2435
  %3030 = vmatprep.subr.bf16.mxu0 %v2443
  %3031 = vmatpush1.bf16.msra.mxu0 %v2442
  %3032 = vmatprep.subr.bf16.mxu0 %v2450
  %3033 = vmatpush1.bf16.msra.mxu0 %v2449
  %3034 = vmatprep.subr.bf16.mxu0 %v2457
  %3035 = vmatpush1.bf16.msra.mxu0 %v2456
  %3036 = vmatprep.subr.bf16.mxu0 %v2464
  %3037 = vmatpush1.bf16.msra.mxu0 %v2463
  %3038 = vmatprep.subr.bf16.mxu0 %v2471
  %3039 = vmatpush1.bf16.msra.mxu0 %v2470
  %3040 = vmatprep.subr.bf16.mxu0 %v2478
  %3041 = vmatpush1.bf16.msra.mxu0 %v2477
  %3042 = vmatprep.subr.bf16.mxu0 %v2485
  %3043 = vmatpush1.bf16.msra.mxu0 %v2484
  %3044 = vmatprep.subr.bf16.mxu0 %v2492
  %3045 = vmatpush1.bf16.msra.mxu0 %v2491
  %3046 = vmatprep.subr.bf16.mxu0 %v2499
  %3047 = vmatpush1.bf16.msra.mxu0 %v2498
  %3048 = vmatprep.subr.bf16.mxu0 %v2506
  %3049 = vmatpush1.bf16.msra.mxu0 %v2505
  %3050 = vmatprep.subr.bf16.mxu0 %v2513
  %3051 = vmatpush1.bf16.msra.mxu0 %v2512
  %3052 = vmatprep.subr.bf16.mxu0 %v2520
  %3053 = vmatpush1.bf16.msra.mxu0 %v2519
  %3054 = vmatprep.mubr.bf16.mxu0 %v1447
  %3055 = vmatmul.mubr.bf16.gmra.mrb[0].mxu0 %v1446
  %v3056 = vpop.f32.mrb[0].mxu0
  %v3057 = vadd.f32 0.0, %v3056
  %v3058 = vpop.f32.mrb[0].mxu0
  %v3059 = vadd.f32 0.0, %v3058
  %v3060 = vpop.f32.mrb[0].mxu0
  %v3061 = vpop.f32.mrb[0].mxu0
  %3062 = vdwg.mxu0
  %3063 = vmatprep.subr.bf16.mxu0 %v2527
  %3064 = vmatpush1.bf16.msra.mxu0 %v2526
  %3065 = vmatprep.subr.bf16.mxu0 %v2534
  %3066 = vmatpush1.bf16.msra.mxu0 %v2533
  %3067 = vmatprep.subr.bf16.mxu0 %v2541
  %3068 = vmatpush1.bf16.msra.mxu0 %v2540
  %3069 = vmatprep.subr.bf16.mxu0 %v2548
  %3070 = vmatpush1.bf16.msra.mxu0 %v2547
  %3071 = vmatprep.subr.bf16.mxu0 %v2555
  %3072 = vmatpush1.bf16.msra.mxu0 %v2554
  %3073 = vmatprep.subr.bf16.mxu0 %v2562
  %3074 = vmatpush1.bf16.msra.mxu0 %v2561
  %3075 = vmatprep.subr.bf16.mxu0 %v2569
  %3076 = vmatpush1.bf16.msra.mxu0 %v2568
  %3077 = vmatprep.subr.bf16.mxu0 %v2576
  %3078 = vmatpush1.bf16.msra.mxu0 %v2575
  %3079 = vmatprep.subr.bf16.mxu0 %v2583
  %3080 = vmatpush1.bf16.msra.mxu0 %v2582
  %3081 = vmatprep.subr.bf16.mxu0 %v2590
  %3082 = vmatpush1.bf16.msra.mxu0 %v2589
  %3083 = vmatprep.subr.bf16.mxu0 %v2597
  %3084 = vmatpush1.bf16.msra.mxu0 %v2596
  %3085 = vmatprep.subr.bf16.mxu0 %v2604
  %3086 = vmatpush1.bf16.msra.mxu0 %v2603
  %3087 = vmatprep.subr.bf16.mxu0 %v2611
  %3088 = vmatpush1.bf16.msra.mxu0 %v2610
  %3089 = vmatprep.subr.bf16.mxu0 %v2618
  %3090 = vmatpush1.bf16.msra.mxu0 %v2617
  %3091 = vmatprep.subr.bf16.mxu0 %v2625
  %3092 = vmatpush1.bf16.msra.mxu0 %v2624
  %3093 = vmatprep.subr.bf16.mxu0 %v2632
  %3094 = vmatpush1.bf16.msra.mxu0 %v2631
  %3095 = vmatprep.mubr.bf16.mxu0 %v1449
  %3096 = vmatmul.mubr.bf16.gmra.mrb[0].mxu0 %v1448
  %v3097 = vpop.f32.mrb[0].mxu0
  %v3098 = vadd.f32 %v3057, %v3097
  %v3099 = vpop.f32.mrb[0].mxu0
  %v3100 = vadd.f32 %v3059, %v3099
  %v3101 = vpop.f32.mrb[0].mxu0
  %v3102 = vpop.f32.mrb[0].mxu0
  %3103 = vdwg.mxu0
  %3104 = vmatprep.subr.bf16.mxu0 0
  %3105 = vmatpush1.bf16.msra.mxu0 %v2416
  %3106 = vmatprep.subr.bf16.mxu0 0
  %3107 = vmatpush1.bf16.msra.mxu0 %v2423
  %3108 = vmatprep.subr.bf16.mxu0 0
  %3109 = vmatpush1.bf16.msra.mxu0 %v2430
  %3110 = vmatprep.subr.bf16.mxu0 0
  %3111 = vmatpush1.bf16.msra.mxu0 %v2437
  %3112 = vmatprep.subr.bf16.mxu0 0
  %3113 = vmatpush1.bf16.msra.mxu0 %v2444
  %3114 = vmatprep.subr.bf16.mxu0 0
  %3115 = vmatpush1.bf16.msra.mxu0 %v2451
  %3116 = vmatprep.subr.bf16.mxu0 0
  %3117 = vmatpush1.bf16.msra.mxu0 %v2458
  %3118 = vmatprep.subr.bf16.mxu0 0
  %3119 = vmatpush1.bf16.msra.mxu0 %v2465
  %3120 = vmatprep.subr.bf16.mxu0 0
  %3121 = vmatpush1.bf16.msra.mxu0 %v2472
  %3122 = vmatprep.subr.bf16.mxu0 0
  %3123 = vmatpush1.bf16.msra.mxu0 %v2479
  %3124 = vmatprep.subr.bf16.mxu0 0
  %3125 = vmatpush1.bf16.msra.mxu0 %v2486
  %3126 = vmatprep.subr.bf16.mxu0 0
  %3127 = vmatpush1.bf16.msra.mxu0 %v2493
  %3128 = vmatprep.subr.bf16.mxu0 0
  %3129 = vmatpush1.bf16.msra.mxu0 %v2500
  %3130 = vmatprep.subr.bf16.mxu0 0
  %3131 = vmatpush1.bf16.msra.mxu0 %v2507
  %3132 = vmatprep.subr.bf16.mxu0 0
  %3133 = vmatpush1.bf16.msra.mxu0 %v2514
  %3134 = vmatprep.subr.bf16.mxu0 0
  %3135 = vmatpush1.bf16.msra.mxu0 %v2521
  %3136 = vmatprep.mubr.bf16.mxu0 %v1447
  %3137 = vmatmul.mubr.bf16.gmra.mrb[0].mxu0 %v1446
  %v3138 = vpop.f32.mrb[0].mxu0
  %v3139 = vadd.f32 0.0, %v3138
  %v3140 = vpop.f32.mrb[0].mxu0
  %v3141 = vpop.f32.mrb[0].mxu0
  %v3142 = vpop.f32.mrb[0].mxu0
  %3143 = vdwg.mxu0
  %3144 = vmatprep.subr.bf16.mxu0 0
  %3145 = vmatpush1.bf16.msra.mxu0 %v2528
  %3146 = vmatprep.subr.bf16.mxu0 0
  %3147 = vmatpush1.bf16.msra.mxu0 %v2535
  %3148 = vmatprep.subr.bf16.mxu0 0
  %3149 = vmatpush1.bf16.msra.mxu0 %v2542
  %3150 = vmatprep.subr.bf16.mxu0 0
  %3151 = vmatpush1.bf16.msra.mxu0 %v2549
  %3152 = vmatprep.subr.bf16.mxu0 0
  %3153 = vmatpush1.bf16.msra.mxu0 %v2556
  %3154 = vmatprep.subr.bf16.mxu0 0
  %3155 = vmatpush1.bf16.msra.mxu0 %v2563
  %3156 = vmatprep.subr.bf16.mxu0 0
  %3157 = vmatpush1.bf16.msra.mxu0 %v2570
  %3158 = vmatprep.subr.bf16.mxu0 0
  %3159 = vmatpush1.bf16.msra.mxu0 %v2577
  %3160 = vmatprep.subr.bf16.mxu0 0
  %3161 = vmatpush1.bf16.msra.mxu0 %v2584
  %3162 = vmatprep.subr.bf16.mxu0 0
  %3163 = vmatpush1.bf16.msra.mxu0 %v2591
  %3164 = vmatprep.subr.bf16.mxu0 0
  %3165 = vmatpush1.bf16.msra.mxu0 %v2598
  %3166 = vmatprep.subr.bf16.mxu0 0
  %3167 = vmatpush1.bf16.msra.mxu0 %v2605
  %3168 = vmatprep.subr.bf16.mxu0 0
  %3169 = vmatpush1.bf16.msra.mxu0 %v2612
  %3170 = vmatprep.subr.bf16.mxu0 0
  %3171 = vmatpush1.bf16.msra.mxu0 %v2619
  %3172 = vmatprep.subr.bf16.mxu0 0
  %3173 = vmatpush1.bf16.msra.mxu0 %v2626
  %3174 = vmatprep.subr.bf16.mxu0 0
  %3175 = vmatpush1.bf16.msra.mxu0 %v2633
  %3176 = vmatprep.mubr.bf16.mxu0 %v1449
  %3177 = vmatmul.mubr.bf16.gmra.mrb[0].mxu0 %v1448
  %v3178 = vpop.f32.mrb[0].mxu0
  %v3179 = vadd.f32 %v3139, %v3178
  %v3180 = vpop.f32.mrb[0].mxu0
  %v3181 = vpop.f32.mrb[0].mxu0
  %v3182 = vpop.f32.mrb[0].mxu0
  %3183 = vdwg.mxu0
  %v3184 = vrot.slane %v2934, 4
  %v3185 = vadd.f32 %v2934, %v3184
  %v3186 = vrot.slane %v3185, 2
  %v3187 = vadd.f32 %v3185, %v3186
  %v3188 = vrot.slane %v3187, 1
  %v3189 = vadd.f32 %v3187, %v3188
  %v3190 = vrot.slane %v2936, 4
  %v3191 = vadd.f32 %v2936, %v3190
  %v3192 = vrot.slane %v3191, 2
  %v3193 = vadd.f32 %v3191, %v3192
  %v3194 = vrot.slane %v3193, 1
  %v3195 = vadd.f32 %v3193, %v3194
  %v3196 = vrot.slane %v3016, 4
  %v3197 = vadd.f32 %v3016, %v3196
  %v3198 = vrot.slane %v3197, 2
  %v3199 = vadd.f32 %v3197, %v3198
  %v3200 = vrot.slane %v3199, 1
  %v3201 = vadd.f32 %v3199, %v3200
  %v3202 = vrot.slane %v3018, 4
  %v3203 = vadd.f32 %v3018, %v3202
  %v3204 = vrot.slane %v3203, 2
  %v3205 = vadd.f32 %v3203, %v3204
  %v3206 = vrot.slane %v3205, 1
  %v3207 = vadd.f32 %v3205, %v3206
  %v3208 = vrot.slane %v3098, 4
  %v3209 = vadd.f32 %v3098, %v3208
  %v3210 = vrot.slane %v3209, 2
  %v3211 = vadd.f32 %v3209, %v3210
  %v3212 = vrot.slane %v3211, 1
  %v3213 = vadd.f32 %v3211, %v3212
  %v3214 = vrot.slane %v3100, 4
  %v3215 = vadd.f32 %v3100, %v3214
  %v3216 = vrot.slane %v3215, 2
  %v3217 = vadd.f32 %v3215, %v3216
  %v3218 = vrot.slane %v3217, 1
  %v3219 = vadd.f32 %v3217, %v3218
  %v3220 = vrot.slane %v3179, 4
  %v3221 = vadd.f32 %v3179, %v3220
  %v3222 = vrot.slane %v3221, 2
  %v3223 = vadd.f32 %v3221, %v3222
  %v3224 = vrot.slane %v3223, 1
  %v3225 = vadd.f32 %v3223, %v3224
  %v3226 = vmul.f32 %v2934, %v2934
  %v3227 = vmul.f32 %v2936, %v2936
  %v3228 = vmul.f32 %v3016, %v3016
  %v3229 = vmul.f32 %v3018, %v3018
  %v3230 = vmul.f32 %v3098, %v3098
  %v3231 = vmul.f32 %v3100, %v3100
  %v3232 = vmul.f32 %v3179, %v3179
  %v3233 = vrot.slane %v3226, 4
  %v3234 = vadd.f32 %v3226, %v3233
  %v3235 = vrot.slane %v3234, 2
  %v3236 = vadd.f32 %v3234, %v3235
  %v3237 = vrot.slane %v3236, 1
  %v3238 = vadd.f32 %v3236, %v3237
  %v3239 = vrot.slane %v3227, 4
  %v3240 = vadd.f32 %v3227, %v3239
  %v3241 = vrot.slane %v3240, 2
  %v3242 = vadd.f32 %v3240, %v3241
  %v3243 = vrot.slane %v3242, 1
  %v3244 = vadd.f32 %v3242, %v3243
  %v3245 = vrot.slane %v3228, 4
  %v3246 = vadd.f32 %v3228, %v3245
  %v3247 = vrot.slane %v3246, 2
  %v3248 = vadd.f32 %v3246, %v3247
  %v3249 = vrot.slane %v3248, 1
  %v3250 = vadd.f32 %v3248, %v3249
  %v3251 = vrot.slane %v3229, 4
  %v3252 = vadd.f32 %v3229, %v3251
  %v3253 = vrot.slane %v3252, 2
  %v3254 = vadd.f32 %v3252, %v3253
  %v3255 = vrot.slane %v3254, 1
  %v3256 = vadd.f32 %v3254, %v3255
  %v3257 = vrot.slane %v3230, 4
  %v3258 = vadd.f32 %v3230, %v3257
  %v3259 = vrot.slane %v3258, 2
  %v3260 = vadd.f32 %v3258, %v3259
  %v3261 = vrot.slane %v3260, 1
  %v3262 = vadd.f32 %v3260, %v3261
  %v3263 = vrot.slane %v3231, 4
  %v3264 = vadd.f32 %v3231, %v3263
  %v3265 = vrot.slane %v3264, 2
  %v3266 = vadd.f32 %v3264, %v3265
  %v3267 = vrot.slane %v3266, 1
  %v3268 = vadd.f32 %v3266, %v3267
  %v3269 = vrot.slane %v3232, 4
  %v3270 = vadd.f32 %v3232, %v3269
  %v3271 = vrot.slane %v3270, 2
  %v3272 = vadd.f32 %v3270, %v3271
  %v3273 = vrot.slane %v3272, 1
  %v3274 = vadd.f32 %v3272, %v3273
  %v3275 = vsel %vm234, %v3189, %v3238
  %v3276 = vsel %vm234, %v3195, %v3244
  %v3277 = vsel %vm234, %v3201, %v3250
  %v3278 = vsel %vm234, %v3207, %v3256
  %v3279 = vsel %vm234, %v3213, %v3262
  %v3280 = vsel %vm234, %v3219, %v3268
  %v3281 = vsel %vm234, %v3225, %v3274
  %v3282 = vld [vmem:[%s12] sm:$0xff]
  %v3283 = vld [vmem:[%s12 + $0x8] sm:$0xff]
  %v3284 = vld [vmem:[%s12 + $0x10] sm:$0xff]
  %v3285 = vld [vmem:[%s12 + $0x18] sm:$0xff]
  %v3286 = vld [vmem:[%s12 + $0x20] sm:$0xff]
  %v3287 = vld [vmem:[%s12 + $0x28] sm:$0xff]
  %v3288 = vld [vmem:[%s12 + $0x30] sm:$0xff]
  %v3289 = vld [vmem:[%s12 + $0x38] sm:$0xff]
  %v3290 = vld [vmem:[%s12 + $0x40] sm:$0xff]
  %v3291 = vld [vmem:[%s12 + $0x48] sm:$0xff]
  %v3292 = vld [vmem:[%s12 + $0x50] sm:$0xff]
  %v3293 = vld [vmem:[%s12 + $0x58] sm:$0xff]
  %v3294 = vld [vmem:[%s12 + $0x60] sm:$0xff]
  %v3295 = vld [vmem:[%s12 + $0x68] sm:$0xff]
  %v3296 = vld [vmem:[%s12 + $0x70] sm:$0xff]
  %v3297 = vld [vmem:[%s12 + $0x78] sm:$0xff]
  %v3298 = vld [vmem:[%s12 + $0x80] sm:$0xff]
  %v3299 = vld [vmem:[%s12 + $0x88] sm:$0xff]
  %v3300 = vld [vmem:[%s12 + $0x90] sm:$0xff]
  %v3301 = vld [vmem:[%s12 + $0x98] sm:$0xff]
  %v3302 = vld [vmem:[%s12 + $0xa0] sm:$0xff]
  %v3303 = vld [vmem:[%s12 + $0xa8] sm:$0xff]
  %v3304 = vld [vmem:[%s12 + $0xb0] sm:$0xff]
  %v3305 = vld [vmem:[%s12 + $0xb8] sm:$0xff]
  %v3306 = vld [vmem:[%s12 + $0xc0] sm:$0xff]
  %v3307 = vld [vmem:[%s12 + $0xc8] sm:$0xff]
  %v3308 = vld [vmem:[%s12 + $0xd0] sm:$0xff]
  %v3309 = vld [vmem:[%s12 + $0xd8] sm:$0xff]
  %v3310 = vld [vmem:[%s12 + $0xe0] sm:$0xff]
  %v3311 = vld [vmem:[%s12 + $0xe8] sm:$0xff]
  %v3312 = vld [vmem:[%s12 + $0xf0] sm:$0xff]
  %v3313 = vld [vmem:[%s12 + $0xf8] sm:$0xff]
  %v3314 = vld [vmem:[%s12 + $0x100] sm:$0xff]
  %v3315 = vld [vmem:[%s12 + $0x108] sm:$0xff]
  %v3316 = vld [vmem:[%s12 + $0x110] sm:$0xff]
  %v3317 = vld [vmem:[%s12 + $0x118] sm:$0xff]
  %v3318 = vld [vmem:[%s12 + $0x120] sm:$0xff]
  %v3319 = vld [vmem:[%s12 + $0x128] sm:$0xff]
  %v3320 = vld [vmem:[%s12 + $0x130] sm:$0xff]
  %v3321 = vld [vmem:[%s12 + $0x138] sm:$0xff]
  %v3322 = vld [vmem:[%s12 + $0x140] sm:$0xff]
  %v3323 = vld [vmem:[%s12 + $0x148] sm:$0xff]
  %v3324 = vld [vmem:[%s12 + $0x150] sm:$0xff]
  %v3325 = vld [vmem:[%s12 + $0x158] sm:$0xff]
  %v3326 = vld [vmem:[%s12 + $0x160] sm:$0xff]
  %v3327 = vld [vmem:[%s12 + $0x168] sm:$0xff]
  %v3328 = vld [vmem:[%s12 + $0x170] sm:$0xff]
  %v3329 = vld [vmem:[%s12 + $0x178] sm:$0xff]
  %v3330 = vld [vmem:[%s12 + $0x180] sm:$0xff]
  %v3331 = vld [vmem:[%s12 + $0x188] sm:$0xff]
  %v3332 = vld [vmem:[%s12 + $0x190] sm:$0xff]
  %v3333 = vld [vmem:[%s12 + $0x198] sm:$0xff]
  %v3334 = vld [vmem:[%s12 + $0x1a0] sm:$0xff]
  %v3335 = vld [vmem:[%s12 + $0x1a8] sm:$0xff]
  %v3336 = vld [vmem:[%s12 + $0x1b0] sm:$0xff]
  %v3337 = vld [vmem:[%s12 + $0x1b8] sm:$0xff]
  %v3338 = vld [vmem:[%s12 + $0x1c0] sm:$0xff]
  %v3339 = vld [vmem:[%s12 + $0x1c8] sm:$0xff]
  %v3340 = vld [vmem:[%s12 + $0x1d0] sm:$0xff]
  %v3341 = vld [vmem:[%s12 + $0x1d8] sm:$0xff]
  %v3342 = vld [vmem:[%s12 + $0x1e0] sm:$0xff]
  %v3343 = vld [vmem:[%s12 + $0x1e8] sm:$0xff]
  %v3344 = vld [vmem:[%s12 + $0x1f0] sm:$0xff]
  %v3345 = vld [vmem:[%s12 + $0x1f8] sm:$0xff]
  %v3346 = vld [vmem:[%s12 + $0x200] sm:$0xff]
  %v3347 = vld [vmem:[%s12 + $0x208] sm:$0xff]
  %v3348 = vld [vmem:[%s12 + $0x210] sm:$0xff]
  %v3349 = vld [vmem:[%s12 + $0x218] sm:$0xff]
  %v3350 = vld [vmem:[%s12 + $0x220] sm:$0xff]
  %v3351 = vld [vmem:[%s12 + $0x228] sm:$0xff]
  %v3352 = vld [vmem:[%s12 + $0x230] sm:$0xff]
  %v3353 = vld [vmem:[%s12 + $0x238] sm:$0xff]
  %v3354 = vld [vmem:[%s12 + $0x240] sm:$0xff]
  %v3355 = vld [vmem:[%s12 + $0x248] sm:$0xff]
  %v3356 = vld [vmem:[%s12 + $0x250] sm:$0xff]
  %v3357 = vld [vmem:[%s12 + $0x258] sm:$0xff]
  %v3358 = vld [vmem:[%s12 + $0x260] sm:$0xff]
  %v3359 = vld [vmem:[%s12 + $0x268] sm:$0xff]
  %v3360 = vld [vmem:[%s12 + $0x270] sm:$0xff]
  %v3361 = vld [vmem:[%s12 + $0x278] sm:$0xff]
  %v3362 = vld [vmem:[%s12 + $0x280] sm:$0xff]
  %v3363 = vld [vmem:[%s12 + $0x288] sm:$0xff]
  %v3364 = vld [vmem:[%s12 + $0x290] sm:$0xff]
  %v3365 = vld [vmem:[%s12 + $0x298] sm:$0xff]
  %v3366 = vld [vmem:[%s12 + $0x2a0] sm:$0xff]
  %v3367 = vld [vmem:[%s12 + $0x2a8] sm:$0xff]
  %v3368 = vld [vmem:[%s12 + $0x2b0] sm:$0xff]
  %v3369 = vld [vmem:[%s12 + $0x2b8] sm:$0xff]
  %v3370 = vld [vmem:[%s12 + $0x2c0] sm:$0xff]
  %v3371 = vld [vmem:[%s12 + $0x2c8] sm:$0xff]
  %v3372 = vld [vmem:[%s12 + $0x2d0] sm:$0xff]
  %v3373 = vld [vmem:[%s12 + $0x2d8] sm:$0xff]
  %v3374 = vld [vmem:[%s12 + $0x2e0] sm:$0xff]
  %v3375 = vld [vmem:[%s12 + $0x2e8] sm:$0xff]
  %v3376 = vld [vmem:[%s12 + $0x2f0] sm:$0xff]
  %v3377 = vld [vmem:[%s12 + $0x2f8] sm:$0xff]
  %v3378 = vld [vmem:[%s12 + $0x300] sm:$0xff]
  %v3379 = vld [vmem:[%s12 + $0x308] sm:$0xff]
  %v3380 = vld [vmem:[%s12 + $0x310] sm:$0xff]
  %v3381 = vld [vmem:[%s12 + $0x318] sm:$0xff]
  %v3382 = vld [vmem:[%s12 + $0x320] sm:$0xff]
  %v3383 = vld [vmem:[%s12 + $0x328] sm:$0xff]
  %v3384 = vld [vmem:[%s12 + $0x330] sm:$0xff]
  %v3385 = vld [vmem:[%s12 + $0x338] sm:$0xff]
  %v3386 = vld [vmem:[%s12 + $0x340] sm:$0xff]
  %v3387 = vld [vmem:[%s12 + $0x348] sm:$0xff]
  %v3388 = vld [vmem:[%s12 + $0x350] sm:$0xff]
  %v3389 = vld [vmem:[%s12 + $0x358] sm:$0xff]
  %v3390 = vld [vmem:[%s12 + $0x360] sm:$0xff]
  %v3391 = vld [vmem:[%s12 + $0x368] sm:$0xff]
  %v3392 = vld [vmem:[%s12 + $0x370] sm:$0xff]
  %v3393 = vld [vmem:[%s12 + $0x378] sm:$0xff]
  %3394 = vmatprep.subr.mxu0 0.0
  %3395 = vmatpush1.msra.mxu0 %v3282
  %3396 = vmatprep.subr.mxu0 0.0
  %3397 = vmatpush1.msra.mxu0 %v3283
  %3398 = vmatprep.subr.mxu0 0.0
  %3399 = vmatpush1.msra.mxu0 %v3284
  %3400 = vmatprep.subr.mxu0 0.0
  %3401 = vmatpush1.msra.mxu0 %v3285
  %3402 = vmatprep.subr.mxu0 0.0
  %3403 = vmatpush1.msra.mxu0 %v3286
  %3404 = vmatprep.subr.mxu0 0.0
  %3405 = vmatpush1.msra.mxu0 %v3287
  %3406 = vmatprep.subr.mxu0 0.0
  %3407 = vmatpush1.msra.mxu0 %v3288
  %3408 = vmatprep.subr.mxu0 0.0
  %3409 = vmatpush1.msra.mxu0 %v3289
  %3410 = vmatprep.subr.mxu0 0.0
  %3411 = vmatpush1.msra.mxu0 %v3290
  %3412 = vmatprep.subr.mxu0 0.0
  %3413 = vmatpush1.msra.mxu0 %v3291
  %3414 = vmatprep.subr.mxu0 0.0
  %3415 = vmatpush1.msra.mxu0 %v3292
  %3416 = vmatprep.subr.mxu0 0.0
  %3417 = vmatpush1.msra.mxu0 %v3293
  %3418 = vmatprep.subr.mxu0 0.0
  %3419 = vmatpush1.msra.mxu0 %v3294
  %3420 = vmatprep.subr.mxu0 0.0
  %3421 = vmatpush1.msra.mxu0 %v3295
  %3422 = vmatprep.subr.mxu0 0.0
  %3423 = vmatpush1.msra.mxu0 %v3296
  %3424 = vmatprep.subr.mxu0 0.0
  %3425 = vmatpush1.msra.mxu0 %v3297
  %3426 = vmatprep.subr.mxu0 0.0
  %3427 = vmatpush1.msra.mxu0 %v3298
  %3428 = vmatprep.subr.mxu0 0.0
  %3429 = vmatpush1.msra.mxu0 %v3299
  %3430 = vmatprep.subr.mxu0 0.0
  %3431 = vmatpush1.msra.mxu0 %v3300
  %3432 = vmatprep.subr.mxu0 0.0
  %3433 = vmatpush1.msra.mxu0 %v3301
  %3434 = vmatprep.subr.mxu0 0.0
  %3435 = vmatpush1.msra.mxu0 %v3302
  %3436 = vmatprep.subr.mxu0 0.0
  %3437 = vmatpush1.msra.mxu0 %v3303
  %3438 = vmatprep.subr.mxu0 0.0
  %3439 = vmatpush1.msra.mxu0 %v3304
  %3440 = vmatprep.subr.mxu0 0.0
  %3441 = vmatpush1.msra.mxu0 %v3305
  %3442 = vmatprep.subr.mxu0 0.0
  %3443 = vmatpush1.msra.mxu0 %v3306
  %3444 = vmatprep.subr.mxu0 0.0
  %3445 = vmatpush1.msra.mxu0 %v3307
  %3446 = vmatprep.subr.mxu0 0.0
  %3447 = vmatpush1.msra.mxu0 %v3308
  %3448 = vmatprep.subr.mxu0 0.0
  %3449 = vmatpush1.msra.mxu0 %v3309
  %3450 = vmatprep.subr.mxu0 0.0
  %3451 = vmatpush1.msra.mxu0 %v3310
  %3452 = vmatprep.subr.mxu0 0.0
  %3453 = vmatpush1.msra.mxu0 %v3311
  %3454 = vmatprep.subr.mxu0 0.0
  %3455 = vmatpush1.msra.mxu0 %v3312
  %3456 = vmatprep.subr.mxu0 0.0
  %3457 = vmatpush1.msra.mxu0 %v3313
  %3458 = vmatprep.mubr.f32.mxu0 %v3276
  %3459 = vmatmul.mubr.f32.gmra.mrb[0].mxu0 %v3275
  %v3460 = vpop.f32.mrb[0].mxu0
  %v3461 = vadd.f32 0.0, %v3460
  %v3462 = vpop.f32.mrb[0].mxu0
  %3463 = vdwg.mxu0
  %3464 = vmatprep.subr.mxu0 0.0
  %3465 = vmatpush1.msra.mxu0 %v3314
  %3466 = vmatprep.subr.mxu0 0.0
  %3467 = vmatpush1.msra.mxu0 %v3315
  %3468 = vmatprep.subr.mxu0 0.0
  %3469 = vmatpush1.msra.mxu0 %v3316
  %3470 = vmatprep.subr.mxu0 0.0
  %3471 = vmatpush1.msra.mxu0 %v3317
  %3472 = vmatprep.subr.mxu0 0.0
  %3473 = vmatpush1.msra.mxu0 %v3318
  %3474 = vmatprep.subr.mxu0 0.0
  %3475 = vmatpush1.msra.mxu0 %v3319
  %3476 = vmatprep.subr.mxu0 0.0
  %3477 = vmatpush1.msra.mxu0 %v3320
  %3478 = vmatprep.subr.mxu0 0.0
  %3479 = vmatpush1.msra.mxu0 %v3321
  %3480 = vmatprep.subr.mxu0 0.0
  %3481 = vmatpush1.msra.mxu0 %v3322
  %3482 = vmatprep.subr.mxu0 0.0
  %3483 = vmatpush1.msra.mxu0 %v3323
  %3484 = vmatprep.subr.mxu0 0.0
  %3485 = vmatpush1.msra.mxu0 %v3324
  %3486 = vmatprep.subr.mxu0 0.0
  %3487 = vmatpush1.msra.mxu0 %v3325
  %3488 = vmatprep.subr.mxu0 0.0
  %3489 = vmatpush1.msra.mxu0 %v3326
  %3490 = vmatprep.subr.mxu0 0.0
  %3491 = vmatpush1.msra.mxu0 %v3327
  %3492 = vmatprep.subr.mxu0 0.0
  %3493 = vmatpush1.msra.mxu0 %v3328
  %3494 = vmatprep.subr.mxu0 0.0
  %3495 = vmatpush1.msra.mxu0 %v3329
  %3496 = vmatprep.subr.mxu0 0.0
  %3497 = vmatpush1.msra.mxu0 %v3330
  %3498 = vmatprep.subr.mxu0 0.0
  %3499 = vmatpush1.msra.mxu0 %v3331
  %3500 = vmatprep.subr.mxu0 0.0
  %3501 = vmatpush1.msra.mxu0 %v3332
  %3502 = vmatprep.subr.mxu0 0.0
  %3503 = vmatpush1.msra.mxu0 %v3333
  %3504 = vmatprep.subr.mxu0 0.0
  %3505 = vmatpush1.msra.mxu0 %v3334
  %3506 = vmatprep.subr.mxu0 0.0
  %3507 = vmatpush1.msra.mxu0 %v3335
  %3508 = vmatprep.subr.mxu0 0.0
  %3509 = vmatpush1.msra.mxu0 %v3336
  %3510 = vmatprep.subr.mxu0 0.0
  %3511 = vmatpush1.msra.mxu0 %v3337
  %3512 = vmatprep.subr.mxu0 0.0
  %3513 = vmatpush1.msra.mxu0 %v3338
  %3514 = vmatprep.subr.mxu0 0.0
  %3515 = vmatpush1.msra.mxu0 %v3339
  %3516 = vmatprep.subr.mxu0 0.0
  %3517 = vmatpush1.msra.mxu0 %v3340
  %3518 = vmatprep.subr.mxu0 0.0
  %3519 = vmatpush1.msra.mxu0 %v3341
  %3520 = vmatprep.subr.mxu0 0.0
  %3521 = vmatpush1.msra.mxu0 %v3342
  %3522 = vmatprep.subr.mxu0 0.0
  %3523 = vmatpush1.msra.mxu0 %v3343
  %3524 = vmatprep.subr.mxu0 0.0
  %3525 = vmatpush1.msra.mxu0 %v3344
  %3526 = vmatprep.subr.mxu0 0.0
  %3527 = vmatpush1.msra.mxu0 %v3345
  %3528 = vmatprep.mubr.f32.mxu0 %v3278
  %3529 = vmatmul.mubr.f32.gmra.mrb[0].mxu0 %v3277
  %v3530 = vpop.f32.mrb[0].mxu0
  %v3531 = vadd.f32 %v3461, %v3530
  %v3532 = vpop.f32.mrb[0].mxu0
  %3533 = vdwg.mxu0
  %3534 = vmatprep.subr.mxu0 0.0
  %3535 = vmatpush1.msra.mxu0 %v3346
  %3536 = vmatprep.subr.mxu0 0.0
  %3537 = vmatpush1.msra.mxu0 %v3347
  %3538 = vmatprep.subr.mxu0 0.0
  %3539 = vmatpush1.msra.mxu0 %v3348
  %3540 = vmatprep.subr.mxu0 0.0
  %3541 = vmatpush1.msra.mxu0 %v3349
  %3542 = vmatprep.subr.mxu0 0.0
  %3543 = vmatpush1.msra.mxu0 %v3350
  %3544 = vmatprep.subr.mxu0 0.0
  %3545 = vmatpush1.msra.mxu0 %v3351
  %3546 = vmatprep.subr.mxu0 0.0
  %3547 = vmatpush1.msra.mxu0 %v3352
  %3548 = vmatprep.subr.mxu0 0.0
  %3549 = vmatpush1.msra.mxu0 %v3353
  %3550 = vmatprep.subr.mxu0 0.0
  %3551 = vmatpush1.msra.mxu0 %v3354
  %3552 = vmatprep.subr.mxu0 0.0
  %3553 = vmatpush1.msra.mxu0 %v3355
  %3554 = vmatprep.subr.mxu0 0.0
  %3555 = vmatpush1.msra.mxu0 %v3356
  %3556 = vmatprep.subr.mxu0 0.0
  %3557 = vmatpush1.msra.mxu0 %v3357
  %3558 = vmatprep.subr.mxu0 0.0
  %3559 = vmatpush1.msra.mxu0 %v3358
  %3560 = vmatprep.subr.mxu0 0.0
  %3561 = vmatpush1.msra.mxu0 %v3359
  %3562 = vmatprep.subr.mxu0 0.0
  %3563 = vmatpush1.msra.mxu0 %v3360
  %3564 = vmatprep.subr.mxu0 0.0
  %3565 = vmatpush1.msra.mxu0 %v3361
  %3566 = vmatprep.subr.mxu0 0.0
  %3567 = vmatpush1.msra.mxu0 %v3362
  %3568 = vmatprep.subr.mxu0 0.0
  %3569 = vmatpush1.msra.mxu0 %v3363
  %3570 = vmatprep.subr.mxu0 0.0
  %3571 = vmatpush1.msra.mxu0 %v3364
  %3572 = vmatprep.subr.mxu0 0.0
  %3573 = vmatpush1.msra.mxu0 %v3365
  %3574 = vmatprep.subr.mxu0 0.0
  %3575 = vmatpush1.msra.mxu0 %v3366
  %3576 = vmatprep.subr.mxu0 0.0
  %3577 = vmatpush1.msra.mxu0 %v3367
  %3578 = vmatprep.subr.mxu0 0.0
  %3579 = vmatpush1.msra.mxu0 %v3368
  %3580 = vmatprep.subr.mxu0 0.0
  %3581 = vmatpush1.msra.mxu0 %v3369
  %3582 = vmatprep.subr.mxu0 0.0
  %3583 = vmatpush1.msra.mxu0 %v3370
  %3584 = vmatprep.subr.mxu0 0.0
  %3585 = vmatpush1.msra.mxu0 %v3371
  %3586 = vmatprep.subr.mxu0 0.0
  %3587 = vmatpush1.msra.mxu0 %v3372
  %3588 = vmatprep.subr.mxu0 0.0
  %3589 = vmatpush1.msra.mxu0 %v3373
  %3590 = vmatprep.subr.mxu0 0.0
  %3591 = vmatpush1.msra.mxu0 %v3374
  %3592 = vmatprep.subr.mxu0 0.0
  %3593 = vmatpush1.msra.mxu0 %v3375
  %3594 = vmatprep.subr.mxu0 0.0
  %3595 = vmatpush1.msra.mxu0 %v3376
  %3596 = vmatprep.subr.mxu0 0.0
  %3597 = vmatpush1.msra.mxu0 %v3377
  %3598 = vmatprep.mubr.f32.mxu0 %v3280
  %3599 = vmatmul.mubr.f32.gmra.mrb[0].mxu0 %v3279
  %v3600 = vpop.f32.mrb[0].mxu0
  %v3601 = vadd.f32 %v3531, %v3600
  %v3602 = vpop.f32.mrb[0].mxu0
  %3603 = vdwg.mxu0
  %3604 = vmatprep.subr.mxu0 0.0
  %3605 = vmatpush1.msra.mxu0 %v3378
  %3606 = vmatprep.subr.mxu0 0.0
  %3607 = vmatpush1.msra.mxu0 %v3379
  %3608 = vmatprep.subr.mxu0 0.0
  %3609 = vmatpush1.msra.mxu0 %v3380
  %3610 = vmatprep.subr.mxu0 0.0
  %3611 = vmatpush1.msra.mxu0 %v3381
  %3612 = vmatprep.subr.mxu0 0.0
  %3613 = vmatpush1.msra.mxu0 %v3382
  %3614 = vmatprep.subr.mxu0 0.0
  %3615 = vmatpush1.msra.mxu0 %v3383
  %3616 = vmatprep.subr.mxu0 0.0
  %3617 = vmatpush1.msra.mxu0 %v3384
  %3618 = vmatprep.subr.mxu0 0.0
  %3619 = vmatpush1.msra.mxu0 %v3385
  %3620 = vmatprep.subr.mxu0 0.0
  %3621 = vmatpush1.msra.mxu0 %v3386
  %3622 = vmatprep.subr.mxu0 0.0
  %3623 = vmatpush1.msra.mxu0 %v3387
  %3624 = vmatprep.subr.mxu0 0.0
  %3625 = vmatpush1.msra.mxu0 %v3388
  %3626 = vmatprep.subr.mxu0 0.0
  %3627 = vmatpush1.msra.mxu0 %v3389
  %3628 = vmatprep.subr.mxu0 0.0
  %3629 = vmatpush1.msra.mxu0 %v3390
  %3630 = vmatprep.subr.mxu0 0.0
  %3631 = vmatpush1.msra.mxu0 %v3391
  %3632 = vmatprep.subr.mxu0 0.0
  %3633 = vmatpush1.msra.mxu0 %v3392
  %3634 = vmatprep.subr.mxu0 0.0
  %3635 = vmatpush1.msra.mxu0 %v3393
  %3636 = vmatprep.subr.mxu0 0.0
  %3637 = vmatpush1.msra.mxu0 0.0
  %3638 = vmatprep.subr.mxu0 0.0
  %3639 = vmatpush1.msra.mxu0 0.0
  %3640 = vmatprep.subr.mxu0 0.0
  %3641 = vmatpush1.msra.mxu0 0.0
  %3642 = vmatprep.subr.mxu0 0.0
  %3643 = vmatpush1.msra.mxu0 0.0
  %3644 = vmatprep.subr.mxu0 0.0
  %3645 = vmatpush1.msra.mxu0 0.0
  %3646 = vmatprep.subr.mxu0 0.0
  %3647 = vmatpush1.msra.mxu0 0.0
  %3648 = vmatprep.subr.mxu0 0.0
  %3649 = vmatpush1.msra.mxu0 0.0
  %3650 = vmatprep.subr.mxu0 0.0
  %3651 = vmatpush1.msra.mxu0 0.0
  %3652 = vmatprep.subr.mxu0 0.0
  %3653 = vmatpush1.msra.mxu0 0.0
  %3654 = vmatprep.subr.mxu0 0.0
  %3655 = vmatpush1.msra.mxu0 0.0
  %3656 = vmatprep.subr.mxu0 0.0
  %3657 = vmatpush1.msra.mxu0 0.0
  %3658 = vmatprep.subr.mxu0 0.0
  %3659 = vmatpush1.msra.mxu0 0.0
  %3660 = vmatprep.subr.mxu0 0.0
  %3661 = vmatpush1.msra.mxu0 0.0
  %3662 = vmatprep.subr.mxu0 0.0
  %3663 = vmatpush1.msra.mxu0 0.0
  %3664 = vmatprep.subr.mxu0 0.0
  %3665 = vmatpush1.msra.mxu0 0.0
  %3666 = vmatprep.subr.mxu0 0.0
  %3667 = vmatpush1.msra.mxu0 0.0
  %3668 = vmatprep.mubr.f32.mxu0 0.0
  %3669 = vmatmul.mubr.f32.gmra.mrb[0].mxu0 %v3281
  %v3670 = vpop.f32.mrb[0].mxu0
  %v3671 = vadd.f32 %v3601, %v3670
  %v3672 = vpop.f32.mrb[0].mxu0
  %3673 = vdwg.mxu0
  %v3674 = vmul.f32 %v3671, %v3671
  %v3676 = vrot.slane %v3674, 7
  %v3678 = vsub.f32 %v3671, %v3676
  %v3679 = vld [vmem:[%s14] sm:$0x1]
  %v3680 = vadd.f32 %v3678, 1e-05
  %v3681 = vrsqrt.pop %v3680
  %v3684 = vunpack.c.l.s4 1966171168
  %v3685 = vunpack.c.0.s8 %v3684
  %v3686 = vlaneseq
  %v3687 = vshrl.u32 %v3686, 7
  %v3688 = vsub.s32 %v3685, %v3687
  %v3689 = vrot.slane %v3681, %v3688
  %v3690 = vcombine.high %v3689, %v3689
  %v3692 = vunpack.c.l.s4 1966171168
  %v3693 = vunpack.c.0.s8 %v3692
  %v3694 = vlaneseq
  %v3695 = vshrl.u32 %v3694, 7
  %v3696 = vsub.s32 %v3693, %v3695
  %v3697 = vrot.slane %v3690, %v3696
  %v3699 = vmul.f32 %v3679, %v3697
  %v3700 = vld [vmem:[%s15] sm:$0x1]
  %v3701 = vmul.f32 %v3671, %v3699
  %v3702 = vsub.f32 %v3700, %v3701
  %v3704 = vlaneseq
  %v3705 = vshrl.u32 %v3704, 7
  %v3706 = vsub.s32 0, %v3705
  %v3707 = vrot.slane %v3702, %v3706
  %v3709 = vsel %vm234, %v3699, %v3707
  %v3710 = vld [vmem:[%s13] sm:$0xff]
  %v3711 = vld [vmem:[%s13 + $0x8] sm:$0xff]
  %v3712 = vld [vmem:[%s13 + $0x10] sm:$0xff]
  %v3713 = vld [vmem:[%s13 + $0x18] sm:$0xff]
  %v3714 = vld [vmem:[%s13 + $0x20] sm:$0xff]
  %v3715 = vld [vmem:[%s13 + $0x28] sm:$0xff]
  %v3716 = vld [vmem:[%s13 + $0x30] sm:$0xff]
  %v3717 = vld [vmem:[%s13 + $0x38] sm:$0xff]
  %v3718 = vld [vmem:[%s13 + $0x40] sm:$0xff]
  %v3719 = vld [vmem:[%s13 + $0x48] sm:$0xff]
  %v3720 = vld [vmem:[%s13 + $0x50] sm:$0xff]
  %v3721 = vld [vmem:[%s13 + $0x58] sm:$0xff]
  %v3722 = vld [vmem:[%s13 + $0x60] sm:$0xff]
  %v3723 = vld [vmem:[%s13 + $0x68] sm:$0xff]
  %v3725 = vsel %vm379, %v3709, 0
  %3727 = vmatprep.subr.mxu0 %v3711
  %3728 = vmatpush1.msra.mxu0 %v3710
  %3729 = vmatprep.subr.mxu0 %v3718
  %3730 = vmatpush1.msra.mxu0 %v3717
  %3731 = vmatprep.subr.mxu0 0.0
  %3732 = vmatpush1.msra.mxu0 0.0
  %3733 = vmatprep.subr.mxu0 0.0
  %3734 = vmatpush1.msra.mxu0 0.0
  %3735 = vmatprep.subr.mxu0 0.0
  %3736 = vmatpush1.msra.mxu0 0.0
  %3737 = vmatprep.subr.mxu0 0.0
  %3738 = vmatpush1.msra.mxu0 0.0
  %3739 = vmatprep.subr.mxu0 0.0
  %3740 = vmatpush1.msra.mxu0 0.0
  %3741 = vmatprep.subr.mxu0 0.0
  %3742 = vmatpush1.msra.mxu0 0.0
  %3743 = vmatprep.subr.mxu0 0.0
  %3744 = vmatpush1.msra.mxu0 0.0
  %3745 = vmatprep.subr.mxu0 0.0
  %3746 = vmatpush1.msra.mxu0 0.0
  %3747 = vmatprep.subr.mxu0 0.0
  %3748 = vmatpush1.msra.mxu0 0.0
  %3749 = vmatprep.subr.mxu0 0.0
  %3750 = vmatpush1.msra.mxu0 0.0
  %3751 = vmatprep.subr.mxu0 0.0
  %3752 = vmatpush1.msra.mxu0 0.0
  %3753 = vmatprep.subr.mxu0 0.0
  %3754 = vmatpush1.msra.mxu0 0.0
  %3755 = vmatprep.subr.mxu0 0.0
  %3756 = vmatpush1.msra.mxu0 0.0
  %3757 = vmatprep.subr.mxu0 0.0
  %3758 = vmatpush1.msra.mxu0 0.0
  %3759 = vmatprep.subr.mxu0 0.0
  %3760 = vmatpush1.msra.mxu0 0.0
  %3761 = vmatprep.subr.mxu0 0.0
  %3762 = vmatpush1.msra.mxu0 0.0
  %3763 = vmatprep.subr.mxu0 0.0
  %3764 = vmatpush1.msra.mxu0 0.0
  %3765 = vmatprep.subr.mxu0 0.0
  %3766 = vmatpush1.msra.mxu0 0.0
  %3767 = vmatprep.subr.mxu0 0.0
  %3768 = vmatpush1.msra.mxu0 0.0
  %3769 = vmatprep.subr.mxu0 0.0
  %3770 = vmatpush1.msra.mxu0 0.0
  %3771 = vmatprep.subr.mxu0 0.0
  %3772 = vmatpush1.msra.mxu0 0.0
  %3773 = vmatprep.subr.mxu0 0.0
  %3774 = vmatpush1.msra.mxu0 0.0
  %3775 = vmatprep.subr.mxu0 0.0
  %3776 = vmatpush1.msra.mxu0 0.0
  %3777 = vmatprep.subr.mxu0 0.0
  %3778 = vmatpush1.msra.mxu0 0.0
  %3779 = vmatprep.subr.mxu0 0.0
  %3780 = vmatpush1.msra.mxu0 0.0
  %3781 = vmatprep.subr.mxu0 0.0
  %3782 = vmatpush1.msra.mxu0 0.0
  %3783 = vmatprep.subr.mxu0 0.0
  %3784 = vmatpush1.msra.mxu0 0.0
  %3785 = vmatprep.subr.mxu0 0.0
  %3786 = vmatpush1.msra.mxu0 0.0
  %3787 = vmatprep.subr.mxu0 0.0
  %3788 = vmatpush1.msra.mxu0 0.0
  %3789 = vmatprep.subr.mxu0 0.0
  %3790 = vmatpush1.msra.mxu0 0.0
  %3791 = vmatprep.mubr.f32.mxu0 0.0
  %3792 = vmatmul.mubr.f32.gmra.mrb[0].mxu0 %v3725
  %v3793 = vpop.f32.mrb[0].mxu0
  %v3794 = vadd.f32 0.0, %v3793
  %v3795 = vpop.f32.mrb[0].mxu0
  %v3796 = vadd.f32 0.0, %v3795
  %3797 = vdwg.mxu0
  %3798 = vmatprep.subr.mxu0 %v3713
  %3799 = vmatpush1.msra.mxu0 %v3712
  %3800 = vmatprep.subr.mxu0 %v3720
  %3801 = vmatpush1.msra.mxu0 %v3719
  %3802 = vmatprep.subr.mxu0 0.0
  %3803 = vmatpush1.msra.mxu0 0.0
  %3804 = vmatprep.subr.mxu0 0.0
  %3805 = vmatpush1.msra.mxu0 0.0
  %3806 = vmatprep.subr.mxu0 0.0
  %3807 = vmatpush1.msra.mxu0 0.0
  %3808 = vmatprep.subr.mxu0 0.0
  %3809 = vmatpush1.msra.mxu0 0.0
  %3810 = vmatprep.subr.mxu0 0.0
  %3811 = vmatpush1.msra.mxu0 0.0
  %3812 = vmatprep.subr.mxu0 0.0
  %3813 = vmatpush1.msra.mxu0 0.0
  %3814 = vmatprep.subr.mxu0 0.0
  %3815 = vmatpush1.msra.mxu0 0.0
  %3816 = vmatprep.subr.mxu0 0.0
  %3817 = vmatpush1.msra.mxu0 0.0
  %3818 = vmatprep.subr.mxu0 0.0
  %3819 = vmatpush1.msra.mxu0 0.0
  %3820 = vmatprep.subr.mxu0 0.0
  %3821 = vmatpush1.msra.mxu0 0.0
  %3822 = vmatprep.subr.mxu0 0.0
  %3823 = vmatpush1.msra.mxu0 0.0
  %3824 = vmatprep.subr.mxu0 0.0
  %3825 = vmatpush1.msra.mxu0 0.0
  %3826 = vmatprep.subr.mxu0 0.0
  %3827 = vmatpush1.msra.mxu0 0.0
  %3828 = vmatprep.subr.mxu0 0.0
  %3829 = vmatpush1.msra.mxu0 0.0
  %3830 = vmatprep.subr.mxu0 0.0
  %3831 = vmatpush1.msra.mxu0 0.0
  %3832 = vmatprep.subr.mxu0 0.0
  %3833 = vmatpush1.msra.mxu0 0.0
  %3834 = vmatprep.subr.mxu0 0.0
  %3835 = vmatpush1.msra.mxu0 0.0
  %3836 = vmatprep.subr.mxu0 0.0
  %3837 = vmatpush1.msra.mxu0 0.0
  %3838 = vmatprep.subr.mxu0 0.0
  %3839 = vmatpush1.msra.mxu0 0.0
  %3840 = vmatprep.subr.mxu0 0.0
  %3841 = vmatpush1.msra.mxu0 0.0
  %3842 = vmatprep.subr.mxu0 0.0
  %3843 = vmatpush1.msra.mxu0 0.0
  %3844 = vmatprep.subr.mxu0 0.0
  %3845 = vmatpush1.msra.mxu0 0.0
  %3846 = vmatprep.subr.mxu0 0.0
  %3847 = vmatpush1.msra.mxu0 0.0
  %3848 = vmatprep.subr.mxu0 0.0
  %3849 = vmatpush1.msra.mxu0 0.0
  %3850 = vmatprep.subr.mxu0 0.0
  %3851 = vmatpush1.msra.mxu0 0.0
  %3852 = vmatprep.subr.mxu0 0.0
  %3853 = vmatpush1.msra.mxu0 0.0
  %3854 = vmatprep.subr.mxu0 0.0
  %3855 = vmatpush1.msra.mxu0 0.0
  %3856 = vmatprep.subr.mxu0 0.0
  %3857 = vmatpush1.msra.mxu0 0.0
  %3858 = vmatprep.subr.mxu0 0.0
  %3859 = vmatpush1.msra.mxu0 0.0
  %3860 = vmatprep.subr.mxu0 0.0
  %3861 = vmatpush1.msra.mxu0 0.0
  %3862 = vmatprep.mubr.f32.mxu0 0.0
  %3863 = vmatmul.mubr.f32.gmra.mrb[0].mxu0 %v3725
  %v3864 = vpop.f32.mrb[0].mxu0
  %v3865 = vadd.f32 0.0, %v3864
  %v3866 = vpop.f32.mrb[0].mxu0
  %v3867 = vadd.f32 0.0, %v3866
  %3868 = vdwg.mxu0
  %3869 = vmatprep.subr.mxu0 %v3715
  %3870 = vmatpush1.msra.mxu0 %v3714
  %3871 = vmatprep.subr.mxu0 %v3722
  %3872 = vmatpush1.msra.mxu0 %v3721
  %3873 = vmatprep.subr.mxu0 0.0
  %3874 = vmatpush1.msra.mxu0 0.0
  %3875 = vmatprep.subr.mxu0 0.0
  %3876 = vmatpush1.msra.mxu0 0.0
  %3877 = vmatprep.subr.mxu0 0.0
  %3878 = vmatpush1.msra.mxu0 0.0
  %3879 = vmatprep.subr.mxu0 0.0
  %3880 = vmatpush1.msra.mxu0 0.0
  %3881 = vmatprep.subr.mxu0 0.0
  %3882 = vmatpush1.msra.mxu0 0.0
  %3883 = vmatprep.subr.mxu0 0.0
  %3884 = vmatpush1.msra.mxu0 0.0
  %3885 = vmatprep.subr.mxu0 0.0
  %3886 = vmatpush1.msra.mxu0 0.0
  %3887 = vmatprep.subr.mxu0 0.0
  %3888 = vmatpush1.msra.mxu0 0.0
  %3889 = vmatprep.subr.mxu0 0.0
  %3890 = vmatpush1.msra.mxu0 0.0
  %3891 = vmatprep.subr.mxu0 0.0
  %3892 = vmatpush1.msra.mxu0 0.0
  %3893 = vmatprep.subr.mxu0 0.0
  %3894 = vmatpush1.msra.mxu0 0.0
  %3895 = vmatprep.subr.mxu0 0.0
  %3896 = vmatpush1.msra.mxu0 0.0
  %3897 = vmatprep.subr.mxu0 0.0
  %3898 = vmatpush1.msra.mxu0 0.0
  %3899 = vmatprep.subr.mxu0 0.0
  %3900 = vmatpush1.msra.mxu0 0.0
  %3901 = vmatprep.subr.mxu0 0.0
  %3902 = vmatpush1.msra.mxu0 0.0
  %3903 = vmatprep.subr.mxu0 0.0
  %3904 = vmatpush1.msra.mxu0 0.0
  %3905 = vmatprep.subr.mxu0 0.0
  %3906 = vmatpush1.msra.mxu0 0.0
  %3907 = vmatprep.subr.mxu0 0.0
  %3908 = vmatpush1.msra.mxu0 0.0
  %3909 = vmatprep.subr.mxu0 0.0
  %3910 = vmatpush1.msra.mxu0 0.0
  %3911 = vmatprep.subr.mxu0 0.0
  %3912 = vmatpush1.msra.mxu0 0.0
  %3913 = vmatprep.subr.mxu0 0.0
  %3914 = vmatpush1.msra.mxu0 0.0
  %3915 = vmatprep.subr.mxu0 0.0
  %3916 = vmatpush1.msra.mxu0 0.0
  %3917 = vmatprep.subr.mxu0 0.0
  %3918 = vmatpush1.msra.mxu0 0.0
  %3919 = vmatprep.subr.mxu0 0.0
  %3920 = vmatpush1.msra.mxu0 0.0
  %3921 = vmatprep.subr.mxu0 0.0
  %3922 = vmatpush1.msra.mxu0 0.0
  %3923 = vmatprep.subr.mxu0 0.0
  %3924 = vmatpush1.msra.mxu0 0.0
  %3925 = vmatprep.subr.mxu0 0.0
  %3926 = vmatpush1.msra.mxu0 0.0
  %3927 = vmatprep.subr.mxu0 0.0
  %3928 = vmatpush1.msra.mxu0 0.0
  %3929 = vmatprep.subr.mxu0 0.0
  %3930 = vmatpush1.msra.mxu0 0.0
  %3931 = vmatprep.subr.mxu0 0.0
  %3932 = vmatpush1.msra.mxu0 0.0
  %3933 = vmatprep.mubr.f32.mxu0 0.0
  %3934 = vmatmul.mubr.f32.gmra.mrb[0].mxu0 %v3725
  %v3935 = vpop.f32.mrb[0].mxu0
  %v3936 = vadd.f32 0.0, %v3935
  %v3937 = vpop.f32.mrb[0].mxu0
  %v3938 = vadd.f32 0.0, %v3937
  %3939 = vdwg.mxu0
  %3940 = vmatprep.subr.mxu0 0.0
  %3941 = vmatpush1.msra.mxu0 %v3716
  %3942 = vmatprep.subr.mxu0 0.0
  %3943 = vmatpush1.msra.mxu0 %v3723
  %3944 = vmatprep.subr.mxu0 0.0
  %3945 = vmatpush1.msra.mxu0 0.0
  %3946 = vmatprep.subr.mxu0 0.0
  %3947 = vmatpush1.msra.mxu0 0.0
  %3948 = vmatprep.subr.mxu0 0.0
  %3949 = vmatpush1.msra.mxu0 0.0
  %3950 = vmatprep.subr.mxu0 0.0
  %3951 = vmatpush1.msra.mxu0 0.0
  %3952 = vmatprep.subr.mxu0 0.0
  %3953 = vmatpush1.msra.mxu0 0.0
  %3954 = vmatprep.subr.mxu0 0.0
  %3955 = vmatpush1.msra.mxu0 0.0
  %3956 = vmatprep.subr.mxu0 0.0
  %3957 = vmatpush1.msra.mxu0 0.0
  %3958 = vmatprep.subr.mxu0 0.0
  %3959 = vmatpush1.msra.mxu0 0.0
  %3960 = vmatprep.subr.mxu0 0.0
  %3961 = vmatpush1.msra.mxu0 0.0
  %3962 = vmatprep.subr.mxu0 0.0
  %3963 = vmatpush1.msra.mxu0 0.0
  %3964 = vmatprep.subr.mxu0 0.0
  %3965 = vmatpush1.msra.mxu0 0.0
  %3966 = vmatprep.subr.mxu0 0.0
  %3967 = vmatpush1.msra.mxu0 0.0
  %3968 = vmatprep.subr.mxu0 0.0
  %3969 = vmatpush1.msra.mxu0 0.0
  %3970 = vmatprep.subr.mxu0 0.0
  %3971 = vmatpush1.msra.mxu0 0.0
  %3972 = vmatprep.subr.mxu0 0.0
  %3973 = vmatpush1.msra.mxu0 0.0
  %3974 = vmatprep.subr.mxu0 0.0
  %3975 = vmatpush1.msra.mxu0 0.0
  %3976 = vmatprep.subr.mxu0 0.0
  %3977 = vmatpush1.msra.mxu0 0.0
  %3978 = vmatprep.subr.mxu0 0.0
  %3979 = vmatpush1.msra.mxu0 0.0
  %3980 = vmatprep.subr.mxu0 0.0
  %3981 = vmatpush1.msra.mxu0 0.0
  %3982 = vmatprep.subr.mxu0 0.0
  %3983 = vmatpush1.msra.mxu0 0.0
  %3984 = vmatprep.subr.mxu0 0.0
  %3985 = vmatpush1.msra.mxu0 0.0
  %3986 = vmatprep.subr.mxu0 0.0
  %3987 = vmatpush1.msra.mxu0 0.0
  %3988 = vmatprep.subr.mxu0 0.0
  %3989 = vmatpush1.msra.mxu0 0.0
  %3990 = vmatprep.subr.mxu0 0.0
  %3991 = vmatpush1.msra.mxu0 0.0
  %3992 = vmatprep.subr.mxu0 0.0
  %3993 = vmatpush1.msra.mxu0 0.0
  %3994 = vmatprep.subr.mxu0 0.0
  %3995 = vmatpush1.msra.mxu0 0.0
  %3996 = vmatprep.subr.mxu0 0.0
  %3997 = vmatpush1.msra.mxu0 0.0
  %3998 = vmatprep.subr.mxu0 0.0
  %3999 = vmatpush1.msra.mxu0 0.0
  %4000 = vmatprep.subr.mxu0 0.0
  %4001 = vmatpush1.msra.mxu0 0.0
  %4002 = vmatprep.subr.mxu0 0.0
  %4003 = vmatpush1.msra.mxu0 0.0
  %4004 = vmatprep.mubr.f32.mxu0 0.0
  %4005 = vmatmul.mubr.f32.gmra.mrb[0].mxu0 %v3725
  %v4006 = vpop.f32.mrb[0].mxu0
  %v4007 = vadd.f32 0.0, %v4006
  %v4008 = vpop.f32.mrb[0].mxu0
  %4009 = vdwg.mxu0
  %v4010 = vlaneseq
  %v4011 = vshrl.u32 %v4010, 7
  %v4012 = vsub.s32 0, %v4011
  %v4013 = vrot.slane %v3794, %v4012
  %v4014 = vlaneseq
  %v4015 = vshrl.u32 %v4014, 7
  %v4016 = vsub.s32 0, %v4015
  %v4017 = vrot.slane %v3796, %v4016
  %v4018 = vlaneseq
  %v4019 = vshrl.u32 %v4018, 7
  %v4020 = vsub.s32 0, %v4019
  %v4021 = vrot.slane %v3865, %v4020
  %v4022 = vlaneseq
  %v4023 = vshrl.u32 %v4022, 7
  %v4024 = vsub.s32 0, %v4023
  %v4025 = vrot.slane %v3867, %v4024
  %v4026 = vlaneseq
  %v4027 = vshrl.u32 %v4026, 7
  %v4028 = vsub.s32 0, %v4027
  %v4029 = vrot.slane %v3936, %v4028
  %v4030 = vlaneseq
  %v4031 = vshrl.u32 %v4030, 7
  %v4032 = vsub.s32 0, %v4031
  %v4033 = vrot.slane %v3938, %v4032
  %v4034 = vlaneseq
  %v4035 = vshrl.u32 %v4034, 7
  %v4036 = vsub.s32 0, %v4035
  %v4037 = vrot.slane %v4007, %v4036
  %v4038 = vmul.f32 %v2934, %v4013
  %v4039 = vmul.f32 %v2936, %v4017
  %v4040 = vmul.f32 %v3016, %v4021
  %v4041 = vmul.f32 %v3018, %v4025
  %v4042 = vmul.f32 %v3098, %v4029
  %v4043 = vmul.f32 %v3100, %v4033
  %v4044 = vmul.f32 %v3179, %v4037
  %v4045 = vlaneseq
  %v4046 = vshrl.u32 %v4045, 7
  %v4047 = vsub.s32 1, %v4046
  %v4048 = vrot.slane %v3794, %v4047
  %v4049 = vlaneseq
  %v4050 = vshrl.u32 %v4049, 7
  %v4051 = vsub.s32 1, %v4050
  %v4052 = vrot.slane %v3796, %v4051
  %v4053 = vlaneseq
  %v4054 = vshrl.u32 %v4053, 7
  %v4055 = vsub.s32 1, %v4054
  %v4056 = vrot.slane %v3865, %v4055
  %v4057 = vlaneseq
  %v4058 = vshrl.u32 %v4057, 7
  %v4059 = vsub.s32 1, %v4058
  %v4060 = vrot.slane %v3867, %v4059
  %v4061 = vlaneseq
  %v4062 = vshrl.u32 %v4061, 7
  %v4063 = vsub.s32 1, %v4062
  %v4064 = vrot.slane %v3936, %v4063
  %v4065 = vlaneseq
  %v4066 = vshrl.u32 %v4065, 7
  %v4067 = vsub.s32 1, %v4066
  %v4068 = vrot.slane %v3938, %v4067
  %v4069 = vlaneseq
  %v4070 = vshrl.u32 %v4069, 7
  %v4071 = vsub.s32 1, %v4070
  %v4072 = vrot.slane %v4007, %v4071
  %v4073 = vadd.f32 %v4038, %v4048
  %v4074 = vadd.f32 %v4039, %v4052
  %v4075 = vadd.f32 %v4040, %v4056
  %v4076 = vadd.f32 %v4041, %v4060
  %v4077 = vadd.f32 %v4042, %v4064
  %v4078 = vadd.f32 %v4043, %v4068
  %v4079 = vadd.f32 %v4044, %v4072
  %v4080 = vmax.f32 %v4073, 0.0
  %v4081 = vmax.f32 %v4074, 0.0
  %v4082 = vmax.f32 %v4075, 0.0
  %v4083 = vmax.f32 %v4076, 0.0
  %v4084 = vmax.f32 %v4077, 0.0
  %v4085 = vmax.f32 %v4078, 0.0
  %v4086 = vmax.f32 %v4079, 0.0
  %v4087 = vsel %vm478, %v4080, 0.0
  %v4088 = vsel %vm478, %v4081, 0.0
  %v4089 = vsel %vm478, %v4082, 0.0
  %v4090 = vsel %vm478, %v4083, 0.0
  %v4091 = vsel %vm478, %v4084, 0.0
  %v4092 = vsel %vm478, %v4085, 0.0
  %v4093 = vsel %vm478, %v4086, 0.0
  %v4094 = vpack.c.bf16 %v4087, %v4087
  %v4095 = vpack.c.bf16 %v4088, %v4088
  %v4096 = vpack.c.bf16 %v4089, %v4089
  %v4097 = vpack.c.bf16 %v4090, %v4090
  %v4098 = vpack.c.bf16 %v4091, %v4091
  %v4099 = vpack.c.bf16 %v4092, %v4092
  %v4100 = vpack.c.bf16 %v4093, %v4093
  %v4101 = vld [vmem:[%s16] sm:$0xff]
  %v4102 = vld [vmem:[%s16 + $0x8] sm:$0xff]
  %v4103 = vld [vmem:[%s16 + $0x10] sm:$0xff]
  %v4104 = vld [vmem:[%s16 + $0x18] sm:$0xf]
  %v4105 = vld [vmem:[%s16 + $0x1c] sm:$0xff]
  %v4106 = vld [vmem:[%s16 + $0x24] sm:$0xff]
  %v4107 = vld [vmem:[%s16 + $0x2c] sm:$0xff]
  %v4108 = vld [vmem:[%s16 + $0x34] sm:$0xf]
  %v4109 = vld [vmem:[%s16 + $0x38] sm:$0xff]
  %v4110 = vld [vmem:[%s16 + $0x40] sm:$0xff]
  %v4111 = vld [vmem:[%s16 + $0x48] sm:$0xff]
  %v4112 = vld [vmem:[%s16 + $0x50] sm:$0xf]
  %v4113 = vld [vmem:[%s16 + $0x54] sm:$0xff]
  %v4114 = vld [vmem:[%s16 + $0x5c] sm:$0xff]
  %v4115 = vld [vmem:[%s16 + $0x64] sm:$0xff]
  %v4116 = vld [vmem:[%s16 + $0x6c] sm:$0xf]
  %v4117 = vld [vmem:[%s16 + $0x70] sm:$0xff]
  %v4118 = vld [vmem:[%s16 + $0x78] sm:$0xff]
  %v4119 = vld [vmem:[%s16 + $0x80] sm:$0xff]
  %v4120 = vld [vmem:[%s16 + $0x88] sm:$0xf]
  %v4121 = vld [vmem:[%s16 + $0x8c] sm:$0xff]
  %v4122 = vld [vmem:[%s16 + $0x94] sm:$0xff]
  %v4123 = vld [vmem:[%s16 + $0x9c] sm:$0xff]
  %v4124 = vld [vmem:[%s16 + $0xa4] sm:$0xf]
  %v4125 = vld [vmem:[%s16 + $0xa8] sm:$0xff]
  %v4126 = vld [vmem:[%s16 + $0xb0] sm:$0xff]
  %v4127 = vld [vmem:[%s16 + $0xb8] sm:$0xff]
  %v4128 = vld [vmem:[%s16 + $0xc0] sm:$0xf]
  %v4129 = vld [vmem:[%s16 + $0xc4] sm:$0xff]
  %v4130 = vld [vmem:[%s16 + $0xcc] sm:$0xff]
  %v4131 = vld [vmem:[%s16 + $0xd4] sm:$0xff]
  %v4132 = vld [vmem:[%s16 + $0xdc] sm:$0xf]
  %v4133 = vld [vmem:[%s16 + $0xe0] sm:$0xff]
  %v4134 = vld [vmem:[%s16 + $0xe8] sm:$0xff]
  %v4135 = vld [vmem:[%s16 + $0xf0] sm:$0xff]
  %v4136 = vld [vmem:[%s16 + $0xf8] sm:$0xf]
  %v4137 = vld [vmem:[%s16 + $0xfc] sm:$0xff]
  %v4138 = vld [vmem:[%s16 + $0x104] sm:$0xff]
  %v4139 = vld [vmem:[%s16 + $0x10c] sm:$0xff]
  %v4140 = vld [vmem:[%s16 + $0x114] sm:$0xf]
  %v4141 = vld [vmem:[%s16 + $0x118] sm:$0xff]
  %v4142 = vld [vmem:[%s16 + $0x120] sm:$0xff]
  %v4143 = vld [vmem:[%s16 + $0x128] sm:$0xff]
  %v4144 = vld [vmem:[%s16 + $0x130] sm:$0xf]
  %v4145 = vld [vmem:[%s16 + $0x134] sm:$0xff]
  %v4146 = vld [vmem:[%s16 + $0x13c] sm:$0xff]
  %v4147 = vld [vmem:[%s16 + $0x144] sm:$0xff]
  %v4148 = vld [vmem:[%s16 + $0x14c] sm:$0xf]
  %v4149 = vld [vmem:[%s16 + $0x150] sm:$0xff]
  %v4150 = vld [vmem:[%s16 + $0x158] sm:$0xff]
  %v4151 = vld [vmem:[%s16 + $0x160] sm:$0xff]
  %v4152 = vld [vmem:[%s16 + $0x168] sm:$0xf]
  %v4153 = vld [vmem:[%s16 + $0x16c] sm:$0xff]
  %v4154 = vld [vmem:[%s16 + $0x174] sm:$0xff]
  %v4155 = vld [vmem:[%s16 + $0x17c] sm:$0xff]
  %v4156 = vld [vmem:[%s16 + $0x184] sm:$0xf]
  %v4157 = vld [vmem:[%s16 + $0x188] sm:$0xff]
  %v4158 = vld [vmem:[%s16 + $0x190] sm:$0xff]
  %v4159 = vld [vmem:[%s16 + $0x198] sm:$0xff]
  %v4160 = vld [vmem:[%s16 + $0x1a0] sm:$0xf]
  %v4161 = vld [vmem:[%s16 + $0x1a4] sm:$0xff]
  %v4162 = vld [vmem:[%s16 + $0x1ac] sm:$0xff]
  %v4163 = vld [vmem:[%s16 + $0x1b4] sm:$0xff]
  %v4164 = vld [vmem:[%s16 + $0x1bc] sm:$0xf]
  %v4165 = vld [vmem:[%s16 + $0x1c0] sm:$0xff]
  %v4166 = vld [vmem:[%s16 + $0x1c8] sm:$0xff]
  %v4167 = vld [vmem:[%s16 + $0x1d0] sm:$0xff]
  %v4168 = vld [vmem:[%s16 + $0x1d8] sm:$0xf]
  %v4169 = vld [vmem:[%s16 + $0x1dc] sm:$0xff]
  %v4170 = vld [vmem:[%s16 + $0x1e4] sm:$0xff]
  %v4171 = vld [vmem:[%s16 + $0x1ec] sm:$0xff]
  %v4172 = vld [vmem:[%s16 + $0x1f4] sm:$0xf]
  %v4173 = vld [vmem:[%s16 + $0x1f8] sm:$0xff]
  %v4174 = vld [vmem:[%s16 + $0x200] sm:$0xff]
  %v4175 = vld [vmem:[%s16 + $0x208] sm:$0xff]
  %v4176 = vld [vmem:[%s16 + $0x210] sm:$0xf]
  %v4177 = vld [vmem:[%s16 + $0x214] sm:$0xff]
  %v4178 = vld [vmem:[%s16 + $0x21c] sm:$0xff]
  %v4179 = vld [vmem:[%s16 + $0x224] sm:$0xff]
  %v4180 = vld [vmem:[%s16 + $0x22c] sm:$0xf]
  %v4181 = vld [vmem:[%s16 + $0x230] sm:$0xff]
  %v4182 = vld [vmem:[%s16 + $0x238] sm:$0xff]
  %v4183 = vld [vmem:[%s16 + $0x240] sm:$0xff]
  %v4184 = vld [vmem:[%s16 + $0x248] sm:$0xf]
  %v4185 = vld [vmem:[%s16 + $0x24c] sm:$0xff]
  %v4186 = vld [vmem:[%s16 + $0x254] sm:$0xff]
  %v4187 = vld [vmem:[%s16 + $0x25c] sm:$0xff]
  %v4188 = vld [vmem:[%s16 + $0x264] sm:$0xf]
  %v4189 = vld [vmem:[%s16 + $0x268] sm:$0xff]
  %v4190 = vld [vmem:[%s16 + $0x270] sm:$0xff]
  %v4191 = vld [vmem:[%s16 + $0x278] sm:$0xff]
  %v4192 = vld [vmem:[%s16 + $0x280] sm:$0xf]
  %v4193 = vld [vmem:[%s16 + $0x284] sm:$0xff]
  %v4194 = vld [vmem:[%s16 + $0x28c] sm:$0xff]
  %v4195 = vld [vmem:[%s16 + $0x294] sm:$0xff]
  %v4196 = vld [vmem:[%s16 + $0x29c] sm:$0xf]
  %v4197 = vld [vmem:[%s16 + $0x2a0] sm:$0xff]
  %v4198 = vld [vmem:[%s16 + $0x2a8] sm:$0xff]
  %v4199 = vld [vmem:[%s16 + $0x2b0] sm:$0xff]
  %v4200 = vld [vmem:[%s16 + $0x2b8] sm:$0xf]
  %v4201 = vld [vmem:[%s16 + $0x2bc] sm:$0xff]
  %v4202 = vld [vmem:[%s16 + $0x2c4] sm:$0xff]
  %v4203 = vld [vmem:[%s16 + $0x2cc] sm:$0xff]
  %v4204 = vld [vmem:[%s16 + $0x2d4] sm:$0xf]
  %v4205 = vld [vmem:[%s16 + $0x2d8] sm:$0xff]
  %v4206 = vld [vmem:[%s16 + $0x2e0] sm:$0xff]
  %v4207 = vld [vmem:[%s16 + $0x2e8] sm:$0xff]
  %v4208 = vld [vmem:[%s16 + $0x2f0] sm:$0xf]
  %v4209 = vld [vmem:[%s16 + $0x2f4] sm:$0xff]
  %v4210 = vld [vmem:[%s16 + $0x2fc] sm:$0xff]
  %v4211 = vld [vmem:[%s16 + $0x304] sm:$0xff]
  %v4212 = vld [vmem:[%s16 + $0x30c] sm:$0xf]
  %v4213 = vld [vmem:[%s16 + $0x310] sm:$0xff]
  %v4214 = vld [vmem:[%s16 + $0x318] sm:$0xff]
  %v4215 = vld [vmem:[%s16 + $0x320] sm:$0xff]
  %v4216 = vld [vmem:[%s16 + $0x328] sm:$0xf]
  %v4217 = vld [vmem:[%s16 + $0x32c] sm:$0xff]
  %v4218 = vld [vmem:[%s16 + $0x334] sm:$0xff]
  %v4219 = vld [vmem:[%s16 + $0x33c] sm:$0xff]
  %v4220 = vld [vmem:[%s16 + $0x344] sm:$0xf]
  %v4221 = vld [vmem:[%s16 + $0x348] sm:$0xff]
  %v4222 = vld [vmem:[%s16 + $0x350] sm:$0xff]
  %v4223 = vld [vmem:[%s16 + $0x358] sm:$0xff]
  %v4224 = vld [vmem:[%s16 + $0x360] sm:$0xf]
  %v4225 = vld [vmem:[%s16 + $0x364] sm:$0xff]
  %v4226 = vld [vmem:[%s16 + $0x36c] sm:$0xff]
  %v4227 = vld [vmem:[%s16 + $0x374] sm:$0xff]
  %v4228 = vld [vmem:[%s16 + $0x37c] sm:$0xf]
  %v4229 = vld [vmem:[%s16 + $0x380] sm:$0xff]
  %v4230 = vld [vmem:[%s16 + $0x388] sm:$0xff]
  %v4231 = vld [vmem:[%s16 + $0x390] sm:$0xff]
  %v4232 = vld [vmem:[%s16 + $0x398] sm:$0xf]
  %v4233 = vld [vmem:[%s16 + $0x39c] sm:$0xff]
  %v4234 = vld [vmem:[%s16 + $0x3a4] sm:$0xff]
  %v4235 = vld [vmem:[%s16 + $0x3ac] sm:$0xff]
  %v4236 = vld [vmem:[%s16 + $0x3b4] sm:$0xf]
  %v4237 = vld [vmem:[%s16 + $0x3b8] sm:$0xff]
  %v4238 = vld [vmem:[%s16 + $0x3c0] sm:$0xff]
  %v4239 = vld [vmem:[%s16 + $0x3c8] sm:$0xff]
  %v4240 = vld [vmem:[%s16 + $0x3d0] sm:$0xf]
  %v4241 = vld [vmem:[%s16 + $0x3d4] sm:$0xff]
  %v4242 = vld [vmem:[%s16 + $0x3dc] sm:$0xff]
  %v4243 = vld [vmem:[%s16 + $0x3e4] sm:$0xff]
  %v4244 = vld [vmem:[%s16 + $0x3ec] sm:$0xf]
  %v4245 = vld [vmem:[%s16 + $0x3f0] sm:$0xff]
  %v4246 = vld [vmem:[%s16 + $0x3f8] sm:$0xff]
  %v4247 = vld [vmem:[%s16 + $0x400] sm:$0xff]
  %v4248 = vld [vmem:[%s16 + $0x408] sm:$0xf]
  %v4249 = vld [vmem:[%s16 + $0x40c] sm:$0xff]
  %v4250 = vld [vmem:[%s16 + $0x414] sm:$0xff]
  %v4251 = vld [vmem:[%s16 + $0x41c] sm:$0xff]
  %v4252 = vld [vmem:[%s16 + $0x424] sm:$0xf]
  %v4253 = vld [vmem:[%s16 + $0x428] sm:$0xff]
  %v4254 = vld [vmem:[%s16 + $0x430] sm:$0xff]
  %v4255 = vld [vmem:[%s16 + $0x438] sm:$0xff]
  %v4256 = vld [vmem:[%s16 + $0x440] sm:$0xf]
  %v4257 = vld [vmem:[%s16 + $0x444] sm:$0xff]
  %v4258 = vld [vmem:[%s16 + $0x44c] sm:$0xff]
  %v4259 = vld [vmem:[%s16 + $0x454] sm:$0xff]
  %v4260 = vld [vmem:[%s16 + $0x45c] sm:$0xf]
  %v4261 = vld [vmem:[%s16 + $0x460] sm:$0xff]
  %v4262 = vld [vmem:[%s16 + $0x468] sm:$0xff]
  %v4263 = vld [vmem:[%s16 + $0x470] sm:$0xff]
  %v4264 = vld [vmem:[%s16 + $0x478] sm:$0xf]
  %v4265 = vld [vmem:[%s16 + $0x47c] sm:$0xff]
  %v4266 = vld [vmem:[%s16 + $0x484] sm:$0xff]
  %v4267 = vld [vmem:[%s16 + $0x48c] sm:$0xff]
  %v4268 = vld [vmem:[%s16 + $0x494] sm:$0xf]
  %v4269 = vld [vmem:[%s16 + $0x498] sm:$0xff]
  %v4270 = vld [vmem:[%s16 + $0x4a0] sm:$0xff]
  %v4271 = vld [vmem:[%s16 + $0x4a8] sm:$0xff]
  %v4272 = vld [vmem:[%s16 + $0x4b0] sm:$0xf]
  %v4273 = vld [vmem:[%s16 + $0x4b4] sm:$0xff]
  %v4274 = vld [vmem:[%s16 + $0x4bc] sm:$0xff]
  %v4275 = vld [vmem:[%s16 + $0x4c4] sm:$0xff]
  %v4276 = vld [vmem:[%s16 + $0x4cc] sm:$0xf]
  %v4277 = vld [vmem:[%s16 + $0x4d0] sm:$0xff]
  %v4278 = vld [vmem:[%s16 + $0x4d8] sm:$0xff]
  %v4279 = vld [vmem:[%s16 + $0x4e0] sm:$0xff]
  %v4280 = vld [vmem:[%s16 + $0x4e8] sm:$0xf]
  %v4281 = vld [vmem:[%s16 + $0x4ec] sm:$0xff]
  %v4282 = vld [vmem:[%s16 + $0x4f4] sm:$0xff]
  %v4283 = vld [vmem:[%s16 + $0x4fc] sm:$0xff]
  %v4284 = vld [vmem:[%s16 + $0x504] sm:$0xf]
  %v4285 = vld [vmem:[%s16 + $0x508] sm:$0xff]
  %v4286 = vld [vmem:[%s16 + $0x510] sm:$0xff]
  %v4287 = vld [vmem:[%s16 + $0x518] sm:$0xff]
  %v4288 = vld [vmem:[%s16 + $0x520] sm:$0xf]
  %v4289 = vld [vmem:[%s16 + $0x524] sm:$0xff]
  %v4290 = vld [vmem:[%s16 + $0x52c] sm:$0xff]
  %v4291 = vld [vmem:[%s16 + $0x534] sm:$0xff]
  %v4292 = vld [vmem:[%s16 + $0x53c] sm:$0xf]
  %v4293 = vld [vmem:[%s16 + $0x540] sm:$0xff]
  %v4294 = vld [vmem:[%s16 + $0x548] sm:$0xff]
  %v4295 = vld [vmem:[%s16 + $0x550] sm:$0xff]
  %v4296 = vld [vmem:[%s16 + $0x558] sm:$0xf]
  %v4297 = vld [vmem:[%s16 + $0x55c] sm:$0xff]
  %v4298 = vld [vmem:[%s16 + $0x564] sm:$0xff]
  %v4299 = vld [vmem:[%s16 + $0x56c] sm:$0xff]
  %v4300 = vld [vmem:[%s16 + $0x574] sm:$0xf]
  %v4301 = vld [vmem:[%s16 + $0x578] sm:$0xff]
  %v4302 = vld [vmem:[%s16 + $0x580] sm:$0xff]
  %v4303 = vld [vmem:[%s16 + $0x588] sm:$0xff]
  %v4304 = vld [vmem:[%s16 + $0x590] sm:$0xf]
  %v4305 = vld [vmem:[%s16 + $0x594] sm:$0xff]
  %v4306 = vld [vmem:[%s16 + $0x59c] sm:$0xff]
  %v4307 = vld [vmem:[%s16 + $0x5a4] sm:$0xff]
  %v4308 = vld [vmem:[%s16 + $0x5ac] sm:$0xf]
  %v4309 = vld [vmem:[%s16 + $0x5b0] sm:$0xff]
  %v4310 = vld [vmem:[%s16 + $0x5b8] sm:$0xff]
  %v4311 = vld [vmem:[%s16 + $0x5c0] sm:$0xff]
  %v4312 = vld [vmem:[%s16 + $0x5c8] sm:$0xf]
  %v4313 = vld [vmem:[%s16 + $0x5cc] sm:$0xff]
  %v4314 = vld [vmem:[%s16 + $0x5d4] sm:$0xff]
  %v4315 = vld [vmem:[%s16 + $0x5dc] sm:$0xff]
  %v4316 = vld [vmem:[%s16 + $0x5e4] sm:$0xf]
  %v4317 = vld [vmem:[%s16 + $0x5e8] sm:$0xff]
  %v4318 = vld [vmem:[%s16 + $0x5f0] sm:$0xff]
  %v4319 = vld [vmem:[%s16 + $0x5f8] sm:$0xff]
  %v4320 = vld [vmem:[%s16 + $0x600] sm:$0xf]
  %v4321 = vld [vmem:[%s16 + $0x604] sm:$0xff]
  %v4322 = vld [vmem:[%s16 + $0x60c] sm:$0xff]
  %v4323 = vld [vmem:[%s16 + $0x614] sm:$0xff]
  %v4324 = vld [vmem:[%s16 + $0x61c] sm:$0xf]
  %v4325 = vld [vmem:[%s16 + $0x620] sm:$0xff]
  %v4326 = vld [vmem:[%s16 + $0x628] sm:$0xff]
  %v4327 = vld [vmem:[%s16 + $0x630] sm:$0xff]
  %v4328 = vld [vmem:[%s16 + $0x638] sm:$0xf]
  %v4329 = vld [vmem:[%s16 + $0x63c] sm:$0xff]
  %v4330 = vld [vmem:[%s16 + $0x644] sm:$0xff]
  %v4331 = vld [vmem:[%s16 + $0x64c] sm:$0xff]
  %v4332 = vld [vmem:[%s16 + $0x654] sm:$0xf]
  %v4333 = vld [vmem:[%s16 + $0x658] sm:$0xff]
  %v4334 = vld [vmem:[%s16 + $0x660] sm:$0xff]
  %v4335 = vld [vmem:[%s16 + $0x668] sm:$0xff]
  %v4336 = vld [vmem:[%s16 + $0x670] sm:$0xf]
  %v4337 = vld [vmem:[%s16 + $0x674] sm:$0xff]
  %v4338 = vld [vmem:[%s16 + $0x67c] sm:$0xff]
  %v4339 = vld [vmem:[%s16 + $0x684] sm:$0xff]
  %v4340 = vld [vmem:[%s16 + $0x68c] sm:$0xf]
  %v4341 = vld [vmem:[%s16 + $0x690] sm:$0xff]
  %v4342 = vld [vmem:[%s16 + $0x698] sm:$0xff]
  %v4343 = vld [vmem:[%s16 + $0x6a0] sm:$0xff]
  %v4344 = vld [vmem:[%s16 + $0x6a8] sm:$0xf]
  %v4345 = vld [vmem:[%s16 + $0x6ac] sm:$0xff]
  %v4346 = vld [vmem:[%s16 + $0x6b4] sm:$0xff]
  %v4347 = vld [vmem:[%s16 + $0x6bc] sm:$0xff]
  %v4348 = vld [vmem:[%s16 + $0x6c4] sm:$0xf]
  %v4349 = vld [vmem:[%s16 + $0x6c8] sm:$0xff]
  %v4350 = vld [vmem:[%s16 + $0x6d0] sm:$0xff]
  %v4351 = vld [vmem:[%s16 + $0x6d8] sm:$0xff]
  %v4352 = vld [vmem:[%s16 + $0x6e0] sm:$0xf]
  %v4353 = vld [vmem:[%s16 + $0x6e4] sm:$0xff]
  %v4354 = vld [vmem:[%s16 + $0x6ec] sm:$0xff]
  %v4355 = vld [vmem:[%s16 + $0x6f4] sm:$0xff]
  %v4356 = vld [vmem:[%s16 + $0x6fc] sm:$0xf]
  %v4357 = vld [vmem:[%s16 + $0x700] sm:$0xff]
  %v4358 = vld [vmem:[%s16 + $0x708] sm:$0xff]
  %v4359 = vld [vmem:[%s16 + $0x710] sm:$0xff]
  %v4360 = vld [vmem:[%s16 + $0x718] sm:$0xf]
  %v4361 = vld [vmem:[%s16 + $0x71c] sm:$0xff]
  %v4362 = vld [vmem:[%s16 + $0x724] sm:$0xff]
  %v4363 = vld [vmem:[%s16 + $0x72c] sm:$0xff]
  %v4364 = vld [vmem:[%s16 + $0x734] sm:$0xf]
  %v4365 = vld [vmem:[%s16 + $0x738] sm:$0xff]
  %v4366 = vld [vmem:[%s16 + $0x740] sm:$0xff]
  %v4367 = vld [vmem:[%s16 + $0x748] sm:$0xff]
  %v4368 = vld [vmem:[%s16 + $0x750] sm:$0xf]
  %v4369 = vld [vmem:[%s16 + $0x754] sm:$0xff]
  %v4370 = vld [vmem:[%s16 + $0x75c] sm:$0xff]
  %v4371 = vld [vmem:[%s16 + $0x764] sm:$0xff]
  %v4372 = vld [vmem:[%s16 + $0x76c] sm:$0xf]
  %v4373 = vld [vmem:[%s16 + $0x770] sm:$0xff]
  %v4374 = vld [vmem:[%s16 + $0x778] sm:$0xff]
  %v4375 = vld [vmem:[%s16 + $0x780] sm:$0xff]
  %v4376 = vld [vmem:[%s16 + $0x788] sm:$0xf]
  %v4377 = vld [vmem:[%s16 + $0x78c] sm:$0xff]
  %v4378 = vld [vmem:[%s16 + $0x794] sm:$0xff]
  %v4379 = vld [vmem:[%s16 + $0x79c] sm:$0xff]
  %v4380 = vld [vmem:[%s16 + $0x7a4] sm:$0xf]
  %v4381 = vld [vmem:[%s16 + $0x7a8] sm:$0xff]
  %v4382 = vld [vmem:[%s16 + $0x7b0] sm:$0xff]
  %v4383 = vld [vmem:[%s16 + $0x7b8] sm:$0xff]
  %v4384 = vld [vmem:[%s16 + $0x7c0] sm:$0xf]
  %v4385 = vld [vmem:[%s16 + $0x7c4] sm:$0xff]
  %v4386 = vld [vmem:[%s16 + $0x7cc] sm:$0xff]
  %v4387 = vld [vmem:[%s16 + $0x7d4] sm:$0xff]
  %v4388 = vld [vmem:[%s16 + $0x7dc] sm:$0xf]
  %v4389 = vld [vmem:[%s16 + $0x7e0] sm:$0xff]
  %v4390 = vld [vmem:[%s16 + $0x7e8] sm:$0xff]
  %v4391 = vld [vmem:[%s16 + $0x7f0] sm:$0xff]
  %v4392 = vld [vmem:[%s16 + $0x7f8] sm:$0xf]
  %v4393 = vld [vmem:[%s16 + $0x7fc] sm:$0xff]
  %v4394 = vld [vmem:[%s16 + $0x804] sm:$0xff]
  %v4395 = vld [vmem:[%s16 + $0x80c] sm:$0xff]
  %v4396 = vld [vmem:[%s16 + $0x814] sm:$0xf]
  %v4397 = vld [vmem:[%s16 + $0x818] sm:$0xff]
  %v4398 = vld [vmem:[%s16 + $0x820] sm:$0xff]
  %v4399 = vld [vmem:[%s16 + $0x828] sm:$0xff]
  %v4400 = vld [vmem:[%s16 + $0x830] sm:$0xf]
  %v4401 = vld [vmem:[%s16 + $0x834] sm:$0xff]
  %v4402 = vld [vmem:[%s16 + $0x83c] sm:$0xff]
  %v4403 = vld [vmem:[%s16 + $0x844] sm:$0xff]
  %v4404 = vld [vmem:[%s16 + $0x84c] sm:$0xf]
  %v4405 = vld [vmem:[%s16 + $0x850] sm:$0xff]
  %v4406 = vld [vmem:[%s16 + $0x858] sm:$0xff]
  %v4407 = vld [vmem:[%s16 + $0x860] sm:$0xff]
  %v4408 = vld [vmem:[%s16 + $0x868] sm:$0xf]
  %v4409 = vld [vmem:[%s16 + $0x86c] sm:$0xff]
  %v4410 = vld [vmem:[%s16 + $0x874] sm:$0xff]
  %v4411 = vld [vmem:[%s16 + $0x87c] sm:$0xff]
  %v4412 = vld [vmem:[%s16 + $0x884] sm:$0xf]
  %v4413 = vld [vmem:[%s16 + $0x888] sm:$0xff]
  %v4414 = vld [vmem:[%s16 + $0x890] sm:$0xff]
  %v4415 = vld [vmem:[%s16 + $0x898] sm:$0xff]
  %v4416 = vld [vmem:[%s16 + $0x8a0] sm:$0xf]
  %v4417 = vld [vmem:[%s16 + $0x8a4] sm:$0xff]
  %v4418 = vld [vmem:[%s16 + $0x8ac] sm:$0xff]
  %v4419 = vld [vmem:[%s16 + $0x8b4] sm:$0xff]
  %v4420 = vld [vmem:[%s16 + $0x8bc] sm:$0xf]
  %v4421 = vld [vmem:[%s16 + $0x8c0] sm:$0xff]
  %v4422 = vld [vmem:[%s16 + $0x8c8] sm:$0xff]
  %v4423 = vld [vmem:[%s16 + $0x8d0] sm:$0xff]
  %v4424 = vld [vmem:[%s16 + $0x8d8] sm:$0xf]
  %v4425 = vld [vmem:[%s16 + $0x8dc] sm:$0xff]
  %v4426 = vld [vmem:[%s16 + $0x8e4] sm:$0xff]
  %v4427 = vld [vmem:[%s16 + $0x8ec] sm:$0xff]
  %v4428 = vld [vmem:[%s16 + $0x8f4] sm:$0xf]
  %v4429 = vld [vmem:[%s16 + $0x8f8] sm:$0xff]
  %v4430 = vld [vmem:[%s16 + $0x900] sm:$0xff]
  %v4431 = vld [vmem:[%s16 + $0x908] sm:$0xff]
  %v4432 = vld [vmem:[%s16 + $0x910] sm:$0xf]
  %v4433 = vld [vmem:[%s16 + $0x914] sm:$0xff]
  %v4434 = vld [vmem:[%s16 + $0x91c] sm:$0xff]
  %v4435 = vld [vmem:[%s16 + $0x924] sm:$0xff]
  %v4436 = vld [vmem:[%s16 + $0x92c] sm:$0xf]
  %v4437 = vld [vmem:[%s16 + $0x930] sm:$0xff]
  %v4438 = vld [vmem:[%s16 + $0x938] sm:$0xff]
  %v4439 = vld [vmem:[%s16 + $0x940] sm:$0xff]
  %v4440 = vld [vmem:[%s16 + $0x948] sm:$0xf]
  %v4441 = vld [vmem:[%s16 + $0x94c] sm:$0xff]
  %v4442 = vld [vmem:[%s16 + $0x954] sm:$0xff]
  %v4443 = vld [vmem:[%s16 + $0x95c] sm:$0xff]
  %v4444 = vld [vmem:[%s16 + $0x964] sm:$0xf]
  %v4445 = vld [vmem:[%s16 + $0x968] sm:$0xff]
  %v4446 = vld [vmem:[%s16 + $0x970] sm:$0xff]
  %v4447 = vld [vmem:[%s16 + $0x978] sm:$0xff]
  %v4448 = vld [vmem:[%s16 + $0x980] sm:$0xf]
  %v4449 = vld [vmem:[%s16 + $0x984] sm:$0xff]
  %v4450 = vld [vmem:[%s16 + $0x98c] sm:$0xff]
  %v4451 = vld [vmem:[%s16 + $0x994] sm:$0xff]
  %v4452 = vld [vmem:[%s16 + $0x99c] sm:$0xf]
  %v4453 = vld [vmem:[%s16 + $0x9a0] sm:$0xff]
  %v4454 = vld [vmem:[%s16 + $0x9a8] sm:$0xff]
  %v4455 = vld [vmem:[%s16 + $0x9b0] sm:$0xff]
  %v4456 = vld [vmem:[%s16 + $0x9b8] sm:$0xf]
  %v4457 = vld [vmem:[%s16 + $0x9bc] sm:$0xff]
  %v4458 = vld [vmem:[%s16 + $0x9c4] sm:$0xff]
  %v4459 = vld [vmem:[%s16 + $0x9cc] sm:$0xff]
  %v4460 = vld [vmem:[%s16 + $0x9d4] sm:$0xf]
  %v4461 = vld [vmem:[%s16 + $0x9d8] sm:$0xff]
  %v4462 = vld [vmem:[%s16 + $0x9e0] sm:$0xff]
  %v4463 = vld [vmem:[%s16 + $0x9e8] sm:$0xff]
  %v4464 = vld [vmem:[%s16 + $0x9f0] sm:$0xf]
  %v4465 = vld [vmem:[%s16 + $0x9f4] sm:$0xff]
  %v4466 = vld [vmem:[%s16 + $0x9fc] sm:$0xff]
  %v4467 = vld [vmem:[%s16 + $0xa04] sm:$0xff]
  %v4468 = vld [vmem:[%s16 + $0xa0c] sm:$0xf]
  %v4469 = vld [vmem:[%s16 + $0xa10] sm:$0xff]
  %v4470 = vld [vmem:[%s16 + $0xa18] sm:$0xff]
  %v4471 = vld [vmem:[%s16 + $0xa20] sm:$0xff]
  %v4472 = vld [vmem:[%s16 + $0xa28] sm:$0xf]
  %v4473 = vld [vmem:[%s16 + $0xa2c] sm:$0xff]
  %v4474 = vld [vmem:[%s16 + $0xa34] sm:$0xff]
  %v4475 = vld [vmem:[%s16 + $0xa3c] sm:$0xff]
  %v4476 = vld [vmem:[%s16 + $0xa44] sm:$0xf]
  %v4477 = vld [vmem:[%s16 + $0xa48] sm:$0xff]
  %v4478 = vld [vmem:[%s16 + $0xa50] sm:$0xff]
  %v4479 = vld [vmem:[%s16 + $0xa58] sm:$0xff]
  %v4480 = vld [vmem:[%s16 + $0xa60] sm:$0xf]
  %v4481 = vld [vmem:[%s16 + $0xa64] sm:$0xff]
  %v4482 = vld [vmem:[%s16 + $0xa6c] sm:$0xff]
  %v4483 = vld [vmem:[%s16 + $0xa74] sm:$0xff]
  %v4484 = vld [vmem:[%s16 + $0xa7c] sm:$0xf]
  %v4485 = vld [vmem:[%s16 + $0xa80] sm:$0xff]
  %v4486 = vld [vmem:[%s16 + $0xa88] sm:$0xff]
  %v4487 = vld [vmem:[%s16 + $0xa90] sm:$0xff]
  %v4488 = vld [vmem:[%s16 + $0xa98] sm:$0xf]
  %v4489 = vld [vmem:[%s16 + $0xa9c] sm:$0xff]
  %v4490 = vld [vmem:[%s16 + $0xaa4] sm:$0xff]
  %v4491 = vld [vmem:[%s16 + $0xaac] sm:$0xff]
  %v4492 = vld [vmem:[%s16 + $0xab4] sm:$0xf]
  %v4493 = vld [vmem:[%s16 + $0xab8] sm:$0xff]
  %v4494 = vld [vmem:[%s16 + $0xac0] sm:$0xff]
  %v4495 = vld [vmem:[%s16 + $0xac8] sm:$0xff]
  %v4496 = vld [vmem:[%s16 + $0xad0] sm:$0xf]
  %v4497 = vld [vmem:[%s16 + $0xad4] sm:$0xff]
  %v4498 = vld [vmem:[%s16 + $0xadc] sm:$0xff]
  %v4499 = vld [vmem:[%s16 + $0xae4] sm:$0xff]
  %v4500 = vld [vmem:[%s16 + $0xaec] sm:$0xf]
  %v4501 = vld [vmem:[%s16 + $0xaf0] sm:$0xff]
  %v4502 = vld [vmem:[%s16 + $0xaf8] sm:$0xff]
  %v4503 = vld [vmem:[%s16 + $0xb00] sm:$0xff]
  %v4504 = vld [vmem:[%s16 + $0xb08] sm:$0xf]
  %v4505 = vld [vmem:[%s16 + $0xb0c] sm:$0xff]
  %v4506 = vld [vmem:[%s16 + $0xb14] sm:$0xff]
  %v4507 = vld [vmem:[%s16 + $0xb1c] sm:$0xff]
  %v4508 = vld [vmem:[%s16 + $0xb24] sm:$0xf]
  %v4509 = vld [vmem:[%s16 + $0xb28] sm:$0xff]
  %v4510 = vld [vmem:[%s16 + $0xb30] sm:$0xff]
  %v4511 = vld [vmem:[%s16 + $0xb38] sm:$0xff]
  %v4512 = vld [vmem:[%s16 + $0xb40] sm:$0xf]
  %v4513 = vld [vmem:[%s16 + $0xb44] sm:$0xff]
  %v4514 = vld [vmem:[%s16 + $0xb4c] sm:$0xff]
  %v4515 = vld [vmem:[%s16 + $0xb54] sm:$0xff]
  %v4516 = vld [vmem:[%s16 + $0xb5c] sm:$0xf]
  %v4517 = vld [vmem:[%s16 + $0xb60] sm:$0xff]
  %v4518 = vld [vmem:[%s16 + $0xb68] sm:$0xff]
  %v4519 = vld [vmem:[%s16 + $0xb70] sm:$0xff]
  %v4520 = vld [vmem:[%s16 + $0xb78] sm:$0xf]
  %v4521 = vld [vmem:[%s16 + $0xb7c] sm:$0xff]
  %v4522 = vld [vmem:[%s16 + $0xb84] sm:$0xff]
  %v4523 = vld [vmem:[%s16 + $0xb8c] sm:$0xff]
  %v4524 = vld [vmem:[%s16 + $0xb94] sm:$0xf]
  %v4525 = vld [vmem:[%s16 + $0xb98] sm:$0xff]
  %v4526 = vld [vmem:[%s16 + $0xba0] sm:$0xff]
  %v4527 = vld [vmem:[%s16 + $0xba8] sm:$0xff]
  %v4528 = vld [vmem:[%s16 + $0xbb0] sm:$0xf]
  %v4529 = vld [vmem:[%s16 + $0xbb4] sm:$0xff]
  %v4530 = vld [vmem:[%s16 + $0xbbc] sm:$0xff]
  %v4531 = vld [vmem:[%s16 + $0xbc4] sm:$0xff]
  %v4532 = vld [vmem:[%s16 + $0xbcc] sm:$0xf]
  %v4533 = vld [vmem:[%s16 + $0xbd0] sm:$0xff]
  %v4534 = vld [vmem:[%s16 + $0xbd8] sm:$0xff]
  %v4535 = vld [vmem:[%s16 + $0xbe0] sm:$0xff]
  %v4536 = vld [vmem:[%s16 + $0xbe8] sm:$0xf]
  %v4537 = vld [vmem:[%s16 + $0xbec] sm:$0xff]
  %v4538 = vld [vmem:[%s16 + $0xbf4] sm:$0xff]
  %v4539 = vld [vmem:[%s16 + $0xbfc] sm:$0xff]
  %v4540 = vld [vmem:[%s16 + $0xc04] sm:$0xf]
  %v4541 = vld [vmem:[%s16 + $0xc08] sm:$0xff]
  %v4542 = vld [vmem:[%s16 + $0xc10] sm:$0xff]
  %v4543 = vld [vmem:[%s16 + $0xc18] sm:$0xff]
  %v4544 = vld [vmem:[%s16 + $0xc20] sm:$0xf]
  %v4545 = vld [vmem:[%s16 + $0xc24] sm:$0xff]
  %v4546 = vld [vmem:[%s16 + $0xc2c] sm:$0xff]
  %v4547 = vld [vmem:[%s16 + $0xc34] sm:$0xff]
  %v4548 = vld [vmem:[%s16 + $0xc3c] sm:$0xf]
  %v4997 = vunpack.c.l.b16 %v4101
  %v4998 = vunpack.c.h.b16 %v4101
  %v4999 = vunpack.c.l.b16 %v4102
  %v5000 = vunpack.c.h.b16 %v4102
  %v5001 = vunpack.c.l.b16 %v4103
  %v5002 = vunpack.c.h.b16 %v4103
  %v5003 = vunpack.c.l.b16 %v4104
  %v5004 = vunpack.c.l.b16 %v4105
  %v5005 = vunpack.c.h.b16 %v4105
  %v5006 = vunpack.c.l.b16 %v4106
  %v5007 = vunpack.c.h.b16 %v4106
  %v5008 = vunpack.c.l.b16 %v4107
  %v5009 = vunpack.c.h.b16 %v4107
  %v5010 = vunpack.c.l.b16 %v4108
  %v5011 = vunpack.c.l.b16 %v4109
  %v5012 = vunpack.c.h.b16 %v4109
  %v5013 = vunpack.c.l.b16 %v4110
  %v5014 = vunpack.c.h.b16 %v4110
  %v5015 = vunpack.c.l.b16 %v4111
  %v5016 = vunpack.c.h.b16 %v4111
  %v5017 = vunpack.c.l.b16 %v4112
  %v5018 = vunpack.c.l.b16 %v4113
  %v5019 = vunpack.c.h.b16 %v4113
  %v5020 = vunpack.c.l.b16 %v4114
  %v5021 = vunpack.c.h.b16 %v4114
  %v5022 = vunpack.c.l.b16 %v4115
  %v5023 = vunpack.c.h.b16 %v4115
  %v5024 = vunpack.c.l.b16 %v4116
  %v5025 = vunpack.c.l.b16 %v4117
  %v5026 = vunpack.c.h.b16 %v4117
  %v5027 = vunpack.c.l.b16 %v4118
  %v5028 = vunpack.c.h.b16 %v4118
  %v5029 = vunpack.c.l.b16 %v4119
  %v5030 = vunpack.c.h.b16 %v4119
  %v5031 = vunpack.c.l.b16 %v4120
  %v5032 = vunpack.c.l.b16 %v4121
  %v5033 = vunpack.c.h.b16 %v4121
  %v5034 = vunpack.c.l.b16 %v4122
  %v5035 = vunpack.c.h.b16 %v4122
  %v5036 = vunpack.c.l.b16 %v4123
  %v5037 = vunpack.c.h.b16 %v4123
  %v5038 = vunpack.c.l.b16 %v4124
  %v5039 = vunpack.c.l.b16 %v4125
  %v5040 = vunpack.c.h.b16 %v4125
  %v5041 = vunpack.c.l.b16 %v4126
  %v5042 = vunpack.c.h.b16 %v4126
  %v5043 = vunpack.c.l.b16 %v4127
  %v5044 = vunpack.c.h.b16 %v4127
  %v5045 = vunpack.c.l.b16 %v4128
  %v5046 = vunpack.c.l.b16 %v4129
  %v5047 = vunpack.c.h.b16 %v4129
  %v5048 = vunpack.c.l.b16 %v4130
  %v5049 = vunpack.c.h.b16 %v4130
  %v5050 = vunpack.c.l.b16 %v4131
  %v5051 = vunpack.c.h.b16 %v4131
  %v5052 = vunpack.c.l.b16 %v4132
  %v5053 = vunpack.c.l.b16 %v4133
  %v5054 = vunpack.c.h.b16 %v4133
  %v5055 = vunpack.c.l.b16 %v4134
  %v5056 = vunpack.c.h.b16 %v4134
  %v5057 = vunpack.c.l.b16 %v4135
  %v5058 = vunpack.c.h.b16 %v4135
  %v5059 = vunpack.c.l.b16 %v4136
  %v5060 = vunpack.c.l.b16 %v4137
  %v5061 = vunpack.c.h.b16 %v4137
  %v5062 = vunpack.c.l.b16 %v4138
  %v5063 = vunpack.c.h.b16 %v4138
  %v5064 = vunpack.c.l.b16 %v4139
  %v5065 = vunpack.c.h.b16 %v4139
  %v5066 = vunpack.c.l.b16 %v4140
  %v5067 = vunpack.c.l.b16 %v4141
  %v5068 = vunpack.c.h.b16 %v4141
  %v5069 = vunpack.c.l.b16 %v4142
  %v5070 = vunpack.c.h.b16 %v4142
  %v5071 = vunpack.c.l.b16 %v4143
  %v5072 = vunpack.c.h.b16 %v4143
  %v5073 = vunpack.c.l.b16 %v4144
  %v5074 = vunpack.c.l.b16 %v4145
  %v5075 = vunpack.c.h.b16 %v4145
  %v5076 = vunpack.c.l.b16 %v4146
  %v5077 = vunpack.c.h.b16 %v4146
  %v5078 = vunpack.c.l.b16 %v4147
  %v5079 = vunpack.c.h.b16 %v4147
  %v5080 = vunpack.c.l.b16 %v4148
  %v5081 = vunpack.c.l.b16 %v4149
  %v5082 = vunpack.c.h.b16 %v4149
  %v5083 = vunpack.c.l.b16 %v4150
  %v5084 = vunpack.c.h.b16 %v4150
  %v5085 = vunpack.c.l.b16 %v4151
  %v5086 = vunpack.c.h.b16 %v4151
  %v5087 = vunpack.c.l.b16 %v4152
  %v5088 = vunpack.c.l.b16 %v4153
  %v5089 = vunpack.c.h.b16 %v4153
  %v5090 = vunpack.c.l.b16 %v4154
  %v5091 = vunpack.c.h.b16 %v4154
  %v5092 = vunpack.c.l.b16 %v4155
  %v5093 = vunpack.c.h.b16 %v4155
  %v5094 = vunpack.c.l.b16 %v4156
  %v5095 = vunpack.c.l.b16 %v4157
  %v5096 = vunpack.c.h.b16 %v4157
  %v5097 = vunpack.c.l.b16 %v4158
  %v5098 = vunpack.c.h.b16 %v4158
  %v5099 = vunpack.c.l.b16 %v4159
  %v5100 = vunpack.c.h.b16 %v4159
  %v5101 = vunpack.c.l.b16 %v4160
  %v5102 = vunpack.c.l.b16 %v4161
  %v5103 = vunpack.c.h.b16 %v4161
  %v5104 = vunpack.c.l.b16 %v4162
  %v5105 = vunpack.c.h.b16 %v4162
  %v5106 = vunpack.c.l.b16 %v4163
  %v5107 = vunpack.c.h.b16 %v4163
  %v5108 = vunpack.c.l.b16 %v4164
  %v5109 = vunpack.c.l.b16 %v4165
  %v5110 = vunpack.c.h.b16 %v4165
  %v5111 = vunpack.c.l.b16 %v4166
  %v5112 = vunpack.c.h.b16 %v4166
  %v5113 = vunpack.c.l.b16 %v4167
  %v5114 = vunpack.c.h.b16 %v4167
  %v5115 = vunpack.c.l.b16 %v4168
  %v5116 = vunpack.c.l.b16 %v4169
  %v5117 = vunpack.c.h.b16 %v4169
  %v5118 = vunpack.c.l.b16 %v4170
  %v5119 = vunpack.c.h.b16 %v4170
  %v5120 = vunpack.c.l.b16 %v4171
  %v5121 = vunpack.c.h.b16 %v4171
  %v5122 = vunpack.c.l.b16 %v4172
  %v5123 = vunpack.c.l.b16 %v4173
  %v5124 = vunpack.c.h.b16 %v4173
  %v5125 = vunpack.c.l.b16 %v4174
  %v5126 = vunpack.c.h.b16 %v4174
  %v5127 = vunpack.c.l.b16 %v4175
  %v5128 = vunpack.c.h.b16 %v4175
  %v5129 = vunpack.c.l.b16 %v4176
  %v5130 = vunpack.c.l.b16 %v4177
  %v5131 = vunpack.c.h.b16 %v4177
  %v5132 = vunpack.c.l.b16 %v4178
  %v5133 = vunpack.c.h.b16 %v4178
  %v5134 = vunpack.c.l.b16 %v4179
  %v5135 = vunpack.c.h.b16 %v4179
  %v5136 = vunpack.c.l.b16 %v4180
  %v5137 = vunpack.c.l.b16 %v4181
  %v5138 = vunpack.c.h.b16 %v4181
  %v5139 = vunpack.c.l.b16 %v4182
  %v5140 = vunpack.c.h.b16 %v4182
  %v5141 = vunpack.c.l.b16 %v4183
  %v5142 = vunpack.c.h.b16 %v4183
  %v5143 = vunpack.c.l.b16 %v4184
  %v5144 = vunpack.c.l.b16 %v4185
  %v5145 = vunpack.c.h.b16 %v4185
  %v5146 = vunpack.c.l.b16 %v4186
  %v5147 = vunpack.c.h.b16 %v4186
  %v5148 = vunpack.c.l.b16 %v4187
  %v5149 = vunpack.c.h.b16 %v4187
  %v5150 = vunpack.c.l.b16 %v4188
  %v5151 = vunpack.c.l.b16 %v4189
  %v5152 = vunpack.c.h.b16 %v4189
  %v5153 = vunpack.c.l.b16 %v4190
  %v5154 = vunpack.c.h.b16 %v4190
  %v5155 = vunpack.c.l.b16 %v4191
  %v5156 = vunpack.c.h.b16 %v4191
  %v5157 = vunpack.c.l.b16 %v4192
  %v5158 = vunpack.c.l.b16 %v4193
  %v5159 = vunpack.c.h.b16 %v4193
  %v5160 = vunpack.c.l.b16 %v4194
  %v5161 = vunpack.c.h.b16 %v4194
  %v5162 = vunpack.c.l.b16 %v4195
  %v5163 = vunpack.c.h.b16 %v4195
  %v5164 = vunpack.c.l.b16 %v4196
  %v5165 = vunpack.c.l.b16 %v4197
  %v5166 = vunpack.c.h.b16 %v4197
  %v5167 = vunpack.c.l.b16 %v4198
  %v5168 = vunpack.c.h.b16 %v4198
  %v5169 = vunpack.c.l.b16 %v4199
  %v5170 = vunpack.c.h.b16 %v4199
  %v5171 = vunpack.c.l.b16 %v4200
  %v5172 = vunpack.c.l.b16 %v4201
  %v5173 = vunpack.c.h.b16 %v4201
  %v5174 = vunpack.c.l.b16 %v4202
  %v5175 = vunpack.c.h.b16 %v4202
  %v5176 = vunpack.c.l.b16 %v4203
  %v5177 = vunpack.c.h.b16 %v4203
  %v5178 = vunpack.c.l.b16 %v4204
  %v5179 = vunpack.c.l.b16 %v4205
  %v5180 = vunpack.c.h.b16 %v4205
  %v5181 = vunpack.c.l.b16 %v4206
  %v5182 = vunpack.c.h.b16 %v4206
  %v5183 = vunpack.c.l.b16 %v4207
  %v5184 = vunpack.c.h.b16 %v4207
  %v5185 = vunpack.c.l.b16 %v4208
  %v5186 = vunpack.c.l.b16 %v4209
  %v5187 = vunpack.c.h.b16 %v4209
  %v5188 = vunpack.c.l.b16 %v4210
  %v5189 = vunpack.c.h.b16 %v4210
  %v5190 = vunpack.c.l.b16 %v4211
  %v5191 = vunpack.c.h.b16 %v4211
  %v5192 = vunpack.c.l.b16 %v4212
  %v5193 = vunpack.c.l.b16 %v4213
  %v5194 = vunpack.c.h.b16 %v4213
  %v5195 = vunpack.c.l.b16 %v4214
  %v5196 = vunpack.c.h.b16 %v4214
  %v5197 = vunpack.c.l.b16 %v4215
  %v5198 = vunpack.c.h.b16 %v4215
  %v5199 = vunpack.c.l.b16 %v4216
  %v5200 = vunpack.c.l.b16 %v4217
  %v5201 = vunpack.c.h.b16 %v4217
  %v5202 = vunpack.c.l.b16 %v4218
  %v5203 = vunpack.c.h.b16 %v4218
  %v5204 = vunpack.c.l.b16 %v4219
  %v5205 = vunpack.c.h.b16 %v4219
  %v5206 = vunpack.c.l.b16 %v4220
  %v5207 = vunpack.c.l.b16 %v4221
  %v5208 = vunpack.c.h.b16 %v4221
  %v5209 = vunpack.c.l.b16 %v4222
  %v5210 = vunpack.c.h.b16 %v4222
  %v5211 = vunpack.c.l.b16 %v4223
  %v5212 = vunpack.c.h.b16 %v4223
  %v5213 = vunpack.c.l.b16 %v4224
  %v5214 = vunpack.c.l.b16 %v4225
  %v5215 = vunpack.c.h.b16 %v4225
  %v5216 = vunpack.c.l.b16 %v4226
  %v5217 = vunpack.c.h.b16 %v4226
  %v5218 = vunpack.c.l.b16 %v4227
  %v5219 = vunpack.c.h.b16 %v4227
  %v5220 = vunpack.c.l.b16 %v4228
  %v5221 = vunpack.c.l.b16 %v4229
  %v5222 = vunpack.c.h.b16 %v4229
  %v5223 = vunpack.c.l.b16 %v4230
  %v5224 = vunpack.c.h.b16 %v4230
  %v5225 = vunpack.c.l.b16 %v4231
  %v5226 = vunpack.c.h.b16 %v4231
  %v5227 = vunpack.c.l.b16 %v4232
  %v5228 = vunpack.c.l.b16 %v4233
  %v5229 = vunpack.c.h.b16 %v4233
  %v5230 = vunpack.c.l.b16 %v4234
  %v5231 = vunpack.c.h.b16 %v4234
  %v5232 = vunpack.c.l.b16 %v4235
  %v5233 = vunpack.c.h.b16 %v4235
  %v5234 = vunpack.c.l.b16 %v4236
  %v5235 = vunpack.c.l.b16 %v4237
  %v5236 = vunpack.c.h.b16 %v4237
  %v5237 = vunpack.c.l.b16 %v4238
  %v5238 = vunpack.c.h.b16 %v4238
  %v5239 = vunpack.c.l.b16 %v4239
  %v5240 = vunpack.c.h.b16 %v4239
  %v5241 = vunpack.c.l.b16 %v4240
  %v5242 = vunpack.c.l.b16 %v4241
  %v5243 = vunpack.c.h.b16 %v4241
  %v5244 = vunpack.c.l.b16 %v4242
  %v5245 = vunpack.c.h.b16 %v4242
  %v5246 = vunpack.c.l.b16 %v4243
  %v5247 = vunpack.c.h.b16 %v4243
  %v5248 = vunpack.c.l.b16 %v4244
  %v5249 = vunpack.c.l.b16 %v4245
  %v5250 = vunpack.c.h.b16 %v4245
  %v5251 = vunpack.c.l.b16 %v4246
  %v5252 = vunpack.c.h.b16 %v4246
  %v5253 = vunpack.c.l.b16 %v4247
  %v5254 = vunpack.c.h.b16 %v4247
  %v5255 = vunpack.c.l.b16 %v4248
  %v5256 = vunpack.c.l.b16 %v4249
  %v5257 = vunpack.c.h.b16 %v4249
  %v5258 = vunpack.c.l.b16 %v4250
  %v5259 = vunpack.c.h.b16 %v4250
  %v5260 = vunpack.c.l.b16 %v4251
  %v5261 = vunpack.c.h.b16 %v4251
  %v5262 = vunpack.c.l.b16 %v4252
  %v5263 = vunpack.c.l.b16 %v4253
  %v5264 = vunpack.c.h.b16 %v4253
  %v5265 = vunpack.c.l.b16 %v4254
  %v5266 = vunpack.c.h.b16 %v4254
  %v5267 = vunpack.c.l.b16 %v4255
  %v5268 = vunpack.c.h.b16 %v4255
  %v5269 = vunpack.c.l.b16 %v4256
  %v5270 = vunpack.c.l.b16 %v4257
  %v5271 = vunpack.c.h.b16 %v4257
  %v5272 = vunpack.c.l.b16 %v4258
  %v5273 = vunpack.c.h.b16 %v4258
  %v5274 = vunpack.c.l.b16 %v4259
  %v5275 = vunpack.c.h.b16 %v4259
  %v5276 = vunpack.c.l.b16 %v4260
  %v5277 = vunpack.c.l.b16 %v4261
  %v5278 = vunpack.c.h.b16 %v4261
  %v5279 = vunpack.c.l.b16 %v4262
  %v5280 = vunpack.c.h.b16 %v4262
  %v5281 = vunpack.c.l.b16 %v4263
  %v5282 = vunpack.c.h.b16 %v4263
  %v5283 = vunpack.c.l.b16 %v4264
  %v5284 = vunpack.c.l.b16 %v4265
  %v5285 = vunpack.c.h.b16 %v4265
  %v5286 = vunpack.c.l.b16 %v4266
  %v5287 = vunpack.c.h.b16 %v4266
  %v5288 = vunpack.c.l.b16 %v4267
  %v5289 = vunpack.c.h.b16 %v4267
  %v5290 = vunpack.c.l.b16 %v4268
  %v5291 = vunpack.c.l.b16 %v4269
  %v5292 = vunpack.c.h.b16 %v4269
  %v5293 = vunpack.c.l.b16 %v4270
  %v5294 = vunpack.c.h.b16 %v4270
  %v5295 = vunpack.c.l.b16 %v4271
  %v5296 = vunpack.c.h.b16 %v4271
  %v5297 = vunpack.c.l.b16 %v4272
  %v5298 = vunpack.c.l.b16 %v4273
  %v5299 = vunpack.c.h.b16 %v4273
  %v5300 = vunpack.c.l.b16 %v4274
  %v5301 = vunpack.c.h.b16 %v4274
  %v5302 = vunpack.c.l.b16 %v4275
  %v5303 = vunpack.c.h.b16 %v4275
  %v5304 = vunpack.c.l.b16 %v4276
  %v5305 = vunpack.c.l.b16 %v4277
  %v5306 = vunpack.c.h.b16 %v4277
  %v5307 = vunpack.c.l.b16 %v4278
  %v5308 = vunpack.c.h.b16 %v4278
  %v5309 = vunpack.c.l.b16 %v4279
  %v5310 = vunpack.c.h.b16 %v4279
  %v5311 = vunpack.c.l.b16 %v4280
  %v5312 = vunpack.c.l.b16 %v4281
  %v5313 = vunpack.c.h.b16 %v4281
  %v5314 = vunpack.c.l.b16 %v4282
  %v5315 = vunpack.c.h.b16 %v4282
  %v5316 = vunpack.c.l.b16 %v4283
  %v5317 = vunpack.c.h.b16 %v4283
  %v5318 = vunpack.c.l.b16 %v4284
  %v5319 = vunpack.c.l.b16 %v4285
  %v5320 = vunpack.c.h.b16 %v4285
  %v5321 = vunpack.c.l.b16 %v4286
  %v5322 = vunpack.c.h.b16 %v4286
  %v5323 = vunpack.c.l.b16 %v4287
  %v5324 = vunpack.c.h.b16 %v4287
  %v5325 = vunpack.c.l.b16 %v4288
  %v5326 = vunpack.c.l.b16 %v4289
  %v5327 = vunpack.c.h.b16 %v4289
  %v5328 = vunpack.c.l.b16 %v4290
  %v5329 = vunpack.c.h.b16 %v4290
  %v5330 = vunpack.c.l.b16 %v4291
  %v5331 = vunpack.c.h.b16 %v4291
  %v5332 = vunpack.c.l.b16 %v4292
  %v5333 = vunpack.c.l.b16 %v4293
  %v5334 = vunpack.c.h.b16 %v4293
  %v5335 = vunpack.c.l.b16 %v4294
  %v5336 = vunpack.c.h.b16 %v4294
  %v5337 = vunpack.c.l.b16 %v4295
  %v5338 = vunpack.c.h.b16 %v4295
  %v5339 = vunpack.c.l.b16 %v4296
  %v5340 = vunpack.c.l.b16 %v4297
  %v5341 = vunpack.c.h.b16 %v4297
  %v5342 = vunpack.c.l.b16 %v4298
  %v5343 = vunpack.c.h.b16 %v4298
  %v5344 = vunpack.c.l.b16 %v4299
  %v5345 = vunpack.c.h.b16 %v4299
  %v5346 = vunpack.c.l.b16 %v4300
  %v5347 = vunpack.c.l.b16 %v4301
  %v5348 = vunpack.c.h.b16 %v4301
  %v5349 = vunpack.c.l.b16 %v4302
  %v5350 = vunpack.c.h.b16 %v4302
  %v5351 = vunpack.c.l.b16 %v4303
  %v5352 = vunpack.c.h.b16 %v4303
  %v5353 = vunpack.c.l.b16 %v4304
  %v5354 = vunpack.c.l.b16 %v4305
  %v5355 = vunpack.c.h.b16 %v4305
  %v5356 = vunpack.c.l.b16 %v4306
  %v5357 = vunpack.c.h.b16 %v4306
  %v5358 = vunpack.c.l.b16 %v4307
  %v5359 = vunpack.c.h.b16 %v4307
  %v5360 = vunpack.c.l.b16 %v4308
  %v5361 = vunpack.c.l.b16 %v4309
  %v5362 = vunpack.c.h.b16 %v4309
  %v5363 = vunpack.c.l.b16 %v4310
  %v5364 = vunpack.c.h.b16 %v4310
  %v5365 = vunpack.c.l.b16 %v4311
  %v5366 = vunpack.c.h.b16 %v4311
  %v5367 = vunpack.c.l.b16 %v4312
  %v5368 = vunpack.c.l.b16 %v4313
  %v5369 = vunpack.c.h.b16 %v4313
  %v5370 = vunpack.c.l.b16 %v4314
  %v5371 = vunpack.c.h.b16 %v4314
  %v5372 = vunpack.c.l.b16 %v4315
  %v5373 = vunpack.c.h.b16 %v4315
  %v5374 = vunpack.c.l.b16 %v4316
  %v5375 = vunpack.c.l.b16 %v4317
  %v5376 = vunpack.c.h.b16 %v4317
  %v5377 = vunpack.c.l.b16 %v4318
  %v5378 = vunpack.c.h.b16 %v4318
  %v5379 = vunpack.c.l.b16 %v4319
  %v5380 = vunpack.c.h.b16 %v4319
  %v5381 = vunpack.c.l.b16 %v4320
  %v5382 = vunpack.c.l.b16 %v4321
  %v5383 = vunpack.c.h.b16 %v4321
  %v5384 = vunpack.c.l.b16 %v4322
  %v5385 = vunpack.c.h.b16 %v4322
  %v5386 = vunpack.c.l.b16 %v4323
  %v5387 = vunpack.c.h.b16 %v4323
  %v5388 = vunpack.c.l.b16 %v4324
  %v5389 = vunpack.c.l.b16 %v4325
  %v5390 = vunpack.c.h.b16 %v4325
  %v5391 = vunpack.c.l.b16 %v4326
  %v5392 = vunpack.c.h.b16 %v4326
  %v5393 = vunpack.c.l.b16 %v4327
  %v5394 = vunpack.c.h.b16 %v4327
  %v5395 = vunpack.c.l.b16 %v4328
  %v5396 = vunpack.c.l.b16 %v4329
  %v5397 = vunpack.c.h.b16 %v4329
  %v5398 = vunpack.c.l.b16 %v4330
  %v5399 = vunpack.c.h.b16 %v4330
  %v5400 = vunpack.c.l.b16 %v4331
  %v5401 = vunpack.c.h.b16 %v4331
  %v5402 = vunpack.c.l.b16 %v4332
  %v5403 = vunpack.c.l.b16 %v4333
  %v5404 = vunpack.c.h.b16 %v4333
  %v5405 = vunpack.c.l.b16 %v4334
  %v5406 = vunpack.c.h.b16 %v4334
  %v5407 = vunpack.c.l.b16 %v4335
  %v5408 = vunpack.c.h.b16 %v4335
  %v5409 = vunpack.c.l.b16 %v4336
  %v5410 = vunpack.c.l.b16 %v4337
  %v5411 = vunpack.c.h.b16 %v4337
  %v5412 = vunpack.c.l.b16 %v4338
  %v5413 = vunpack.c.h.b16 %v4338
  %v5414 = vunpack.c.l.b16 %v4339
  %v5415 = vunpack.c.h.b16 %v4339
  %v5416 = vunpack.c.l.b16 %v4340
  %v5417 = vunpack.c.l.b16 %v4341
  %v5418 = vunpack.c.h.b16 %v4341
  %v5419 = vunpack.c.l.b16 %v4342
  %v5420 = vunpack.c.h.b16 %v4342
  %v5421 = vunpack.c.l.b16 %v4343
  %v5422 = vunpack.c.h.b16 %v4343
  %v5423 = vunpack.c.l.b16 %v4344
  %v5424 = vunpack.c.l.b16 %v4345
  %v5425 = vunpack.c.h.b16 %v4345
  %v5426 = vunpack.c.l.b16 %v4346
  %v5427 = vunpack.c.h.b16 %v4346
  %v5428 = vunpack.c.l.b16 %v4347
  %v5429 = vunpack.c.h.b16 %v4347
  %v5430 = vunpack.c.l.b16 %v4348
  %v5431 = vunpack.c.l.b16 %v4349
  %v5432 = vunpack.c.h.b16 %v4349
  %v5433 = vunpack.c.l.b16 %v4350
  %v5434 = vunpack.c.h.b16 %v4350
  %v5435 = vunpack.c.l.b16 %v4351
  %v5436 = vunpack.c.h.b16 %v4351
  %v5437 = vunpack.c.l.b16 %v4352
  %v5438 = vunpack.c.l.b16 %v4353
  %v5439 = vunpack.c.h.b16 %v4353
  %v5440 = vunpack.c.l.b16 %v4354
  %v5441 = vunpack.c.h.b16 %v4354
  %v5442 = vunpack.c.l.b16 %v4355
  %v5443 = vunpack.c.h.b16 %v4355
  %v5444 = vunpack.c.l.b16 %v4356
  %v5445 = vunpack.c.l.b16 %v4357
  %v5446 = vunpack.c.h.b16 %v4357
  %v5447 = vunpack.c.l.b16 %v4358
  %v5448 = vunpack.c.h.b16 %v4358
  %v5449 = vunpack.c.l.b16 %v4359
  %v5450 = vunpack.c.h.b16 %v4359
  %v5451 = vunpack.c.l.b16 %v4360
  %v5452 = vunpack.c.l.b16 %v4361
  %v5453 = vunpack.c.h.b16 %v4361
  %v5454 = vunpack.c.l.b16 %v4362
  %v5455 = vunpack.c.h.b16 %v4362
  %v5456 = vunpack.c.l.b16 %v4363
  %v5457 = vunpack.c.h.b16 %v4363
  %v5458 = vunpack.c.l.b16 %v4364
  %v5459 = vunpack.c.l.b16 %v4365
  %v5460 = vunpack.c.h.b16 %v4365
  %v5461 = vunpack.c.l.b16 %v4366
  %v5462 = vunpack.c.h.b16 %v4366
  %v5463 = vunpack.c.l.b16 %v4367
  %v5464 = vunpack.c.h.b16 %v4367
  %v5465 = vunpack.c.l.b16 %v4368
  %v5466 = vunpack.c.l.b16 %v4369
  %v5467 = vunpack.c.h.b16 %v4369
  %v5468 = vunpack.c.l.b16 %v4370
  %v5469 = vunpack.c.h.b16 %v4370
  %v5470 = vunpack.c.l.b16 %v4371
  %v5471 = vunpack.c.h.b16 %v4371
  %v5472 = vunpack.c.l.b16 %v4372
  %v5473 = vunpack.c.l.b16 %v4373
  %v5474 = vunpack.c.h.b16 %v4373
  %v5475 = vunpack.c.l.b16 %v4374
  %v5476 = vunpack.c.h.b16 %v4374
  %v5477 = vunpack.c.l.b16 %v4375
  %v5478 = vunpack.c.h.b16 %v4375
  %v5479 = vunpack.c.l.b16 %v4376
  %v5480 = vunpack.c.l.b16 %v4377
  %v5481 = vunpack.c.h.b16 %v4377
  %v5482 = vunpack.c.l.b16 %v4378
  %v5483 = vunpack.c.h.b16 %v4378
  %v5484 = vunpack.c.l.b16 %v4379
  %v5485 = vunpack.c.h.b16 %v4379
  %v5486 = vunpack.c.l.b16 %v4380
  %v5487 = vunpack.c.l.b16 %v4381
  %v5488 = vunpack.c.h.b16 %v4381
  %v5489 = vunpack.c.l.b16 %v4382
  %v5490 = vunpack.c.h.b16 %v4382
  %v5491 = vunpack.c.l.b16 %v4383
  %v5492 = vunpack.c.h.b16 %v4383
  %v5493 = vunpack.c.l.b16 %v4384
  %v5494 = vunpack.c.l.b16 %v4385
  %v5495 = vunpack.c.h.b16 %v4385
  %v5496 = vunpack.c.l.b16 %v4386
  %v5497 = vunpack.c.h.b16 %v4386
  %v5498 = vunpack.c.l.b16 %v4387
  %v5499 = vunpack.c.h.b16 %v4387
  %v5500 = vunpack.c.l.b16 %v4388
  %v5501 = vunpack.c.l.b16 %v4389
  %v5502 = vunpack.c.h.b16 %v4389
  %v5503 = vunpack.c.l.b16 %v4390
  %v5504 = vunpack.c.h.b16 %v4390
  %v5505 = vunpack.c.l.b16 %v4391
  %v5506 = vunpack.c.h.b16 %v4391
  %v5507 = vunpack.c.l.b16 %v4392
  %v5508 = vunpack.c.l.b16 %v4393
  %v5509 = vunpack.c.h.b16 %v4393
  %v5510 = vunpack.c.l.b16 %v4394
  %v5511 = vunpack.c.h.b16 %v4394
  %v5512 = vunpack.c.l.b16 %v4395
  %v5513 = vunpack.c.h.b16 %v4395
  %v5514 = vunpack.c.l.b16 %v4396
  %v5515 = vunpack.c.l.b16 %v4397
  %v5516 = vunpack.c.h.b16 %v4397
  %v5517 = vunpack.c.l.b16 %v4398
  %v5518 = vunpack.c.h.b16 %v4398
  %v5519 = vunpack.c.l.b16 %v4399
  %v5520 = vunpack.c.h.b16 %v4399
  %v5521 = vunpack.c.l.b16 %v4400
  %v5522 = vunpack.c.l.b16 %v4401
  %v5523 = vunpack.c.h.b16 %v4401
  %v5524 = vunpack.c.l.b16 %v4402
  %v5525 = vunpack.c.h.b16 %v4402
  %v5526 = vunpack.c.l.b16 %v4403
  %v5527 = vunpack.c.h.b16 %v4403
  %v5528 = vunpack.c.l.b16 %v4404
  %v5529 = vunpack.c.l.b16 %v4405
  %v5530 = vunpack.c.h.b16 %v4405
  %v5531 = vunpack.c.l.b16 %v4406
  %v5532 = vunpack.c.h.b16 %v4406
  %v5533 = vunpack.c.l.b16 %v4407
  %v5534 = vunpack.c.h.b16 %v4407
  %v5535 = vunpack.c.l.b16 %v4408
  %v5536 = vunpack.c.l.b16 %v4409
  %v5537 = vunpack.c.h.b16 %v4409
  %v5538 = vunpack.c.l.b16 %v4410
  %v5539 = vunpack.c.h.b16 %v4410
  %v5540 = vunpack.c.l.b16 %v4411
  %v5541 = vunpack.c.h.b16 %v4411
  %v5542 = vunpack.c.l.b16 %v4412
  %v5543 = vunpack.c.l.b16 %v4413
  %v5544 = vunpack.c.h.b16 %v4413
  %v5545 = vunpack.c.l.b16 %v4414
  %v5546 = vunpack.c.h.b16 %v4414
  %v5547 = vunpack.c.l.b16 %v4415
  %v5548 = vunpack.c.h.b16 %v4415
  %v5549 = vunpack.c.l.b16 %v4416
  %v5550 = vunpack.c.l.b16 %v4417
  %v5551 = vunpack.c.h.b16 %v4417
  %v5552 = vunpack.c.l.b16 %v4418
  %v5553 = vunpack.c.h.b16 %v4418
  %v5554 = vunpack.c.l.b16 %v4419
  %v5555 = vunpack.c.h.b16 %v4419
  %v5556 = vunpack.c.l.b16 %v4420
  %v5557 = vunpack.c.l.b16 %v4421
  %v5558 = vunpack.c.h.b16 %v4421
  %v5559 = vunpack.c.l.b16 %v4422
  %v5560 = vunpack.c.h.b16 %v4422
  %v5561 = vunpack.c.l.b16 %v4423
  %v5562 = vunpack.c.h.b16 %v4423
  %v5563 = vunpack.c.l.b16 %v4424
  %v5564 = vunpack.c.l.b16 %v4425
  %v5565 = vunpack.c.h.b16 %v4425
  %v5566 = vunpack.c.l.b16 %v4426
  %v5567 = vunpack.c.h.b16 %v4426
  %v5568 = vunpack.c.l.b16 %v4427
  %v5569 = vunpack.c.h.b16 %v4427
  %v5570 = vunpack.c.l.b16 %v4428
  %v5571 = vunpack.c.l.b16 %v4429
  %v5572 = vunpack.c.h.b16 %v4429
  %v5573 = vunpack.c.l.b16 %v4430
  %v5574 = vunpack.c.h.b16 %v4430
  %v5575 = vunpack.c.l.b16 %v4431
  %v5576 = vunpack.c.h.b16 %v4431
  %v5577 = vunpack.c.l.b16 %v4432
  %v5578 = vunpack.c.l.b16 %v4433
  %v5579 = vunpack.c.h.b16 %v4433
  %v5580 = vunpack.c.l.b16 %v4434
  %v5581 = vunpack.c.h.b16 %v4434
  %v5582 = vunpack.c.l.b16 %v4435
  %v5583 = vunpack.c.h.b16 %v4435
  %v5584 = vunpack.c.l.b16 %v4436
  %v5585 = vunpack.c.l.b16 %v4437
  %v5586 = vunpack.c.h.b16 %v4437
  %v5587 = vunpack.c.l.b16 %v4438
  %v5588 = vunpack.c.h.b16 %v4438
  %v5589 = vunpack.c.l.b16 %v4439
  %v5590 = vunpack.c.h.b16 %v4439
  %v5591 = vunpack.c.l.b16 %v4440
  %v5592 = vunpack.c.l.b16 %v4441
  %v5593 = vunpack.c.h.b16 %v4441
  %v5594 = vunpack.c.l.b16 %v4442
  %v5595 = vunpack.c.h.b16 %v4442
  %v5596 = vunpack.c.l.b16 %v4443
  %v5597 = vunpack.c.h.b16 %v4443
  %v5598 = vunpack.c.l.b16 %v4444
  %v5599 = vunpack.c.l.b16 %v4445
  %v5600 = vunpack.c.h.b16 %v4445
  %v5601 = vunpack.c.l.b16 %v4446
  %v5602 = vunpack.c.h.b16 %v4446
  %v5603 = vunpack.c.l.b16 %v4447
  %v5604 = vunpack.c.h.b16 %v4447
  %v5605 = vunpack.c.l.b16 %v4448
  %v5606 = vunpack.c.l.b16 %v4449
  %v5607 = vunpack.c.h.b16 %v4449
  %v5608 = vunpack.c.l.b16 %v4450
  %v5609 = vunpack.c.h.b16 %v4450
  %v5610 = vunpack.c.l.b16 %v4451
  %v5611 = vunpack.c.h.b16 %v4451
  %v5612 = vunpack.c.l.b16 %v4452
  %v5613 = vunpack.c.l.b16 %v4453
  %v5614 = vunpack.c.h.b16 %v4453
  %v5615 = vunpack.c.l.b16 %v4454
  %v5616 = vunpack.c.h.b16 %v4454
  %v5617 = vunpack.c.l.b16 %v4455
  %v5618 = vunpack.c.h.b16 %v4455
  %v5619 = vunpack.c.l.b16 %v4456
  %v5620 = vunpack.c.l.b16 %v4457
  %v5621 = vunpack.c.h.b16 %v4457
  %v5622 = vunpack.c.l.b16 %v4458
  %v5623 = vunpack.c.h.b16 %v4458
  %v5624 = vunpack.c.l.b16 %v4459
  %v5625 = vunpack.c.h.b16 %v4459
  %v5626 = vunpack.c.l.b16 %v4460
  %v5627 = vunpack.c.l.b16 %v4461
  %v5628 = vunpack.c.h.b16 %v4461
  %v5629 = vunpack.c.l.b16 %v4462
  %v5630 = vunpack.c.h.b16 %v4462
  %v5631 = vunpack.c.l.b16 %v4463
  %v5632 = vunpack.c.h.b16 %v4463
  %v5633 = vunpack.c.l.b16 %v4464
  %v5634 = vunpack.c.l.b16 %v4465
  %v5635 = vunpack.c.h.b16 %v4465
  %v5636 = vunpack.c.l.b16 %v4466
  %v5637 = vunpack.c.h.b16 %v4466
  %v5638 = vunpack.c.l.b16 %v4467
  %v5639 = vunpack.c.h.b16 %v4467
  %v5640 = vunpack.c.l.b16 %v4468
  %v5641 = vunpack.c.l.b16 %v4469
  %v5642 = vunpack.c.h.b16 %v4469
  %v5643 = vunpack.c.l.b16 %v4470
  %v5644 = vunpack.c.h.b16 %v4470
  %v5645 = vunpack.c.l.b16 %v4471
  %v5646 = vunpack.c.h.b16 %v4471
  %v5647 = vunpack.c.l.b16 %v4472
  %v5648 = vunpack.c.l.b16 %v4473
  %v5649 = vunpack.c.h.b16 %v4473
  %v5650 = vunpack.c.l.b16 %v4474
  %v5651 = vunpack.c.h.b16 %v4474
  %v5652 = vunpack.c.l.b16 %v4475
  %v5653 = vunpack.c.h.b16 %v4475
  %v5654 = vunpack.c.l.b16 %v4476
  %v5655 = vunpack.c.l.b16 %v4477
  %v5656 = vunpack.c.h.b16 %v4477
  %v5657 = vunpack.c.l.b16 %v4478
  %v5658 = vunpack.c.h.b16 %v4478
  %v5659 = vunpack.c.l.b16 %v4479
  %v5660 = vunpack.c.h.b16 %v4479
  %v5661 = vunpack.c.l.b16 %v4480
  %v5662 = vunpack.c.l.b16 %v4481
  %v5663 = vunpack.c.h.b16 %v4481
  %v5664 = vunpack.c.l.b16 %v4482
  %v5665 = vunpack.c.h.b16 %v4482
  %v5666 = vunpack.c.l.b16 %v4483
  %v5667 = vunpack.c.h.b16 %v4483
  %v5668 = vunpack.c.l.b16 %v4484
  %v5669 = vunpack.c.l.b16 %v4485
  %v5670 = vunpack.c.h.b16 %v4485
  %v5671 = vunpack.c.l.b16 %v4486
  %v5672 = vunpack.c.h.b16 %v4486
  %v5673 = vunpack.c.l.b16 %v4487
  %v5674 = vunpack.c.h.b16 %v4487
  %v5675 = vunpack.c.l.b16 %v4488
  %v5676 = vunpack.c.l.b16 %v4489
  %v5677 = vunpack.c.h.b16 %v4489
  %v5678 = vunpack.c.l.b16 %v4490
  %v5679 = vunpack.c.h.b16 %v4490
  %v5680 = vunpack.c.l.b16 %v4491
  %v5681 = vunpack.c.h.b16 %v4491
  %v5682 = vunpack.c.l.b16 %v4492
  %v5683 = vunpack.c.l.b16 %v4493
  %v5684 = vunpack.c.h.b16 %v4493
  %v5685 = vunpack.c.l.b16 %v4494
  %v5686 = vunpack.c.h.b16 %v4494
  %v5687 = vunpack.c.l.b16 %v4495
  %v5688 = vunpack.c.h.b16 %v4495
  %v5689 = vunpack.c.l.b16 %v4496
  %v5690 = vunpack.c.l.b16 %v4497
  %v5691 = vunpack.c.h.b16 %v4497
  %v5692 = vunpack.c.l.b16 %v4498
  %v5693 = vunpack.c.h.b16 %v4498
  %v5694 = vunpack.c.l.b16 %v4499
  %v5695 = vunpack.c.h.b16 %v4499
  %v5696 = vunpack.c.l.b16 %v4500
  %v5697 = vunpack.c.l.b16 %v4501
  %v5698 = vunpack.c.h.b16 %v4501
  %v5699 = vunpack.c.l.b16 %v4502
  %v5700 = vunpack.c.h.b16 %v4502
  %v5701 = vunpack.c.l.b16 %v4503
  %v5702 = vunpack.c.h.b16 %v4503
  %v5703 = vunpack.c.l.b16 %v4504
  %v5704 = vunpack.c.l.b16 %v4505
  %v5705 = vunpack.c.h.b16 %v4505
  %v5706 = vunpack.c.l.b16 %v4506
  %v5707 = vunpack.c.h.b16 %v4506
  %v5708 = vunpack.c.l.b16 %v4507
  %v5709 = vunpack.c.h.b16 %v4507
  %v5710 = vunpack.c.l.b16 %v4508
  %v5711 = vunpack.c.l.b16 %v4509
  %v5712 = vunpack.c.h.b16 %v4509
  %v5713 = vunpack.c.l.b16 %v4510
  %v5714 = vunpack.c.h.b16 %v4510
  %v5715 = vunpack.c.l.b16 %v4511
  %v5716 = vunpack.c.h.b16 %v4511
  %v5717 = vunpack.c.l.b16 %v4512
  %v5718 = vunpack.c.l.b16 %v4513
  %v5719 = vunpack.c.h.b16 %v4513
  %v5720 = vunpack.c.l.b16 %v4514
  %v5721 = vunpack.c.h.b16 %v4514
  %v5722 = vunpack.c.l.b16 %v4515
  %v5723 = vunpack.c.h.b16 %v4515
  %v5724 = vunpack.c.l.b16 %v4516
  %v5725 = vunpack.c.l.b16 %v4517
  %v5726 = vunpack.c.h.b16 %v4517
  %v5727 = vunpack.c.l.b16 %v4518
  %v5728 = vunpack.c.h.b16 %v4518
  %v5729 = vunpack.c.l.b16 %v4519
  %v5730 = vunpack.c.h.b16 %v4519
  %v5731 = vunpack.c.l.b16 %v4520
  %v5732 = vunpack.c.l.b16 %v4521
  %v5733 = vunpack.c.h.b16 %v4521
  %v5734 = vunpack.c.l.b16 %v4522
  %v5735 = vunpack.c.h.b16 %v4522
  %v5736 = vunpack.c.l.b16 %v4523
  %v5737 = vunpack.c.h.b16 %v4523
  %v5738 = vunpack.c.l.b16 %v4524
  %v5739 = vunpack.c.l.b16 %v4525
  %v5740 = vunpack.c.h.b16 %v4525
  %v5741 = vunpack.c.l.b16 %v4526
  %v5742 = vunpack.c.h.b16 %v4526
  %v5743 = vunpack.c.l.b16 %v4527
  %v5744 = vunpack.c.h.b16 %v4527
  %v5745 = vunpack.c.l.b16 %v4528
  %v5746 = vunpack.c.l.b16 %v4529
  %v5747 = vunpack.c.h.b16 %v4529
  %v5748 = vunpack.c.l.b16 %v4530
  %v5749 = vunpack.c.h.b16 %v4530
  %v5750 = vunpack.c.l.b16 %v4531
  %v5751 = vunpack.c.h.b16 %v4531
  %v5752 = vunpack.c.l.b16 %v4532
  %v5753 = vunpack.c.l.b16 %v4533
  %v5754 = vunpack.c.h.b16 %v4533
  %v5755 = vunpack.c.l.b16 %v4534
  %v5756 = vunpack.c.h.b16 %v4534
  %v5757 = vunpack.c.l.b16 %v4535
  %v5758 = vunpack.c.h.b16 %v4535
  %v5759 = vunpack.c.l.b16 %v4536
  %v5760 = vunpack.c.l.b16 %v4537
  %v5761 = vunpack.c.h.b16 %v4537
  %v5762 = vunpack.c.l.b16 %v4538
  %v5763 = vunpack.c.h.b16 %v4538
  %v5764 = vunpack.c.l.b16 %v4539
  %v5765 = vunpack.c.h.b16 %v4539
  %v5766 = vunpack.c.l.b16 %v4540
  %v5767 = vunpack.c.l.b16 %v4541
  %v5768 = vunpack.c.h.b16 %v4541
  %v5769 = vunpack.c.l.b16 %v4542
  %v5770 = vunpack.c.h.b16 %v4542
  %v5771 = vunpack.c.l.b16 %v4543
  %v5772 = vunpack.c.h.b16 %v4543
  %v5773 = vunpack.c.l.b16 %v4544
  %v5774 = vunpack.c.l.b16 %v4545
  %v5775 = vunpack.c.h.b16 %v4545
  %v5776 = vunpack.c.l.b16 %v4546
  %v5777 = vunpack.c.h.b16 %v4546
  %v5778 = vunpack.c.l.b16 %v4547
  %v5779 = vunpack.c.h.b16 %v4547
  %v5780 = vunpack.c.l.b16 %v4548
  %v5781 = vpack.c.b16 %v5004, %v4997
  %v5782 = vpack.c.b16 %v5005, %v4998
  %v5783 = vpack.c.b16 %v5006, %v4999
  %v5784 = vpack.c.b16 %v5007, %v5000
  %v5785 = vpack.c.b16 %v5008, %v5001
  %v5786 = vpack.c.b16 %v5009, %v5002
  %v5787 = vpack.c.b16 %v5010, %v5003
  %v5788 = vpack.c.b16 %v5018, %v5011
  %v5789 = vpack.c.b16 %v5019, %v5012
  %v5790 = vpack.c.b16 %v5020, %v5013
  %v5791 = vpack.c.b16 %v5021, %v5014
  %v5792 = vpack.c.b16 %v5022, %v5015
  %v5793 = vpack.c.b16 %v5023, %v5016
  %v5794 = vpack.c.b16 %v5024, %v5017
  %v5795 = vpack.c.b16 %v5032, %v5025
  %v5796 = vpack.c.b16 %v5033, %v5026
  %v5797 = vpack.c.b16 %v5034, %v5027
  %v5798 = vpack.c.b16 %v5035, %v5028
  %v5799 = vpack.c.b16 %v5036, %v5029
  %v5800 = vpack.c.b16 %v5037, %v5030
  %v5801 = vpack.c.b16 %v5038, %v5031
  %v5802 = vpack.c.b16 %v5046, %v5039
  %v5803 = vpack.c.b16 %v5047, %v5040
  %v5804 = vpack.c.b16 %v5048, %v5041
  %v5805 = vpack.c.b16 %v5049, %v5042
  %v5806 = vpack.c.b16 %v5050, %v5043
  %v5807 = vpack.c.b16 %v5051, %v5044
  %v5808 = vpack.c.b16 %v5052, %v5045
  %v5809 = vpack.c.b16 %v5060, %v5053
  %v5810 = vpack.c.b16 %v5061, %v5054
  %v5811 = vpack.c.b16 %v5062, %v5055
  %v5812 = vpack.c.b16 %v5063, %v5056
  %v5813 = vpack.c.b16 %v5064, %v5057
  %v5814 = vpack.c.b16 %v5065, %v5058
  %v5815 = vpack.c.b16 %v5066, %v5059
  %v5816 = vpack.c.b16 %v5074, %v5067
  %v5817 = vpack.c.b16 %v5075, %v5068
  %v5818 = vpack.c.b16 %v5076, %v5069
  %v5819 = vpack.c.b16 %v5077, %v5070
  %v5820 = vpack.c.b16 %v5078, %v5071
  %v5821 = vpack.c.b16 %v5079, %v5072
  %v5822 = vpack.c.b16 %v5080, %v5073
  %v5823 = vpack.c.b16 %v5088, %v5081
  %v5824 = vpack.c.b16 %v5089, %v5082
  %v5825 = vpack.c.b16 %v5090, %v5083
  %v5826 = vpack.c.b16 %v5091, %v5084
  %v5827 = vpack.c.b16 %v5092, %v5085
  %v5828 = vpack.c.b16 %v5093, %v5086
  %v5829 = vpack.c.b16 %v5094, %v5087
  %v5830 = vpack.c.b16 %v5102, %v5095
  %v5831 = vpack.c.b16 %v5103, %v5096
  %v5832 = vpack.c.b16 %v5104, %v5097
  %v5833 = vpack.c.b16 %v5105, %v5098
  %v5834 = vpack.c.b16 %v5106, %v5099
  %v5835 = vpack.c.b16 %v5107, %v5100
  %v5836 = vpack.c.b16 %v5108, %v5101
  %v5837 = vpack.c.b16 %v5116, %v5109
  %v5838 = vpack.c.b16 %v5117, %v5110
  %v5839 = vpack.c.b16 %v5118, %v5111
  %v5840 = vpack.c.b16 %v5119, %v5112
  %v5841 = vpack.c.b16 %v5120, %v5113
  %v5842 = vpack.c.b16 %v5121, %v5114
  %v5843 = vpack.c.b16 %v5122, %v5115
  %v5844 = vpack.c.b16 %v5130, %v5123
  %v5845 = vpack.c.b16 %v5131, %v5124
  %v5846 = vpack.c.b16 %v5132, %v5125
  %v5847 = vpack.c.b16 %v5133, %v5126
  %v5848 = vpack.c.b16 %v5134, %v5127
  %v5849 = vpack.c.b16 %v5135, %v5128
  %v5850 = vpack.c.b16 %v5136, %v5129
  %v5851 = vpack.c.b16 %v5144, %v5137
  %v5852 = vpack.c.b16 %v5145, %v5138
  %v5853 = vpack.c.b16 %v5146, %v5139
  %v5854 = vpack.c.b16 %v5147, %v5140
  %v5855 = vpack.c.b16 %v5148, %v5141
  %v5856 = vpack.c.b16 %v5149, %v5142
  %v5857 = vpack.c.b16 %v5150, %v5143
  %v5858 = vpack.c.b16 %v5158, %v5151
  %v5859 = vpack.c.b16 %v5159, %v5152
  %v5860 = vpack.c.b16 %v5160, %v5153
  %v5861 = vpack.c.b16 %v5161, %v5154
  %v5862 = vpack.c.b16 %v5162, %v5155
  %v5863 = vpack.c.b16 %v5163, %v5156
  %v5864 = vpack.c.b16 %v5164, %v5157
  %v5865 = vpack.c.b16 %v5172, %v5165
  %v5866 = vpack.c.b16 %v5173, %v5166
  %v5867 = vpack.c.b16 %v5174, %v5167
  %v5868 = vpack.c.b16 %v5175, %v5168
  %v5869 = vpack.c.b16 %v5176, %v5169
  %v5870 = vpack.c.b16 %v5177, %v5170
  %v5871 = vpack.c.b16 %v5178, %v5171
  %v5872 = vpack.c.b16 %v5186, %v5179
  %v5873 = vpack.c.b16 %v5187, %v5180
  %v5874 = vpack.c.b16 %v5188, %v5181
  %v5875 = vpack.c.b16 %v5189, %v5182
  %v5876 = vpack.c.b16 %v5190, %v5183
  %v5877 = vpack.c.b16 %v5191, %v5184
  %v5878 = vpack.c.b16 %v5192, %v5185
  %v5879 = vpack.c.b16 %v5200, %v5193
  %v5880 = vpack.c.b16 %v5201, %v5194
  %v5881 = vpack.c.b16 %v5202, %v5195
  %v5882 = vpack.c.b16 %v5203, %v5196
  %v5883 = vpack.c.b16 %v5204, %v5197
  %v5884 = vpack.c.b16 %v5205, %v5198
  %v5885 = vpack.c.b16 %v5206, %v5199
  %v5886 = vpack.c.b16 %v5214, %v5207
  %v5887 = vpack.c.b16 %v5215, %v5208
  %v5888 = vpack.c.b16 %v5216, %v5209
  %v5889 = vpack.c.b16 %v5217, %v5210
  %v5890 = vpack.c.b16 %v5218, %v5211
  %v5891 = vpack.c.b16 %v5219, %v5212
  %v5892 = vpack.c.b16 %v5220, %v5213
  %v5893 = vpack.c.b16 %v5228, %v5221
  %v5894 = vpack.c.b16 %v5229, %v5222
  %v5895 = vpack.c.b16 %v5230, %v5223
  %v5896 = vpack.c.b16 %v5231, %v5224
  %v5897 = vpack.c.b16 %v5232, %v5225
  %v5898 = vpack.c.b16 %v5233, %v5226
  %v5899 = vpack.c.b16 %v5234, %v5227
  %v5900 = vpack.c.b16 %v5242, %v5235
  %v5901 = vpack.c.b16 %v5243, %v5236
  %v5902 = vpack.c.b16 %v5244, %v5237
  %v5903 = vpack.c.b16 %v5245, %v5238
  %v5904 = vpack.c.b16 %v5246, %v5239
  %v5905 = vpack.c.b16 %v5247, %v5240
  %v5906 = vpack.c.b16 %v5248, %v5241
  %v5907 = vpack.c.b16 %v5256, %v5249
  %v5908 = vpack.c.b16 %v5257, %v5250
  %v5909 = vpack.c.b16 %v5258, %v5251
  %v5910 = vpack.c.b16 %v5259, %v5252
  %v5911 = vpack.c.b16 %v5260, %v5253
  %v5912 = vpack.c.b16 %v5261, %v5254
  %v5913 = vpack.c.b16 %v5262, %v5255
  %v5914 = vpack.c.b16 %v5270, %v5263
  %v5915 = vpack.c.b16 %v5271, %v5264
  %v5916 = vpack.c.b16 %v5272, %v5265
  %v5917 = vpack.c.b16 %v5273, %v5266
  %v5918 = vpack.c.b16 %v5274, %v5267
  %v5919 = vpack.c.b16 %v5275, %v5268
  %v5920 = vpack.c.b16 %v5276, %v5269
  %v5921 = vpack.c.b16 %v5284, %v5277
  %v5922 = vpack.c.b16 %v5285, %v5278
  %v5923 = vpack.c.b16 %v5286, %v5279
  %v5924 = vpack.c.b16 %v5287, %v5280
  %v5925 = vpack.c.b16 %v5288, %v5281
  %v5926 = vpack.c.b16 %v5289, %v5282
  %v5927 = vpack.c.b16 %v5290, %v5283
  %v5928 = vpack.c.b16 %v5298, %v5291
  %v5929 = vpack.c.b16 %v5299, %v5292
  %v5930 = vpack.c.b16 %v5300, %v5293
  %v5931 = vpack.c.b16 %v5301, %v5294
  %v5932 = vpack.c.b16 %v5302, %v5295
  %v5933 = vpack.c.b16 %v5303, %v5296
  %v5934 = vpack.c.b16 %v5304, %v5297
  %v5935 = vpack.c.b16 %v5312, %v5305
  %v5936 = vpack.c.b16 %v5313, %v5306
  %v5937 = vpack.c.b16 %v5314, %v5307
  %v5938 = vpack.c.b16 %v5315, %v5308
  %v5939 = vpack.c.b16 %v5316, %v5309
  %v5940 = vpack.c.b16 %v5317, %v5310
  %v5941 = vpack.c.b16 %v5318, %v5311
  %v5942 = vpack.c.b16 %v5326, %v5319
  %v5943 = vpack.c.b16 %v5327, %v5320
  %v5944 = vpack.c.b16 %v5328, %v5321
  %v5945 = vpack.c.b16 %v5329, %v5322
  %v5946 = vpack.c.b16 %v5330, %v5323
  %v5947 = vpack.c.b16 %v5331, %v5324
  %v5948 = vpack.c.b16 %v5332, %v5325
  %v5949 = vpack.c.b16 %v5340, %v5333
  %v5950 = vpack.c.b16 %v5341, %v5334
  %v5951 = vpack.c.b16 %v5342, %v5335
  %v5952 = vpack.c.b16 %v5343, %v5336
  %v5953 = vpack.c.b16 %v5344, %v5337
  %v5954 = vpack.c.b16 %v5345, %v5338
  %v5955 = vpack.c.b16 %v5346, %v5339
  %v5956 = vpack.c.b16 %v5354, %v5347
  %v5957 = vpack.c.b16 %v5355, %v5348
  %v5958 = vpack.c.b16 %v5356, %v5349
  %v5959 = vpack.c.b16 %v5357, %v5350
  %v5960 = vpack.c.b16 %v5358, %v5351
  %v5961 = vpack.c.b16 %v5359, %v5352
  %v5962 = vpack.c.b16 %v5360, %v5353
  %v5963 = vpack.c.b16 %v5368, %v5361
  %v5964 = vpack.c.b16 %v5369, %v5362
  %v5965 = vpack.c.b16 %v5370, %v5363
  %v5966 = vpack.c.b16 %v5371, %v5364
  %v5967 = vpack.c.b16 %v5372, %v5365
  %v5968 = vpack.c.b16 %v5373, %v5366
  %v5969 = vpack.c.b16 %v5374, %v5367
  %v5970 = vpack.c.b16 %v5382, %v5375
  %v5971 = vpack.c.b16 %v5383, %v5376
  %v5972 = vpack.c.b16 %v5384, %v5377
  %v5973 = vpack.c.b16 %v5385, %v5378
  %v5974 = vpack.c.b16 %v5386, %v5379
  %v5975 = vpack.c.b16 %v5387, %v5380
  %v5976 = vpack.c.b16 %v5388, %v5381
  %v5977 = vpack.c.b16 %v5396, %v5389
  %v5978 = vpack.c.b16 %v5397, %v5390
  %v5979 = vpack.c.b16 %v5398, %v5391
  %v5980 = vpack.c.b16 %v5399, %v5392
  %v5981 = vpack.c.b16 %v5400, %v5393
  %v5982 = vpack.c.b16 %v5401, %v5394
  %v5983 = vpack.c.b16 %v5402, %v5395
  %v5984 = vpack.c.b16 %v5410, %v5403
  %v5985 = vpack.c.b16 %v5411, %v5404
  %v5986 = vpack.c.b16 %v5412, %v5405
  %v5987 = vpack.c.b16 %v5413, %v5406
  %v5988 = vpack.c.b16 %v5414, %v5407
  %v5989 = vpack.c.b16 %v5415, %v5408
  %v5990 = vpack.c.b16 %v5416, %v5409
  %v5991 = vpack.c.b16 %v5424, %v5417
  %v5992 = vpack.c.b16 %v5425, %v5418
  %v5993 = vpack.c.b16 %v5426, %v5419
  %v5994 = vpack.c.b16 %v5427, %v5420
  %v5995 = vpack.c.b16 %v5428, %v5421
  %v5996 = vpack.c.b16 %v5429, %v5422
  %v5997 = vpack.c.b16 %v5430, %v5423
  %v5998 = vpack.c.b16 %v5438, %v5431
  %v5999 = vpack.c.b16 %v5439, %v5432
  %v6000 = vpack.c.b16 %v5440, %v5433
  %v6001 = vpack.c.b16 %v5441, %v5434
  %v6002 = vpack.c.b16 %v5442, %v5435
  %v6003 = vpack.c.b16 %v5443, %v5436
  %v6004 = vpack.c.b16 %v5444, %v5437
  %v6005 = vpack.c.b16 %v5452, %v5445
  %v6006 = vpack.c.b16 %v5453, %v5446
  %v6007 = vpack.c.b16 %v5454, %v5447
  %v6008 = vpack.c.b16 %v5455, %v5448
  %v6009 = vpack.c.b16 %v5456, %v5449
  %v6010 = vpack.c.b16 %v5457, %v5450
  %v6011 = vpack.c.b16 %v5458, %v5451
  %v6012 = vpack.c.b16 %v5466, %v5459
  %v6013 = vpack.c.b16 %v5467, %v5460
  %v6014 = vpack.c.b16 %v5468, %v5461
  %v6015 = vpack.c.b16 %v5469, %v5462
  %v6016 = vpack.c.b16 %v5470, %v5463
  %v6017 = vpack.c.b16 %v5471, %v5464
  %v6018 = vpack.c.b16 %v5472, %v5465
  %v6019 = vpack.c.b16 %v5480, %v5473
  %v6020 = vpack.c.b16 %v5481, %v5474
  %v6021 = vpack.c.b16 %v5482, %v5475
  %v6022 = vpack.c.b16 %v5483, %v5476
  %v6023 = vpack.c.b16 %v5484, %v5477
  %v6024 = vpack.c.b16 %v5485, %v5478
  %v6025 = vpack.c.b16 %v5486, %v5479
  %v6026 = vpack.c.b16 %v5494, %v5487
  %v6027 = vpack.c.b16 %v5495, %v5488
  %v6028 = vpack.c.b16 %v5496, %v5489
  %v6029 = vpack.c.b16 %v5497, %v5490
  %v6030 = vpack.c.b16 %v5498, %v5491
  %v6031 = vpack.c.b16 %v5499, %v5492
  %v6032 = vpack.c.b16 %v5500, %v5493
  %v6033 = vpack.c.b16 %v5508, %v5501
  %v6034 = vpack.c.b16 %v5509, %v5502
  %v6035 = vpack.c.b16 %v5510, %v5503
  %v6036 = vpack.c.b16 %v5511, %v5504
  %v6037 = vpack.c.b16 %v5512, %v5505
  %v6038 = vpack.c.b16 %v5513, %v5506
  %v6039 = vpack.c.b16 %v5514, %v5507
  %v6040 = vpack.c.b16 %v5522, %v5515
  %v6041 = vpack.c.b16 %v5523, %v5516
  %v6042 = vpack.c.b16 %v5524, %v5517
  %v6043 = vpack.c.b16 %v5525, %v5518
  %v6044 = vpack.c.b16 %v5526, %v5519
  %v6045 = vpack.c.b16 %v5527, %v5520
  %v6046 = vpack.c.b16 %v5528, %v5521
  %v6047 = vpack.c.b16 %v5536, %v5529
  %v6048 = vpack.c.b16 %v5537, %v5530
  %v6049 = vpack.c.b16 %v5538, %v5531
  %v6050 = vpack.c.b16 %v5539, %v5532
  %v6051 = vpack.c.b16 %v5540, %v5533
  %v6052 = vpack.c.b16 %v5541, %v5534
  %v6053 = vpack.c.b16 %v5542, %v5535
  %v6054 = vpack.c.b16 %v5550, %v5543
  %v6055 = vpack.c.b16 %v5551, %v5544
  %v6056 = vpack.c.b16 %v5552, %v5545
  %v6057 = vpack.c.b16 %v5553, %v5546
  %v6058 = vpack.c.b16 %v5554, %v5547
  %v6059 = vpack.c.b16 %v5555, %v5548
  %v6060 = vpack.c.b16 %v5556, %v5549
  %v6061 = vpack.c.b16 %v5564, %v5557
  %v6062 = vpack.c.b16 %v5565, %v5558
  %v6063 = vpack.c.b16 %v5566, %v5559
  %v6064 = vpack.c.b16 %v5567, %v5560
  %v6065 = vpack.c.b16 %v5568, %v5561
  %v6066 = vpack.c.b16 %v5569, %v5562
  %v6067 = vpack.c.b16 %v5570, %v5563
  %v6068 = vpack.c.b16 %v5578, %v5571
  %v6069 = vpack.c.b16 %v5579, %v5572
  %v6070 = vpack.c.b16 %v5580, %v5573
  %v6071 = vpack.c.b16 %v5581, %v5574
  %v6072 = vpack.c.b16 %v5582, %v5575
  %v6073 = vpack.c.b16 %v5583, %v5576
  %v6074 = vpack.c.b16 %v5584, %v5577
  %v6075 = vpack.c.b16 %v5592, %v5585
  %v6076 = vpack.c.b16 %v5593, %v5586
  %v6077 = vpack.c.b16 %v5594, %v5587
  %v6078 = vpack.c.b16 %v5595, %v5588
  %v6079 = vpack.c.b16 %v5596, %v5589
  %v6080 = vpack.c.b16 %v5597, %v5590
  %v6081 = vpack.c.b16 %v5598, %v5591
  %v6082 = vpack.c.b16 %v5606, %v5599
  %v6083 = vpack.c.b16 %v5607, %v5600
  %v6084 = vpack.c.b16 %v5608, %v5601
  %v6085 = vpack.c.b16 %v5609, %v5602
  %v6086 = vpack.c.b16 %v5610, %v5603
  %v6087 = vpack.c.b16 %v5611, %v5604
  %v6088 = vpack.c.b16 %v5612, %v5605
  %v6089 = vpack.c.b16 %v5620, %v5613
  %v6090 = vpack.c.b16 %v5621, %v5614
  %v6091 = vpack.c.b16 %v5622, %v5615
  %v6092 = vpack.c.b16 %v5623, %v5616
  %v6093 = vpack.c.b16 %v5624, %v5617
  %v6094 = vpack.c.b16 %v5625, %v5618
  %v6095 = vpack.c.b16 %v5626, %v5619
  %v6096 = vpack.c.b16 %v5634, %v5627
  %v6097 = vpack.c.b16 %v5635, %v5628
  %v6098 = vpack.c.b16 %v5636, %v5629
  %v6099 = vpack.c.b16 %v5637, %v5630
  %v6100 = vpack.c.b16 %v5638, %v5631
  %v6101 = vpack.c.b16 %v5639, %v5632
  %v6102 = vpack.c.b16 %v5640, %v5633
  %v6103 = vpack.c.b16 %v5648, %v5641
  %v6104 = vpack.c.b16 %v5649, %v5642
  %v6105 = vpack.c.b16 %v5650, %v5643
  %v6106 = vpack.c.b16 %v5651, %v5644
  %v6107 = vpack.c.b16 %v5652, %v5645
  %v6108 = vpack.c.b16 %v5653, %v5646
  %v6109 = vpack.c.b16 %v5654, %v5647
  %v6110 = vpack.c.b16 %v5662, %v5655
  %v6111 = vpack.c.b16 %v5663, %v5656
  %v6112 = vpack.c.b16 %v5664, %v5657
  %v6113 = vpack.c.b16 %v5665, %v5658
  %v6114 = vpack.c.b16 %v5666, %v5659
  %v6115 = vpack.c.b16 %v5667, %v5660
  %v6116 = vpack.c.b16 %v5668, %v5661
  %v6117 = vpack.c.b16 %v5676, %v5669
  %v6118 = vpack.c.b16 %v5677, %v5670
  %v6119 = vpack.c.b16 %v5678, %v5671
  %v6120 = vpack.c.b16 %v5679, %v5672
  %v6121 = vpack.c.b16 %v5680, %v5673
  %v6122 = vpack.c.b16 %v5681, %v5674
  %v6123 = vpack.c.b16 %v5682, %v5675
  %v6124 = vpack.c.b16 %v5690, %v5683
  %v6125 = vpack.c.b16 %v5691, %v5684
  %v6126 = vpack.c.b16 %v5692, %v5685
  %v6127 = vpack.c.b16 %v5693, %v5686
  %v6128 = vpack.c.b16 %v5694, %v5687
  %v6129 = vpack.c.b16 %v5695, %v5688
  %v6130 = vpack.c.b16 %v5696, %v5689
  %v6131 = vpack.c.b16 %v5704, %v5697
  %v6132 = vpack.c.b16 %v5705, %v5698
  %v6133 = vpack.c.b16 %v5706, %v5699
  %v6134 = vpack.c.b16 %v5707, %v5700
  %v6135 = vpack.c.b16 %v5708, %v5701
  %v6136 = vpack.c.b16 %v5709, %v5702
  %v6137 = vpack.c.b16 %v5710, %v5703
  %v6138 = vpack.c.b16 %v5718, %v5711
  %v6139 = vpack.c.b16 %v5719, %v5712
  %v6140 = vpack.c.b16 %v5720, %v5713
  %v6141 = vpack.c.b16 %v5721, %v5714
  %v6142 = vpack.c.b16 %v5722, %v5715
  %v6143 = vpack.c.b16 %v5723, %v5716
  %v6144 = vpack.c.b16 %v5724, %v5717
  %v6145 = vpack.c.b16 %v5732, %v5725
  %v6146 = vpack.c.b16 %v5733, %v5726
  %v6147 = vpack.c.b16 %v5734, %v5727
  %v6148 = vpack.c.b16 %v5735, %v5728
  %v6149 = vpack.c.b16 %v5736, %v5729
  %v6150 = vpack.c.b16 %v5737, %v5730
  %v6151 = vpack.c.b16 %v5738, %v5731
  %v6152 = vpack.c.b16 %v5746, %v5739
  %v6153 = vpack.c.b16 %v5747, %v5740
  %v6154 = vpack.c.b16 %v5748, %v5741
  %v6155 = vpack.c.b16 %v5749, %v5742
  %v6156 = vpack.c.b16 %v5750, %v5743
  %v6157 = vpack.c.b16 %v5751, %v5744
  %v6158 = vpack.c.b16 %v5752, %v5745
  %v6159 = vpack.c.b16 %v5760, %v5753
  %v6160 = vpack.c.b16 %v5761, %v5754
  %v6161 = vpack.c.b16 %v5762, %v5755
  %v6162 = vpack.c.b16 %v5763, %v5756
  %v6163 = vpack.c.b16 %v5764, %v5757
  %v6164 = vpack.c.b16 %v5765, %v5758
  %v6165 = vpack.c.b16 %v5766, %v5759
  %v6166 = vpack.c.b16 %v5774, %v5767
  %v6167 = vpack.c.b16 %v5775, %v5768
  %v6168 = vpack.c.b16 %v5776, %v5769
  %v6169 = vpack.c.b16 %v5777, %v5770
  %v6170 = vpack.c.b16 %v5778, %v5771
  %v6171 = vpack.c.b16 %v5779, %v5772
  %v6172 = vpack.c.b16 %v5780, %v5773
  %6565 = vmatprep.subr.bf16.mxu0 %v5782
  %6566 = vmatpush1.bf16.msra.mxu0 %v5781
  %6567 = vmatprep.subr.bf16.mxu0 %v5789
  %6568 = vmatpush1.bf16.msra.mxu0 %v5788
  %6569 = vmatprep.subr.bf16.mxu0 %v5796
  %6570 = vmatpush1.bf16.msra.mxu0 %v5795
  %6571 = vmatprep.subr.bf16.mxu0 %v5803
  %6572 = vmatpush1.bf16.msra.mxu0 %v5802
  %6573 = vmatprep.subr.bf16.mxu0 %v5810
  %6574 = vmatpush1.bf16.msra.mxu0 %v5809
  %6575 = vmatprep.subr.bf16.mxu0 %v5817
  %6576 = vmatpush1.bf16.msra.mxu0 %v5816
  %6577 = vmatprep.subr.bf16.mxu0 %v5824
  %6578 = vmatpush1.bf16.msra.mxu0 %v5823
  %6579 = vmatprep.subr.bf16.mxu0 %v5831
  %6580 = vmatpush1.bf16.msra.mxu0 %v5830
  %6581 = vmatprep.subr.bf16.mxu0 %v5838
  %6582 = vmatpush1.bf16.msra.mxu0 %v5837
  %6583 = vmatprep.subr.bf16.mxu0 %v5845
  %6584 = vmatpush1.bf16.msra.mxu0 %v5844
  %6585 = vmatprep.subr.bf16.mxu0 %v5852
  %6586 = vmatpush1.bf16.msra.mxu0 %v5851
  %6587 = vmatprep.subr.bf16.mxu0 %v5859
  %6588 = vmatpush1.bf16.msra.mxu0 %v5858
  %6589 = vmatprep.subr.bf16.mxu0 %v5866
  %6590 = vmatpush1.bf16.msra.mxu0 %v5865
  %6591 = vmatprep.subr.bf16.mxu0 %v5873
  %6592 = vmatpush1.bf16.msra.mxu0 %v5872
  %6593 = vmatprep.subr.bf16.mxu0 %v5880
  %6594 = vmatpush1.bf16.msra.mxu0 %v5879
  %6595 = vmatprep.subr.bf16.mxu0 %v5887
  %6596 = vmatpush1.bf16.msra.mxu0 %v5886
  %6597 = vmatprep.mubr.bf16.mxu0 %v4095
  %6598 = vmatmul.mubr.bf16.gmra.mrb[0].mxu0 %v4094
  %v6599 = vpop.f32.mrb[0].mxu0
  %v6600 = vadd.f32 0.0, %v6599
  %v6601 = vpop.f32.mrb[0].mxu0
  %v6602 = vadd.f32 0.0, %v6601
  %v6603 = vpop.f32.mrb[0].mxu0
  %v6604 = vpop.f32.mrb[0].mxu0
  %6605 = vdwg.mxu0
  %6606 = vmatprep.subr.bf16.mxu0 %v5894
  %6607 = vmatpush1.bf16.msra.mxu0 %v5893
  %6608 = vmatprep.subr.bf16.mxu0 %v5901
  %6609 = vmatpush1.bf16.msra.mxu0 %v5900
  %6610 = vmatprep.subr.bf16.mxu0 %v5908
  %6611 = vmatpush1.bf16.msra.mxu0 %v5907
  %6612 = vmatprep.subr.bf16.mxu0 %v5915
  %6613 = vmatpush1.bf16.msra.mxu0 %v5914
  %6614 = vmatprep.subr.bf16.mxu0 %v5922
  %6615 = vmatpush1.bf16.msra.mxu0 %v5921
  %6616 = vmatprep.subr.bf16.mxu0 %v5929
  %6617 = vmatpush1.bf16.msra.mxu0 %v5928
  %6618 = vmatprep.subr.bf16.mxu0 %v5936
  %6619 = vmatpush1.bf16.msra.mxu0 %v5935
  %6620 = vmatprep.subr.bf16.mxu0 %v5943
  %6621 = vmatpush1.bf16.msra.mxu0 %v5942
  %6622 = vmatprep.subr.bf16.mxu0 %v5950
  %6623 = vmatpush1.bf16.msra.mxu0 %v5949
  %6624 = vmatprep.subr.bf16.mxu0 %v5957
  %6625 = vmatpush1.bf16.msra.mxu0 %v5956
  %6626 = vmatprep.subr.bf16.mxu0 %v5964
  %6627 = vmatpush1.bf16.msra.mxu0 %v5963
  %6628 = vmatprep.subr.bf16.mxu0 %v5971
  %6629 = vmatpush1.bf16.msra.mxu0 %v5970
  %6630 = vmatprep.subr.bf16.mxu0 %v5978
  %6631 = vmatpush1.bf16.msra.mxu0 %v5977
  %6632 = vmatprep.subr.bf16.mxu0 %v5985
  %6633 = vmatpush1.bf16.msra.mxu0 %v5984
  %6634 = vmatprep.subr.bf16.mxu0 %v5992
  %6635 = vmatpush1.bf16.msra.mxu0 %v5991
  %6636 = vmatprep.subr.bf16.mxu0 %v5999
  %6637 = vmatpush1.bf16.msra.mxu0 %v5998
  %6638 = vmatprep.mubr.bf16.mxu0 %v4097
  %6639 = vmatmul.mubr.bf16.gmra.mrb[0].mxu0 %v4096
  %v6640 = vpop.f32.mrb[0].mxu0
  %v6641 = vadd.f32 %v6600, %v6640
  %v6642 = vpop.f32.mrb[0].mxu0
  %v6643 = vadd.f32 %v6602, %v6642
  %v6644 = vpop.f32.mrb[0].mxu0
  %v6645 = vpop.f32.mrb[0].mxu0
  %6646 = vdwg.mxu0
  %6647 = vmatprep.subr.bf16.mxu0 %v6006
  %6648 = vmatpush1.bf16.msra.mxu0 %v6005
  %6649 = vmatprep.subr.bf16.mxu0 %v6013
  %6650 = vmatpush1.bf16.msra.mxu0 %v6012
  %6651 = vmatprep.subr.bf16.mxu0 %v6020
  %6652 = vmatpush1.bf16.msra.mxu0 %v6019
  %6653 = vmatprep.subr.bf16.mxu0 %v6027
  %6654 = vmatpush1.bf16.msra.mxu0 %v6026
  %6655 = vmatprep.subr.bf16.mxu0 %v6034
  %6656 = vmatpush1.bf16.msra.mxu0 %v6033
  %6657 = vmatprep.subr.bf16.mxu0 %v6041
  %6658 = vmatpush1.bf16.msra.mxu0 %v6040
  %6659 = vmatprep.subr.bf16.mxu0 %v6048
  %6660 = vmatpush1.bf16.msra.mxu0 %v6047
  %6661 = vmatprep.subr.bf16.mxu0 %v6055
  %6662 = vmatpush1.bf16.msra.mxu0 %v6054
  %6663 = vmatprep.subr.bf16.mxu0 %v6062
  %6664 = vmatpush1.bf16.msra.mxu0 %v6061
  %6665 = vmatprep.subr.bf16.mxu0 %v6069
  %6666 = vmatpush1.bf16.msra.mxu0 %v6068
  %6667 = vmatprep.subr.bf16.mxu0 %v6076
  %6668 = vmatpush1.bf16.msra.mxu0 %v6075
  %6669 = vmatprep.subr.bf16.mxu0 %v6083
  %6670 = vmatpush1.bf16.msra.mxu0 %v6082
  %6671 = vmatprep.subr.bf16.mxu0 %v6090
  %6672 = vmatpush1.bf16.msra.mxu0 %v6089
  %6673 = vmatprep.subr.bf16.mxu0 %v6097
  %6674 = vmatpush1.bf16.msra.mxu0 %v6096
  %6675 = vmatprep.subr.bf16.mxu0 %v6104
  %6676 = vmatpush1.bf16.msra.mxu0 %v6103
  %6677 = vmatprep.subr.bf16.mxu0 %v6111
  %6678 = vmatpush1.bf16.msra.mxu0 %v6110
  %6679 = vmatprep.mubr.bf16.mxu0 %v4099
  %6680 = vmatmul.mubr.bf16.gmra.mrb[0].mxu0 %v4098
  %v6681 = vpop.f32.mrb[0].mxu0
  %v6682 = vadd.f32 %v6641, %v6681
  %v6683 = vpop.f32.mrb[0].mxu0
  %v6684 = vadd.f32 %v6643, %v6683
  %v6685 = vpop.f32.mrb[0].mxu0
  %v6686 = vpop.f32.mrb[0].mxu0
  %6687 = vdwg.mxu0
  %6688 = vmatprep.subr.bf16.mxu0 %v6118
  %6689 = vmatpush1.bf16.msra.mxu0 %v6117
  %6690 = vmatprep.subr.bf16.mxu0 %v6125
  %6691 = vmatpush1.bf16.msra.mxu0 %v6124
  %6692 = vmatprep.subr.bf16.mxu0 %v6132
  %6693 = vmatpush1.bf16.msra.mxu0 %v6131
  %6694 = vmatprep.subr.bf16.mxu0 %v6139
  %6695 = vmatpush1.bf16.msra.mxu0 %v6138
  %6696 = vmatprep.subr.bf16.mxu0 %v6146
  %6697 = vmatpush1.bf16.msra.mxu0 %v6145
  %6698 = vmatprep.subr.bf16.mxu0 %v6153
  %6699 = vmatpush1.bf16.msra.mxu0 %v6152
  %6700 = vmatprep.subr.bf16.mxu0 %v6160
  %6701 = vmatpush1.bf16.msra.mxu0 %v6159
  %6702 = vmatprep.subr.bf16.mxu0 %v6167
  %6703 = vmatpush1.bf16.msra.mxu0 %v6166
  %6704 = vmatprep.subr.bf16.mxu0 0
  %6705 = vmatpush1.bf16.msra.mxu0 0
  %6706 = vmatprep.subr.bf16.mxu0 0
  %6707 = vmatpush1.bf16.msra.mxu0 0
  %6708 = vmatprep.subr.bf16.mxu0 0
  %6709 = vmatpush1.bf16.msra.mxu0 0
  %6710 = vmatprep.subr.bf16.mxu0 0
  %6711 = vmatpush1.bf16.msra.mxu0 0
  %6712 = vmatprep.subr.bf16.mxu0 0
  %6713 = vmatpush1.bf16.msra.mxu0 0
  %6714 = vmatprep.subr.bf16.mxu0 0
  %6715 = vmatpush1.bf16.msra.mxu0 0
  %6716 = vmatprep.subr.bf16.mxu0 0
  %6717 = vmatpush1.bf16.msra.mxu0 0
  %6718 = vmatprep.subr.bf16.mxu0 0
  %6719 = vmatpush1.bf16.msra.mxu0 0
  %6720 = vmatprep.mubr.bf16.mxu0 0
  %6721 = vmatmul.mubr.bf16.gmra.mrb[0].mxu0 %v4100
  %v6722 = vpop.f32.mrb[0].mxu0
  %v6723 = vadd.f32 %v6682, %v6722
  %v6724 = vpop.f32.mrb[0].mxu0
  %v6725 = vadd.f32 %v6684, %v6724
  %v6726 = vpop.f32.mrb[0].mxu0
  %v6727 = vpop.f32.mrb[0].mxu0
  %6728 = vdwg.mxu0
  %6729 = vmatprep.subr.bf16.mxu0 %v5784
  %6730 = vmatpush1.bf16.msra.mxu0 %v5783
  %6731 = vmatprep.subr.bf16.mxu0 %v5791
  %6732 = vmatpush1.bf16.msra.mxu0 %v5790
  %6733 = vmatprep.subr.bf16.mxu0 %v5798
  %6734 = vmatpush1.bf16.msra.mxu0 %v5797
  %6735 = vmatprep.subr.bf16.mxu0 %v5805
  %6736 = vmatpush1.bf16.msra.mxu0 %v5804
  %6737 = vmatprep.subr.bf16.mxu0 %v5812
  %6738 = vmatpush1.bf16.msra.mxu0 %v5811
  %6739 = vmatprep.subr.bf16.mxu0 %v5819
  %6740 = vmatpush1.bf16.msra.mxu0 %v5818
  %6741 = vmatprep.subr.bf16.mxu0 %v5826
  %6742 = vmatpush1.bf16.msra.mxu0 %v5825
  %6743 = vmatprep.subr.bf16.mxu0 %v5833
  %6744 = vmatpush1.bf16.msra.mxu0 %v5832
  %6745 = vmatprep.subr.bf16.mxu0 %v5840
  %6746 = vmatpush1.bf16.msra.mxu0 %v5839
  %6747 = vmatprep.subr.bf16.mxu0 %v5847
  %6748 = vmatpush1.bf16.msra.mxu0 %v5846
  %6749 = vmatprep.subr.bf16.mxu0 %v5854
  %6750 = vmatpush1.bf16.msra.mxu0 %v5853
  %6751 = vmatprep.subr.bf16.mxu0 %v5861
  %6752 = vmatpush1.bf16.msra.mxu0 %v5860
  %6753 = vmatprep.subr.bf16.mxu0 %v5868
  %6754 = vmatpush1.bf16.msra.mxu0 %v5867
  %6755 = vmatprep.subr.bf16.mxu0 %v5875
  %6756 = vmatpush1.bf16.msra.mxu0 %v5874
  %6757 = vmatprep.subr.bf16.mxu0 %v5882
  %6758 = vmatpush1.bf16.msra.mxu0 %v5881
  %6759 = vmatprep.subr.bf16.mxu0 %v5889
  %6760 = vmatpush1.bf16.msra.mxu0 %v5888
  %6761 = vmatprep.mubr.bf16.mxu0 %v4095
  %6762 = vmatmul.mubr.bf16.gmra.mrb[0].mxu0 %v4094
  %v6763 = vpop.f32.mrb[0].mxu0
  %v6764 = vadd.f32 0.0, %v6763
  %v6765 = vpop.f32.mrb[0].mxu0
  %v6766 = vadd.f32 0.0, %v6765
  %v6767 = vpop.f32.mrb[0].mxu0
  %v6768 = vpop.f32.mrb[0].mxu0
  %6769 = vdwg.mxu0
  %6770 = vmatprep.subr.bf16.mxu0 %v5896
  %6771 = vmatpush1.bf16.msra.mxu0 %v5895
  %6772 = vmatprep.subr.bf16.mxu0 %v5903
  %6773 = vmatpush1.bf16.msra.mxu0 %v5902
  %6774 = vmatprep.subr.bf16.mxu0 %v5910
  %6775 = vmatpush1.bf16.msra.mxu0 %v5909
  %6776 = vmatprep.subr.bf16.mxu0 %v5917
  %6777 = vmatpush1.bf16.msra.mxu0 %v5916
  %6778 = vmatprep.subr.bf16.mxu0 %v5924
  %6779 = vmatpush1.bf16.msra.mxu0 %v5923
  %6780 = vmatprep.subr.bf16.mxu0 %v5931
  %6781 = vmatpush1.bf16.msra.mxu0 %v5930
  %6782 = vmatprep.subr.bf16.mxu0 %v5938
  %6783 = vmatpush1.bf16.msra.mxu0 %v5937
  %6784 = vmatprep.subr.bf16.mxu0 %v5945
  %6785 = vmatpush1.bf16.msra.mxu0 %v5944
  %6786 = vmatprep.subr.bf16.mxu0 %v5952
  %6787 = vmatpush1.bf16.msra.mxu0 %v5951
  %6788 = vmatprep.subr.bf16.mxu0 %v5959
  %6789 = vmatpush1.bf16.msra.mxu0 %v5958
  %6790 = vmatprep.subr.bf16.mxu0 %v5966
  %6791 = vmatpush1.bf16.msra.mxu0 %v5965
  %6792 = vmatprep.subr.bf16.mxu0 %v5973
  %6793 = vmatpush1.bf16.msra.mxu0 %v5972
  %6794 = vmatprep.subr.bf16.mxu0 %v5980
  %6795 = vmatpush1.bf16.msra.mxu0 %v5979
  %6796 = vmatprep.subr.bf16.mxu0 %v5987
  %6797 = vmatpush1.bf16.msra.mxu0 %v5986
  %6798 = vmatprep.subr.bf16.mxu0 %v5994
  %6799 = vmatpush1.bf16.msra.mxu0 %v5993
  %6800 = vmatprep.subr.bf16.mxu0 %v6001
  %6801 = vmatpush1.bf16.msra.mxu0 %v6000
  %6802 = vmatprep.mubr.bf16.mxu0 %v4097
  %6803 = vmatmul.mubr.bf16.gmra.mrb[0].mxu0 %v4096
  %v6804 = vpop.f32.mrb[0].mxu0
  %v6805 = vadd.f32 %v6764, %v6804
  %v6806 = vpop.f32.mrb[0].mxu0
  %v6807 = vadd.f32 %v6766, %v6806
  %v6808 = vpop.f32.mrb[0].mxu0
  %v6809 = vpop.f32.mrb[0].mxu0
  %6810 = vdwg.mxu0
  %6811 = vmatprep.subr.bf16.mxu0 %v6008
  %6812 = vmatpush1.bf16.msra.mxu0 %v6007
  %6813 = vmatprep.subr.bf16.mxu0 %v6015
  %6814 = vmatpush1.bf16.msra.mxu0 %v6014
  %6815 = vmatprep.subr.bf16.mxu0 %v6022
  %6816 = vmatpush1.bf16.msra.mxu0 %v6021
  %6817 = vmatprep.subr.bf16.mxu0 %v6029
  %6818 = vmatpush1.bf16.msra.mxu0 %v6028
  %6819 = vmatprep.subr.bf16.mxu0 %v6036
  %6820 = vmatpush1.bf16.msra.mxu0 %v6035
  %6821 = vmatprep.subr.bf16.mxu0 %v6043
  %6822 = vmatpush1.bf16.msra.mxu0 %v6042
  %6823 = vmatprep.subr.bf16.mxu0 %v6050
  %6824 = vmatpush1.bf16.msra.mxu0 %v6049
  %6825 = vmatprep.subr.bf16.mxu0 %v6057
  %6826 = vmatpush1.bf16.msra.mxu0 %v6056
  %6827 = vmatprep.subr.bf16.mxu0 %v6064
  %6828 = vmatpush1.bf16.msra.mxu0 %v6063
  %6829 = vmatprep.subr.bf16.mxu0 %v6071
  %6830 = vmatpush1.bf16.msra.mxu0 %v6070
  %6831 = vmatprep.subr.bf16.mxu0 %v6078
  %6832 = vmatpush1.bf16.msra.mxu0 %v6077
  %6833 = vmatprep.subr.bf16.mxu0 %v6085
  %6834 = vmatpush1.bf16.msra.mxu0 %v6084
  %6835 = vmatprep.subr.bf16.mxu0 %v6092
  %6836 = vmatpush1.bf16.msra.mxu0 %v6091
  %6837 = vmatprep.subr.bf16.mxu0 %v6099
  %6838 = vmatpush1.bf16.msra.mxu0 %v6098
  %6839 = vmatprep.subr.bf16.mxu0 %v6106
  %6840 = vmatpush1.bf16.msra.mxu0 %v6105
  %6841 = vmatprep.subr.bf16.mxu0 %v6113
  %6842 = vmatpush1.bf16.msra.mxu0 %v6112
  %6843 = vmatprep.mubr.bf16.mxu0 %v4099
  %6844 = vmatmul.mubr.bf16.gmra.mrb[0].mxu0 %v4098
  %v6845 = vpop.f32.mrb[0].mxu0
  %v6846 = vadd.f32 %v6805, %v6845
  %v6847 = vpop.f32.mrb[0].mxu0
  %v6848 = vadd.f32 %v6807, %v6847
  %v6849 = vpop.f32.mrb[0].mxu0
  %v6850 = vpop.f32.mrb[0].mxu0
  %6851 = vdwg.mxu0
  %6852 = vmatprep.subr.bf16.mxu0 %v6120
  %6853 = vmatpush1.bf16.msra.mxu0 %v6119
  %6854 = vmatprep.subr.bf16.mxu0 %v6127
  %6855 = vmatpush1.bf16.msra.mxu0 %v6126
  %6856 = vmatprep.subr.bf16.mxu0 %v6134
  %6857 = vmatpush1.bf16.msra.mxu0 %v6133
  %6858 = vmatprep.subr.bf16.mxu0 %v6141
  %6859 = vmatpush1.bf16.msra.mxu0 %v6140
  %6860 = vmatprep.subr.bf16.mxu0 %v6148
  %6861 = vmatpush1.bf16.msra.mxu0 %v6147
  %6862 = vmatprep.subr.bf16.mxu0 %v6155
  %6863 = vmatpush1.bf16.msra.mxu0 %v6154
  %6864 = vmatprep.subr.bf16.mxu0 %v6162
  %6865 = vmatpush1.bf16.msra.mxu0 %v6161
  %6866 = vmatprep.subr.bf16.mxu0 %v6169
  %6867 = vmatpush1.bf16.msra.mxu0 %v6168
  %6868 = vmatprep.subr.bf16.mxu0 0
  %6869 = vmatpush1.bf16.msra.mxu0 0
  %6870 = vmatprep.subr.bf16.mxu0 0
  %6871 = vmatpush1.bf16.msra.mxu0 0
  %6872 = vmatprep.subr.bf16.mxu0 0
  %6873 = vmatpush1.bf16.msra.mxu0 0
  %6874 = vmatprep.subr.bf16.mxu0 0
  %6875 = vmatpush1.bf16.msra.mxu0 0
  %6876 = vmatprep.subr.bf16.mxu0 0
  %6877 = vmatpush1.bf16.msra.mxu0 0
  %6878 = vmatprep.subr.bf16.mxu0 0
  %6879 = vmatpush1.bf16.msra.mxu0 0
  %6880 = vmatprep.subr.bf16.mxu0 0
  %6881 = vmatpush1.bf16.msra.mxu0 0
  %6882 = vmatprep.subr.bf16.mxu0 0
  %6883 = vmatpush1.bf16.msra.mxu0 0
  %6884 = vmatprep.mubr.bf16.mxu0 0
  %6885 = vmatmul.mubr.bf16.gmra.mrb[0].mxu0 %v4100
  %v6886 = vpop.f32.mrb[0].mxu0
  %v6887 = vadd.f32 %v6846, %v6886
  %v6888 = vpop.f32.mrb[0].mxu0
  %v6889 = vadd.f32 %v6848, %v6888
  %v6890 = vpop.f32.mrb[0].mxu0
  %v6891 = vpop.f32.mrb[0].mxu0
  %6892 = vdwg.mxu0
  %6893 = vmatprep.subr.bf16.mxu0 %v5786
  %6894 = vmatpush1.bf16.msra.mxu0 %v5785
  %6895 = vmatprep.subr.bf16.mxu0 %v5793
  %6896 = vmatpush1.bf16.msra.mxu0 %v5792
  %6897 = vmatprep.subr.bf16.mxu0 %v5800
  %6898 = vmatpush1.bf16.msra.mxu0 %v5799
  %6899 = vmatprep.subr.bf16.mxu0 %v5807
  %6900 = vmatpush1.bf16.msra.mxu0 %v5806
  %6901 = vmatprep.subr.bf16.mxu0 %v5814
  %6902 = vmatpush1.bf16.msra.mxu0 %v5813
  %6903 = vmatprep.subr.bf16.mxu0 %v5821
  %6904 = vmatpush1.bf16.msra.mxu0 %v5820
  %6905 = vmatprep.subr.bf16.mxu0 %v5828
  %6906 = vmatpush1.bf16.msra.mxu0 %v5827
  %6907 = vmatprep.subr.bf16.mxu0 %v5835
  %6908 = vmatpush1.bf16.msra.mxu0 %v5834
  %6909 = vmatprep.subr.bf16.mxu0 %v5842
  %6910 = vmatpush1.bf16.msra.mxu0 %v5841
  %6911 = vmatprep.subr.bf16.mxu0 %v5849
  %6912 = vmatpush1.bf16.msra.mxu0 %v5848
  %6913 = vmatprep.subr.bf16.mxu0 %v5856
  %6914 = vmatpush1.bf16.msra.mxu0 %v5855
  %6915 = vmatprep.subr.bf16.mxu0 %v5863
  %6916 = vmatpush1.bf16.msra.mxu0 %v5862
  %6917 = vmatprep.subr.bf16.mxu0 %v5870
  %6918 = vmatpush1.bf16.msra.mxu0 %v5869
  %6919 = vmatprep.subr.bf16.mxu0 %v5877
  %6920 = vmatpush1.bf16.msra.mxu0 %v5876
  %6921 = vmatprep.subr.bf16.mxu0 %v5884
  %6922 = vmatpush1.bf16.msra.mxu0 %v5883
  %6923 = vmatprep.subr.bf16.mxu0 %v5891
  %6924 = vmatpush1.bf16.msra.mxu0 %v5890
  %6925 = vmatprep.mubr.bf16.mxu0 %v4095
  %6926 = vmatmul.mubr.bf16.gmra.mrb[0].mxu0 %v4094
  %v6927 = vpop.f32.mrb[0].mxu0
  %v6928 = vadd.f32 0.0, %v6927
  %v6929 = vpop.f32.mrb[0].mxu0
  %v6930 = vadd.f32 0.0, %v6929
  %v6931 = vpop.f32.mrb[0].mxu0
  %v6932 = vpop.f32.mrb[0].mxu0
  %6933 = vdwg.mxu0
  %6934 = vmatprep.subr.bf16.mxu0 %v5898
  %6935 = vmatpush1.bf16.msra.mxu0 %v5897
  %6936 = vmatprep.subr.bf16.mxu0 %v5905
  %6937 = vmatpush1.bf16.msra.mxu0 %v5904
  %6938 = vmatprep.subr.bf16.mxu0 %v5912
  %6939 = vmatpush1.bf16.msra.mxu0 %v5911
  %6940 = vmatprep.subr.bf16.mxu0 %v5919
  %6941 = vmatpush1.bf16.msra.mxu0 %v5918
  %6942 = vmatprep.subr.bf16.mxu0 %v5926
  %6943 = vmatpush1.bf16.msra.mxu0 %v5925
  %6944 = vmatprep.subr.bf16.mxu0 %v5933
  %6945 = vmatpush1.bf16.msra.mxu0 %v5932
  %6946 = vmatprep.subr.bf16.mxu0 %v5940
  %6947 = vmatpush1.bf16.msra.mxu0 %v5939
  %6948 = vmatprep.subr.bf16.mxu0 %v5947
  %6949 = vmatpush1.bf16.msra.mxu0 %v5946
  %6950 = vmatprep.subr.bf16.mxu0 %v5954
  %6951 = vmatpush1.bf16.msra.mxu0 %v5953
  %6952 = vmatprep.subr.bf16.mxu0 %v5961
  %6953 = vmatpush1.bf16.msra.mxu0 %v5960
  %6954 = vmatprep.subr.bf16.mxu0 %v5968
  %6955 = vmatpush1.bf16.msra.mxu0 %v5967
  %6956 = vmatprep.subr.bf16.mxu0 %v5975
  %6957 = vmatpush1.bf16.msra.mxu0 %v5974
  %6958 = vmatprep.subr.bf16.mxu0 %v5982
  %6959 = vmatpush1.bf16.msra.mxu0 %v5981
  %6960 = vmatprep.subr.bf16.mxu0 %v5989
  %6961 = vmatpush1.bf16.msra.mxu0 %v5988
  %6962 = vmatprep.subr.bf16.mxu0 %v5996
  %6963 = vmatpush1.bf16.msra.mxu0 %v5995
  %6964 = vmatprep.subr.bf16.mxu0 %v6003
  %6965 = vmatpush1.bf16.msra.mxu0 %v6002
  %6966 = vmatprep.mubr.bf16.mxu0 %v4097
  %6967 = vmatmul.mubr.bf16.gmra.mrb[0].mxu0 %v4096
  %v6968 = vpop.f32.mrb[0].mxu0
  %v6969 = vadd.f32 %v6928, %v6968
  %v6970 = vpop.f32.mrb[0].mxu0
  %v6971 = vadd.f32 %v6930, %v6970
  %v6972 = vpop.f32.mrb[0].mxu0
  %v6973 = vpop.f32.mrb[0].mxu0
  %6974 = vdwg.mxu0
  %6975 = vmatprep.subr.bf16.mxu0 %v6010
  %6976 = vmatpush1.bf16.msra.mxu0 %v6009
  %6977 = vmatprep.subr.bf16.mxu0 %v6017
  %6978 = vmatpush1.bf16.msra.mxu0 %v6016
  %6979 = vmatprep.subr.bf16.mxu0 %v6024
  %6980 = vmatpush1.bf16.msra.mxu0 %v6023
  %6981 = vmatprep.subr.bf16.mxu0 %v6031
  %6982 = vmatpush1.bf16.msra.mxu0 %v6030
  %6983 = vmatprep.subr.bf16.mxu0 %v6038
  %6984 = vmatpush1.bf16.msra.mxu0 %v6037
  %6985 = vmatprep.subr.bf16.mxu0 %v6045
  %6986 = vmatpush1.bf16.msra.mxu0 %v6044
  %6987 = vmatprep.subr.bf16.mxu0 %v6052
  %6988 = vmatpush1.bf16.msra.mxu0 %v6051
  %6989 = vmatprep.subr.bf16.mxu0 %v6059
  %6990 = vmatpush1.bf16.msra.mxu0 %v6058
  %6991 = vmatprep.subr.bf16.mxu0 %v6066
  %6992 = vmatpush1.bf16.msra.mxu0 %v6065
  %6993 = vmatprep.subr.bf16.mxu0 %v6073
  %6994 = vmatpush1.bf16.msra.mxu0 %v6072
  %6995 = vmatprep.subr.bf16.mxu0 %v6080
  %6996 = vmatpush1.bf16.msra.mxu0 %v6079
  %6997 = vmatprep.subr.bf16.mxu0 %v6087
  %6998 = vmatpush1.bf16.msra.mxu0 %v6086
  %6999 = vmatprep.subr.bf16.mxu0 %v6094
  %7000 = vmatpush1.bf16.msra.mxu0 %v6093
  %7001 = vmatprep.subr.bf16.mxu0 %v6101
  %7002 = vmatpush1.bf16.msra.mxu0 %v6100
  %7003 = vmatprep.subr.bf16.mxu0 %v6108
  %7004 = vmatpush1.bf16.msra.mxu0 %v6107
  %7005 = vmatprep.subr.bf16.mxu0 %v6115
  %7006 = vmatpush1.bf16.msra.mxu0 %v6114
  %7007 = vmatprep.mubr.bf16.mxu0 %v4099
  %7008 = vmatmul.mubr.bf16.gmra.mrb[0].mxu0 %v4098
  %v7009 = vpop.f32.mrb[0].mxu0
  %v7010 = vadd.f32 %v6969, %v7009
  %v7011 = vpop.f32.mrb[0].mxu0
  %v7012 = vadd.f32 %v6971, %v7011
  %v7013 = vpop.f32.mrb[0].mxu0
  %v7014 = vpop.f32.mrb[0].mxu0
  %7015 = vdwg.mxu0
  %7016 = vmatprep.subr.bf16.mxu0 %v6122
  %7017 = vmatpush1.bf16.msra.mxu0 %v6121
  %7018 = vmatprep.subr.bf16.mxu0 %v6129
  %7019 = vmatpush1.bf16.msra.mxu0 %v6128
  %7020 = vmatprep.subr.bf16.mxu0 %v6136
  %7021 = vmatpush1.bf16.msra.mxu0 %v6135
  %7022 = vmatprep.subr.bf16.mxu0 %v6143
  %7023 = vmatpush1.bf16.msra.mxu0 %v6142
  %7024 = vmatprep.subr.bf16.mxu0 %v6150
  %7025 = vmatpush1.bf16.msra.mxu0 %v6149
  %7026 = vmatprep.subr.bf16.mxu0 %v6157
  %7027 = vmatpush1.bf16.msra.mxu0 %v6156
  %7028 = vmatprep.subr.bf16.mxu0 %v6164
  %7029 = vmatpush1.bf16.msra.mxu0 %v6163
  %7030 = vmatprep.subr.bf16.mxu0 %v6171
  %7031 = vmatpush1.bf16.msra.mxu0 %v6170
  %7032 = vmatprep.subr.bf16.mxu0 0
  %7033 = vmatpush1.bf16.msra.mxu0 0
  %7034 = vmatprep.subr.bf16.mxu0 0
  %7035 = vmatpush1.bf16.msra.mxu0 0
  %7036 = vmatprep.subr.bf16.mxu0 0
  %7037 = vmatpush1.bf16.msra.mxu0 0
  %7038 = vmatprep.subr.bf16.mxu0 0
  %7039 = vmatpush1.bf16.msra.mxu0 0
  %7040 = vmatprep.subr.bf16.mxu0 0
  %7041 = vmatpush1.bf16.msra.mxu0 0
  %7042 = vmatprep.subr.bf16.mxu0 0
  %7043 = vmatpush1.bf16.msra.mxu0 0
  %7044 = vmatprep.subr.bf16.mxu0 0
  %7045 = vmatpush1.bf16.msra.mxu0 0
  %7046 = vmatprep.subr.bf16.mxu0 0
  %7047 = vmatpush1.bf16.msra.mxu0 0
  %7048 = vmatprep.mubr.bf16.mxu0 0
  %7049 = vmatmul.mubr.bf16.gmra.mrb[0].mxu0 %v4100
  %v7050 = vpop.f32.mrb[0].mxu0
  %v7051 = vadd.f32 %v7010, %v7050
  %v7052 = vpop.f32.mrb[0].mxu0
  %v7053 = vadd.f32 %v7012, %v7052
  %v7054 = vpop.f32.mrb[0].mxu0
  %v7055 = vpop.f32.mrb[0].mxu0
  %7056 = vdwg.mxu0
  %7057 = vmatprep.subr.bf16.mxu0 0
  %7058 = vmatpush1.bf16.msra.mxu0 %v5787
  %7059 = vmatprep.subr.bf16.mxu0 0
  %7060 = vmatpush1.bf16.msra.mxu0 %v5794
  %7061 = vmatprep.subr.bf16.mxu0 0
  %7062 = vmatpush1.bf16.msra.mxu0 %v5801
  %7063 = vmatprep.subr.bf16.mxu0 0
  %7064 = vmatpush1.bf16.msra.mxu0 %v5808
  %7065 = vmatprep.subr.bf16.mxu0 0
  %7066 = vmatpush1.bf16.msra.mxu0 %v5815
  %7067 = vmatprep.subr.bf16.mxu0 0
  %7068 = vmatpush1.bf16.msra.mxu0 %v5822
  %7069 = vmatprep.subr.bf16.mxu0 0
  %7070 = vmatpush1.bf16.msra.mxu0 %v5829
  %7071 = vmatprep.subr.bf16.mxu0 0
  %7072 = vmatpush1.bf16.msra.mxu0 %v5836
  %7073 = vmatprep.subr.bf16.mxu0 0
  %7074 = vmatpush1.bf16.msra.mxu0 %v5843
  %7075 = vmatprep.subr.bf16.mxu0 0
  %7076 = vmatpush1.bf16.msra.mxu0 %v5850
  %7077 = vmatprep.subr.bf16.mxu0 0
  %7078 = vmatpush1.bf16.msra.mxu0 %v5857
  %7079 = vmatprep.subr.bf16.mxu0 0
  %7080 = vmatpush1.bf16.msra.mxu0 %v5864
  %7081 = vmatprep.subr.bf16.mxu0 0
  %7082 = vmatpush1.bf16.msra.mxu0 %v5871
  %7083 = vmatprep.subr.bf16.mxu0 0
  %7084 = vmatpush1.bf16.msra.mxu0 %v5878
  %7085 = vmatprep.subr.bf16.mxu0 0
  %7086 = vmatpush1.bf16.msra.mxu0 %v5885
  %7087 = vmatprep.subr.bf16.mxu0 0
  %7088 = vmatpush1.bf16.msra.mxu0 %v5892
  %7089 = vmatprep.mubr.bf16.mxu0 %v4095
  %7090 = vmatmul.mubr.bf16.gmra.mrb[0].mxu0 %v4094
  %v7091 = vpop.f32.mrb[0].mxu0
  %v7092 = vadd.f32 0.0, %v7091
  %v7093 = vpop.f32.mrb[0].mxu0
  %v7094 = vpop.f32.mrb[0].mxu0
  %v7095 = vpop.f32.mrb[0].mxu0
  %7096 = vdwg.mxu0
  %7097 = vmatprep.subr.bf16.mxu0 0
  %7098 = vmatpush1.bf16.msra.mxu0 %v5899
  %7099 = vmatprep.subr.bf16.mxu0 0
  %7100 = vmatpush1.bf16.msra.mxu0 %v5906
  %7101 = vmatprep.subr.bf16.mxu0 0
  %7102 = vmatpush1.bf16.msra.mxu0 %v5913
  %7103 = vmatprep.subr.bf16.mxu0 0
  %7104 = vmatpush1.bf16.msra.mxu0 %v5920
  %7105 = vmatprep.subr.bf16.mxu0 0
  %7106 = vmatpush1.bf16.msra.mxu0 %v5927
  %7107 = vmatprep.subr.bf16.mxu0 0
  %7108 = vmatpush1.bf16.msra.mxu0 %v5934
  %7109 = vmatprep.subr.bf16.mxu0 0
  %7110 = vmatpush1.bf16.msra.mxu0 %v5941
  %7111 = vmatprep.subr.bf16.mxu0 0
  %7112 = vmatpush1.bf16.msra.mxu0 %v5948
  %7113 = vmatprep.subr.bf16.mxu0 0
  %7114 = vmatpush1.bf16.msra.mxu0 %v5955
  %7115 = vmatprep.subr.bf16.mxu0 0
  %7116 = vmatpush1.bf16.msra.mxu0 %v5962
  %7117 = vmatprep.subr.bf16.mxu0 0
  %7118 = vmatpush1.bf16.msra.mxu0 %v5969
  %7119 = vmatprep.subr.bf16.mxu0 0
  %7120 = vmatpush1.bf16.msra.mxu0 %v5976
  %7121 = vmatprep.subr.bf16.mxu0 0
  %7122 = vmatpush1.bf16.msra.mxu0 %v5983
  %7123 = vmatprep.subr.bf16.mxu0 0
  %7124 = vmatpush1.bf16.msra.mxu0 %v5990
  %7125 = vmatprep.subr.bf16.mxu0 0
  %7126 = vmatpush1.bf16.msra.mxu0 %v5997
  %7127 = vmatprep.subr.bf16.mxu0 0
  %7128 = vmatpush1.bf16.msra.mxu0 %v6004
  %7129 = vmatprep.mubr.bf16.mxu0 %v4097
  %7130 = vmatmul.mubr.bf16.gmra.mrb[0].mxu0 %v4096
  %v7131 = vpop.f32.mrb[0].mxu0
  %v7132 = vadd.f32 %v7092, %v7131
  %v7133 = vpop.f32.mrb[0].mxu0
  %v7134 = vpop.f32.mrb[0].mxu0
  %v7135 = vpop.f32.mrb[0].mxu0
  %7136 = vdwg.mxu0
  %7137 = vmatprep.subr.bf16.mxu0 0
  %7138 = vmatpush1.bf16.msra.mxu0 %v6011
  %7139 = vmatprep.subr.bf16.mxu0 0
  %7140 = vmatpush1.bf16.msra.mxu0 %v6018
  %7141 = vmatprep.subr.bf16.mxu0 0
  %7142 = vmatpush1.bf16.msra.mxu0 %v6025
  %7143 = vmatprep.subr.bf16.mxu0 0
  %7144 = vmatpush1.bf16.msra.mxu0 %v6032
  %7145 = vmatprep.subr.bf16.mxu0 0
  %7146 = vmatpush1.bf16.msra.mxu0 %v6039
  %7147 = vmatprep.subr.bf16.mxu0 0
  %7148 = vmatpush1.bf16.msra.mxu0 %v6046
  %7149 = vmatprep.subr.bf16.mxu0 0
  %7150 = vmatpush1.bf16.msra.mxu0 %v6053
  %7151 = vmatprep.subr.bf16.mxu0 0
  %7152 = vmatpush1.bf16.msra.mxu0 %v6060
  %7153 = vmatprep.subr.bf16.mxu0 0
  %7154 = vmatpush1.bf16.msra.mxu0 %v6067
  %7155 = vmatprep.subr.bf16.mxu0 0
  %7156 = vmatpush1.bf16.msra.mxu0 %v6074
  %7157 = vmatprep.subr.bf16.mxu0 0
  %7158 = vmatpush1.bf16.msra.mxu0 %v6081
  %7159 = vmatprep.subr.bf16.mxu0 0
  %7160 = vmatpush1.bf16.msra.mxu0 %v6088
  %7161 = vmatprep.subr.bf16.mxu0 0
  %7162 = vmatpush1.bf16.msra.mxu0 %v6095
  %7163 = vmatprep.subr.bf16.mxu0 0
  %7164 = vmatpush1.bf16.msra.mxu0 %v6102
  %7165 = vmatprep.subr.bf16.mxu0 0
  %7166 = vmatpush1.bf16.msra.mxu0 %v6109
  %7167 = vmatprep.subr.bf16.mxu0 0
  %7168 = vmatpush1.bf16.msra.mxu0 %v6116
  %7169 = vmatprep.mubr.bf16.mxu0 %v4099
  %7170 = vmatmul.mubr.bf16.gmra.mrb[0].mxu0 %v4098
  %v7171 = vpop.f32.mrb[0].mxu0
  %v7172 = vadd.f32 %v7132, %v7171
  %v7173 = vpop.f32.mrb[0].mxu0
  %v7174 = vpop.f32.mrb[0].mxu0
  %v7175 = vpop.f32.mrb[0].mxu0
  %7176 = vdwg.mxu0
  %7177 = vmatprep.subr.bf16.mxu0 0
  %7178 = vmatpush1.bf16.msra.mxu0 %v6123
  %7179 = vmatprep.subr.bf16.mxu0 0
  %7180 = vmatpush1.bf16.msra.mxu0 %v6130
  %7181 = vmatprep.subr.bf16.mxu0 0
  %7182 = vmatpush1.bf16.msra.mxu0 %v6137
  %7183 = vmatprep.subr.bf16.mxu0 0
  %7184 = vmatpush1.bf16.msra.mxu0 %v6144
  %7185 = vmatprep.subr.bf16.mxu0 0
  %7186 = vmatpush1.bf16.msra.mxu0 %v6151
  %7187 = vmatprep.subr.bf16.mxu0 0
  %7188 = vmatpush1.bf16.msra.mxu0 %v6158
  %7189 = vmatprep.subr.bf16.mxu0 0
  %7190 = vmatpush1.bf16.msra.mxu0 %v6165
  %7191 = vmatprep.subr.bf16.mxu0 0
  %7192 = vmatpush1.bf16.msra.mxu0 %v6172
  %7193 = vmatprep.subr.bf16.mxu0 0
  %7194 = vmatpush1.bf16.msra.mxu0 0
  %7195 = vmatprep.subr.bf16.mxu0 0
  %7196 = vmatpush1.bf16.msra.mxu0 0
  %7197 = vmatprep.subr.bf16.mxu0 0
  %7198 = vmatpush1.bf16.msra.mxu0 0
  %7199 = vmatprep.subr.bf16.mxu0 0
  %7200 = vmatpush1.bf16.msra.mxu0 0
  %7201 = vmatprep.subr.bf16.mxu0 0
  %7202 = vmatpush1.bf16.msra.mxu0 0
  %7203 = vmatprep.subr.bf16.mxu0 0
  %7204 = vmatpush1.bf16.msra.mxu0 0
  %7205 = vmatprep.subr.bf16.mxu0 0
  %7206 = vmatpush1.bf16.msra.mxu0 0
  %7207 = vmatprep.subr.bf16.mxu0 0
  %7208 = vmatpush1.bf16.msra.mxu0 0
  %7209 = vmatprep.mubr.bf16.mxu0 0
  %7210 = vmatmul.mubr.bf16.gmra.mrb[0].mxu0 %v4100
  %v7211 = vpop.f32.mrb[0].mxu0
  %v7212 = vadd.f32 %v7172, %v7211
  %v7213 = vpop.f32.mrb[0].mxu0
  %v7214 = vpop.f32.mrb[0].mxu0
  %v7215 = vpop.f32.mrb[0].mxu0
  %7216 = vdwg.mxu0
  %v7217 = vrot.slane %v6723, 4
  %v7218 = vadd.f32 %v6723, %v7217
  %v7219 = vrot.slane %v7218, 2
  %v7220 = vadd.f32 %v7218, %v7219
  %v7221 = vrot.slane %v7220, 1
  %v7222 = vadd.f32 %v7220, %v7221
  %v7223 = vrot.slane %v6725, 4
  %v7224 = vadd.f32 %v6725, %v7223
  %v7225 = vrot.slane %v7224, 2
  %v7226 = vadd.f32 %v7224, %v7225
  %v7227 = vrot.slane %v7226, 1
  %v7228 = vadd.f32 %v7226, %v7227
  %v7229 = vrot.slane %v6887, 4
  %v7230 = vadd.f32 %v6887, %v7229
  %v7231 = vrot.slane %v7230, 2
  %v7232 = vadd.f32 %v7230, %v7231
  %v7233 = vrot.slane %v7232, 1
  %v7234 = vadd.f32 %v7232, %v7233
  %v7235 = vrot.slane %v6889, 4
  %v7236 = vadd.f32 %v6889, %v7235
  %v7237 = vrot.slane %v7236, 2
  %v7238 = vadd.f32 %v7236, %v7237
  %v7239 = vrot.slane %v7238, 1
  %v7240 = vadd.f32 %v7238, %v7239
  %v7241 = vrot.slane %v7051, 4
  %v7242 = vadd.f32 %v7051, %v7241
  %v7243 = vrot.slane %v7242, 2
  %v7244 = vadd.f32 %v7242, %v7243
  %v7245 = vrot.slane %v7244, 1
  %v7246 = vadd.f32 %v7244, %v7245
  %v7247 = vrot.slane %v7053, 4
  %v7248 = vadd.f32 %v7053, %v7247
  %v7249 = vrot.slane %v7248, 2
  %v7250 = vadd.f32 %v7248, %v7249
  %v7251 = vrot.slane %v7250, 1
  %v7252 = vadd.f32 %v7250, %v7251
  %v7253 = vrot.slane %v7212, 4
  %v7254 = vadd.f32 %v7212, %v7253
  %v7255 = vrot.slane %v7254, 2
  %v7256 = vadd.f32 %v7254, %v7255
  %v7257 = vrot.slane %v7256, 1
  %v7258 = vadd.f32 %v7256, %v7257
  %v7259 = vmul.f32 %v6723, %v6723
  %v7260 = vmul.f32 %v6725, %v6725
  %v7261 = vmul.f32 %v6887, %v6887
  %v7262 = vmul.f32 %v6889, %v6889
  %v7263 = vmul.f32 %v7051, %v7051
  %v7264 = vmul.f32 %v7053, %v7053
  %v7265 = vmul.f32 %v7212, %v7212
  %v7266 = vrot.slane %v7259, 4
  %v7267 = vadd.f32 %v7259, %v7266
  %v7268 = vrot.slane %v7267, 2
  %v7269 = vadd.f32 %v7267, %v7268
  %v7270 = vrot.slane %v7269, 1
  %v7271 = vadd.f32 %v7269, %v7270
  %v7272 = vrot.slane %v7260, 4
  %v7273 = vadd.f32 %v7260, %v7272
  %v7274 = vrot.slane %v7273, 2
  %v7275 = vadd.f32 %v7273, %v7274
  %v7276 = vrot.slane %v7275, 1
  %v7277 = vadd.f32 %v7275, %v7276
  %v7278 = vrot.slane %v7261, 4
  %v7279 = vadd.f32 %v7261, %v7278
  %v7280 = vrot.slane %v7279, 2
  %v7281 = vadd.f32 %v7279, %v7280
  %v7282 = vrot.slane %v7281, 1
  %v7283 = vadd.f32 %v7281, %v7282
  %v7284 = vrot.slane %v7262, 4
  %v7285 = vadd.f32 %v7262, %v7284
  %v7286 = vrot.slane %v7285, 2
  %v7287 = vadd.f32 %v7285, %v7286
  %v7288 = vrot.slane %v7287, 1
  %v7289 = vadd.f32 %v7287, %v7288
  %v7290 = vrot.slane %v7263, 4
  %v7291 = vadd.f32 %v7263, %v7290
  %v7292 = vrot.slane %v7291, 2
  %v7293 = vadd.f32 %v7291, %v7292
  %v7294 = vrot.slane %v7293, 1
  %v7295 = vadd.f32 %v7293, %v7294
  %v7296 = vrot.slane %v7264, 4
  %v7297 = vadd.f32 %v7264, %v7296
  %v7298 = vrot.slane %v7297, 2
  %v7299 = vadd.f32 %v7297, %v7298
  %v7300 = vrot.slane %v7299, 1
  %v7301 = vadd.f32 %v7299, %v7300
  %v7302 = vrot.slane %v7265, 4
  %v7303 = vadd.f32 %v7265, %v7302
  %v7304 = vrot.slane %v7303, 2
  %v7305 = vadd.f32 %v7303, %v7304
  %v7306 = vrot.slane %v7305, 1
  %v7307 = vadd.f32 %v7305, %v7306
  %v7308 = vsel %vm234, %v7222, %v7271
  %v7309 = vsel %vm234, %v7228, %v7277
  %v7310 = vsel %vm234, %v7234, %v7283
  %v7311 = vsel %vm234, %v7240, %v7289
  %v7312 = vsel %vm234, %v7246, %v7295
  %v7313 = vsel %vm234, %v7252, %v7301
  %v7314 = vsel %vm234, %v7258, %v7307
  %v7315 = vld [vmem:[%s17] sm:$0xff]
  %v7316 = vld [vmem:[%s17 + $0x8] sm:$0xff]
  %v7317 = vld [vmem:[%s17 + $0x10] sm:$0xff]
  %v7318 = vld [vmem:[%s17 + $0x18] sm:$0xff]
  %v7319 = vld [vmem:[%s17 + $0x20] sm:$0xff]
  %v7320 = vld [vmem:[%s17 + $0x28] sm:$0xff]
  %v7321 = vld [vmem:[%s17 + $0x30] sm:$0xff]
  %v7322 = vld [vmem:[%s17 + $0x38] sm:$0xff]
  %v7323 = vld [vmem:[%s17 + $0x40] sm:$0xff]
  %v7324 = vld [vmem:[%s17 + $0x48] sm:$0xff]
  %v7325 = vld [vmem:[%s17 + $0x50] sm:$0xff]
  %v7326 = vld [vmem:[%s17 + $0x58] sm:$0xff]
  %v7327 = vld [vmem:[%s17 + $0x60] sm:$0xff]
  %v7328 = vld [vmem:[%s17 + $0x68] sm:$0xff]
  %v7329 = vld [vmem:[%s17 + $0x70] sm:$0xff]
  %v7330 = vld [vmem:[%s17 + $0x78] sm:$0xff]
  %v7331 = vld [vmem:[%s17 + $0x80] sm:$0xff]
  %v7332 = vld [vmem:[%s17 + $0x88] sm:$0xff]
  %v7333 = vld [vmem:[%s17 + $0x90] sm:$0xff]
  %v7334 = vld [vmem:[%s17 + $0x98] sm:$0xff]
  %v7335 = vld [vmem:[%s17 + $0xa0] sm:$0xff]
  %v7336 = vld [vmem:[%s17 + $0xa8] sm:$0xff]
  %v7337 = vld [vmem:[%s17 + $0xb0] sm:$0xff]
  %v7338 = vld [vmem:[%s17 + $0xb8] sm:$0xff]
  %v7339 = vld [vmem:[%s17 + $0xc0] sm:$0xff]
  %v7340 = vld [vmem:[%s17 + $0xc8] sm:$0xff]
  %v7341 = vld [vmem:[%s17 + $0xd0] sm:$0xff]
  %v7342 = vld [vmem:[%s17 + $0xd8] sm:$0xff]
  %v7343 = vld [vmem:[%s17 + $0xe0] sm:$0xff]
  %v7344 = vld [vmem:[%s17 + $0xe8] sm:$0xff]
  %v7345 = vld [vmem:[%s17 + $0xf0] sm:$0xff]
  %v7346 = vld [vmem:[%s17 + $0xf8] sm:$0xff]
  %v7347 = vld [vmem:[%s17 + $0x100] sm:$0xff]
  %v7348 = vld [vmem:[%s17 + $0x108] sm:$0xff]
  %v7349 = vld [vmem:[%s17 + $0x110] sm:$0xff]
  %v7350 = vld [vmem:[%s17 + $0x118] sm:$0xff]
  %v7351 = vld [vmem:[%s17 + $0x120] sm:$0xff]
  %v7352 = vld [vmem:[%s17 + $0x128] sm:$0xff]
  %v7353 = vld [vmem:[%s17 + $0x130] sm:$0xff]
  %v7354 = vld [vmem:[%s17 + $0x138] sm:$0xff]
  %v7355 = vld [vmem:[%s17 + $0x140] sm:$0xff]
  %v7356 = vld [vmem:[%s17 + $0x148] sm:$0xff]
  %v7357 = vld [vmem:[%s17 + $0x150] sm:$0xff]
  %v7358 = vld [vmem:[%s17 + $0x158] sm:$0xff]
  %v7359 = vld [vmem:[%s17 + $0x160] sm:$0xff]
  %v7360 = vld [vmem:[%s17 + $0x168] sm:$0xff]
  %v7361 = vld [vmem:[%s17 + $0x170] sm:$0xff]
  %v7362 = vld [vmem:[%s17 + $0x178] sm:$0xff]
  %v7363 = vld [vmem:[%s17 + $0x180] sm:$0xff]
  %v7364 = vld [vmem:[%s17 + $0x188] sm:$0xff]
  %v7365 = vld [vmem:[%s17 + $0x190] sm:$0xff]
  %v7366 = vld [vmem:[%s17 + $0x198] sm:$0xff]
  %v7367 = vld [vmem:[%s17 + $0x1a0] sm:$0xff]
  %v7368 = vld [vmem:[%s17 + $0x1a8] sm:$0xff]
  %v7369 = vld [vmem:[%s17 + $0x1b0] sm:$0xff]
  %v7370 = vld [vmem:[%s17 + $0x1b8] sm:$0xff]
  %v7371 = vld [vmem:[%s17 + $0x1c0] sm:$0xff]
  %v7372 = vld [vmem:[%s17 + $0x1c8] sm:$0xff]
  %v7373 = vld [vmem:[%s17 + $0x1d0] sm:$0xff]
  %v7374 = vld [vmem:[%s17 + $0x1d8] sm:$0xff]
  %v7375 = vld [vmem:[%s17 + $0x1e0] sm:$0xff]
  %v7376 = vld [vmem:[%s17 + $0x1e8] sm:$0xff]
  %v7377 = vld [vmem:[%s17 + $0x1f0] sm:$0xff]
  %v7378 = vld [vmem:[%s17 + $0x1f8] sm:$0xff]
  %v7379 = vld [vmem:[%s17 + $0x200] sm:$0xff]
  %v7380 = vld [vmem:[%s17 + $0x208] sm:$0xff]
  %v7381 = vld [vmem:[%s17 + $0x210] sm:$0xff]
  %v7382 = vld [vmem:[%s17 + $0x218] sm:$0xff]
  %v7383 = vld [vmem:[%s17 + $0x220] sm:$0xff]
  %v7384 = vld [vmem:[%s17 + $0x228] sm:$0xff]
  %v7385 = vld [vmem:[%s17 + $0x230] sm:$0xff]
  %v7386 = vld [vmem:[%s17 + $0x238] sm:$0xff]
  %v7387 = vld [vmem:[%s17 + $0x240] sm:$0xff]
  %v7388 = vld [vmem:[%s17 + $0x248] sm:$0xff]
  %v7389 = vld [vmem:[%s17 + $0x250] sm:$0xff]
  %v7390 = vld [vmem:[%s17 + $0x258] sm:$0xff]
  %v7391 = vld [vmem:[%s17 + $0x260] sm:$0xff]
  %v7392 = vld [vmem:[%s17 + $0x268] sm:$0xff]
  %v7393 = vld [vmem:[%s17 + $0x270] sm:$0xff]
  %v7394 = vld [vmem:[%s17 + $0x278] sm:$0xff]
  %v7395 = vld [vmem:[%s17 + $0x280] sm:$0xff]
  %v7396 = vld [vmem:[%s17 + $0x288] sm:$0xff]
  %v7397 = vld [vmem:[%s17 + $0x290] sm:$0xff]
  %v7398 = vld [vmem:[%s17 + $0x298] sm:$0xff]
  %v7399 = vld [vmem:[%s17 + $0x2a0] sm:$0xff]
  %v7400 = vld [vmem:[%s17 + $0x2a8] sm:$0xff]
  %v7401 = vld [vmem:[%s17 + $0x2b0] sm:$0xff]
  %v7402 = vld [vmem:[%s17 + $0x2b8] sm:$0xff]
  %v7403 = vld [vmem:[%s17 + $0x2c0] sm:$0xff]
  %v7404 = vld [vmem:[%s17 + $0x2c8] sm:$0xff]
  %v7405 = vld [vmem:[%s17 + $0x2d0] sm:$0xff]
  %v7406 = vld [vmem:[%s17 + $0x2d8] sm:$0xff]
  %v7407 = vld [vmem:[%s17 + $0x2e0] sm:$0xff]
  %v7408 = vld [vmem:[%s17 + $0x2e8] sm:$0xff]
  %v7409 = vld [vmem:[%s17 + $0x2f0] sm:$0xff]
  %v7410 = vld [vmem:[%s17 + $0x2f8] sm:$0xff]
  %v7411 = vld [vmem:[%s17 + $0x300] sm:$0xff]
  %v7412 = vld [vmem:[%s17 + $0x308] sm:$0xff]
  %v7413 = vld [vmem:[%s17 + $0x310] sm:$0xff]
  %v7414 = vld [vmem:[%s17 + $0x318] sm:$0xff]
  %v7415 = vld [vmem:[%s17 + $0x320] sm:$0xff]
  %v7416 = vld [vmem:[%s17 + $0x328] sm:$0xff]
  %v7417 = vld [vmem:[%s17 + $0x330] sm:$0xff]
  %v7418 = vld [vmem:[%s17 + $0x338] sm:$0xff]
  %v7419 = vld [vmem:[%s17 + $0x340] sm:$0xff]
  %v7420 = vld [vmem:[%s17 + $0x348] sm:$0xff]
  %v7421 = vld [vmem:[%s17 + $0x350] sm:$0xff]
  %v7422 = vld [vmem:[%s17 + $0x358] sm:$0xff]
  %v7423 = vld [vmem:[%s17 + $0x360] sm:$0xff]
  %v7424 = vld [vmem:[%s17 + $0x368] sm:$0xff]
  %v7425 = vld [vmem:[%s17 + $0x370] sm:$0xff]
  %v7426 = vld [vmem:[%s17 + $0x378] sm:$0xff]
  %7427 = vmatprep.subr.mxu0 0.0
  %7428 = vmatpush1.msra.mxu0 %v7315
  %7429 = vmatprep.subr.mxu0 0.0
  %7430 = vmatpush1.msra.mxu0 %v7316
  %7431 = vmatprep.subr.mxu0 0.0
  %7432 = vmatpush1.msra.mxu0 %v7317
  %7433 = vmatprep.subr.mxu0 0.0
  %7434 = vmatpush1.msra.mxu0 %v7318
  %7435 = vmatprep.subr.mxu0 0.0
  %7436 = vmatpush1.msra.mxu0 %v7319
  %7437 = vmatprep.subr.mxu0 0.0
  %7438 = vmatpush1.msra.mxu0 %v7320
  %7439 = vmatprep.subr.mxu0 0.0
  %7440 = vmatpush1.msra.mxu0 %v7321
  %7441 = vmatprep.subr.mxu0 0.0
  %7442 = vmatpush1.msra.mxu0 %v7322
  %7443 = vmatprep.subr.mxu0 0.0
  %7444 = vmatpush1.msra.mxu0 %v7323
  %7445 = vmatprep.subr.mxu0 0.0
  %7446 = vmatpush1.msra.mxu0 %v7324
  %7447 = vmatprep.subr.mxu0 0.0
  %7448 = vmatpush1.msra.mxu0 %v7325
  %7449 = vmatprep.subr.mxu0 0.0
  %7450 = vmatpush1.msra.mxu0 %v7326
  %7451 = vmatprep.subr.mxu0 0.0
  %7452 = vmatpush1.msra.mxu0 %v7327
  %7453 = vmatprep.subr.mxu0 0.0
  %7454 = vmatpush1.msra.mxu0 %v7328
  %7455 = vmatprep.subr.mxu0 0.0
  %7456 = vmatpush1.msra.mxu0 %v7329
  %7457 = vmatprep.subr.mxu0 0.0
  %7458 = vmatpush1.msra.mxu0 %v7330
  %7459 = vmatprep.subr.mxu0 0.0
  %7460 = vmatpush1.msra.mxu0 %v7331
  %7461 = vmatprep.subr.mxu0 0.0
  %7462 = vmatpush1.msra.mxu0 %v7332
  %7463 = vmatprep.subr.mxu0 0.0
  %7464 = vmatpush1.msra.mxu0 %v7333
  %7465 = vmatprep.subr.mxu0 0.0
  %7466 = vmatpush1.msra.mxu0 %v7334
  %7467 = vmatprep.subr.mxu0 0.0
  %7468 = vmatpush1.msra.mxu0 %v7335
  %7469 = vmatprep.subr.mxu0 0.0
  %7470 = vmatpush1.msra.mxu0 %v7336
  %7471 = vmatprep.subr.mxu0 0.0
  %7472 = vmatpush1.msra.mxu0 %v7337
  %7473 = vmatprep.subr.mxu0 0.0
  %7474 = vmatpush1.msra.mxu0 %v7338
  %7475 = vmatprep.subr.mxu0 0.0
  %7476 = vmatpush1.msra.mxu0 %v7339
  %7477 = vmatprep.subr.mxu0 0.0
  %7478 = vmatpush1.msra.mxu0 %v7340
  %7479 = vmatprep.subr.mxu0 0.0
  %7480 = vmatpush1.msra.mxu0 %v7341
  %7481 = vmatprep.subr.mxu0 0.0
  %7482 = vmatpush1.msra.mxu0 %v7342
  %7483 = vmatprep.subr.mxu0 0.0
  %7484 = vmatpush1.msra.mxu0 %v7343
  %7485 = vmatprep.subr.mxu0 0.0
  %7486 = vmatpush1.msra.mxu0 %v7344
  %7487 = vmatprep.subr.mxu0 0.0
  %7488 = vmatpush1.msra.mxu0 %v7345
  %7489 = vmatprep.subr.mxu0 0.0
  %7490 = vmatpush1.msra.mxu0 %v7346
  %7491 = vmatprep.mubr.f32.mxu0 %v7309
  %7492 = vmatmul.mubr.f32.gmra.mrb[0].mxu0 %v7308
  %v7493 = vpop.f32.mrb[0].mxu0
  %v7494 = vadd.f32 0.0, %v7493
  %v7495 = vpop.f32.mrb[0].mxu0
  %7496 = vdwg.mxu0
  %7497 = vmatprep.subr.mxu0 0.0
  %7498 = vmatpush1.msra.mxu0 %v7347
  %7499 = vmatprep.subr.mxu0 0.0
  %7500 = vmatpush1.msra.mxu0 %v7348
  %7501 = vmatprep.subr.mxu0 0.0
  %7502 = vmatpush1.msra.mxu0 %v7349
  %7503 = vmatprep.subr.mxu0 0.0
  %7504 = vmatpush1.msra.mxu0 %v7350
  %7505 = vmatprep.subr.mxu0 0.0
  %7506 = vmatpush1.msra.mxu0 %v7351
  %7507 = vmatprep.subr.mxu0 0.0
  %7508 = vmatpush1.msra.mxu0 %v7352
  %7509 = vmatprep.subr.mxu0 0.0
  %7510 = vmatpush1.msra.mxu0 %v7353
  %7511 = vmatprep.subr.mxu0 0.0
  %7512 = vmatpush1.msra.mxu0 %v7354
  %7513 = vmatprep.subr.mxu0 0.0
  %7514 = vmatpush1.msra.mxu0 %v7355
  %7515 = vmatprep.subr.mxu0 0.0
  %7516 = vmatpush1.msra.mxu0 %v7356
  %7517 = vmatprep.subr.mxu0 0.0
  %7518 = vmatpush1.msra.mxu0 %v7357
  %7519 = vmatprep.subr.mxu0 0.0
  %7520 = vmatpush1.msra.mxu0 %v7358
  %7521 = vmatprep.subr.mxu0 0.0
  %7522 = vmatpush1.msra.mxu0 %v7359
  %7523 = vmatprep.subr.mxu0 0.0
  %7524 = vmatpush1.msra.mxu0 %v7360
  %7525 = vmatprep.subr.mxu0 0.0
  %7526 = vmatpush1.msra.mxu0 %v7361
  %7527 = vmatprep.subr.mxu0 0.0
  %7528 = vmatpush1.msra.mxu0 %v7362
  %7529 = vmatprep.subr.mxu0 0.0
  %7530 = vmatpush1.msra.mxu0 %v7363
  %7531 = vmatprep.subr.mxu0 0.0
  %7532 = vmatpush1.msra.mxu0 %v7364
  %7533 = vmatprep.subr.mxu0 0.0
  %7534 = vmatpush1.msra.mxu0 %v7365
  %7535 = vmatprep.subr.mxu0 0.0
  %7536 = vmatpush1.msra.mxu0 %v7366
  %7537 = vmatprep.subr.mxu0 0.0
  %7538 = vmatpush1.msra.mxu0 %v7367
  %7539 = vmatprep.subr.mxu0 0.0
  %7540 = vmatpush1.msra.mxu0 %v7368
  %7541 = vmatprep.subr.mxu0 0.0
  %7542 = vmatpush1.msra.mxu0 %v7369
  %7543 = vmatprep.subr.mxu0 0.0
  %7544 = vmatpush1.msra.mxu0 %v7370
  %7545 = vmatprep.subr.mxu0 0.0
  %7546 = vmatpush1.msra.mxu0 %v7371
  %7547 = vmatprep.subr.mxu0 0.0
  %7548 = vmatpush1.msra.mxu0 %v7372
  %7549 = vmatprep.subr.mxu0 0.0
  %7550 = vmatpush1.msra.mxu0 %v7373
  %7551 = vmatprep.subr.mxu0 0.0
  %7552 = vmatpush1.msra.mxu0 %v7374
  %7553 = vmatprep.subr.mxu0 0.0
  %7554 = vmatpush1.msra.mxu0 %v7375
  %7555 = vmatprep.subr.mxu0 0.0
  %7556 = vmatpush1.msra.mxu0 %v7376
  %7557 = vmatprep.subr.mxu0 0.0
  %7558 = vmatpush1.msra.mxu0 %v7377
  %7559 = vmatprep.subr.mxu0 0.0
  %7560 = vmatpush1.msra.mxu0 %v7378
  %7561 = vmatprep.mubr.f32.mxu0 %v7311
  %7562 = vmatmul.mubr.f32.gmra.mrb[0].mxu0 %v7310
  %v7563 = vpop.f32.mrb[0].mxu0
  %v7564 = vadd.f32 %v7494, %v7563
  %v7565 = vpop.f32.mrb[0].mxu0
  %7566 = vdwg.mxu0
  %7567 = vmatprep.subr.mxu0 0.0
  %7568 = vmatpush1.msra.mxu0 %v7379
  %7569 = vmatprep.subr.mxu0 0.0
  %7570 = vmatpush1.msra.mxu0 %v7380
  %7571 = vmatprep.subr.mxu0 0.0
  %7572 = vmatpush1.msra.mxu0 %v7381
  %7573 = vmatprep.subr.mxu0 0.0
  %7574 = vmatpush1.msra.mxu0 %v7382
  %7575 = vmatprep.subr.mxu0 0.0
  %7576 = vmatpush1.msra.mxu0 %v7383
  %7577 = vmatprep.subr.mxu0 0.0
  %7578 = vmatpush1.msra.mxu0 %v7384
  %7579 = vmatprep.subr.mxu0 0.0
  %7580 = vmatpush1.msra.mxu0 %v7385
  %7581 = vmatprep.subr.mxu0 0.0
  %7582 = vmatpush1.msra.mxu0 %v7386
  %7583 = vmatprep.subr.mxu0 0.0
  %7584 = vmatpush1.msra.mxu0 %v7387
  %7585 = vmatprep.subr.mxu0 0.0
  %7586 = vmatpush1.msra.mxu0 %v7388
  %7587 = vmatprep.subr.mxu0 0.0
  %7588 = vmatpush1.msra.mxu0 %v7389
  %7589 = vmatprep.subr.mxu0 0.0
  %7590 = vmatpush1.msra.mxu0 %v7390
  %7591 = vmatprep.subr.mxu0 0.0
  %7592 = vmatpush1.msra.mxu0 %v7391
  %7593 = vmatprep.subr.mxu0 0.0
  %7594 = vmatpush1.msra.mxu0 %v7392
  %7595 = vmatprep.subr.mxu0 0.0
  %7596 = vmatpush1.msra.mxu0 %v7393
  %7597 = vmatprep.subr.mxu0 0.0
  %7598 = vmatpush1.msra.mxu0 %v7394
  %7599 = vmatprep.subr.mxu0 0.0
  %7600 = vmatpush1.msra.mxu0 %v7395
  %7601 = vmatprep.subr.mxu0 0.0
  %7602 = vmatpush1.msra.mxu0 %v7396
  %7603 = vmatprep.subr.mxu0 0.0
  %7604 = vmatpush1.msra.mxu0 %v7397
  %7605 = vmatprep.subr.mxu0 0.0
  %7606 = vmatpush1.msra.mxu0 %v7398
  %7607 = vmatprep.subr.mxu0 0.0
  %7608 = vmatpush1.msra.mxu0 %v7399
  %7609 = vmatprep.subr.mxu0 0.0
  %7610 = vmatpush1.msra.mxu0 %v7400
  %7611 = vmatprep.subr.mxu0 0.0
  %7612 = vmatpush1.msra.mxu0 %v7401
  %7613 = vmatprep.subr.mxu0 0.0
  %7614 = vmatpush1.msra.mxu0 %v7402
  %7615 = vmatprep.subr.mxu0 0.0
  %7616 = vmatpush1.msra.mxu0 %v7403
  %7617 = vmatprep.subr.mxu0 0.0
  %7618 = vmatpush1.msra.mxu0 %v7404
  %7619 = vmatprep.subr.mxu0 0.0
  %7620 = vmatpush1.msra.mxu0 %v7405
  %7621 = vmatprep.subr.mxu0 0.0
  %7622 = vmatpush1.msra.mxu0 %v7406
  %7623 = vmatprep.subr.mxu0 0.0
  %7624 = vmatpush1.msra.mxu0 %v7407
  %7625 = vmatprep.subr.mxu0 0.0
  %7626 = vmatpush1.msra.mxu0 %v7408
  %7627 = vmatprep.subr.mxu0 0.0
  %7628 = vmatpush1.msra.mxu0 %v7409
  %7629 = vmatprep.subr.mxu0 0.0
  %7630 = vmatpush1.msra.mxu0 %v7410
  %7631 = vmatprep.mubr.f32.mxu0 %v7313
  %7632 = vmatmul.mubr.f32.gmra.mrb[0].mxu0 %v7312
  %v7633 = vpop.f32.mrb[0].mxu0
  %v7634 = vadd.f32 %v7564, %v7633
  %v7635 = vpop.f32.mrb[0].mxu0
  %7636 = vdwg.mxu0
  %7637 = vmatprep.subr.mxu0 0.0
  %7638 = vmatpush1.msra.mxu0 %v7411
  %7639 = vmatprep.subr.mxu0 0.0
  %7640 = vmatpush1.msra.mxu0 %v7412
  %7641 = vmatprep.subr.mxu0 0.0
  %7642 = vmatpush1.msra.mxu0 %v7413
  %7643 = vmatprep.subr.mxu0 0.0
  %7644 = vmatpush1.msra.mxu0 %v7414
  %7645 = vmatprep.subr.mxu0 0.0
  %7646 = vmatpush1.msra.mxu0 %v7415
  %7647 = vmatprep.subr.mxu0 0.0
  %7648 = vmatpush1.msra.mxu0 %v7416
  %7649 = vmatprep.subr.mxu0 0.0
  %7650 = vmatpush1.msra.mxu0 %v7417
  %7651 = vmatprep.subr.mxu0 0.0
  %7652 = vmatpush1.msra.mxu0 %v7418
  %7653 = vmatprep.subr.mxu0 0.0
  %7654 = vmatpush1.msra.mxu0 %v7419
  %7655 = vmatprep.subr.mxu0 0.0
  %7656 = vmatpush1.msra.mxu0 %v7420
  %7657 = vmatprep.subr.mxu0 0.0
  %7658 = vmatpush1.msra.mxu0 %v7421
  %7659 = vmatprep.subr.mxu0 0.0
  %7660 = vmatpush1.msra.mxu0 %v7422
  %7661 = vmatprep.subr.mxu0 0.0
  %7662 = vmatpush1.msra.mxu0 %v7423
  %7663 = vmatprep.subr.mxu0 0.0
  %7664 = vmatpush1.msra.mxu0 %v7424
  %7665 = vmatprep.subr.mxu0 0.0
  %7666 = vmatpush1.msra.mxu0 %v7425
  %7667 = vmatprep.subr.mxu0 0.0
  %7668 = vmatpush1.msra.mxu0 %v7426
  %7669 = vmatprep.subr.mxu0 0.0
  %7670 = vmatpush1.msra.mxu0 0.0
  %7671 = vmatprep.subr.mxu0 0.0
  %7672 = vmatpush1.msra.mxu0 0.0
  %7673 = vmatprep.subr.mxu0 0.0
  %7674 = vmatpush1.msra.mxu0 0.0
  %7675 = vmatprep.subr.mxu0 0.0
  %7676 = vmatpush1.msra.mxu0 0.0
  %7677 = vmatprep.subr.mxu0 0.0
  %7678 = vmatpush1.msra.mxu0 0.0
  %7679 = vmatprep.subr.mxu0 0.0
  %7680 = vmatpush1.msra.mxu0 0.0
  %7681 = vmatprep.subr.mxu0 0.0
  %7682 = vmatpush1.msra.mxu0 0.0
  %7683 = vmatprep.subr.mxu0 0.0
  %7684 = vmatpush1.msra.mxu0 0.0
  %7685 = vmatprep.subr.mxu0 0.0
  %7686 = vmatpush1.msra.mxu0 0.0
  %7687 = vmatprep.subr.mxu0 0.0
  %7688 = vmatpush1.msra.mxu0 0.0
  %7689 = vmatprep.subr.mxu0 0.0
  %7690 = vmatpush1.msra.mxu0 0.0
  %7691 = vmatprep.subr.mxu0 0.0
  %7692 = vmatpush1.msra.mxu0 0.0
  %7693 = vmatprep.subr.mxu0 0.0
  %7694 = vmatpush1.msra.mxu0 0.0
  %7695 = vmatprep.subr.mxu0 0.0
  %7696 = vmatpush1.msra.mxu0 0.0
  %7697 = vmatprep.subr.mxu0 0.0
  %7698 = vmatpush1.msra.mxu0 0.0
  %7699 = vmatprep.subr.mxu0 0.0
  %7700 = vmatpush1.msra.mxu0 0.0
  %7701 = vmatprep.mubr.f32.mxu0 0.0
  %7702 = vmatmul.mubr.f32.gmra.mrb[0].mxu0 %v7314
  %v7703 = vpop.f32.mrb[0].mxu0
  %v7704 = vadd.f32 %v7634, %v7703
  %v7705 = vpop.f32.mrb[0].mxu0
  %7706 = vdwg.mxu0
  %v7707 = vmul.f32 %v7704, %v7704
  %v7709 = vrot.slane %v7707, 7
  %v7711 = vsub.f32 %v7704, %v7709
  %v7712 = vld [vmem:[%s19] sm:$0x1]
  %v7713 = vadd.f32 %v7711, 1e-05
  %v7714 = vrsqrt.pop %v7713
  %v7717 = vunpack.c.l.s4 1966171168
  %v7718 = vunpack.c.0.s8 %v7717
  %v7719 = vlaneseq
  %v7720 = vshrl.u32 %v7719, 7
  %v7721 = vsub.s32 %v7718, %v7720
  %v7722 = vrot.slane %v7714, %v7721
  %v7723 = vcombine.high %v7722, %v7722
  %v7725 = vunpack.c.l.s4 1966171168
  %v7726 = vunpack.c.0.s8 %v7725
  %v7727 = vlaneseq
  %v7728 = vshrl.u32 %v7727, 7
  %v7729 = vsub.s32 %v7726, %v7728
  %v7730 = vrot.slane %v7723, %v7729
  %v7732 = vmul.f32 %v7712, %v7730
  %v7733 = vld [vmem:[%s20] sm:$0x1]
  %v7734 = vmul.f32 %v7704, %v7732
  %v7735 = vsub.f32 %v7733, %v7734
  %v7737 = vlaneseq
  %v7738 = vshrl.u32 %v7737, 7
  %v7739 = vsub.s32 0, %v7738
  %v7740 = vrot.slane %v7735, %v7739
  %v7742 = vsel %vm234, %v7732, %v7740
  %v7743 = vld [vmem:[%s18] sm:$0xff]
  %v7744 = vld [vmem:[%s18 + $0x8] sm:$0xff]
  %v7745 = vld [vmem:[%s18 + $0x10] sm:$0xff]
  %v7746 = vld [vmem:[%s18 + $0x18] sm:$0xff]
  %v7747 = vld [vmem:[%s18 + $0x20] sm:$0xff]
  %v7748 = vld [vmem:[%s18 + $0x28] sm:$0xff]
  %v7749 = vld [vmem:[%s18 + $0x30] sm:$0xff]
  %v7750 = vld [vmem:[%s18 + $0x38] sm:$0xff]
  %v7751 = vld [vmem:[%s18 + $0x40] sm:$0xff]
  %v7752 = vld [vmem:[%s18 + $0x48] sm:$0xff]
  %v7753 = vld [vmem:[%s18 + $0x50] sm:$0xff]
  %v7754 = vld [vmem:[%s18 + $0x58] sm:$0xff]
  %v7755 = vld [vmem:[%s18 + $0x60] sm:$0xff]
  %v7756 = vld [vmem:[%s18 + $0x68] sm:$0xff]
  %v7758 = vsel %vm379, %v7742, 0
  %7760 = vmatprep.subr.mxu0 %v7744
  %7761 = vmatpush1.msra.mxu0 %v7743
  %7762 = vmatprep.subr.mxu0 %v7751
  %7763 = vmatpush1.msra.mxu0 %v7750
  %7764 = vmatprep.subr.mxu0 0.0
  %7765 = vmatpush1.msra.mxu0 0.0
  %7766 = vmatprep.subr.mxu0 0.0
  %7767 = vmatpush1.msra.mxu0 0.0
  %7768 = vmatprep.subr.mxu0 0.0
  %7769 = vmatpush1.msra.mxu0 0.0
  %7770 = vmatprep.subr.mxu0 0.0
  %7771 = vmatpush1.msra.mxu0 0.0
  %7772 = vmatprep.subr.mxu0 0.0
  %7773 = vmatpush1.msra.mxu0 0.0
  %7774 = vmatprep.subr.mxu0 0.0
  %7775 = vmatpush1.msra.mxu0 0.0
  %7776 = vmatprep.subr.mxu0 0.0
  %7777 = vmatpush1.msra.mxu0 0.0
  %7778 = vmatprep.subr.mxu0 0.0
  %7779 = vmatpush1.msra.mxu0 0.0
  %7780 = vmatprep.subr.mxu0 0.0
  %7781 = vmatpush1.msra.mxu0 0.0
  %7782 = vmatprep.subr.mxu0 0.0
  %7783 = vmatpush1.msra.mxu0 0.0
  %7784 = vmatprep.subr.mxu0 0.0
  %7785 = vmatpush1.msra.mxu0 0.0
  %7786 = vmatprep.subr.mxu0 0.0
  %7787 = vmatpush1.msra.mxu0 0.0
  %7788 = vmatprep.subr.mxu0 0.0
  %7789 = vmatpush1.msra.mxu0 0.0
  %7790 = vmatprep.subr.mxu0 0.0
  %7791 = vmatpush1.msra.mxu0 0.0
  %7792 = vmatprep.subr.mxu0 0.0
  %7793 = vmatpush1.msra.mxu0 0.0
  %7794 = vmatprep.subr.mxu0 0.0
  %7795 = vmatpush1.msra.mxu0 0.0
  %7796 = vmatprep.subr.mxu0 0.0
  %7797 = vmatpush1.msra.mxu0 0.0
  %7798 = vmatprep.subr.mxu0 0.0
  %7799 = vmatpush1.msra.mxu0 0.0
  %7800 = vmatprep.subr.mxu0 0.0
  %7801 = vmatpush1.msra.mxu0 0.0
  %7802 = vmatprep.subr.mxu0 0.0
  %7803 = vmatpush1.msra.mxu0 0.0
  %7804 = vmatprep.subr.mxu0 0.0
  %7805 = vmatpush1.msra.mxu0 0.0
  %7806 = vmatprep.subr.mxu0 0.0
  %7807 = vmatpush1.msra.mxu0 0.0
  %7808 = vmatprep.subr.mxu0 0.0
  %7809 = vmatpush1.msra.mxu0 0.0
  %7810 = vmatprep.subr.mxu0 0.0
  %7811 = vmatpush1.msra.mxu0 0.0
  %7812 = vmatprep.subr.mxu0 0.0
  %7813 = vmatpush1.msra.mxu0 0.0
  %7814 = vmatprep.subr.mxu0 0.0
  %7815 = vmatpush1.msra.mxu0 0.0
  %7816 = vmatprep.subr.mxu0 0.0
  %7817 = vmatpush1.msra.mxu0 0.0
  %7818 = vmatprep.subr.mxu0 0.0
  %7819 = vmatpush1.msra.mxu0 0.0
  %7820 = vmatprep.subr.mxu0 0.0
  %7821 = vmatpush1.msra.mxu0 0.0
  %7822 = vmatprep.subr.mxu0 0.0
  %7823 = vmatpush1.msra.mxu0 0.0
  %7824 = vmatprep.mubr.f32.mxu0 0.0
  %7825 = vmatmul.mubr.f32.gmra.mrb[0].mxu0 %v7758
  %v7826 = vpop.f32.mrb[0].mxu0
  %v7827 = vadd.f32 0.0, %v7826
  %v7828 = vpop.f32.mrb[0].mxu0
  %v7829 = vadd.f32 0.0, %v7828
  %7830 = vdwg.mxu0
  %7831 = vmatprep.subr.mxu0 %v7746
  %7832 = vmatpush1.msra.mxu0 %v7745
  %7833 = vmatprep.subr.mxu0 %v7753
  %7834 = vmatpush1.msra.mxu0 %v7752
  %7835 = vmatprep.subr.mxu0 0.0
  %7836 = vmatpush1.msra.mxu0 0.0
  %7837 = vmatprep.subr.mxu0 0.0
  %7838 = vmatpush1.msra.mxu0 0.0
  %7839 = vmatprep.subr.mxu0 0.0
  %7840 = vmatpush1.msra.mxu0 0.0
  %7841 = vmatprep.subr.mxu0 0.0
  %7842 = vmatpush1.msra.mxu0 0.0
  %7843 = vmatprep.subr.mxu0 0.0
  %7844 = vmatpush1.msra.mxu0 0.0
  %7845 = vmatprep.subr.mxu0 0.0
  %7846 = vmatpush1.msra.mxu0 0.0
  %7847 = vmatprep.subr.mxu0 0.0
  %7848 = vmatpush1.msra.mxu0 0.0
  %7849 = vmatprep.subr.mxu0 0.0
  %7850 = vmatpush1.msra.mxu0 0.0
  %7851 = vmatprep.subr.mxu0 0.0
  %7852 = vmatpush1.msra.mxu0 0.0
  %7853 = vmatprep.subr.mxu0 0.0
  %7854 = vmatpush1.msra.mxu0 0.0
  %7855 = vmatprep.subr.mxu0 0.0
  %7856 = vmatpush1.msra.mxu0 0.0
  %7857 = vmatprep.subr.mxu0 0.0
  %7858 = vmatpush1.msra.mxu0 0.0
  %7859 = vmatprep.subr.mxu0 0.0
  %7860 = vmatpush1.msra.mxu0 0.0
  %7861 = vmatprep.subr.mxu0 0.0
  %7862 = vmatpush1.msra.mxu0 0.0
  %7863 = vmatprep.subr.mxu0 0.0
  %7864 = vmatpush1.msra.mxu0 0.0
  %7865 = vmatprep.subr.mxu0 0.0
  %7866 = vmatpush1.msra.mxu0 0.0
  %7867 = vmatprep.subr.mxu0 0.0
  %7868 = vmatpush1.msra.mxu0 0.0
  %7869 = vmatprep.subr.mxu0 0.0
  %7870 = vmatpush1.msra.mxu0 0.0
  %7871 = vmatprep.subr.mxu0 0.0
  %7872 = vmatpush1.msra.mxu0 0.0
  %7873 = vmatprep.subr.mxu0 0.0
  %7874 = vmatpush1.msra.mxu0 0.0
  %7875 = vmatprep.subr.mxu0 0.0
  %7876 = vmatpush1.msra.mxu0 0.0
  %7877 = vmatprep.subr.mxu0 0.0
  %7878 = vmatpush1.msra.mxu0 0.0
  %7879 = vmatprep.subr.mxu0 0.0
  %7880 = vmatpush1.msra.mxu0 0.0
  %7881 = vmatprep.subr.mxu0 0.0
  %7882 = vmatpush1.msra.mxu0 0.0
  %7883 = vmatprep.subr.mxu0 0.0
  %7884 = vmatpush1.msra.mxu0 0.0
  %7885 = vmatprep.subr.mxu0 0.0
  %7886 = vmatpush1.msra.mxu0 0.0
  %7887 = vmatprep.subr.mxu0 0.0
  %7888 = vmatpush1.msra.mxu0 0.0
  %7889 = vmatprep.subr.mxu0 0.0
  %7890 = vmatpush1.msra.mxu0 0.0
  %7891 = vmatprep.subr.mxu0 0.0
  %7892 = vmatpush1.msra.mxu0 0.0
  %7893 = vmatprep.subr.mxu0 0.0
  %7894 = vmatpush1.msra.mxu0 0.0
  %7895 = vmatprep.mubr.f32.mxu0 0.0
  %7896 = vmatmul.mubr.f32.gmra.mrb[0].mxu0 %v7758
  %v7897 = vpop.f32.mrb[0].mxu0
  %v7898 = vadd.f32 0.0, %v7897
  %v7899 = vpop.f32.mrb[0].mxu0
  %v7900 = vadd.f32 0.0, %v7899
  %7901 = vdwg.mxu0
  %7902 = vmatprep.subr.mxu0 %v7748
  %7903 = vmatpush1.msra.mxu0 %v7747
  %7904 = vmatprep.subr.mxu0 %v7755
  %7905 = vmatpush1.msra.mxu0 %v7754
  %7906 = vmatprep.subr.mxu0 0.0
  %7907 = vmatpush1.msra.mxu0 0.0
  %7908 = vmatprep.subr.mxu0 0.0
  %7909 = vmatpush1.msra.mxu0 0.0
  %7910 = vmatprep.subr.mxu0 0.0
  %7911 = vmatpush1.msra.mxu0 0.0
  %7912 = vmatprep.subr.mxu0 0.0
  %7913 = vmatpush1.msra.mxu0 0.0
  %7914 = vmatprep.subr.mxu0 0.0
  %7915 = vmatpush1.msra.mxu0 0.0
  %7916 = vmatprep.subr.mxu0 0.0
  %7917 = vmatpush1.msra.mxu0 0.0
  %7918 = vmatprep.subr.mxu0 0.0
  %7919 = vmatpush1.msra.mxu0 0.0
  %7920 = vmatprep.subr.mxu0 0.0
  %7921 = vmatpush1.msra.mxu0 0.0
  %7922 = vmatprep.subr.mxu0 0.0
  %7923 = vmatpush1.msra.mxu0 0.0
  %7924 = vmatprep.subr.mxu0 0.0
  %7925 = vmatpush1.msra.mxu0 0.0
  %7926 = vmatprep.subr.mxu0 0.0
  %7927 = vmatpush1.msra.mxu0 0.0
  %7928 = vmatprep.subr.mxu0 0.0
  %7929 = vmatpush1.msra.mxu0 0.0
  %7930 = vmatprep.subr.mxu0 0.0
  %7931 = vmatpush1.msra.mxu0 0.0
  %7932 = vmatprep.subr.mxu0 0.0
  %7933 = vmatpush1.msra.mxu0 0.0
  %7934 = vmatprep.subr.mxu0 0.0
  %7935 = vmatpush1.msra.mxu0 0.0
  %7936 = vmatprep.subr.mxu0 0.0
  %7937 = vmatpush1.msra.mxu0 0.0
  %7938 = vmatprep.subr.mxu0 0.0
  %7939 = vmatpush1.msra.mxu0 0.0
  %7940 = vmatprep.subr.mxu0 0.0
  %7941 = vmatpush1.msra.mxu0 0.0
  %7942 = vmatprep.subr.mxu0 0.0
  %7943 = vmatpush1.msra.mxu0 0.0
  %7944 = vmatprep.subr.mxu0 0.0
  %7945 = vmatpush1.msra.mxu0 0.0
  %7946 = vmatprep.subr.mxu0 0.0
  %7947 = vmatpush1.msra.mxu0 0.0
  %7948 = vmatprep.subr.mxu0 0.0
  %7949 = vmatpush1.msra.mxu0 0.0
  %7950 = vmatprep.subr.mxu0 0.0
  %7951 = vmatpush1.msra.mxu0 0.0
  %7952 = vmatprep.subr.mxu0 0.0
  %7953 = vmatpush1.msra.mxu0 0.0
  %7954 = vmatprep.subr.mxu0 0.0
  %7955 = vmatpush1.msra.mxu0 0.0
  %7956 = vmatprep.subr.mxu0 0.0
  %7957 = vmatpush1.msra.mxu0 0.0
  %7958 = vmatprep.subr.mxu0 0.0
  %7959 = vmatpush1.msra.mxu0 0.0
  %7960 = vmatprep.subr.mxu0 0.0
  %7961 = vmatpush1.msra.mxu0 0.0
  %7962 = vmatprep.subr.mxu0 0.0
  %7963 = vmatpush1.msra.mxu0 0.0
  %7964 = vmatprep.subr.mxu0 0.0
  %7965 = vmatpush1.msra.mxu0 0.0
  %7966 = vmatprep.mubr.f32.mxu0 0.0
  %7967 = vmatmul.mubr.f32.gmra.mrb[0].mxu0 %v7758
  %v7968 = vpop.f32.mrb[0].mxu0
  %v7969 = vadd.f32 0.0, %v7968
  %v7970 = vpop.f32.mrb[0].mxu0
  %v7971 = vadd.f32 0.0, %v7970
  %7972 = vdwg.mxu0
  %7973 = vmatprep.subr.mxu0 0.0
  %7974 = vmatpush1.msra.mxu0 %v7749
  %7975 = vmatprep.subr.mxu0 0.0
  %7976 = vmatpush1.msra.mxu0 %v7756
  %7977 = vmatprep.subr.mxu0 0.0
  %7978 = vmatpush1.msra.mxu0 0.0
  %7979 = vmatprep.subr.mxu0 0.0
  %7980 = vmatpush1.msra.mxu0 0.0
  %7981 = vmatprep.subr.mxu0 0.0
  %7982 = vmatpush1.msra.mxu0 0.0
  %7983 = vmatprep.subr.mxu0 0.0
  %7984 = vmatpush1.msra.mxu0 0.0
  %7985 = vmatprep.subr.mxu0 0.0
  %7986 = vmatpush1.msra.mxu0 0.0
  %7987 = vmatprep.subr.mxu0 0.0
  %7988 = vmatpush1.msra.mxu0 0.0
  %7989 = vmatprep.subr.mxu0 0.0
  %7990 = vmatpush1.msra.mxu0 0.0
  %7991 = vmatprep.subr.mxu0 0.0
  %7992 = vmatpush1.msra.mxu0 0.0
  %7993 = vmatprep.subr.mxu0 0.0
  %7994 = vmatpush1.msra.mxu0 0.0
  %7995 = vmatprep.subr.mxu0 0.0
  %7996 = vmatpush1.msra.mxu0 0.0
  %7997 = vmatprep.subr.mxu0 0.0
  %7998 = vmatpush1.msra.mxu0 0.0
  %7999 = vmatprep.subr.mxu0 0.0
  %8000 = vmatpush1.msra.mxu0 0.0
  %8001 = vmatprep.subr.mxu0 0.0
  %8002 = vmatpush1.msra.mxu0 0.0
  %8003 = vmatprep.subr.mxu0 0.0
  %8004 = vmatpush1.msra.mxu0 0.0
  %8005 = vmatprep.subr.mxu0 0.0
  %8006 = vmatpush1.msra.mxu0 0.0
  %8007 = vmatprep.subr.mxu0 0.0
  %8008 = vmatpush1.msra.mxu0 0.0
  %8009 = vmatprep.subr.mxu0 0.0
  %8010 = vmatpush1.msra.mxu0 0.0
  %8011 = vmatprep.subr.mxu0 0.0
  %8012 = vmatpush1.msra.mxu0 0.0
  %8013 = vmatprep.subr.mxu0 0.0
  %8014 = vmatpush1.msra.mxu0 0.0
  %8015 = vmatprep.subr.mxu0 0.0
  %8016 = vmatpush1.msra.mxu0 0.0
  %8017 = vmatprep.subr.mxu0 0.0
  %8018 = vmatpush1.msra.mxu0 0.0
  %8019 = vmatprep.subr.mxu0 0.0
  %8020 = vmatpush1.msra.mxu0 0.0
  %8021 = vmatprep.subr.mxu0 0.0
  %8022 = vmatpush1.msra.mxu0 0.0
  %8023 = vmatprep.subr.mxu0 0.0
  %8024 = vmatpush1.msra.mxu0 0.0
  %8025 = vmatprep.subr.mxu0 0.0
  %8026 = vmatpush1.msra.mxu0 0.0
  %8027 = vmatprep.subr.mxu0 0.0
  %8028 = vmatpush1.msra.mxu0 0.0
  %8029 = vmatprep.subr.mxu0 0.0
  %8030 = vmatpush1.msra.mxu0 0.0
  %8031 = vmatprep.subr.mxu0 0.0
  %8032 = vmatpush1.msra.mxu0 0.0
  %8033 = vmatprep.subr.mxu0 0.0
  %8034 = vmatpush1.msra.mxu0 0.0
  %8035 = vmatprep.subr.mxu0 0.0
  %8036 = vmatpush1.msra.mxu0 0.0
  %8037 = vmatprep.mubr.f32.mxu0 0.0
  %8038 = vmatmul.mubr.f32.gmra.mrb[0].mxu0 %v7758
  %v8039 = vpop.f32.mrb[0].mxu0
  %v8040 = vadd.f32 0.0, %v8039
  %v8041 = vpop.f32.mrb[0].mxu0
  %8042 = vdwg.mxu0
  %v8043 = vlaneseq
  %v8044 = vshrl.u32 %v8043, 7
  %v8045 = vsub.s32 0, %v8044
  %v8046 = vrot.slane %v7827, %v8045
  %v8047 = vlaneseq
  %v8048 = vshrl.u32 %v8047, 7
  %v8049 = vsub.s32 0, %v8048
  %v8050 = vrot.slane %v7829, %v8049
  %v8051 = vlaneseq
  %v8052 = vshrl.u32 %v8051, 7
  %v8053 = vsub.s32 0, %v8052
  %v8054 = vrot.slane %v7898, %v8053
  %v8055 = vlaneseq
  %v8056 = vshrl.u32 %v8055, 7
  %v8057 = vsub.s32 0, %v8056
  %v8058 = vrot.slane %v7900, %v8057
  %v8059 = vlaneseq
  %v8060 = vshrl.u32 %v8059, 7
  %v8061 = vsub.s32 0, %v8060
  %v8062 = vrot.slane %v7969, %v8061
  %v8063 = vlaneseq
  %v8064 = vshrl.u32 %v8063, 7
  %v8065 = vsub.s32 0, %v8064
  %v8066 = vrot.slane %v7971, %v8065
  %v8067 = vlaneseq
  %v8068 = vshrl.u32 %v8067, 7
  %v8069 = vsub.s32 0, %v8068
  %v8070 = vrot.slane %v8040, %v8069
  %v8071 = vmul.f32 %v6723, %v8046
  %v8072 = vmul.f32 %v6725, %v8050
  %v8073 = vmul.f32 %v6887, %v8054
  %v8074 = vmul.f32 %v6889, %v8058
  %v8075 = vmul.f32 %v7051, %v8062
  %v8076 = vmul.f32 %v7053, %v8066
  %v8077 = vmul.f32 %v7212, %v8070
  %v8078 = vlaneseq
  %v8079 = vshrl.u32 %v8078, 7
  %v8080 = vsub.s32 1, %v8079
  %v8081 = vrot.slane %v7827, %v8080
  %v8082 = vlaneseq
  %v8083 = vshrl.u32 %v8082, 7
  %v8084 = vsub.s32 1, %v8083
  %v8085 = vrot.slane %v7829, %v8084
  %v8086 = vlaneseq
  %v8087 = vshrl.u32 %v8086, 7
  %v8088 = vsub.s32 1, %v8087
  %v8089 = vrot.slane %v7898, %v8088
  %v8090 = vlaneseq
  %v8091 = vshrl.u32 %v8090, 7
  %v8092 = vsub.s32 1, %v8091
  %v8093 = vrot.slane %v7900, %v8092
  %v8094 = vlaneseq
  %v8095 = vshrl.u32 %v8094, 7
  %v8096 = vsub.s32 1, %v8095
  %v8097 = vrot.slane %v7969, %v8096
  %v8098 = vlaneseq
  %v8099 = vshrl.u32 %v8098, 7
  %v8100 = vsub.s32 1, %v8099
  %v8101 = vrot.slane %v7971, %v8100
  %v8102 = vlaneseq
  %v8103 = vshrl.u32 %v8102, 7
  %v8104 = vsub.s32 1, %v8103
  %v8105 = vrot.slane %v8040, %v8104
  %v8106 = vadd.f32 %v8071, %v8081
  %v8107 = vadd.f32 %v8072, %v8085
  %v8108 = vadd.f32 %v8073, %v8089
  %v8109 = vadd.f32 %v8074, %v8093
  %v8110 = vadd.f32 %v8075, %v8097
  %v8111 = vadd.f32 %v8076, %v8101
  %v8112 = vadd.f32 %v8077, %v8105
  %v8113 = vtanh.pop %v8106
  %v8114 = vtanh.pop %v8107
  %v8115 = vtanh.pop %v8108
  %v8116 = vtanh.pop %v8109
  %v8117 = vtanh.pop %v8110
  %v8118 = vtanh.pop %v8111
  %v8119 = vtanh.pop %v8112
  %8120 = vst [vmem:[%s21] sm:$0xff] %v8113
  %8121 = vst [vmem:[%s21 + $0x8] sm:$0xff] %v8114
  %8122 = vst [vmem:[%s21 + $0x10] sm:$0xff] %v8115
  %8123 = vst [vmem:[%s21 + $0x18] sm:$0xff] %v8116
  %8124 = vst [vmem:[%s21 + $0x20] sm:$0xff] %v8117
  %8125 = vst [vmem:[%s21 + $0x28] sm:$0xff] %v8118
  %8126 = vst [vmem:[%s21 + $0x30] sm:$0xff] %v8119
  // Predicated region
  $region86: #{forward.1} parent=0 // pred_check
    _
  $region87: #{forward.1} parent=0 // pred_check_branch
    %8128 = sbr.rel (0) target = $region89
  $region88: #{forward.1} parent=0 // pred_region
    _
  $region89: #{forward.1} parent=0 // pred_fallthru
    _
  // Predicated region
  $region90: #{forward.1} parent=0 // pred_check
    _
  $region91: #{forward.1} parent=0 // pred_check_branch
    %8130 = sbr.rel (0) target = $region93
  $region92: #{forward.1} parent=0 // pred_region
    _
  $region93: #{forward.1} parent=0 // pred_fallthru
    _

</llo_original>
